<compile_context>
chip_gen: v7x
topology: tpu7x:2x2x1
jax: 0.10.0
libtpu: 0.0.40
codegen_flags: <defaults>
</compile_context>

<pallas_src>
import jax
import jax.numpy as jnp
from jax.experimental import pallas as pl
from jax.experimental.pallas import tpu as pltpu

EPS = 1e-12  # F.normalize default eps


def _l2_normalize(x):
    # F.normalize(x, p=2, dim=1): x / max(||x||_2, eps), row-wise.
    # Rewritten as x * rsqrt(max(sum(x^2), eps^2)) — mathematically identical,
    # rsqrt lowers to the EUP which has its own VLIW slot.
    ss = jnp.sum(x * x, axis=-1, keepdims=True)
    return x * jax.lax.rsqrt(jnp.maximum(ss, EPS * EPS))


def mlp_kernel(x_ref, w1_ref, b1_ref, w2_ref, b2_ref, w3_ref, b3_ref, o_ref):
    # Normalize the raw input in f32, then feed bf16 operands to the MXU with
    # f32 accumulation. Bias add / ReLU / normalize stay in f32.
    x = _l2_normalize(x_ref[...].astype(jnp.float32))

    h = jnp.dot(x.astype(jnp.bfloat16), w1_ref[...],
                preferred_element_type=jnp.float32)
    h = jnp.maximum(h + b1_ref[...], 0.0)
    h = _l2_normalize(h)

    h = jnp.dot(h.astype(jnp.bfloat16), w2_ref[...],
                preferred_element_type=jnp.float32)
    h = jnp.maximum(h + b2_ref[...], 0.0)
    h = _l2_normalize(h)

    h = jnp.dot(h.astype(jnp.bfloat16), w3_ref[...],
                preferred_element_type=jnp.float32)
    o_ref[...] = (h + b3_ref[...]).astype(o_ref.dtype)


def _round_up(n, m):
    return ((n + m - 1) // m) * m


def mlp_forward(x, params, *, tile_b=256):
    """x: (B, 1024) float32. params: transposed bf16 weights + f32 biases."""
    B, D_in = x.shape
    assert D_in == 1024

    # Pick the batch tile: whole (padded) batch if it is tiny, else tile_b.
    tile_b = min(tile_b, _round_up(B, 8))
    pad_b = _round_up(B, tile_b)
    if pad_b != B:
        x = jnp.pad(x, ((0, pad_b - B), (0, 0)))

    w1, b1 = params["w1"], params["b1"]   # (1024, 512) bf16, (1, 512) f32
    w2, b2 = params["w2"], params["b2"]   # (512, 256)  bf16, (1, 256) f32
    w3, b3 = params["w3"], params["b3"]   # (256, 128)  bf16, (1, 128) f32

    grid = (pad_b // tile_b,)

    # Grid-invariant blocks (weights / biases): single-buffer them so VMEM is
    # not wasted on a second copy that never changes.
    def const_spec(shape):
        return pl.BlockSpec(shape, lambda i: (0, 0),
                            pipeline_mode=pl.Buffered(1))

    out = pl.pallas_call(
        mlp_kernel,
        out_shape=jax.ShapeDtypeStruct((pad_b, 128), x.dtype),
        grid_spec=pltpu.PrefetchScalarGridSpec(
            num_scalar_prefetch=0,
            grid=grid,
            in_specs=[
                pl.BlockSpec((tile_b, 1024), lambda i: (i, 0)),   # x tile
                const_spec((1024, 512)), const_spec((1, 512)),    # fc1
                const_spec((512, 256)),  const_spec((1, 256)),    # fc2
                const_spec((256, 128)),  const_spec((1, 128)),    # fc3
            ],
            out_specs=pl.BlockSpec((tile_b, 128), lambda i: (i, 0)),
        ),
        compiler_params=pltpu.CompilerParams(
            dimension_semantics=("parallel",)),
    )(x, w1, b1, w2, b2, w3, b3)

    return out[:B]


def init_params(key):
    """Deterministic synthetic parameters with nn.Linear-like shapes."""
    ks = jax.random.split(key, 6)

    def linear(kw, kb, fan_in, fan_out):
        bound = 1.0 / jnp.sqrt(fan_in)
        # PyTorch stores W as (out, in); keep it transposed (in, out) for x @ W
        # and pre-cast to bf16 for native-rate MXU matmuls.
        w = jax.random.uniform(kw, (fan_in, fan_out), jnp.float32, -bound, bound)
        b = jax.random.uniform(kb, (1, fan_out), jnp.float32, -bound, bound)
        return w.astype(jnp.bfloat16), b

    w1, b1 = linear(ks[0], ks[1], 1024, 512)
    w2, b2 = linear(ks[2], ks[3], 512, 256)
    w3, b3 = linear(ks[4], ks[5], 256, 128)
    return {"w1": w1, "b1": b1, "w2": w2, "b2": b2, "w3": w3, "b3": b3}


def mlp_reference(x, params):
    """Plain-JAX reference mirroring the PyTorch forward (same bf16 matmul
    numerics as the kernel: bf16 operands, f32 accumulation)."""
    def dot(a, w):
        return jnp.dot(a.astype(jnp.bfloat16), w,
                       preferred_element_type=jnp.float32)

    h = _l2_normalize(x)
    h = jnp.maximum(dot(h, params["w1"]) + params["b1"], 0.0)
    h = _l2_normalize(h)
    h = jnp.maximum(dot(h, params["w2"]) + params["b2"], 0.0)
    h = _l2_normalize(h)
    return dot(h, params["w3"]) + params["b3"]


if __name__ == "__main__":
    key = jax.random.PRNGKey(0)
    k_x, k_p = jax.random.split(key)

    B = 512  # two 256-row tiles -> grid of 2 (keeps the pipeline / both v7x TCs busy)
    x = jax.random.normal(k_x, (B, 1024), dtype=jnp.float32)
    params = init_params(k_p)

    out = jax.block_until_ready(mlp_forward(x, params, tile_b=256))

    ref = mlp_reference(x, params)
    assert out.shape == (B, 128)
    max_err = float(jnp.max(jnp.abs(out - ref)))
    assert jnp.allclose(out, ref, atol=2e-3, rtol=2e-3), max_err

    print("KERNEL_OK")
</pallas_src>

<mosaic_0001>
module attributes {stable_mosaic.version = 11 : i64} {
  func.func @mlp_kernel(%arg0: i32, %arg1: memref<256x1024xf32, #tpu.memory_space<vmem>>, %arg2: memref<1024x512xbf16, #tpu.memory_space<vmem>>, %arg3: memref<1x512xf32, #tpu.memory_space<vmem>>, %arg4: memref<512x256xbf16, #tpu.memory_space<vmem>>, %arg5: memref<1x256xf32, #tpu.memory_space<vmem>>, %arg6: memref<256x128xbf16, #tpu.memory_space<vmem>>, %arg7: memref<1x128xf32, #tpu.memory_space<vmem>>, %arg8: memref<256x128xf32, #tpu.memory_space<vmem>>) attributes {dimension_semantics = [#tpu.dimension_semantics<parallel>], iteration_bounds = array<i64: 2>, scalar_prefetch = 0 : i64, scratch_operands = 0 : i64, tpu.core_type = #tpu.core_type<tc>, window_params = [{transform_indices = @transform_0, window_bounds = array<i64: 256, 1024>}, {pipeline_mode = #tpu.pipeline_mode<synchronous>, transform_indices = @transform_1, window_bounds = array<i64: 1024, 512>}, {pipeline_mode = #tpu.pipeline_mode<synchronous>, transform_indices = @transform_2, window_bounds = array<i64: 1, 512>}, {pipeline_mode = #tpu.pipeline_mode<synchronous>, transform_indices = @transform_3, window_bounds = array<i64: 512, 256>}, {pipeline_mode = #tpu.pipeline_mode<synchronous>, transform_indices = @transform_4, window_bounds = array<i64: 1, 256>}, {pipeline_mode = #tpu.pipeline_mode<synchronous>, transform_indices = @transform_5, window_bounds = array<i64: 256, 128>}, {pipeline_mode = #tpu.pipeline_mode<synchronous>, transform_indices = @transform_6, window_bounds = array<i64: 1, 128>}, {transform_indices = @transform_7, window_bounds = array<i64: 256, 128>}]} {
    %c0 = arith.constant 0 : index
    %c0_0 = arith.constant 0 : index
    %0 = vector.load %arg1[%c0, %c0_0] : memref<256x1024xf32, #tpu.memory_space<vmem>>, vector<256x1024xf32>
    %1 = arith.mulf %0, %0 : vector<256x1024xf32>
    %cst = arith.constant dense<0.000000e+00> : vector<256xf32>
    %2 = vector.multi_reduction <add>, %1, %cst [1] : vector<256x1024xf32> to vector<256xf32>
    %3 = vector.shape_cast %2 : vector<256xf32> to vector<256x1xf32>
    %cst_1 = arith.constant 1.000000e-24 : f32
    %4 = vector.broadcast %cst_1 : f32 to vector<256x1xf32>
    %5 = arith.maximumf %3, %4 : vector<256x1xf32>
    %6 = math.rsqrt %5 : vector<256x1xf32>
    %7 = vector.broadcast %6 : vector<256x1xf32> to vector<256x1024xf32>
    %8 = arith.mulf %0, %7 : vector<256x1024xf32>
    %9 = arith.truncf %8 : vector<256x1024xf32> to vector<256x1024xbf16>
    %c0_2 = arith.constant 0 : index
    %c0_3 = arith.constant 0 : index
    %10 = vector.load %arg2[%c0_2, %c0_3] : memref<1024x512xbf16, #tpu.memory_space<vmem>>, vector<1024x512xbf16>
    %cst_4 = arith.constant dense<0.000000e+00> : vector<256x512xf32>
    %11 = tpu.matmul %9, %10, %cst_4 {dimension_numbers = #tpu.dot_dimension_numbers<[1], [0], [0], [1], [0, 0, 1, 1], [], []>} : vector<256x1024xbf16>, vector<1024x512xbf16>, vector<256x512xf32> -> vector<256x512xf32>
    %c0_5 = arith.constant 0 : index
    %c0_6 = arith.constant 0 : index
    %12 = vector.load %arg3[%c0_5, %c0_6] : memref<1x512xf32, #tpu.memory_space<vmem>>, vector<1x512xf32>
    %13 = vector.broadcast %12 : vector<1x512xf32> to vector<256x512xf32>
    %14 = arith.addf %11, %13 : vector<256x512xf32>
    %cst_7 = arith.constant 0.000000e+00 : f32
    %15 = vector.broadcast %cst_7 : f32 to vector<256x512xf32>
    %16 = arith.maximumf %14, %15 : vector<256x512xf32>
    %17 = arith.mulf %16, %16 : vector<256x512xf32>
    %cst_8 = arith.constant dense<0.000000e+00> : vector<256xf32>
    %18 = vector.multi_reduction <add>, %17, %cst_8 [1] : vector<256x512xf32> to vector<256xf32>
    %19 = vector.shape_cast %18 : vector<256xf32> to vector<256x1xf32>
    %cst_9 = arith.constant 1.000000e-24 : f32
    %20 = vector.broadcast %cst_9 : f32 to vector<256x1xf32>
    %21 = arith.maximumf %19, %20 : vector<256x1xf32>
    %22 = math.rsqrt %21 : vector<256x1xf32>
    %23 = vector.broadcast %22 : vector<256x1xf32> to vector<256x512xf32>
    %24 = arith.mulf %16, %23 : vector<256x512xf32>
    %25 = arith.truncf %24 : vector<256x512xf32> to vector<256x512xbf16>
    %c0_10 = arith.constant 0 : index
    %c0_11 = arith.constant 0 : index
    %26 = vector.load %arg4[%c0_10, %c0_11] : memref<512x256xbf16, #tpu.memory_space<vmem>>, vector<512x256xbf16>
    %cst_12 = arith.constant dense<0.000000e+00> : vector<256x256xf32>
    %27 = tpu.matmul %25, %26, %cst_12 {dimension_numbers = #tpu.dot_dimension_numbers<[1], [0], [0], [1], [0, 0, 1, 1], [], []>} : vector<256x512xbf16>, vector<512x256xbf16>, vector<256x256xf32> -> vector<256x256xf32>
    %c0_13 = arith.constant 0 : index
    %c0_14 = arith.constant 0 : index
    %28 = vector.load %arg5[%c0_13, %c0_14] : memref<1x256xf32, #tpu.memory_space<vmem>>, vector<1x256xf32>
    %29 = vector.broadcast %28 : vector<1x256xf32> to vector<256x256xf32>
    %30 = arith.addf %27, %29 : vector<256x256xf32>
    %cst_15 = arith.constant 0.000000e+00 : f32
    %31 = vector.broadcast %cst_15 : f32 to vector<256x256xf32>
    %32 = arith.maximumf %30, %31 : vector<256x256xf32>
    %33 = arith.mulf %32, %32 : vector<256x256xf32>
    %cst_16 = arith.constant dense<0.000000e+00> : vector<256xf32>
    %34 = vector.multi_reduction <add>, %33, %cst_16 [1] : vector<256x256xf32> to vector<256xf32>
    %35 = vector.shape_cast %34 : vector<256xf32> to vector<256x1xf32>
    %cst_17 = arith.constant 1.000000e-24 : f32
    %36 = vector.broadcast %cst_17 : f32 to vector<256x1xf32>
    %37 = arith.maximumf %35, %36 : vector<256x1xf32>
    %38 = math.rsqrt %37 : vector<256x1xf32>
    %39 = vector.broadcast %38 : vector<256x1xf32> to vector<256x256xf32>
    %40 = arith.mulf %32, %39 : vector<256x256xf32>
    %41 = arith.truncf %40 : vector<256x256xf32> to vector<256x256xbf16>
    %c0_18 = arith.constant 0 : index
    %c0_19 = arith.constant 0 : index
    %42 = vector.load %arg6[%c0_18, %c0_19] : memref<256x128xbf16, #tpu.memory_space<vmem>>, vector<256x128xbf16>
    %cst_20 = arith.constant dense<0.000000e+00> : vector<256x128xf32>
    %43 = tpu.matmul %41, %42, %cst_20 {dimension_numbers = #tpu.dot_dimension_numbers<[1], [0], [0], [1], [0, 0, 1, 1], [], []>} : vector<256x256xbf16>, vector<256x128xbf16>, vector<256x128xf32> -> vector<256x128xf32>
    %c0_21 = arith.constant 0 : index
    %c0_22 = arith.constant 0 : index
    %44 = vector.load %arg7[%c0_21, %c0_22] : memref<1x128xf32, #tpu.memory_space<vmem>>, vector<1x128xf32>
    %45 = vector.broadcast %44 : vector<1x128xf32> to vector<256x128xf32>
    %46 = arith.addf %43, %45 : vector<256x128xf32>
    %c0_23 = arith.constant 0 : index
    %c0_24 = arith.constant 0 : index
    %47 = vector.load %arg8[%c0_23, %c0_24] : memref<256x128xf32, #tpu.memory_space<vmem>>, vector<256x128xf32>
    tpu.vector_store %arg8[%c0_23, %c0_24], %46 {strides = array<i32>} : memref<256x128xf32, #tpu.memory_space<vmem>>, vector<256x128xf32>,
    return
  }
  func.func @transform_0(%arg0: i32) -> (i32, i32) {
    %c0_i32 = arith.constant 0 : i32
    %c0_i32_0 = arith.constant 0 : i32
    return %arg0, %c0_i32 : i32, i32
  }
  func.func @transform_1(%arg0: i32) -> (i32, i32) {
    %c0_i32 = arith.constant 0 : i32
    %c0_i32_0 = arith.constant 0 : i32
    %c0_i32_1 = arith.constant 0 : i32
    return %c0_i32, %c0_i32_0 : i32, i32
  }
  func.func @transform_2(%arg0: i32) -> (i32, i32) {
    %c0_i32 = arith.constant 0 : i32
    %c0_i32_0 = arith.constant 0 : i32
    %c0_i32_1 = arith.constant 0 : i32
    return %c0_i32, %c0_i32_0 : i32, i32
  }
  func.func @transform_3(%arg0: i32) -> (i32, i32) {
    %c0_i32 = arith.constant 0 : i32
    %c0_i32_0 = arith.constant 0 : i32
    %c0_i32_1 = arith.constant 0 : i32
    return %c0_i32, %c0_i32_0 : i32, i32
  }
  func.func @transform_4(%arg0: i32) -> (i32, i32) {
    %c0_i32 = arith.constant 0 : i32
    %c0_i32_0 = arith.constant 0 : i32
    %c0_i32_1 = arith.constant 0 : i32
    return %c0_i32, %c0_i32_0 : i32, i32
  }
  func.func @transform_5(%arg0: i32) -> (i32, i32) {
    %c0_i32 = arith.constant 0 : i32
    %c0_i32_0 = arith.constant 0 : i32
    %c0_i32_1 = arith.constant 0 : i32
    return %c0_i32, %c0_i32_0 : i32, i32
  }
  func.func @transform_6(%arg0: i32) -> (i32, i32) {
    %c0_i32 = arith.constant 0 : i32
    %c0_i32_0 = arith.constant 0 : i32
    %c0_i32_1 = arith.constant 0 : i32
    return %c0_i32, %c0_i32_0 : i32, i32
  }
  func.func @transform_7(%arg0: i32) -> (i32, i32) {
    %c0_i32 = arith.constant 0 : i32
    %c0_i32_0 = arith.constant 0 : i32
    return %arg0, %c0_i32 : i32, i32
  }
}

</mosaic_0001>

<llo_original>
// kernel: tpu_custom_call.1
$region0: #{tpu_custom_call.1}
  #allocation0 [shape = 'u32[]', space=smem, size = 0x4, offset = 0x4, fixed_abs, tag = 'smem constant byte address 0x4 - core index']
  #allocation1 [shape = 'u32[144,128]{1,0:T(1,128)}', space=vmem, size = 0x12000, scoped, tag = 'internal scratch']
  %s0 = inlined_call_operand.hbm [shape: f32[512,1024], index: 0, kind: input, shape index: {}]
  %s1 = inlined_call_operand.hbm [shape: bf16[1024,512], index: 1, kind: input, shape index: {}]
  %s2 = inlined_call_operand.hbm [shape: f32[1,512], index: 2, kind: input, shape index: {}]
  %s3 = inlined_call_operand.hbm [shape: bf16[512,256], index: 3, kind: input, shape index: {}]
  %s4 = inlined_call_operand.hbm [shape: f32[1,256], index: 4, kind: input, shape index: {}]
  %s5 = inlined_call_operand.hbm [shape: bf16[256,128], index: 5, kind: input, shape index: {}]
  %s6 = inlined_call_operand.hbm [shape: f32[1,128], index: 6, kind: input, shape index: {}]
  %s7 = inlined_call_operand.hbm [shape: f32[512,128], index: 7, kind: output, shape index: {}]
  %s8 = sld [smem:[#allocation0]]
  $region89: #{tpu_custom_call.1} parent=0
    _
  %s10 = ssub.s32 1, %s8
  %s11 = scalar_select 0, %s10, %s8
  $region1: #{tpu_custom_call.1} parent=0
    #allocation2 [shape = 'u8[2097152]{0}', space=vmem, size = 0x200000, scoped, tag = 'input window, operand 0']
    #allocation3 [shape = 's32[2]{0}', space=sflag, size = 0x8, scoped, tag = 'scoped memory for tpu_custom_call.1']
    #allocation4 [shape = 's32[2]{0}', space=sflag, size = 0x8, scoped, tag = 'scoped memory for tpu_custom_call.1']
    #allocation5 [shape = 'u8[1048576]{0}', space=vmem, size = 0x100000, scoped, tag = 'input window, operand 1, single buffered']
    #allocation6 [shape = 's32[1]{0}', space=sflag, size = 0x4, scoped, tag = 'scoped memory for tpu_custom_call.1']
    #allocation7 [shape = 'u8[2048]{0}', space=vmem, size = 0x800, scoped, tag = 'input window, operand 2, single buffered']
    #allocation8 [shape = 'u8[262144]{0}', space=vmem, size = 0x40000, scoped, tag = 'input window, operand 3, single buffered']
    #allocation9 [shape = 's32[1]{0}', space=sflag, size = 0x4, scoped, tag = 'scoped memory for tpu_custom_call.1']
    #allocation10 [shape = 'u8[1024]{0}', space=vmem, size = 0x400, scoped, tag = 'input window, operand 4, single buffered']
    #allocation11 [shape = 'u8[65536]{0}', space=vmem, size = 0x10000, scoped, tag = 'input window, operand 5, single buffered']
    #allocation12 [shape = 's32[1]{0}', space=sflag, size = 0x4, scoped, tag = 'scoped memory for tpu_custom_call.1']
    #allocation13 [shape = 'u8[512]{0}', space=vmem, size = 0x400, scoped, tag = 'input window, operand 6, single buffered']
    #allocation14 [shape = 'u8[262144]{0}', space=vmem, size = 0x40000, scoped, tag = 'output window, operand 0']
    %12 = vsyncpa [#allocation3], 0
    %s13 = scalar_lea.sflag [#allocation3], 1
    %14 = vsyncpa %s13, 0
    %15 = vsyncpa [#allocation6], 0
    %16 = vsyncpa [#allocation9], 0
    %17 = vsyncpa [#allocation12], 0
    %18 = vsyncpa [#allocation4], 0
    %s19 = scalar_lea.sflag [#allocation4], 1
    %20 = vsyncpa %s19, 0
    loop: start=0, step=1, limit=4
    $region2: #{tpu_custom_call.1} parent=1 // loop_pre_header
      _
    $region3: #{tpu_custom_call.1} parent=1 // loop_header
      %s22 = sphi 0, %s26
      %p23 = scmp.ge.s32.totalorder %s22, 4
      %s32 = sphi 0, %s34
      %s35 = sphi 0, %s32
      %s36 = sphi 0, %s35
      %s52 = sphi 0, %s36
      %s56 = sphi 0, %s56
      %s58 = sphi 0, %s56
      %s59 = sphi 0, %s58
      %s73 = sphi 0, %s59
      %s77 = sphi 0, %s77
      %s79 = sphi 0, %s77
      %s80 = sphi 0, %s79
      %s94 = sphi 0, %s80
      %s98 = sphi 0, %s98
      %s100 = sphi 0, %s98
      %s101 = sphi 0, %s100
      %s115 = sphi 0, %s101
      %s119 = sphi 0, %s119
      %s121 = sphi 0, %s119
      %s122 = sphi 0, %s121
      %s136 = sphi 0, %s122
      %s140 = sphi 0, %s140
      %s142 = sphi 0, %s140
      %s143 = sphi 0, %s142
      %s157 = sphi 0, %s143
      %s161 = sphi 0, %s161
      %s163 = sphi 0, %s161
      %s164 = sphi 0, %s163
      %s178 = sphi 0, %s164
      %s184 = sphi 0, %s186
      %s187 = sphi 0, %s184
      %s188 = sphi 0, %s187
      %s204 = sphi 0, %s188
    $region4: #{tpu_custom_call.1} parent=1 // loop_header_branch
      %25 = sbr.rel (%p23) target = $region8
    $region5: #{tpu_custom_call.1} parent=1 // loop_body
      %s27 = ssub.s32 %s22, 1
      %s28 = ssub.s32 %s22, 2
      %s29 = sadd.s32 %s22, 1
      %s30 = ssub.s32 %s22, %s29
      %p31 = scmp.eq.s32.totalorder %s30, 0
      %s33 = sadd.s32 %s32, 1
      %s34 = scalar_select %p31, %s32, %s33
      %p37 = pneg %p31
      %p38 = scmp.eq.s32.totalorder %s22, 1
      %p39 = por %p37, %p38
      %p40 = scmp.ne.s32.totalorder %s32, %s35
      %p41 = scmp.eq.s32.totalorder %s22, 0
      %p42 = por %p40, %p41
      %p43 = scmp.ne.s32.totalorder %s32, %s35
      %p44 = scmp.eq.s32.totalorder %s27, 1
      %p45 = por %p43, %p44
      %p46 = scmp.ne.s32.totalorder %s35, %s36
      %p47 = scmp.eq.s32.totalorder %s27, 0
      %p48 = por %p46, %p47
      %p49 = scmp.ne.s32.totalorder %s35, %s36
      %p50 = scmp.eq.s32.totalorder %s28, 1
      %p51 = por %p49, %p50
      %p53 = scmp.ne.s32.totalorder %s36, %s52
      %p54 = scmp.eq.s32.totalorder %s28, 0
      %p55 = por %p53, %p54
      %s57 = sadd.s32 %s56, 1
      %p60 = scmp.eq.s32.totalorder %s22, 1
      %p61 = scmp.ne.s32.totalorder %s56, %s58
      %p62 = scmp.eq.s32.totalorder %s22, 0
      %p63 = por %p61, %p62
      %p64 = scmp.ne.s32.totalorder %s56, %s58
      %p65 = scmp.eq.s32.totalorder %s27, 1
      %p66 = por %p64, %p65
      %p67 = scmp.ne.s32.totalorder %s58, %s59
      %p68 = scmp.eq.s32.totalorder %s27, 0
      %p69 = por %p67, %p68
      %p70 = scmp.ne.s32.totalorder %s58, %s59
      %p71 = scmp.eq.s32.totalorder %s28, 1
      %p72 = por %p70, %p71
      %p74 = scmp.ne.s32.totalorder %s59, %s73
      %p75 = scmp.eq.s32.totalorder %s28, 0
      %p76 = por %p74, %p75
      %s78 = sadd.s32 %s77, 1
      %p81 = scmp.eq.s32.totalorder %s22, 1
      %p82 = scmp.ne.s32.totalorder %s77, %s79
      %p83 = scmp.eq.s32.totalorder %s22, 0
      %p84 = por %p82, %p83
      %p85 = scmp.ne.s32.totalorder %s77, %s79
      %p86 = scmp.eq.s32.totalorder %s27, 1
      %p87 = por %p85, %p86
      %p88 = scmp.ne.s32.totalorder %s79, %s80
      %p89 = scmp.eq.s32.totalorder %s27, 0
      %p90 = por %p88, %p89
      %p91 = scmp.ne.s32.totalorder %s79, %s80
      %p92 = scmp.eq.s32.totalorder %s28, 1
      %p93 = por %p91, %p92
      %p95 = scmp.ne.s32.totalorder %s80, %s94
      %p96 = scmp.eq.s32.totalorder %s28, 0
      %p97 = por %p95, %p96
      %s99 = sadd.s32 %s98, 1
      %p102 = scmp.eq.s32.totalorder %s22, 1
      %p103 = scmp.ne.s32.totalorder %s98, %s100
      %p104 = scmp.eq.s32.totalorder %s22, 0
      %p105 = por %p103, %p104
      %p106 = scmp.ne.s32.totalorder %s98, %s100
      %p107 = scmp.eq.s32.totalorder %s27, 1
      %p108 = por %p106, %p107
      %p109 = scmp.ne.s32.totalorder %s100, %s101
      %p110 = scmp.eq.s32.totalorder %s27, 0
      %p111 = por %p109, %p110
      %p112 = scmp.ne.s32.totalorder %s100, %s101
      %p113 = scmp.eq.s32.totalorder %s28, 1
      %p114 = por %p112, %p113
      %p116 = scmp.ne.s32.totalorder %s101, %s115
      %p117 = scmp.eq.s32.totalorder %s28, 0
      %p118 = por %p116, %p117
      %s120 = sadd.s32 %s119, 1
      %p123 = scmp.eq.s32.totalorder %s22, 1
      %p124 = scmp.ne.s32.totalorder %s119, %s121
      %p125 = scmp.eq.s32.totalorder %s22, 0
      %p126 = por %p124, %p125
      %p127 = scmp.ne.s32.totalorder %s119, %s121
      %p128 = scmp.eq.s32.totalorder %s27, 1
      %p129 = por %p127, %p128
      %p130 = scmp.ne.s32.totalorder %s121, %s122
      %p131 = scmp.eq.s32.totalorder %s27, 0
      %p132 = por %p130, %p131
      %p133 = scmp.ne.s32.totalorder %s121, %s122
      %p134 = scmp.eq.s32.totalorder %s28, 1
      %p135 = por %p133, %p134
      %p137 = scmp.ne.s32.totalorder %s122, %s136
      %p138 = scmp.eq.s32.totalorder %s28, 0
      %p139 = por %p137, %p138
      %s141 = sadd.s32 %s140, 1
      %p144 = scmp.eq.s32.totalorder %s22, 1
      %p145 = scmp.ne.s32.totalorder %s140, %s142
      %p146 = scmp.eq.s32.totalorder %s22, 0
      %p147 = por %p145, %p146
      %p148 = scmp.ne.s32.totalorder %s140, %s142
      %p149 = scmp.eq.s32.totalorder %s27, 1
      %p150 = por %p148, %p149
      %p151 = scmp.ne.s32.totalorder %s142, %s143
      %p152 = scmp.eq.s32.totalorder %s27, 0
      %p153 = por %p151, %p152
      %p154 = scmp.ne.s32.totalorder %s142, %s143
      %p155 = scmp.eq.s32.totalorder %s28, 1
      %p156 = por %p154, %p155
      %p158 = scmp.ne.s32.totalorder %s143, %s157
      %p159 = scmp.eq.s32.totalorder %s28, 0
      %p160 = por %p158, %p159
      %s162 = sadd.s32 %s161, 1
      %p165 = scmp.eq.s32.totalorder %s22, 1
      %p166 = scmp.ne.s32.totalorder %s161, %s163
      %p167 = scmp.eq.s32.totalorder %s22, 0
      %p168 = por %p166, %p167
      %p169 = scmp.ne.s32.totalorder %s161, %s163
      %p170 = scmp.eq.s32.totalorder %s27, 1
      %p171 = por %p169, %p170
      %p172 = scmp.ne.s32.totalorder %s163, %s164
      %p173 = scmp.eq.s32.totalorder %s27, 0
      %p174 = por %p172, %p173
      %p175 = scmp.ne.s32.totalorder %s163, %s164
      %p176 = scmp.eq.s32.totalorder %s28, 1
      %p177 = por %p175, %p176
      %p179 = scmp.ne.s32.totalorder %s164, %s178
      %p180 = scmp.eq.s32.totalorder %s28, 0
      %p181 = por %p179, %p180
      %s182 = ssub.s32 %s22, %s29
      %p183 = scmp.eq.s32.totalorder %s182, 0
      %s185 = sadd.s32 %s184, 1
      %s186 = scalar_select %p183, %s184, %s185
      %p189 = pneg %p183
      %p190 = scmp.eq.s32.totalorder %s22, 1
      %p191 = por %p189, %p190
      %p192 = scmp.ne.s32.totalorder %s184, %s187
      %p193 = scmp.eq.s32.totalorder %s22, 0
      %p194 = por %p192, %p193
      %p195 = scmp.ne.s32.totalorder %s184, %s187
      %p196 = scmp.eq.s32.totalorder %s27, 1
      %p197 = por %p195, %p196
      %p198 = scmp.ne.s32.totalorder %s187, %s188
      %p199 = scmp.eq.s32.totalorder %s27, 0
      %p200 = por %p198, %p199
      %p201 = scmp.ne.s32.totalorder %s187, %s188
      %p202 = scmp.eq.s32.totalorder %s28, 1
      %p203 = por %p201, %p202
      %p205 = scmp.ne.s32.totalorder %s188, %s204
      %p206 = scmp.eq.s32.totalorder %s28, 0
      %p207 = por %p205, %p206
      %p208 = scmp.le.s32.totalorder 1, %s22
      %p209 = scmp.lt.s32.totalorder %s22, 3
      %p210 = pnand %p208, %p209
      %p211 = pneg %p210
      // Predicated region
      $region9: #{tpu_custom_call.1} parent=5 // pred_check
        _
      $region10: #{tpu_custom_call.1} parent=5 // pred_check_branch
        %213 = sbr.rel (%p210) target = $region12
      $region11: #{tpu_custom_call.1} parent=5 // pred_region
        %s214 = ssub.s32 %s22, 1
        // Predicated region
        $region13: #{tpu_custom_call.1} parent=11 // pred_check
          %p215 = pneg %p69
        $region14: #{tpu_custom_call.1} parent=11 // pred_check_branch
          %217 = sbr.rel (%p215) target = $region16
        $region15: #{tpu_custom_call.1} parent=11 // pred_region
          %s219 = ssub.s32 32768, 32768
          %220 = vsyncadd [#allocation6], %s219
          %s221 = sshll.u32 [#allocation5], 4
          %s222 = int_to_ptr.vmem [resolvable:$true] %s221
          %227 = dma.hbm_to_vmem [thread:$0]  %s1, 32768, %s222, [#allocation6], 256, 256, 16
        $region16: #{tpu_custom_call.1} parent=11 // pred_fallthru
          _
        // Predicated region
        $region17: #{tpu_custom_call.1} parent=11 // pred_check
          %p228 = pneg %p90
        $region18: #{tpu_custom_call.1} parent=11 // pred_check_branch
          %230 = sbr.rel (%p228) target = $region20
        $region19: #{tpu_custom_call.1} parent=11 // pred_region
          %s232 = ssub.s32 64, 64
          %233 = vsyncadd [#allocation6], %s232
          %s235 = sshll.u32 [#allocation7], 4
          %s236 = int_to_ptr.vmem [resolvable:$true] %s235
          %238 = dma.hbm_to_vmem [thread:$0]  %s2, 64, %s236, [#allocation6]
        $region20: #{tpu_custom_call.1} parent=11 // pred_fallthru
          _
        // Predicated region
        $region21: #{tpu_custom_call.1} parent=11 // pred_check
          %p239 = pneg %p111
        $region22: #{tpu_custom_call.1} parent=11 // pred_check_branch
          %241 = sbr.rel (%p239) target = $region24
        $region23: #{tpu_custom_call.1} parent=11 // pred_region
          %s243 = ssub.s32 8192, 8192
          %244 = vsyncadd [#allocation9], %s243
          %s245 = sshll.u32 [#allocation8], 4
          %s246 = int_to_ptr.vmem [resolvable:$true] %s245
          %251 = dma.hbm_to_vmem [thread:$0]  %s3, 8192, %s246, [#allocation9], 128, 128, 8
        $region24: #{tpu_custom_call.1} parent=11 // pred_fallthru
          _
        // Predicated region
        $region25: #{tpu_custom_call.1} parent=11 // pred_check
          %p252 = pneg %p132
        $region26: #{tpu_custom_call.1} parent=11 // pred_check_branch
          %254 = sbr.rel (%p252) target = $region28
        $region27: #{tpu_custom_call.1} parent=11 // pred_region
          %s256 = ssub.s32 32, 32
          %257 = vsyncadd [#allocation9], %s256
          %s259 = sshll.u32 [#allocation10], 4
          %s260 = int_to_ptr.vmem [resolvable:$true] %s259
          %262 = dma.hbm_to_vmem [thread:$0]  %s4, 32, %s260, [#allocation9]
        $region28: #{tpu_custom_call.1} parent=11 // pred_fallthru
          _
        // Predicated region
        $region29: #{tpu_custom_call.1} parent=11 // pred_check
          %p263 = pneg %p153
        $region30: #{tpu_custom_call.1} parent=11 // pred_check_branch
          %265 = sbr.rel (%p263) target = $region32
        $region31: #{tpu_custom_call.1} parent=11 // pred_region
          %s267 = ssub.s32 2048, 2048
          %268 = vsyncadd [#allocation12], %s267
          %s269 = sshll.u32 [#allocation11], 4
          %s270 = int_to_ptr.vmem [resolvable:$true] %s269
          %275 = dma.hbm_to_vmem [thread:$0]  %s5, 2048, %s270, [#allocation12], 64, 64, 4
        $region32: #{tpu_custom_call.1} parent=11 // pred_fallthru
          _
        // Predicated region
        $region33: #{tpu_custom_call.1} parent=11 // pred_check
          %p276 = pneg %p174
        $region34: #{tpu_custom_call.1} parent=11 // pred_check_branch
          %278 = sbr.rel (%p276) target = $region36
        $region35: #{tpu_custom_call.1} parent=11 // pred_region
          %s280 = ssub.s32 16, 16
          %281 = vsyncadd [#allocation12], %s280
          %s283 = sshll.u32 [#allocation13], 4
          %s284 = int_to_ptr.vmem [resolvable:$true] %s283
          %286 = dma.hbm_to_vmem [thread:$0]  %s6, 16, %s284, [#allocation12]
        $region36: #{tpu_custom_call.1} parent=11 // pred_fallthru
          _
      $region12: #{tpu_custom_call.1} parent=5 // pred_fallthru
        _
      %p287 = scmp.lt.s32.totalorder %s22, 2
      // Predicated region
      $region37: #{tpu_custom_call.1} parent=5 // pred_check
        %p288 = pneg %p287
      $region38: #{tpu_custom_call.1} parent=5 // pred_check_branch
        %290 = sbr.rel (%p288) target = $region40
      $region39: #{tpu_custom_call.1} parent=5 // pred_region
        // Predicated region
        $region41: #{tpu_custom_call.1} parent=39 // pred_check
          %p291 = pneg %p42
        $region42: #{tpu_custom_call.1} parent=39 // pred_check_branch
          %293 = sbr.rel (%p291) target = $region44
        $region43: #{tpu_custom_call.1} parent=39 // pred_region
          %s294 = sand.u32 %s32, 1
          %s295 = scalar_lea.sflag [#allocation3], %s294
          %s296 = sand.u32 %s32, 1
          %s297 = smul.addr %s296, 2048
          %s298 = scalar_lea.vmem [#allocation2], %s297
          %s299 = smul.u32 32, %s22
          %s301 = ssub.s32 32768, 32768
          %302 = vsyncadd %s295, %s301
          %s303 = smul.addr %s299, 8
          %s304 = smul.addr %s303, 128
          %s305 = scalar_lea.hbm %s0, %s304
          %s306 = sshll.u32 %s298, 4
          %s307 = int_to_ptr.vmem [resolvable:$true] %s306
          %312 = dma.hbm_to_vmem [thread:$0]  %s305, 32768, %s307, %s295, 1024, 1024, 64
        $region44: #{tpu_custom_call.1} parent=39 // pred_fallthru
          _
      $region40: #{tpu_custom_call.1} parent=5 // pred_fallthru
        _
      %p313 = scmp.le.s32.totalorder 1, %s22
      %p314 = scmp.lt.s32.totalorder %s22, 3
      %p315 = pnand %p313, %p314
      %p316 = pneg %p315
      // Predicated region
      $region45: #{tpu_custom_call.1} parent=5 // pred_check
        _
      $region46: #{tpu_custom_call.1} parent=5 // pred_check_branch
        %318 = sbr.rel (%p315) target = $region48
      $region47: #{tpu_custom_call.1} parent=5 // pred_region
        %s319 = ssub.s32 %s22, 1
        %s320 = sand.u32 %s35, 1
        %s321 = scalar_lea.sflag [#allocation3], %s320
        %s322 = sand.u32 %s35, 1
        %s323 = smul.addr %s322, 2048
        %s324 = scalar_lea.vmem [#allocation2], %s323
        // Predicated region
        $region49: #{tpu_custom_call.1} parent=47 // pred_check
          %p325 = pneg %p48
        $region50: #{tpu_custom_call.1} parent=47 // pred_check_branch
          %327 = sbr.rel (%p325) target = $region52
        $region51: #{tpu_custom_call.1} parent=47 // pred_region
          %328 = dma.done %s321, 32768
        $region52: #{tpu_custom_call.1} parent=47 // pred_fallthru
          _
        // Predicated region
        $region53: #{tpu_custom_call.1} parent=47 // pred_check
          %p329 = pneg %p69
        $region54: #{tpu_custom_call.1} parent=47 // pred_check_branch
          %331 = sbr.rel (%p329) target = $region56
        $region55: #{tpu_custom_call.1} parent=47 // pred_region
          %332 = dma.done [#allocation6], 32768
        $region56: #{tpu_custom_call.1} parent=47 // pred_fallthru
          _
        // Predicated region
        $region57: #{tpu_custom_call.1} parent=47 // pred_check
          %p333 = pneg %p90
        $region58: #{tpu_custom_call.1} parent=47 // pred_check_branch
          %335 = sbr.rel (%p333) target = $region60
        $region59: #{tpu_custom_call.1} parent=47 // pred_region
          %336 = dma.done [#allocation6], 64
        $region60: #{tpu_custom_call.1} parent=47 // pred_fallthru
          _
        // Predicated region
        $region61: #{tpu_custom_call.1} parent=47 // pred_check
          %p337 = pneg %p111
        $region62: #{tpu_custom_call.1} parent=47 // pred_check_branch
          %339 = sbr.rel (%p337) target = $region64
        $region63: #{tpu_custom_call.1} parent=47 // pred_region
          %340 = dma.done [#allocation9], 8192
        $region64: #{tpu_custom_call.1} parent=47 // pred_fallthru
          _
        // Predicated region
        $region65: #{tpu_custom_call.1} parent=47 // pred_check
          %p341 = pneg %p132
        $region66: #{tpu_custom_call.1} parent=47 // pred_check_branch
          %343 = sbr.rel (%p341) target = $region68
        $region67: #{tpu_custom_call.1} parent=47 // pred_region
          %344 = dma.done [#allocation9], 32
        $region68: #{tpu_custom_call.1} parent=47 // pred_fallthru
          _
        // Predicated region
        $region69: #{tpu_custom_call.1} parent=47 // pred_check
          %p345 = pneg %p153
        $region70: #{tpu_custom_call.1} parent=47 // pred_check_branch
          %347 = sbr.rel (%p345) target = $region72
        $region71: #{tpu_custom_call.1} parent=47 // pred_region
          %348 = dma.done [#allocation12], 2048
        $region72: #{tpu_custom_call.1} parent=47 // pred_fallthru
          _
        // Predicated region
        $region73: #{tpu_custom_call.1} parent=47 // pred_check
          %p349 = pneg %p174
        $region74: #{tpu_custom_call.1} parent=47 // pred_check_branch
          %351 = sbr.rel (%p349) target = $region76
        $region75: #{tpu_custom_call.1} parent=47 // pred_region
          %352 = dma.done [#allocation12], 16
        $region76: #{tpu_custom_call.1} parent=47 // pred_fallthru
          _
        %s353 = sand.u32 %s35, 1
        %s354 = scalar_lea.sflag [#allocation3], %s353
        %s355 = sand.u32 %s35, 1
        %s356 = smul.addr %s355, 2048
        %s357 = scalar_lea.vmem [#allocation2], %s356
        %p358 = pneg %p48
        %p359 = pneg %p45
        %p360 = pneg %p69
        %p361 = pneg %p66
        %p362 = pneg %p90
        %p363 = pneg %p87
        %p364 = pneg %p111
        %p365 = pneg %p108
        %p366 = pneg %p132
        %p367 = pneg %p129
        %p368 = pneg %p153
        %p369 = pneg %p150
        %p370 = pneg %p174
        %p371 = pneg %p171
        %p372 = pneg %p200
        %p373 = pneg %p197
        %s374 = sand.u32 %s187, 1
        %s375 = scalar_lea.sflag [#allocation4], %s374
        %s376 = sand.u32 %s187, 1
        %s377 = smul.addr %s376, 256
        %s378 = scalar_lea.vmem [#allocation14], %s377
        %s379 = smul.u32 32, %s27
        %s380 = smul.u32 32, %s27
        %v382 = vld [vmem:[%s324] sm:$0xff]
        %v383 = vld [vmem:[%s324 + $0x8] sm:$0xff]
        %v384 = vld [vmem:[%s324 + $0x10] sm:$0xff]
        %v385 = vld [vmem:[%s324 + $0x18] sm:$0xff]
        %v386 = vld [vmem:[%s324 + $0x20] sm:$0xff]
        %v387 = vld [vmem:[%s324 + $0x28] sm:$0xff]
        %v388 = vld [vmem:[%s324 + $0x30] sm:$0xff]
        %v389 = vld [vmem:[%s324 + $0x38] sm:$0xff]
        %v390 = vld [vmem:[%s324 + $0x40] sm:$0xff]
        %v391 = vld [vmem:[%s324 + $0x48] sm:$0xff]
        %v392 = vld [vmem:[%s324 + $0x50] sm:$0xff]
        %v393 = vld [vmem:[%s324 + $0x58] sm:$0xff]
        %v394 = vld [vmem:[%s324 + $0x60] sm:$0xff]
        %v395 = vld [vmem:[%s324 + $0x68] sm:$0xff]
        %v396 = vld [vmem:[%s324 + $0x70] sm:$0xff]
        %v397 = vld [vmem:[%s324 + $0x78] sm:$0xff]
        %v398 = vld [vmem:[%s324 + $0x80] sm:$0xff]
        %v399 = vld [vmem:[%s324 + $0x88] sm:$0xff]
        %v400 = vld [vmem:[%s324 + $0x90] sm:$0xff]
        %v401 = vld [vmem:[%s324 + $0x98] sm:$0xff]
        %v402 = vld [vmem:[%s324 + $0xa0] sm:$0xff]
        %v403 = vld [vmem:[%s324 + $0xa8] sm:$0xff]
        %v404 = vld [vmem:[%s324 + $0xb0] sm:$0xff]
        %v405 = vld [vmem:[%s324 + $0xb8] sm:$0xff]
        %v406 = vld [vmem:[%s324 + $0xc0] sm:$0xff]
        %v407 = vld [vmem:[%s324 + $0xc8] sm:$0xff]
        %v408 = vld [vmem:[%s324 + $0xd0] sm:$0xff]
        %v409 = vld [vmem:[%s324 + $0xd8] sm:$0xff]
        %v410 = vld [vmem:[%s324 + $0xe0] sm:$0xff]
        %v411 = vld [vmem:[%s324 + $0xe8] sm:$0xff]
        %v412 = vld [vmem:[%s324 + $0xf0] sm:$0xff]
        %v413 = vld [vmem:[%s324 + $0xf8] sm:$0xff]
        %v414 = vld [vmem:[%s324 + $0x100] sm:$0xff]
        %v415 = vld [vmem:[%s324 + $0x108] sm:$0xff]
        %v416 = vld [vmem:[%s324 + $0x110] sm:$0xff]
        %v417 = vld [vmem:[%s324 + $0x118] sm:$0xff]
        %v418 = vld [vmem:[%s324 + $0x120] sm:$0xff]
        %v419 = vld [vmem:[%s324 + $0x128] sm:$0xff]
        %v420 = vld [vmem:[%s324 + $0x130] sm:$0xff]
        %v421 = vld [vmem:[%s324 + $0x138] sm:$0xff]
        %v422 = vld [vmem:[%s324 + $0x140] sm:$0xff]
        %v423 = vld [vmem:[%s324 + $0x148] sm:$0xff]
        %v424 = vld [vmem:[%s324 + $0x150] sm:$0xff]
        %v425 = vld [vmem:[%s324 + $0x158] sm:$0xff]
        %v426 = vld [vmem:[%s324 + $0x160] sm:$0xff]
        %v427 = vld [vmem:[%s324 + $0x168] sm:$0xff]
        %v428 = vld [vmem:[%s324 + $0x170] sm:$0xff]
        %v429 = vld [vmem:[%s324 + $0x178] sm:$0xff]
        %v430 = vld [vmem:[%s324 + $0x180] sm:$0xff]
        %v431 = vld [vmem:[%s324 + $0x188] sm:$0xff]
        %v432 = vld [vmem:[%s324 + $0x190] sm:$0xff]
        %v433 = vld [vmem:[%s324 + $0x198] sm:$0xff]
        %v434 = vld [vmem:[%s324 + $0x1a0] sm:$0xff]
        %v435 = vld [vmem:[%s324 + $0x1a8] sm:$0xff]
        %v436 = vld [vmem:[%s324 + $0x1b0] sm:$0xff]
        %v437 = vld [vmem:[%s324 + $0x1b8] sm:$0xff]
        %v438 = vld [vmem:[%s324 + $0x1c0] sm:$0xff]
        %v439 = vld [vmem:[%s324 + $0x1c8] sm:$0xff]
        %v440 = vld [vmem:[%s324 + $0x1d0] sm:$0xff]
        %v441 = vld [vmem:[%s324 + $0x1d8] sm:$0xff]
        %v442 = vld [vmem:[%s324 + $0x1e0] sm:$0xff]
        %v443 = vld [vmem:[%s324 + $0x1e8] sm:$0xff]
        %v444 = vld [vmem:[%s324 + $0x1f0] sm:$0xff]
        %v445 = vld [vmem:[%s324 + $0x1f8] sm:$0xff]
        %v446 = vld [vmem:[%s324 + $0x200] sm:$0xff]
        %v447 = vld [vmem:[%s324 + $0x208] sm:$0xff]
        %v448 = vld [vmem:[%s324 + $0x210] sm:$0xff]
        %v449 = vld [vmem:[%s324 + $0x218] sm:$0xff]
        %v450 = vld [vmem:[%s324 + $0x220] sm:$0xff]
        %v451 = vld [vmem:[%s324 + $0x228] sm:$0xff]
        %v452 = vld [vmem:[%s324 + $0x230] sm:$0xff]
        %v453 = vld [vmem:[%s324 + $0x238] sm:$0xff]
        %v454 = vld [vmem:[%s324 + $0x240] sm:$0xff]
        %v455 = vld [vmem:[%s324 + $0x248] sm:$0xff]
        %v456 = vld [vmem:[%s324 + $0x250] sm:$0xff]
        %v457 = vld [vmem:[%s324 + $0x258] sm:$0xff]
        %v458 = vld [vmem:[%s324 + $0x260] sm:$0xff]
        %v459 = vld [vmem:[%s324 + $0x268] sm:$0xff]
        %v460 = vld [vmem:[%s324 + $0x270] sm:$0xff]
        %v461 = vld [vmem:[%s324 + $0x278] sm:$0xff]
        %v462 = vld [vmem:[%s324 + $0x280] sm:$0xff]
        %v463 = vld [vmem:[%s324 + $0x288] sm:$0xff]
        %v464 = vld [vmem:[%s324 + $0x290] sm:$0xff]
        %v465 = vld [vmem:[%s324 + $0x298] sm:$0xff]
        %v466 = vld [vmem:[%s324 + $0x2a0] sm:$0xff]
        %v467 = vld [vmem:[%s324 + $0x2a8] sm:$0xff]
        %v468 = vld [vmem:[%s324 + $0x2b0] sm:$0xff]
        %v469 = vld [vmem:[%s324 + $0x2b8] sm:$0xff]
        %v470 = vld [vmem:[%s324 + $0x2c0] sm:$0xff]
        %v471 = vld [vmem:[%s324 + $0x2c8] sm:$0xff]
        %v472 = vld [vmem:[%s324 + $0x2d0] sm:$0xff]
        %v473 = vld [vmem:[%s324 + $0x2d8] sm:$0xff]
        %v474 = vld [vmem:[%s324 + $0x2e0] sm:$0xff]
        %v475 = vld [vmem:[%s324 + $0x2e8] sm:$0xff]
        %v476 = vld [vmem:[%s324 + $0x2f0] sm:$0xff]
        %v477 = vld [vmem:[%s324 + $0x2f8] sm:$0xff]
        %v478 = vld [vmem:[%s324 + $0x300] sm:$0xff]
        %v479 = vld [vmem:[%s324 + $0x308] sm:$0xff]
        %v480 = vld [vmem:[%s324 + $0x310] sm:$0xff]
        %v481 = vld [vmem:[%s324 + $0x318] sm:$0xff]
        %v482 = vld [vmem:[%s324 + $0x320] sm:$0xff]
        %v483 = vld [vmem:[%s324 + $0x328] sm:$0xff]
        %v484 = vld [vmem:[%s324 + $0x330] sm:$0xff]
        %v485 = vld [vmem:[%s324 + $0x338] sm:$0xff]
        %v486 = vld [vmem:[%s324 + $0x340] sm:$0xff]
        %v487 = vld [vmem:[%s324 + $0x348] sm:$0xff]
        %v488 = vld [vmem:[%s324 + $0x350] sm:$0xff]
        %v489 = vld [vmem:[%s324 + $0x358] sm:$0xff]
        %v490 = vld [vmem:[%s324 + $0x360] sm:$0xff]
        %v491 = vld [vmem:[%s324 + $0x368] sm:$0xff]
        %v492 = vld [vmem:[%s324 + $0x370] sm:$0xff]
        %v493 = vld [vmem:[%s324 + $0x378] sm:$0xff]
        %v494 = vld [vmem:[%s324 + $0x380] sm:$0xff]
        %v495 = vld [vmem:[%s324 + $0x388] sm:$0xff]
        %v496 = vld [vmem:[%s324 + $0x390] sm:$0xff]
        %v497 = vld [vmem:[%s324 + $0x398] sm:$0xff]
        %v498 = vld [vmem:[%s324 + $0x3a0] sm:$0xff]
        %v499 = vld [vmem:[%s324 + $0x3a8] sm:$0xff]
        %v500 = vld [vmem:[%s324 + $0x3b0] sm:$0xff]
        %v501 = vld [vmem:[%s324 + $0x3b8] sm:$0xff]
        %v502 = vld [vmem:[%s324 + $0x3c0] sm:$0xff]
        %v503 = vld [vmem:[%s324 + $0x3c8] sm:$0xff]
        %v504 = vld [vmem:[%s324 + $0x3d0] sm:$0xff]
        %v505 = vld [vmem:[%s324 + $0x3d8] sm:$0xff]
        %v506 = vld [vmem:[%s324 + $0x3e0] sm:$0xff]
        %v507 = vld [vmem:[%s324 + $0x3e8] sm:$0xff]
        %v508 = vld [vmem:[%s324 + $0x3f0] sm:$0xff]
        %v509 = vld [vmem:[%s324 + $0x3f8] sm:$0xff]
        %v510 = vld [vmem:[%s324 + $0x400] sm:$0xff]
        %v511 = vld [vmem:[%s324 + $0x408] sm:$0xff]
        %v512 = vld [vmem:[%s324 + $0x410] sm:$0xff]
        %v513 = vld [vmem:[%s324 + $0x418] sm:$0xff]
        %v514 = vld [vmem:[%s324 + $0x420] sm:$0xff]
        %v515 = vld [vmem:[%s324 + $0x428] sm:$0xff]
        %v516 = vld [vmem:[%s324 + $0x430] sm:$0xff]
        %v517 = vld [vmem:[%s324 + $0x438] sm:$0xff]
        %v518 = vld [vmem:[%s324 + $0x440] sm:$0xff]
        %v519 = vld [vmem:[%s324 + $0x448] sm:$0xff]
        %v520 = vld [vmem:[%s324 + $0x450] sm:$0xff]
        %v521 = vld [vmem:[%s324 + $0x458] sm:$0xff]
        %v522 = vld [vmem:[%s324 + $0x460] sm:$0xff]
        %v523 = vld [vmem:[%s324 + $0x468] sm:$0xff]
        %v524 = vld [vmem:[%s324 + $0x470] sm:$0xff]
        %v525 = vld [vmem:[%s324 + $0x478] sm:$0xff]
        %v526 = vld [vmem:[%s324 + $0x480] sm:$0xff]
        %v527 = vld [vmem:[%s324 + $0x488] sm:$0xff]
        %v528 = vld [vmem:[%s324 + $0x490] sm:$0xff]
        %v529 = vld [vmem:[%s324 + $0x498] sm:$0xff]
        %v530 = vld [vmem:[%s324 + $0x4a0] sm:$0xff]
        %v531 = vld [vmem:[%s324 + $0x4a8] sm:$0xff]
        %v532 = vld [vmem:[%s324 + $0x4b0] sm:$0xff]
        %v533 = vld [vmem:[%s324 + $0x4b8] sm:$0xff]
        %v534 = vld [vmem:[%s324 + $0x4c0] sm:$0xff]
        %v535 = vld [vmem:[%s324 + $0x4c8] sm:$0xff]
        %v536 = vld [vmem:[%s324 + $0x4d0] sm:$0xff]
        %v537 = vld [vmem:[%s324 + $0x4d8] sm:$0xff]
        %v538 = vld [vmem:[%s324 + $0x4e0] sm:$0xff]
        %v539 = vld [vmem:[%s324 + $0x4e8] sm:$0xff]
        %v540 = vld [vmem:[%s324 + $0x4f0] sm:$0xff]
        %v541 = vld [vmem:[%s324 + $0x4f8] sm:$0xff]
        %v542 = vld [vmem:[%s324 + $0x500] sm:$0xff]
        %v543 = vld [vmem:[%s324 + $0x508] sm:$0xff]
        %v544 = vld [vmem:[%s324 + $0x510] sm:$0xff]
        %v545 = vld [vmem:[%s324 + $0x518] sm:$0xff]
        %v546 = vld [vmem:[%s324 + $0x520] sm:$0xff]
        %v547 = vld [vmem:[%s324 + $0x528] sm:$0xff]
        %v548 = vld [vmem:[%s324 + $0x530] sm:$0xff]
        %v549 = vld [vmem:[%s324 + $0x538] sm:$0xff]
        %v550 = vld [vmem:[%s324 + $0x540] sm:$0xff]
        %v551 = vld [vmem:[%s324 + $0x548] sm:$0xff]
        %v552 = vld [vmem:[%s324 + $0x550] sm:$0xff]
        %v553 = vld [vmem:[%s324 + $0x558] sm:$0xff]
        %v554 = vld [vmem:[%s324 + $0x560] sm:$0xff]
        %v555 = vld [vmem:[%s324 + $0x568] sm:$0xff]
        %v556 = vld [vmem:[%s324 + $0x570] sm:$0xff]
        %v557 = vld [vmem:[%s324 + $0x578] sm:$0xff]
        %v558 = vld [vmem:[%s324 + $0x580] sm:$0xff]
        %v559 = vld [vmem:[%s324 + $0x588] sm:$0xff]
        %v560 = vld [vmem:[%s324 + $0x590] sm:$0xff]
        %v561 = vld [vmem:[%s324 + $0x598] sm:$0xff]
        %v562 = vld [vmem:[%s324 + $0x5a0] sm:$0xff]
        %v563 = vld [vmem:[%s324 + $0x5a8] sm:$0xff]
        %v564 = vld [vmem:[%s324 + $0x5b0] sm:$0xff]
        %v565 = vld [vmem:[%s324 + $0x5b8] sm:$0xff]
        %v566 = vld [vmem:[%s324 + $0x5c0] sm:$0xff]
        %v567 = vld [vmem:[%s324 + $0x5c8] sm:$0xff]
        %v568 = vld [vmem:[%s324 + $0x5d0] sm:$0xff]
        %v569 = vld [vmem:[%s324 + $0x5d8] sm:$0xff]
        %v570 = vld [vmem:[%s324 + $0x5e0] sm:$0xff]
        %v571 = vld [vmem:[%s324 + $0x5e8] sm:$0xff]
        %v572 = vld [vmem:[%s324 + $0x5f0] sm:$0xff]
        %v573 = vld [vmem:[%s324 + $0x5f8] sm:$0xff]
        %v574 = vld [vmem:[%s324 + $0x600] sm:$0xff]
        %v575 = vld [vmem:[%s324 + $0x608] sm:$0xff]
        %v576 = vld [vmem:[%s324 + $0x610] sm:$0xff]
        %v577 = vld [vmem:[%s324 + $0x618] sm:$0xff]
        %v578 = vld [vmem:[%s324 + $0x620] sm:$0xff]
        %v579 = vld [vmem:[%s324 + $0x628] sm:$0xff]
        %v580 = vld [vmem:[%s324 + $0x630] sm:$0xff]
        %v581 = vld [vmem:[%s324 + $0x638] sm:$0xff]
        %v582 = vld [vmem:[%s324 + $0x640] sm:$0xff]
        %v583 = vld [vmem:[%s324 + $0x648] sm:$0xff]
        %v584 = vld [vmem:[%s324 + $0x650] sm:$0xff]
        %v585 = vld [vmem:[%s324 + $0x658] sm:$0xff]
        %v586 = vld [vmem:[%s324 + $0x660] sm:$0xff]
        %v587 = vld [vmem:[%s324 + $0x668] sm:$0xff]
        %v588 = vld [vmem:[%s324 + $0x670] sm:$0xff]
        %v589 = vld [vmem:[%s324 + $0x678] sm:$0xff]
        %v590 = vld [vmem:[%s324 + $0x680] sm:$0xff]
        %v591 = vld [vmem:[%s324 + $0x688] sm:$0xff]
        %v592 = vld [vmem:[%s324 + $0x690] sm:$0xff]
        %v593 = vld [vmem:[%s324 + $0x698] sm:$0xff]
        %v594 = vld [vmem:[%s324 + $0x6a0] sm:$0xff]
        %v595 = vld [vmem:[%s324 + $0x6a8] sm:$0xff]
        %v596 = vld [vmem:[%s324 + $0x6b0] sm:$0xff]
        %v597 = vld [vmem:[%s324 + $0x6b8] sm:$0xff]
        %v598 = vld [vmem:[%s324 + $0x6c0] sm:$0xff]
        %v599 = vld [vmem:[%s324 + $0x6c8] sm:$0xff]
        %v600 = vld [vmem:[%s324 + $0x6d0] sm:$0xff]
        %v601 = vld [vmem:[%s324 + $0x6d8] sm:$0xff]
        %v602 = vld [vmem:[%s324 + $0x6e0] sm:$0xff]
        %v603 = vld [vmem:[%s324 + $0x6e8] sm:$0xff]
        %v604 = vld [vmem:[%s324 + $0x6f0] sm:$0xff]
        %v605 = vld [vmem:[%s324 + $0x6f8] sm:$0xff]
        %v606 = vld [vmem:[%s324 + $0x700] sm:$0xff]
        %v607 = vld [vmem:[%s324 + $0x708] sm:$0xff]
        %v608 = vld [vmem:[%s324 + $0x710] sm:$0xff]
        %v609 = vld [vmem:[%s324 + $0x718] sm:$0xff]
        %v610 = vld [vmem:[%s324 + $0x720] sm:$0xff]
        %v611 = vld [vmem:[%s324 + $0x728] sm:$0xff]
        %v612 = vld [vmem:[%s324 + $0x730] sm:$0xff]
        %v613 = vld [vmem:[%s324 + $0x738] sm:$0xff]
        %v614 = vld [vmem:[%s324 + $0x740] sm:$0xff]
        %v615 = vld [vmem:[%s324 + $0x748] sm:$0xff]
        %v616 = vld [vmem:[%s324 + $0x750] sm:$0xff]
        %v617 = vld [vmem:[%s324 + $0x758] sm:$0xff]
        %v618 = vld [vmem:[%s324 + $0x760] sm:$0xff]
        %v619 = vld [vmem:[%s324 + $0x768] sm:$0xff]
        %v620 = vld [vmem:[%s324 + $0x770] sm:$0xff]
        %v621 = vld [vmem:[%s324 + $0x778] sm:$0xff]
        %v622 = vld [vmem:[%s324 + $0x780] sm:$0xff]
        %v623 = vld [vmem:[%s324 + $0x788] sm:$0xff]
        %v624 = vld [vmem:[%s324 + $0x790] sm:$0xff]
        %v625 = vld [vmem:[%s324 + $0x798] sm:$0xff]
        %v626 = vld [vmem:[%s324 + $0x7a0] sm:$0xff]
        %v627 = vld [vmem:[%s324 + $0x7a8] sm:$0xff]
        %v628 = vld [vmem:[%s324 + $0x7b0] sm:$0xff]
        %v629 = vld [vmem:[%s324 + $0x7b8] sm:$0xff]
        %v630 = vld [vmem:[%s324 + $0x7c0] sm:$0xff]
        %v631 = vld [vmem:[%s324 + $0x7c8] sm:$0xff]
        %v632 = vld [vmem:[%s324 + $0x7d0] sm:$0xff]
        %v633 = vld [vmem:[%s324 + $0x7d8] sm:$0xff]
        %v634 = vld [vmem:[%s324 + $0x7e0] sm:$0xff]
        %v635 = vld [vmem:[%s324 + $0x7e8] sm:$0xff]
        %v636 = vld [vmem:[%s324 + $0x7f0] sm:$0xff]
        %v637 = vld [vmem:[%s324 + $0x7f8] sm:$0xff]
        %v638 = vmul.f32 %v382, %v382
        %v639 = vmul.f32 %v383, %v383
        %v640 = vmul.f32 %v384, %v384
        %v641 = vmul.f32 %v385, %v385
        %v642 = vmul.f32 %v386, %v386
        %v643 = vmul.f32 %v387, %v387
        %v644 = vmul.f32 %v388, %v388
        %v645 = vmul.f32 %v389, %v389
        %v646 = vmul.f32 %v390, %v390
        %v647 = vmul.f32 %v391, %v391
        %v648 = vmul.f32 %v392, %v392
        %v649 = vmul.f32 %v393, %v393
        %v650 = vmul.f32 %v394, %v394
        %v651 = vmul.f32 %v395, %v395
        %v652 = vmul.f32 %v396, %v396
        %v653 = vmul.f32 %v397, %v397
        %v654 = vmul.f32 %v398, %v398
        %v655 = vmul.f32 %v399, %v399
        %v656 = vmul.f32 %v400, %v400
        %v657 = vmul.f32 %v401, %v401
        %v658 = vmul.f32 %v402, %v402
        %v659 = vmul.f32 %v403, %v403
        %v660 = vmul.f32 %v404, %v404
        %v661 = vmul.f32 %v405, %v405
        %v662 = vmul.f32 %v406, %v406
        %v663 = vmul.f32 %v407, %v407
        %v664 = vmul.f32 %v408, %v408
        %v665 = vmul.f32 %v409, %v409
        %v666 = vmul.f32 %v410, %v410
        %v667 = vmul.f32 %v411, %v411
        %v668 = vmul.f32 %v412, %v412
        %v669 = vmul.f32 %v413, %v413
        %v670 = vmul.f32 %v414, %v414
        %v671 = vmul.f32 %v415, %v415
        %v672 = vmul.f32 %v416, %v416
        %v673 = vmul.f32 %v417, %v417
        %v674 = vmul.f32 %v418, %v418
        %v675 = vmul.f32 %v419, %v419
        %v676 = vmul.f32 %v420, %v420
        %v677 = vmul.f32 %v421, %v421
        %v678 = vmul.f32 %v422, %v422
        %v679 = vmul.f32 %v423, %v423
        %v680 = vmul.f32 %v424, %v424
        %v681 = vmul.f32 %v425, %v425
        %v682 = vmul.f32 %v426, %v426
        %v683 = vmul.f32 %v427, %v427
        %v684 = vmul.f32 %v428, %v428
        %v685 = vmul.f32 %v429, %v429
        %v686 = vmul.f32 %v430, %v430
        %v687 = vmul.f32 %v431, %v431
        %v688 = vmul.f32 %v432, %v432
        %v689 = vmul.f32 %v433, %v433
        %v690 = vmul.f32 %v434, %v434
        %v691 = vmul.f32 %v435, %v435
        %v692 = vmul.f32 %v436, %v436
        %v693 = vmul.f32 %v437, %v437
        %v694 = vmul.f32 %v438, %v438
        %v695 = vmul.f32 %v439, %v439
        %v696 = vmul.f32 %v440, %v440
        %v697 = vmul.f32 %v441, %v441
        %v698 = vmul.f32 %v442, %v442
        %v699 = vmul.f32 %v443, %v443
        %v700 = vmul.f32 %v444, %v444
        %v701 = vmul.f32 %v445, %v445
        %v702 = vmul.f32 %v446, %v446
        %v703 = vmul.f32 %v447, %v447
        %v704 = vmul.f32 %v448, %v448
        %v705 = vmul.f32 %v449, %v449
        %v706 = vmul.f32 %v450, %v450
        %v707 = vmul.f32 %v451, %v451
        %v708 = vmul.f32 %v452, %v452
        %v709 = vmul.f32 %v453, %v453
        %v710 = vmul.f32 %v454, %v454
        %v711 = vmul.f32 %v455, %v455
        %v712 = vmul.f32 %v456, %v456
        %v713 = vmul.f32 %v457, %v457
        %v714 = vmul.f32 %v458, %v458
        %v715 = vmul.f32 %v459, %v459
        %v716 = vmul.f32 %v460, %v460
        %v717 = vmul.f32 %v461, %v461
        %v718 = vmul.f32 %v462, %v462
        %v719 = vmul.f32 %v463, %v463
        %v720 = vmul.f32 %v464, %v464
        %v721 = vmul.f32 %v465, %v465
        %v722 = vmul.f32 %v466, %v466
        %v723 = vmul.f32 %v467, %v467
        %v724 = vmul.f32 %v468, %v468
        %v725 = vmul.f32 %v469, %v469
        %v726 = vmul.f32 %v470, %v470
        %v727 = vmul.f32 %v471, %v471
        %v728 = vmul.f32 %v472, %v472
        %v729 = vmul.f32 %v473, %v473
        %v730 = vmul.f32 %v474, %v474
        %v731 = vmul.f32 %v475, %v475
        %v732 = vmul.f32 %v476, %v476
        %v733 = vmul.f32 %v477, %v477
        %v734 = vmul.f32 %v478, %v478
        %v735 = vmul.f32 %v479, %v479
        %v736 = vmul.f32 %v480, %v480
        %v737 = vmul.f32 %v481, %v481
        %v738 = vmul.f32 %v482, %v482
        %v739 = vmul.f32 %v483, %v483
        %v740 = vmul.f32 %v484, %v484
        %v741 = vmul.f32 %v485, %v485
        %v742 = vmul.f32 %v486, %v486
        %v743 = vmul.f32 %v487, %v487
        %v744 = vmul.f32 %v488, %v488
        %v745 = vmul.f32 %v489, %v489
        %v746 = vmul.f32 %v490, %v490
        %v747 = vmul.f32 %v491, %v491
        %v748 = vmul.f32 %v492, %v492
        %v749 = vmul.f32 %v493, %v493
        %v750 = vmul.f32 %v494, %v494
        %v751 = vmul.f32 %v495, %v495
        %v752 = vmul.f32 %v496, %v496
        %v753 = vmul.f32 %v497, %v497
        %v754 = vmul.f32 %v498, %v498
        %v755 = vmul.f32 %v499, %v499
        %v756 = vmul.f32 %v500, %v500
        %v757 = vmul.f32 %v501, %v501
        %v758 = vmul.f32 %v502, %v502
        %v759 = vmul.f32 %v503, %v503
        %v760 = vmul.f32 %v504, %v504
        %v761 = vmul.f32 %v505, %v505
        %v762 = vmul.f32 %v506, %v506
        %v763 = vmul.f32 %v507, %v507
        %v764 = vmul.f32 %v508, %v508
        %v765 = vmul.f32 %v509, %v509
        %v766 = vmul.f32 %v510, %v510
        %v767 = vmul.f32 %v511, %v511
        %v768 = vmul.f32 %v512, %v512
        %v769 = vmul.f32 %v513, %v513
        %v770 = vmul.f32 %v514, %v514
        %v771 = vmul.f32 %v515, %v515
        %v772 = vmul.f32 %v516, %v516
        %v773 = vmul.f32 %v517, %v517
        %v774 = vmul.f32 %v518, %v518
        %v775 = vmul.f32 %v519, %v519
        %v776 = vmul.f32 %v520, %v520
        %v777 = vmul.f32 %v521, %v521
        %v778 = vmul.f32 %v522, %v522
        %v779 = vmul.f32 %v523, %v523
        %v780 = vmul.f32 %v524, %v524
        %v781 = vmul.f32 %v525, %v525
        %v782 = vmul.f32 %v526, %v526
        %v783 = vmul.f32 %v527, %v527
        %v784 = vmul.f32 %v528, %v528
        %v785 = vmul.f32 %v529, %v529
        %v786 = vmul.f32 %v530, %v530
        %v787 = vmul.f32 %v531, %v531
        %v788 = vmul.f32 %v532, %v532
        %v789 = vmul.f32 %v533, %v533
        %v790 = vmul.f32 %v534, %v534
        %v791 = vmul.f32 %v535, %v535
        %v792 = vmul.f32 %v536, %v536
        %v793 = vmul.f32 %v537, %v537
        %v794 = vmul.f32 %v538, %v538
        %v795 = vmul.f32 %v539, %v539
        %v796 = vmul.f32 %v540, %v540
        %v797 = vmul.f32 %v541, %v541
        %v798 = vmul.f32 %v542, %v542
        %v799 = vmul.f32 %v543, %v543
        %v800 = vmul.f32 %v544, %v544
        %v801 = vmul.f32 %v545, %v545
        %v802 = vmul.f32 %v546, %v546
        %v803 = vmul.f32 %v547, %v547
        %v804 = vmul.f32 %v548, %v548
        %v805 = vmul.f32 %v549, %v549
        %v806 = vmul.f32 %v550, %v550
        %v807 = vmul.f32 %v551, %v551
        %v808 = vmul.f32 %v552, %v552
        %v809 = vmul.f32 %v553, %v553
        %v810 = vmul.f32 %v554, %v554
        %v811 = vmul.f32 %v555, %v555
        %v812 = vmul.f32 %v556, %v556
        %v813 = vmul.f32 %v557, %v557
        %v814 = vmul.f32 %v558, %v558
        %v815 = vmul.f32 %v559, %v559
        %v816 = vmul.f32 %v560, %v560
        %v817 = vmul.f32 %v561, %v561
        %v818 = vmul.f32 %v562, %v562
        %v819 = vmul.f32 %v563, %v563
        %v820 = vmul.f32 %v564, %v564
        %v821 = vmul.f32 %v565, %v565
        %v822 = vmul.f32 %v566, %v566
        %v823 = vmul.f32 %v567, %v567
        %v824 = vmul.f32 %v568, %v568
        %v825 = vmul.f32 %v569, %v569
        %v826 = vmul.f32 %v570, %v570
        %v827 = vmul.f32 %v571, %v571
        %v828 = vmul.f32 %v572, %v572
        %v829 = vmul.f32 %v573, %v573
        %v830 = vmul.f32 %v574, %v574
        %v831 = vmul.f32 %v575, %v575
        %v832 = vmul.f32 %v576, %v576
        %v833 = vmul.f32 %v577, %v577
        %v834 = vmul.f32 %v578, %v578
        %v835 = vmul.f32 %v579, %v579
        %v836 = vmul.f32 %v580, %v580
        %v837 = vmul.f32 %v581, %v581
        %v838 = vmul.f32 %v582, %v582
        %v839 = vmul.f32 %v583, %v583
        %v840 = vmul.f32 %v584, %v584
        %v841 = vmul.f32 %v585, %v585
        %v842 = vmul.f32 %v586, %v586
        %v843 = vmul.f32 %v587, %v587
        %v844 = vmul.f32 %v588, %v588
        %v845 = vmul.f32 %v589, %v589
        %v846 = vmul.f32 %v590, %v590
        %v847 = vmul.f32 %v591, %v591
        %v848 = vmul.f32 %v592, %v592
        %v849 = vmul.f32 %v593, %v593
        %v850 = vmul.f32 %v594, %v594
        %v851 = vmul.f32 %v595, %v595
        %v852 = vmul.f32 %v596, %v596
        %v853 = vmul.f32 %v597, %v597
        %v854 = vmul.f32 %v598, %v598
        %v855 = vmul.f32 %v599, %v599
        %v856 = vmul.f32 %v600, %v600
        %v857 = vmul.f32 %v601, %v601
        %v858 = vmul.f32 %v602, %v602
        %v859 = vmul.f32 %v603, %v603
        %v860 = vmul.f32 %v604, %v604
        %v861 = vmul.f32 %v605, %v605
        %v862 = vmul.f32 %v606, %v606
        %v863 = vmul.f32 %v607, %v607
        %v864 = vmul.f32 %v608, %v608
        %v865 = vmul.f32 %v609, %v609
        %v866 = vmul.f32 %v610, %v610
        %v867 = vmul.f32 %v611, %v611
        %v868 = vmul.f32 %v612, %v612
        %v869 = vmul.f32 %v613, %v613
        %v870 = vmul.f32 %v614, %v614
        %v871 = vmul.f32 %v615, %v615
        %v872 = vmul.f32 %v616, %v616
        %v873 = vmul.f32 %v617, %v617
        %v874 = vmul.f32 %v618, %v618
        %v875 = vmul.f32 %v619, %v619
        %v876 = vmul.f32 %v620, %v620
        %v877 = vmul.f32 %v621, %v621
        %v878 = vmul.f32 %v622, %v622
        %v879 = vmul.f32 %v623, %v623
        %v880 = vmul.f32 %v624, %v624
        %v881 = vmul.f32 %v625, %v625
        %v882 = vmul.f32 %v626, %v626
        %v883 = vmul.f32 %v627, %v627
        %v884 = vmul.f32 %v628, %v628
        %v885 = vmul.f32 %v629, %v629
        %v886 = vmul.f32 %v630, %v630
        %v887 = vmul.f32 %v631, %v631
        %v888 = vmul.f32 %v632, %v632
        %v889 = vmul.f32 %v633, %v633
        %v890 = vmul.f32 %v634, %v634
        %v891 = vmul.f32 %v635, %v635
        %v892 = vmul.f32 %v636, %v636
        %v893 = vmul.f32 %v637, %v637
        %v894 = vadd.f32 %v638, %v639
        %v895 = vadd.f32 %v894, %v640
        %v896 = vadd.f32 %v895, %v641
        %v897 = vadd.f32 %v896, %v642
        %v898 = vadd.f32 %v897, %v643
        %v899 = vadd.f32 %v898, %v644
        %v900 = vadd.f32 %v899, %v645
        %901 = vadd.xlane.f32.xlu0 %v900
        %v902 = vpop.xlane.xlu0 %901
        %v903 = vadd.f32 %v646, %v647
        %v904 = vadd.f32 %v903, %v648
        %v905 = vadd.f32 %v904, %v649
        %v906 = vadd.f32 %v905, %v650
        %v907 = vadd.f32 %v906, %v651
        %v908 = vadd.f32 %v907, %v652
        %v909 = vadd.f32 %v908, %v653
        %910 = vadd.xlane.f32.xlu0 %v909
        %v911 = vpop.xlane.xlu0 %910
        %v912 = vadd.f32 %v654, %v655
        %v913 = vadd.f32 %v912, %v656
        %v914 = vadd.f32 %v913, %v657
        %v915 = vadd.f32 %v914, %v658
        %v916 = vadd.f32 %v915, %v659
        %v917 = vadd.f32 %v916, %v660
        %v918 = vadd.f32 %v917, %v661
        %919 = vadd.xlane.f32.xlu0 %v918
        %v920 = vpop.xlane.xlu0 %919
        %v921 = vadd.f32 %v662, %v663
        %v922 = vadd.f32 %v921, %v664
        %v923 = vadd.f32 %v922, %v665
        %v924 = vadd.f32 %v923, %v666
        %v925 = vadd.f32 %v924, %v667
        %v926 = vadd.f32 %v925, %v668
        %v927 = vadd.f32 %v926, %v669
        %928 = vadd.xlane.f32.xlu0 %v927
        %v929 = vpop.xlane.xlu0 %928
        %v930 = vadd.f32 %v670, %v671
        %v931 = vadd.f32 %v930, %v672
        %v932 = vadd.f32 %v931, %v673
        %v933 = vadd.f32 %v932, %v674
        %v934 = vadd.f32 %v933, %v675
        %v935 = vadd.f32 %v934, %v676
        %v936 = vadd.f32 %v935, %v677
        %937 = vadd.xlane.f32.xlu0 %v936
        %v938 = vpop.xlane.xlu0 %937
        %v939 = vadd.f32 %v678, %v679
        %v940 = vadd.f32 %v939, %v680
        %v941 = vadd.f32 %v940, %v681
        %v942 = vadd.f32 %v941, %v682
        %v943 = vadd.f32 %v942, %v683
        %v944 = vadd.f32 %v943, %v684
        %v945 = vadd.f32 %v944, %v685
        %946 = vadd.xlane.f32.xlu0 %v945
        %v947 = vpop.xlane.xlu0 %946
        %v948 = vadd.f32 %v686, %v687
        %v949 = vadd.f32 %v948, %v688
        %v950 = vadd.f32 %v949, %v689
        %v951 = vadd.f32 %v950, %v690
        %v952 = vadd.f32 %v951, %v691
        %v953 = vadd.f32 %v952, %v692
        %v954 = vadd.f32 %v953, %v693
        %955 = vadd.xlane.f32.xlu0 %v954
        %v956 = vpop.xlane.xlu0 %955
        %v957 = vadd.f32 %v694, %v695
        %v958 = vadd.f32 %v957, %v696
        %v959 = vadd.f32 %v958, %v697
        %v960 = vadd.f32 %v959, %v698
        %v961 = vadd.f32 %v960, %v699
        %v962 = vadd.f32 %v961, %v700
        %v963 = vadd.f32 %v962, %v701
        %964 = vadd.xlane.f32.xlu0 %v963
        %v965 = vpop.xlane.xlu0 %964
        %v966 = vadd.f32 %v702, %v703
        %v967 = vadd.f32 %v966, %v704
        %v968 = vadd.f32 %v967, %v705
        %v969 = vadd.f32 %v968, %v706
        %v970 = vadd.f32 %v969, %v707
        %v971 = vadd.f32 %v970, %v708
        %v972 = vadd.f32 %v971, %v709
        %973 = vadd.xlane.f32.xlu0 %v972
        %v974 = vpop.xlane.xlu0 %973
        %v975 = vadd.f32 %v710, %v711
        %v976 = vadd.f32 %v975, %v712
        %v977 = vadd.f32 %v976, %v713
        %v978 = vadd.f32 %v977, %v714
        %v979 = vadd.f32 %v978, %v715
        %v980 = vadd.f32 %v979, %v716
        %v981 = vadd.f32 %v980, %v717
        %982 = vadd.xlane.f32.xlu0 %v981
        %v983 = vpop.xlane.xlu0 %982
        %v984 = vadd.f32 %v718, %v719
        %v985 = vadd.f32 %v984, %v720
        %v986 = vadd.f32 %v985, %v721
        %v987 = vadd.f32 %v986, %v722
        %v988 = vadd.f32 %v987, %v723
        %v989 = vadd.f32 %v988, %v724
        %v990 = vadd.f32 %v989, %v725
        %991 = vadd.xlane.f32.xlu0 %v990
        %v992 = vpop.xlane.xlu0 %991
        %v993 = vadd.f32 %v726, %v727
        %v994 = vadd.f32 %v993, %v728
        %v995 = vadd.f32 %v994, %v729
        %v996 = vadd.f32 %v995, %v730
        %v997 = vadd.f32 %v996, %v731
        %v998 = vadd.f32 %v997, %v732
        %v999 = vadd.f32 %v998, %v733
        %1000 = vadd.xlane.f32.xlu0 %v999
        %v1001 = vpop.xlane.xlu0 %1000
        %v1002 = vadd.f32 %v734, %v735
        %v1003 = vadd.f32 %v1002, %v736
        %v1004 = vadd.f32 %v1003, %v737
        %v1005 = vadd.f32 %v1004, %v738
        %v1006 = vadd.f32 %v1005, %v739
        %v1007 = vadd.f32 %v1006, %v740
        %v1008 = vadd.f32 %v1007, %v741
        %1009 = vadd.xlane.f32.xlu0 %v1008
        %v1010 = vpop.xlane.xlu0 %1009
        %v1011 = vadd.f32 %v742, %v743
        %v1012 = vadd.f32 %v1011, %v744
        %v1013 = vadd.f32 %v1012, %v745
        %v1014 = vadd.f32 %v1013, %v746
        %v1015 = vadd.f32 %v1014, %v747
        %v1016 = vadd.f32 %v1015, %v748
        %v1017 = vadd.f32 %v1016, %v749
        %1018 = vadd.xlane.f32.xlu0 %v1017
        %v1019 = vpop.xlane.xlu0 %1018
        %v1020 = vadd.f32 %v750, %v751
        %v1021 = vadd.f32 %v1020, %v752
        %v1022 = vadd.f32 %v1021, %v753
        %v1023 = vadd.f32 %v1022, %v754
        %v1024 = vadd.f32 %v1023, %v755
        %v1025 = vadd.f32 %v1024, %v756
        %v1026 = vadd.f32 %v1025, %v757
        %1027 = vadd.xlane.f32.xlu0 %v1026
        %v1028 = vpop.xlane.xlu0 %1027
        %v1029 = vadd.f32 %v758, %v759
        %v1030 = vadd.f32 %v1029, %v760
        %v1031 = vadd.f32 %v1030, %v761
        %v1032 = vadd.f32 %v1031, %v762
        %v1033 = vadd.f32 %v1032, %v763
        %v1034 = vadd.f32 %v1033, %v764
        %v1035 = vadd.f32 %v1034, %v765
        %1036 = vadd.xlane.f32.xlu0 %v1035
        %v1037 = vpop.xlane.xlu0 %1036
        %v1038 = vadd.f32 %v766, %v767
        %v1039 = vadd.f32 %v1038, %v768
        %v1040 = vadd.f32 %v1039, %v769
        %v1041 = vadd.f32 %v1040, %v770
        %v1042 = vadd.f32 %v1041, %v771
        %v1043 = vadd.f32 %v1042, %v772
        %v1044 = vadd.f32 %v1043, %v773
        %1045 = vadd.xlane.f32.xlu0 %v1044
        %v1046 = vpop.xlane.xlu0 %1045
        %v1047 = vadd.f32 %v774, %v775
        %v1048 = vadd.f32 %v1047, %v776
        %v1049 = vadd.f32 %v1048, %v777
        %v1050 = vadd.f32 %v1049, %v778
        %v1051 = vadd.f32 %v1050, %v779
        %v1052 = vadd.f32 %v1051, %v780
        %v1053 = vadd.f32 %v1052, %v781
        %1054 = vadd.xlane.f32.xlu0 %v1053
        %v1055 = vpop.xlane.xlu0 %1054
        %v1056 = vadd.f32 %v782, %v783
        %v1057 = vadd.f32 %v1056, %v784
        %v1058 = vadd.f32 %v1057, %v785
        %v1059 = vadd.f32 %v1058, %v786
        %v1060 = vadd.f32 %v1059, %v787
        %v1061 = vadd.f32 %v1060, %v788
        %v1062 = vadd.f32 %v1061, %v789
        %1063 = vadd.xlane.f32.xlu0 %v1062
        %v1064 = vpop.xlane.xlu0 %1063
        %v1065 = vadd.f32 %v790, %v791
        %v1066 = vadd.f32 %v1065, %v792
        %v1067 = vadd.f32 %v1066, %v793
        %v1068 = vadd.f32 %v1067, %v794
        %v1069 = vadd.f32 %v1068, %v795
        %v1070 = vadd.f32 %v1069, %v796
        %v1071 = vadd.f32 %v1070, %v797
        %1072 = vadd.xlane.f32.xlu0 %v1071
        %v1073 = vpop.xlane.xlu0 %1072
        %v1074 = vadd.f32 %v798, %v799
        %v1075 = vadd.f32 %v1074, %v800
        %v1076 = vadd.f32 %v1075, %v801
        %v1077 = vadd.f32 %v1076, %v802
        %v1078 = vadd.f32 %v1077, %v803
        %v1079 = vadd.f32 %v1078, %v804
        %v1080 = vadd.f32 %v1079, %v805
        %1081 = vadd.xlane.f32.xlu0 %v1080
        %v1082 = vpop.xlane.xlu0 %1081
        %v1083 = vadd.f32 %v806, %v807
        %v1084 = vadd.f32 %v1083, %v808
        %v1085 = vadd.f32 %v1084, %v809
        %v1086 = vadd.f32 %v1085, %v810
        %v1087 = vadd.f32 %v1086, %v811
        %v1088 = vadd.f32 %v1087, %v812
        %v1089 = vadd.f32 %v1088, %v813
        %1090 = vadd.xlane.f32.xlu0 %v1089
        %v1091 = vpop.xlane.xlu0 %1090
        %v1092 = vadd.f32 %v814, %v815
        %v1093 = vadd.f32 %v1092, %v816
        %v1094 = vadd.f32 %v1093, %v817
        %v1095 = vadd.f32 %v1094, %v818
        %v1096 = vadd.f32 %v1095, %v819
        %v1097 = vadd.f32 %v1096, %v820
        %v1098 = vadd.f32 %v1097, %v821
        %1099 = vadd.xlane.f32.xlu0 %v1098
        %v1100 = vpop.xlane.xlu0 %1099
        %v1101 = vadd.f32 %v822, %v823
        %v1102 = vadd.f32 %v1101, %v824
        %v1103 = vadd.f32 %v1102, %v825
        %v1104 = vadd.f32 %v1103, %v826
        %v1105 = vadd.f32 %v1104, %v827
        %v1106 = vadd.f32 %v1105, %v828
        %v1107 = vadd.f32 %v1106, %v829
        %1108 = vadd.xlane.f32.xlu0 %v1107
        %v1109 = vpop.xlane.xlu0 %1108
        %v1110 = vadd.f32 %v830, %v831
        %v1111 = vadd.f32 %v1110, %v832
        %v1112 = vadd.f32 %v1111, %v833
        %v1113 = vadd.f32 %v1112, %v834
        %v1114 = vadd.f32 %v1113, %v835
        %v1115 = vadd.f32 %v1114, %v836
        %v1116 = vadd.f32 %v1115, %v837
        %1117 = vadd.xlane.f32.xlu0 %v1116
        %v1118 = vpop.xlane.xlu0 %1117
        %v1119 = vadd.f32 %v838, %v839
        %v1120 = vadd.f32 %v1119, %v840
        %v1121 = vadd.f32 %v1120, %v841
        %v1122 = vadd.f32 %v1121, %v842
        %v1123 = vadd.f32 %v1122, %v843
        %v1124 = vadd.f32 %v1123, %v844
        %v1125 = vadd.f32 %v1124, %v845
        %1126 = vadd.xlane.f32.xlu0 %v1125
        %v1127 = vpop.xlane.xlu0 %1126
        %v1128 = vadd.f32 %v846, %v847
        %v1129 = vadd.f32 %v1128, %v848
        %v1130 = vadd.f32 %v1129, %v849
        %v1131 = vadd.f32 %v1130, %v850
        %v1132 = vadd.f32 %v1131, %v851
        %v1133 = vadd.f32 %v1132, %v852
        %v1134 = vadd.f32 %v1133, %v853
        %1135 = vadd.xlane.f32.xlu0 %v1134
        %v1136 = vpop.xlane.xlu0 %1135
        %v1137 = vadd.f32 %v854, %v855
        %v1138 = vadd.f32 %v1137, %v856
        %v1139 = vadd.f32 %v1138, %v857
        %v1140 = vadd.f32 %v1139, %v858
        %v1141 = vadd.f32 %v1140, %v859
        %v1142 = vadd.f32 %v1141, %v860
        %v1143 = vadd.f32 %v1142, %v861
        %1144 = vadd.xlane.f32.xlu0 %v1143
        %v1145 = vpop.xlane.xlu0 %1144
        %v1146 = vadd.f32 %v862, %v863
        %v1147 = vadd.f32 %v1146, %v864
        %v1148 = vadd.f32 %v1147, %v865
        %v1149 = vadd.f32 %v1148, %v866
        %v1150 = vadd.f32 %v1149, %v867
        %v1151 = vadd.f32 %v1150, %v868
        %v1152 = vadd.f32 %v1151, %v869
        %1153 = vadd.xlane.f32.xlu0 %v1152
        %v1154 = vpop.xlane.xlu0 %1153
        %v1155 = vadd.f32 %v870, %v871
        %v1156 = vadd.f32 %v1155, %v872
        %v1157 = vadd.f32 %v1156, %v873
        %v1158 = vadd.f32 %v1157, %v874
        %v1159 = vadd.f32 %v1158, %v875
        %v1160 = vadd.f32 %v1159, %v876
        %v1161 = vadd.f32 %v1160, %v877
        %1162 = vadd.xlane.f32.xlu0 %v1161
        %v1163 = vpop.xlane.xlu0 %1162
        %v1164 = vadd.f32 %v878, %v879
        %v1165 = vadd.f32 %v1164, %v880
        %v1166 = vadd.f32 %v1165, %v881
        %v1167 = vadd.f32 %v1166, %v882
        %v1168 = vadd.f32 %v1167, %v883
        %v1169 = vadd.f32 %v1168, %v884
        %v1170 = vadd.f32 %v1169, %v885
        %1171 = vadd.xlane.f32.xlu0 %v1170
        %v1172 = vpop.xlane.xlu0 %1171
        %v1173 = vadd.f32 %v886, %v887
        %v1174 = vadd.f32 %v1173, %v888
        %v1175 = vadd.f32 %v1174, %v889
        %v1176 = vadd.f32 %v1175, %v890
        %v1177 = vadd.f32 %v1176, %v891
        %v1178 = vadd.f32 %v1177, %v892
        %v1179 = vadd.f32 %v1178, %v893
        %1180 = vadd.xlane.f32.xlu0 %v1179
        %v1181 = vpop.xlane.xlu0 %1180
        %v1182 = vmax.f32 %v902, 1e-24
        %v1183 = vmax.f32 %v911, 1e-24
        %v1184 = vmax.f32 %v920, 1e-24
        %v1185 = vmax.f32 %v929, 1e-24
        %v1186 = vmax.f32 %v938, 1e-24
        %v1187 = vmax.f32 %v947, 1e-24
        %v1188 = vmax.f32 %v956, 1e-24
        %v1189 = vmax.f32 %v965, 1e-24
        %v1190 = vmax.f32 %v974, 1e-24
        %v1191 = vmax.f32 %v983, 1e-24
        %v1192 = vmax.f32 %v992, 1e-24
        %v1193 = vmax.f32 %v1001, 1e-24
        %v1194 = vmax.f32 %v1010, 1e-24
        %v1195 = vmax.f32 %v1019, 1e-24
        %v1196 = vmax.f32 %v1028, 1e-24
        %v1197 = vmax.f32 %v1037, 1e-24
        %v1198 = vmax.f32 %v1046, 1e-24
        %v1199 = vmax.f32 %v1055, 1e-24
        %v1200 = vmax.f32 %v1064, 1e-24
        %v1201 = vmax.f32 %v1073, 1e-24
        %v1202 = vmax.f32 %v1082, 1e-24
        %v1203 = vmax.f32 %v1091, 1e-24
        %v1204 = vmax.f32 %v1100, 1e-24
        %v1205 = vmax.f32 %v1109, 1e-24
        %v1206 = vmax.f32 %v1118, 1e-24
        %v1207 = vmax.f32 %v1127, 1e-24
        %v1208 = vmax.f32 %v1136, 1e-24
        %v1209 = vmax.f32 %v1145, 1e-24
        %v1210 = vmax.f32 %v1154, 1e-24
        %v1211 = vmax.f32 %v1163, 1e-24
        %v1212 = vmax.f32 %v1172, 1e-24
        %v1213 = vmax.f32 %v1181, 1e-24
        %v1214 = vrsqrt.pop %v1182
        %v1215 = vrsqrt.pop %v1183
        %v1216 = vrsqrt.pop %v1184
        %v1217 = vrsqrt.pop %v1185
        %v1218 = vrsqrt.pop %v1186
        %v1219 = vrsqrt.pop %v1187
        %v1220 = vrsqrt.pop %v1188
        %v1221 = vrsqrt.pop %v1189
        %v1222 = vrsqrt.pop %v1190
        %v1223 = vrsqrt.pop %v1191
        %v1224 = vrsqrt.pop %v1192
        %v1225 = vrsqrt.pop %v1193
        %v1226 = vrsqrt.pop %v1194
        %v1227 = vrsqrt.pop %v1195
        %v1228 = vrsqrt.pop %v1196
        %v1229 = vrsqrt.pop %v1197
        %v1230 = vrsqrt.pop %v1198
        %v1231 = vrsqrt.pop %v1199
        %v1232 = vrsqrt.pop %v1200
        %v1233 = vrsqrt.pop %v1201
        %v1234 = vrsqrt.pop %v1202
        %v1235 = vrsqrt.pop %v1203
        %v1236 = vrsqrt.pop %v1204
        %v1237 = vrsqrt.pop %v1205
        %v1238 = vrsqrt.pop %v1206
        %v1239 = vrsqrt.pop %v1207
        %v1240 = vrsqrt.pop %v1208
        %v1241 = vrsqrt.pop %v1209
        %v1242 = vrsqrt.pop %v1210
        %v1243 = vrsqrt.pop %v1211
        %v1244 = vrsqrt.pop %v1212
        %v1245 = vrsqrt.pop %v1213
        %v1246 = vmul.f32 %v382, %v1214
        %v1247 = vmul.f32 %v383, %v1214
        %v1248 = vmul.f32 %v384, %v1214
        %v1249 = vmul.f32 %v385, %v1214
        %v1250 = vmul.f32 %v386, %v1214
        %v1251 = vmul.f32 %v387, %v1214
        %v1252 = vmul.f32 %v388, %v1214
        %v1253 = vmul.f32 %v389, %v1214
        %v1254 = vmul.f32 %v390, %v1215
        %v1255 = vmul.f32 %v391, %v1215
        %v1256 = vmul.f32 %v392, %v1215
        %v1257 = vmul.f32 %v393, %v1215
        %v1258 = vmul.f32 %v394, %v1215
        %v1259 = vmul.f32 %v395, %v1215
        %v1260 = vmul.f32 %v396, %v1215
        %v1261 = vmul.f32 %v397, %v1215
        %v1262 = vmul.f32 %v398, %v1216
        %v1263 = vmul.f32 %v399, %v1216
        %v1264 = vmul.f32 %v400, %v1216
        %v1265 = vmul.f32 %v401, %v1216
        %v1266 = vmul.f32 %v402, %v1216
        %v1267 = vmul.f32 %v403, %v1216
        %v1268 = vmul.f32 %v404, %v1216
        %v1269 = vmul.f32 %v405, %v1216
        %v1270 = vmul.f32 %v406, %v1217
        %v1271 = vmul.f32 %v407, %v1217
        %v1272 = vmul.f32 %v408, %v1217
        %v1273 = vmul.f32 %v409, %v1217
        %v1274 = vmul.f32 %v410, %v1217
        %v1275 = vmul.f32 %v411, %v1217
        %v1276 = vmul.f32 %v412, %v1217
        %v1277 = vmul.f32 %v413, %v1217
        %v1278 = vmul.f32 %v414, %v1218
        %v1279 = vmul.f32 %v415, %v1218
        %v1280 = vmul.f32 %v416, %v1218
        %v1281 = vmul.f32 %v417, %v1218
        %v1282 = vmul.f32 %v418, %v1218
        %v1283 = vmul.f32 %v419, %v1218
        %v1284 = vmul.f32 %v420, %v1218
        %v1285 = vmul.f32 %v421, %v1218
        %v1286 = vmul.f32 %v422, %v1219
        %v1287 = vmul.f32 %v423, %v1219
        %v1288 = vmul.f32 %v424, %v1219
        %v1289 = vmul.f32 %v425, %v1219
        %v1290 = vmul.f32 %v426, %v1219
        %v1291 = vmul.f32 %v427, %v1219
        %v1292 = vmul.f32 %v428, %v1219
        %v1293 = vmul.f32 %v429, %v1219
        %v1294 = vmul.f32 %v430, %v1220
        %v1295 = vmul.f32 %v431, %v1220
        %v1296 = vmul.f32 %v432, %v1220
        %v1297 = vmul.f32 %v433, %v1220
        %v1298 = vmul.f32 %v434, %v1220
        %v1299 = vmul.f32 %v435, %v1220
        %v1300 = vmul.f32 %v436, %v1220
        %v1301 = vmul.f32 %v437, %v1220
        %v1302 = vmul.f32 %v438, %v1221
        %v1303 = vmul.f32 %v439, %v1221
        %v1304 = vmul.f32 %v440, %v1221
        %v1305 = vmul.f32 %v441, %v1221
        %v1306 = vmul.f32 %v442, %v1221
        %v1307 = vmul.f32 %v443, %v1221
        %v1308 = vmul.f32 %v444, %v1221
        %v1309 = vmul.f32 %v445, %v1221
        %v1310 = vmul.f32 %v446, %v1222
        %v1311 = vmul.f32 %v447, %v1222
        %v1312 = vmul.f32 %v448, %v1222
        %v1313 = vmul.f32 %v449, %v1222
        %v1314 = vmul.f32 %v450, %v1222
        %v1315 = vmul.f32 %v451, %v1222
        %v1316 = vmul.f32 %v452, %v1222
        %v1317 = vmul.f32 %v453, %v1222
        %v1318 = vmul.f32 %v454, %v1223
        %v1319 = vmul.f32 %v455, %v1223
        %v1320 = vmul.f32 %v456, %v1223
        %v1321 = vmul.f32 %v457, %v1223
        %v1322 = vmul.f32 %v458, %v1223
        %v1323 = vmul.f32 %v459, %v1223
        %v1324 = vmul.f32 %v460, %v1223
        %v1325 = vmul.f32 %v461, %v1223
        %v1326 = vmul.f32 %v462, %v1224
        %v1327 = vmul.f32 %v463, %v1224
        %v1328 = vmul.f32 %v464, %v1224
        %v1329 = vmul.f32 %v465, %v1224
        %v1330 = vmul.f32 %v466, %v1224
        %v1331 = vmul.f32 %v467, %v1224
        %v1332 = vmul.f32 %v468, %v1224
        %v1333 = vmul.f32 %v469, %v1224
        %v1334 = vmul.f32 %v470, %v1225
        %v1335 = vmul.f32 %v471, %v1225
        %v1336 = vmul.f32 %v472, %v1225
        %v1337 = vmul.f32 %v473, %v1225
        %v1338 = vmul.f32 %v474, %v1225
        %v1339 = vmul.f32 %v475, %v1225
        %v1340 = vmul.f32 %v476, %v1225
        %v1341 = vmul.f32 %v477, %v1225
        %v1342 = vmul.f32 %v478, %v1226
        %v1343 = vmul.f32 %v479, %v1226
        %v1344 = vmul.f32 %v480, %v1226
        %v1345 = vmul.f32 %v481, %v1226
        %v1346 = vmul.f32 %v482, %v1226
        %v1347 = vmul.f32 %v483, %v1226
        %v1348 = vmul.f32 %v484, %v1226
        %v1349 = vmul.f32 %v485, %v1226
        %v1350 = vmul.f32 %v486, %v1227
        %v1351 = vmul.f32 %v487, %v1227
        %v1352 = vmul.f32 %v488, %v1227
        %v1353 = vmul.f32 %v489, %v1227
        %v1354 = vmul.f32 %v490, %v1227
        %v1355 = vmul.f32 %v491, %v1227
        %v1356 = vmul.f32 %v492, %v1227
        %v1357 = vmul.f32 %v493, %v1227
        %v1358 = vmul.f32 %v494, %v1228
        %v1359 = vmul.f32 %v495, %v1228
        %v1360 = vmul.f32 %v496, %v1228
        %v1361 = vmul.f32 %v497, %v1228
        %v1362 = vmul.f32 %v498, %v1228
        %v1363 = vmul.f32 %v499, %v1228
        %v1364 = vmul.f32 %v500, %v1228
        %v1365 = vmul.f32 %v501, %v1228
        %v1366 = vmul.f32 %v502, %v1229
        %v1367 = vmul.f32 %v503, %v1229
        %v1368 = vmul.f32 %v504, %v1229
        %v1369 = vmul.f32 %v505, %v1229
        %v1370 = vmul.f32 %v506, %v1229
        %v1371 = vmul.f32 %v507, %v1229
        %v1372 = vmul.f32 %v508, %v1229
        %v1373 = vmul.f32 %v509, %v1229
        %v1374 = vmul.f32 %v510, %v1230
        %v1375 = vmul.f32 %v511, %v1230
        %v1376 = vmul.f32 %v512, %v1230
        %v1377 = vmul.f32 %v513, %v1230
        %v1378 = vmul.f32 %v514, %v1230
        %v1379 = vmul.f32 %v515, %v1230
        %v1380 = vmul.f32 %v516, %v1230
        %v1381 = vmul.f32 %v517, %v1230
        %v1382 = vmul.f32 %v518, %v1231
        %v1383 = vmul.f32 %v519, %v1231
        %v1384 = vmul.f32 %v520, %v1231
        %v1385 = vmul.f32 %v521, %v1231
        %v1386 = vmul.f32 %v522, %v1231
        %v1387 = vmul.f32 %v523, %v1231
        %v1388 = vmul.f32 %v524, %v1231
        %v1389 = vmul.f32 %v525, %v1231
        %v1390 = vmul.f32 %v526, %v1232
        %v1391 = vmul.f32 %v527, %v1232
        %v1392 = vmul.f32 %v528, %v1232
        %v1393 = vmul.f32 %v529, %v1232
        %v1394 = vmul.f32 %v530, %v1232
        %v1395 = vmul.f32 %v531, %v1232
        %v1396 = vmul.f32 %v532, %v1232
        %v1397 = vmul.f32 %v533, %v1232
        %v1398 = vmul.f32 %v534, %v1233
        %v1399 = vmul.f32 %v535, %v1233
        %v1400 = vmul.f32 %v536, %v1233
        %v1401 = vmul.f32 %v537, %v1233
        %v1402 = vmul.f32 %v538, %v1233
        %v1403 = vmul.f32 %v539, %v1233
        %v1404 = vmul.f32 %v540, %v1233
        %v1405 = vmul.f32 %v541, %v1233
        %v1406 = vmul.f32 %v542, %v1234
        %v1407 = vmul.f32 %v543, %v1234
        %v1408 = vmul.f32 %v544, %v1234
        %v1409 = vmul.f32 %v545, %v1234
        %v1410 = vmul.f32 %v546, %v1234
        %v1411 = vmul.f32 %v547, %v1234
        %v1412 = vmul.f32 %v548, %v1234
        %v1413 = vmul.f32 %v549, %v1234
        %v1414 = vmul.f32 %v550, %v1235
        %v1415 = vmul.f32 %v551, %v1235
        %v1416 = vmul.f32 %v552, %v1235
        %v1417 = vmul.f32 %v553, %v1235
        %v1418 = vmul.f32 %v554, %v1235
        %v1419 = vmul.f32 %v555, %v1235
        %v1420 = vmul.f32 %v556, %v1235
        %v1421 = vmul.f32 %v557, %v1235
        %v1422 = vmul.f32 %v558, %v1236
        %v1423 = vmul.f32 %v559, %v1236
        %v1424 = vmul.f32 %v560, %v1236
        %v1425 = vmul.f32 %v561, %v1236
        %v1426 = vmul.f32 %v562, %v1236
        %v1427 = vmul.f32 %v563, %v1236
        %v1428 = vmul.f32 %v564, %v1236
        %v1429 = vmul.f32 %v565, %v1236
        %v1430 = vmul.f32 %v566, %v1237
        %v1431 = vmul.f32 %v567, %v1237
        %v1432 = vmul.f32 %v568, %v1237
        %v1433 = vmul.f32 %v569, %v1237
        %v1434 = vmul.f32 %v570, %v1237
        %v1435 = vmul.f32 %v571, %v1237
        %v1436 = vmul.f32 %v572, %v1237
        %v1437 = vmul.f32 %v573, %v1237
        %v1438 = vmul.f32 %v574, %v1238
        %v1439 = vmul.f32 %v575, %v1238
        %v1440 = vmul.f32 %v576, %v1238
        %v1441 = vmul.f32 %v577, %v1238
        %v1442 = vmul.f32 %v578, %v1238
        %v1443 = vmul.f32 %v579, %v1238
        %v1444 = vmul.f32 %v580, %v1238
        %v1445 = vmul.f32 %v581, %v1238
        %v1446 = vmul.f32 %v582, %v1239
        %v1447 = vmul.f32 %v583, %v1239
        %v1448 = vmul.f32 %v584, %v1239
        %v1449 = vmul.f32 %v585, %v1239
        %v1450 = vmul.f32 %v586, %v1239
        %v1451 = vmul.f32 %v587, %v1239
        %v1452 = vmul.f32 %v588, %v1239
        %v1453 = vmul.f32 %v589, %v1239
        %v1454 = vmul.f32 %v590, %v1240
        %v1455 = vmul.f32 %v591, %v1240
        %v1456 = vmul.f32 %v592, %v1240
        %v1457 = vmul.f32 %v593, %v1240
        %v1458 = vmul.f32 %v594, %v1240
        %v1459 = vmul.f32 %v595, %v1240
        %v1460 = vmul.f32 %v596, %v1240
        %v1461 = vmul.f32 %v597, %v1240
        %v1462 = vmul.f32 %v598, %v1241
        %v1463 = vmul.f32 %v599, %v1241
        %v1464 = vmul.f32 %v600, %v1241
        %v1465 = vmul.f32 %v601, %v1241
        %v1466 = vmul.f32 %v602, %v1241
        %v1467 = vmul.f32 %v603, %v1241
        %v1468 = vmul.f32 %v604, %v1241
        %v1469 = vmul.f32 %v605, %v1241
        %v1470 = vmul.f32 %v606, %v1242
        %v1471 = vmul.f32 %v607, %v1242
        %v1472 = vmul.f32 %v608, %v1242
        %v1473 = vmul.f32 %v609, %v1242
        %v1474 = vmul.f32 %v610, %v1242
        %v1475 = vmul.f32 %v611, %v1242
        %v1476 = vmul.f32 %v612, %v1242
        %v1477 = vmul.f32 %v613, %v1242
        %v1478 = vmul.f32 %v614, %v1243
        %v1479 = vmul.f32 %v615, %v1243
        %v1480 = vmul.f32 %v616, %v1243
        %v1481 = vmul.f32 %v617, %v1243
        %v1482 = vmul.f32 %v618, %v1243
        %v1483 = vmul.f32 %v619, %v1243
        %v1484 = vmul.f32 %v620, %v1243
        %v1485 = vmul.f32 %v621, %v1243
        %v1486 = vmul.f32 %v622, %v1244
        %v1487 = vmul.f32 %v623, %v1244
        %v1488 = vmul.f32 %v624, %v1244
        %v1489 = vmul.f32 %v625, %v1244
        %v1490 = vmul.f32 %v626, %v1244
        %v1491 = vmul.f32 %v627, %v1244
        %v1492 = vmul.f32 %v628, %v1244
        %v1493 = vmul.f32 %v629, %v1244
        %v1494 = vmul.f32 %v630, %v1245
        %v1495 = vmul.f32 %v631, %v1245
        %v1496 = vmul.f32 %v632, %v1245
        %v1497 = vmul.f32 %v633, %v1245
        %v1498 = vmul.f32 %v634, %v1245
        %v1499 = vmul.f32 %v635, %v1245
        %v1500 = vmul.f32 %v636, %v1245
        %v1501 = vmul.f32 %v637, %v1245
        %v1502 = vpack.c.bf16 %v1254, %v1246
        %v1503 = vpack.c.bf16 %v1255, %v1247
        %v1504 = vpack.c.bf16 %v1256, %v1248
        %v1505 = vpack.c.bf16 %v1257, %v1249
        %v1506 = vpack.c.bf16 %v1258, %v1250
        %v1507 = vpack.c.bf16 %v1259, %v1251
        %v1508 = vpack.c.bf16 %v1260, %v1252
        %v1509 = vpack.c.bf16 %v1261, %v1253
        %v1510 = vpack.c.bf16 %v1270, %v1262
        %v1511 = vpack.c.bf16 %v1271, %v1263
        %v1512 = vpack.c.bf16 %v1272, %v1264
        %v1513 = vpack.c.bf16 %v1273, %v1265
        %v1514 = vpack.c.bf16 %v1274, %v1266
        %v1515 = vpack.c.bf16 %v1275, %v1267
        %v1516 = vpack.c.bf16 %v1276, %v1268
        %v1517 = vpack.c.bf16 %v1277, %v1269
        %v1518 = vpack.c.bf16 %v1286, %v1278
        %v1519 = vpack.c.bf16 %v1287, %v1279
        %v1520 = vpack.c.bf16 %v1288, %v1280
        %v1521 = vpack.c.bf16 %v1289, %v1281
        %v1522 = vpack.c.bf16 %v1290, %v1282
        %v1523 = vpack.c.bf16 %v1291, %v1283
        %v1524 = vpack.c.bf16 %v1292, %v1284
        %v1525 = vpack.c.bf16 %v1293, %v1285
        %v1526 = vpack.c.bf16 %v1302, %v1294
        %v1527 = vpack.c.bf16 %v1303, %v1295
        %v1528 = vpack.c.bf16 %v1304, %v1296
        %v1529 = vpack.c.bf16 %v1305, %v1297
        %v1530 = vpack.c.bf16 %v1306, %v1298
        %v1531 = vpack.c.bf16 %v1307, %v1299
        %v1532 = vpack.c.bf16 %v1308, %v1300
        %v1533 = vpack.c.bf16 %v1309, %v1301
        %v1534 = vpack.c.bf16 %v1318, %v1310
        %v1535 = vpack.c.bf16 %v1319, %v1311
        %v1536 = vpack.c.bf16 %v1320, %v1312
        %v1537 = vpack.c.bf16 %v1321, %v1313
        %v1538 = vpack.c.bf16 %v1322, %v1314
        %v1539 = vpack.c.bf16 %v1323, %v1315
        %v1540 = vpack.c.bf16 %v1324, %v1316
        %v1541 = vpack.c.bf16 %v1325, %v1317
        %v1542 = vpack.c.bf16 %v1334, %v1326
        %v1543 = vpack.c.bf16 %v1335, %v1327
        %v1544 = vpack.c.bf16 %v1336, %v1328
        %v1545 = vpack.c.bf16 %v1337, %v1329
        %v1546 = vpack.c.bf16 %v1338, %v1330
        %v1547 = vpack.c.bf16 %v1339, %v1331
        %v1548 = vpack.c.bf16 %v1340, %v1332
        %v1549 = vpack.c.bf16 %v1341, %v1333
        %v1550 = vpack.c.bf16 %v1350, %v1342
        %v1551 = vpack.c.bf16 %v1351, %v1343
        %v1552 = vpack.c.bf16 %v1352, %v1344
        %v1553 = vpack.c.bf16 %v1353, %v1345
        %v1554 = vpack.c.bf16 %v1354, %v1346
        %v1555 = vpack.c.bf16 %v1355, %v1347
        %v1556 = vpack.c.bf16 %v1356, %v1348
        %v1557 = vpack.c.bf16 %v1357, %v1349
        %v1558 = vpack.c.bf16 %v1366, %v1358
        %v1559 = vpack.c.bf16 %v1367, %v1359
        %v1560 = vpack.c.bf16 %v1368, %v1360
        %v1561 = vpack.c.bf16 %v1369, %v1361
        %v1562 = vpack.c.bf16 %v1370, %v1362
        %v1563 = vpack.c.bf16 %v1371, %v1363
        %v1564 = vpack.c.bf16 %v1372, %v1364
        %v1565 = vpack.c.bf16 %v1373, %v1365
        %v1566 = vpack.c.bf16 %v1382, %v1374
        %v1567 = vpack.c.bf16 %v1383, %v1375
        %v1568 = vpack.c.bf16 %v1384, %v1376
        %v1569 = vpack.c.bf16 %v1385, %v1377
        %v1570 = vpack.c.bf16 %v1386, %v1378
        %v1571 = vpack.c.bf16 %v1387, %v1379
        %v1572 = vpack.c.bf16 %v1388, %v1380
        %v1573 = vpack.c.bf16 %v1389, %v1381
        %v1574 = vpack.c.bf16 %v1398, %v1390
        %v1575 = vpack.c.bf16 %v1399, %v1391
        %v1576 = vpack.c.bf16 %v1400, %v1392
        %v1577 = vpack.c.bf16 %v1401, %v1393
        %v1578 = vpack.c.bf16 %v1402, %v1394
        %v1579 = vpack.c.bf16 %v1403, %v1395
        %v1580 = vpack.c.bf16 %v1404, %v1396
        %v1581 = vpack.c.bf16 %v1405, %v1397
        %v1582 = vpack.c.bf16 %v1414, %v1406
        %v1583 = vpack.c.bf16 %v1415, %v1407
        %v1584 = vpack.c.bf16 %v1416, %v1408
        %v1585 = vpack.c.bf16 %v1417, %v1409
        %v1586 = vpack.c.bf16 %v1418, %v1410
        %v1587 = vpack.c.bf16 %v1419, %v1411
        %v1588 = vpack.c.bf16 %v1420, %v1412
        %v1589 = vpack.c.bf16 %v1421, %v1413
        %v1590 = vpack.c.bf16 %v1430, %v1422
        %v1591 = vpack.c.bf16 %v1431, %v1423
        %v1592 = vpack.c.bf16 %v1432, %v1424
        %v1593 = vpack.c.bf16 %v1433, %v1425
        %v1594 = vpack.c.bf16 %v1434, %v1426
        %v1595 = vpack.c.bf16 %v1435, %v1427
        %v1596 = vpack.c.bf16 %v1436, %v1428
        %v1597 = vpack.c.bf16 %v1437, %v1429
        %v1598 = vpack.c.bf16 %v1446, %v1438
        %v1599 = vpack.c.bf16 %v1447, %v1439
        %v1600 = vpack.c.bf16 %v1448, %v1440
        %v1601 = vpack.c.bf16 %v1449, %v1441
        %v1602 = vpack.c.bf16 %v1450, %v1442
        %v1603 = vpack.c.bf16 %v1451, %v1443
        %v1604 = vpack.c.bf16 %v1452, %v1444
        %v1605 = vpack.c.bf16 %v1453, %v1445
        %v1606 = vpack.c.bf16 %v1462, %v1454
        %v1607 = vpack.c.bf16 %v1463, %v1455
        %v1608 = vpack.c.bf16 %v1464, %v1456
        %v1609 = vpack.c.bf16 %v1465, %v1457
        %v1610 = vpack.c.bf16 %v1466, %v1458
        %v1611 = vpack.c.bf16 %v1467, %v1459
        %v1612 = vpack.c.bf16 %v1468, %v1460
        %v1613 = vpack.c.bf16 %v1469, %v1461
        %v1614 = vpack.c.bf16 %v1478, %v1470
        %v1615 = vpack.c.bf16 %v1479, %v1471
        %v1616 = vpack.c.bf16 %v1480, %v1472
        %v1617 = vpack.c.bf16 %v1481, %v1473
        %v1618 = vpack.c.bf16 %v1482, %v1474
        %v1619 = vpack.c.bf16 %v1483, %v1475
        %v1620 = vpack.c.bf16 %v1484, %v1476
        %v1621 = vpack.c.bf16 %v1485, %v1477
        %v1622 = vpack.c.bf16 %v1494, %v1486
        %v1623 = vpack.c.bf16 %v1495, %v1487
        %v1624 = vpack.c.bf16 %v1496, %v1488
        %v1625 = vpack.c.bf16 %v1497, %v1489
        %v1626 = vpack.c.bf16 %v1498, %v1490
        %v1627 = vpack.c.bf16 %v1499, %v1491
        %v1628 = vpack.c.bf16 %v1500, %v1492
        %v1629 = vpack.c.bf16 %v1501, %v1493
        %v1630 = vld [vmem:[#allocation5] sm:$0xff]
        %v1631 = vld [vmem:[#allocation5 + $0x8] sm:$0xff]
        %v1632 = vld [vmem:[#allocation5 + $0x10] sm:$0xff]
        %v1633 = vld [vmem:[#allocation5 + $0x18] sm:$0xff]
        %v1634 = vld [vmem:[#allocation5 + $0x20] sm:$0xff]
        %v1635 = vld [vmem:[#allocation5 + $0x28] sm:$0xff]
        %v1636 = vld [vmem:[#allocation5 + $0x30] sm:$0xff]
        %v1637 = vld [vmem:[#allocation5 + $0x38] sm:$0xff]
        %v1638 = vld [vmem:[#allocation5 + $0x40] sm:$0xff]
        %v1639 = vld [vmem:[#allocation5 + $0x48] sm:$0xff]
        %v1640 = vld [vmem:[#allocation5 + $0x50] sm:$0xff]
        %v1641 = vld [vmem:[#allocation5 + $0x58] sm:$0xff]
        %v1642 = vld [vmem:[#allocation5 + $0x60] sm:$0xff]
        %v1643 = vld [vmem:[#allocation5 + $0x68] sm:$0xff]
        %v1644 = vld [vmem:[#allocation5 + $0x70] sm:$0xff]
        %v1645 = vld [vmem:[#allocation5 + $0x78] sm:$0xff]
        %v1646 = vld [vmem:[#allocation5 + $0x80] sm:$0xff]
        %v1647 = vld [vmem:[#allocation5 + $0x88] sm:$0xff]
        %v1648 = vld [vmem:[#allocation5 + $0x90] sm:$0xff]
        %v1649 = vld [vmem:[#allocation5 + $0x98] sm:$0xff]
        %v1650 = vld [vmem:[#allocation5 + $0xa0] sm:$0xff]
        %v1651 = vld [vmem:[#allocation5 + $0xa8] sm:$0xff]
        %v1652 = vld [vmem:[#allocation5 + $0xb0] sm:$0xff]
        %v1653 = vld [vmem:[#allocation5 + $0xb8] sm:$0xff]
        %v1654 = vld [vmem:[#allocation5 + $0xc0] sm:$0xff]
        %v1655 = vld [vmem:[#allocation5 + $0xc8] sm:$0xff]
        %v1656 = vld [vmem:[#allocation5 + $0xd0] sm:$0xff]
        %v1657 = vld [vmem:[#allocation5 + $0xd8] sm:$0xff]
        %v1658 = vld [vmem:[#allocation5 + $0xe0] sm:$0xff]
        %v1659 = vld [vmem:[#allocation5 + $0xe8] sm:$0xff]
        %v1660 = vld [vmem:[#allocation5 + $0xf0] sm:$0xff]
        %v1661 = vld [vmem:[#allocation5 + $0xf8] sm:$0xff]
        %v1662 = vld [vmem:[#allocation5 + $0x100] sm:$0xff]
        %v1663 = vld [vmem:[#allocation5 + $0x108] sm:$0xff]
        %v1664 = vld [vmem:[#allocation5 + $0x110] sm:$0xff]
        %v1665 = vld [vmem:[#allocation5 + $0x118] sm:$0xff]
        %v1666 = vld [vmem:[#allocation5 + $0x120] sm:$0xff]
        %v1667 = vld [vmem:[#allocation5 + $0x128] sm:$0xff]
        %v1668 = vld [vmem:[#allocation5 + $0x130] sm:$0xff]
        %v1669 = vld [vmem:[#allocation5 + $0x138] sm:$0xff]
        %v1670 = vld [vmem:[#allocation5 + $0x140] sm:$0xff]
        %v1671 = vld [vmem:[#allocation5 + $0x148] sm:$0xff]
        %v1672 = vld [vmem:[#allocation5 + $0x150] sm:$0xff]
        %v1673 = vld [vmem:[#allocation5 + $0x158] sm:$0xff]
        %v1674 = vld [vmem:[#allocation5 + $0x160] sm:$0xff]
        %v1675 = vld [vmem:[#allocation5 + $0x168] sm:$0xff]
        %v1676 = vld [vmem:[#allocation5 + $0x170] sm:$0xff]
        %v1677 = vld [vmem:[#allocation5 + $0x178] sm:$0xff]
        %v1678 = vld [vmem:[#allocation5 + $0x180] sm:$0xff]
        %v1679 = vld [vmem:[#allocation5 + $0x188] sm:$0xff]
        %v1680 = vld [vmem:[#allocation5 + $0x190] sm:$0xff]
        %v1681 = vld [vmem:[#allocation5 + $0x198] sm:$0xff]
        %v1682 = vld [vmem:[#allocation5 + $0x1a0] sm:$0xff]
        %v1683 = vld [vmem:[#allocation5 + $0x1a8] sm:$0xff]
        %v1684 = vld [vmem:[#allocation5 + $0x1b0] sm:$0xff]
        %v1685 = vld [vmem:[#allocation5 + $0x1b8] sm:$0xff]
        %v1686 = vld [vmem:[#allocation5 + $0x1c0] sm:$0xff]
        %v1687 = vld [vmem:[#allocation5 + $0x1c8] sm:$0xff]
        %v1688 = vld [vmem:[#allocation5 + $0x1d0] sm:$0xff]
        %v1689 = vld [vmem:[#allocation5 + $0x1d8] sm:$0xff]
        %v1690 = vld [vmem:[#allocation5 + $0x1e0] sm:$0xff]
        %v1691 = vld [vmem:[#allocation5 + $0x1e8] sm:$0xff]
        %v1692 = vld [vmem:[#allocation5 + $0x1f0] sm:$0xff]
        %v1693 = vld [vmem:[#allocation5 + $0x1f8] sm:$0xff]
        %v1694 = vld [vmem:[#allocation5 + $0x200] sm:$0xff]
        %v1695 = vld [vmem:[#allocation5 + $0x208] sm:$0xff]
        %v1696 = vld [vmem:[#allocation5 + $0x210] sm:$0xff]
        %v1697 = vld [vmem:[#allocation5 + $0x218] sm:$0xff]
        %v1698 = vld [vmem:[#allocation5 + $0x220] sm:$0xff]
        %v1699 = vld [vmem:[#allocation5 + $0x228] sm:$0xff]
        %v1700 = vld [vmem:[#allocation5 + $0x230] sm:$0xff]
        %v1701 = vld [vmem:[#allocation5 + $0x238] sm:$0xff]
        %v1702 = vld [vmem:[#allocation5 + $0x240] sm:$0xff]
        %v1703 = vld [vmem:[#allocation5 + $0x248] sm:$0xff]
        %v1704 = vld [vmem:[#allocation5 + $0x250] sm:$0xff]
        %v1705 = vld [vmem:[#allocation5 + $0x258] sm:$0xff]
        %v1706 = vld [vmem:[#allocation5 + $0x260] sm:$0xff]
        %v1707 = vld [vmem:[#allocation5 + $0x268] sm:$0xff]
        %v1708 = vld [vmem:[#allocation5 + $0x270] sm:$0xff]
        %v1709 = vld [vmem:[#allocation5 + $0x278] sm:$0xff]
        %v1710 = vld [vmem:[#allocation5 + $0x280] sm:$0xff]
        %v1711 = vld [vmem:[#allocation5 + $0x288] sm:$0xff]
        %v1712 = vld [vmem:[#allocation5 + $0x290] sm:$0xff]
        %v1713 = vld [vmem:[#allocation5 + $0x298] sm:$0xff]
        %v1714 = vld [vmem:[#allocation5 + $0x2a0] sm:$0xff]
        %v1715 = vld [vmem:[#allocation5 + $0x2a8] sm:$0xff]
        %v1716 = vld [vmem:[#allocation5 + $0x2b0] sm:$0xff]
        %v1717 = vld [vmem:[#allocation5 + $0x2b8] sm:$0xff]
        %v1718 = vld [vmem:[#allocation5 + $0x2c0] sm:$0xff]
        %v1719 = vld [vmem:[#allocation5 + $0x2c8] sm:$0xff]
        %v1720 = vld [vmem:[#allocation5 + $0x2d0] sm:$0xff]
        %v1721 = vld [vmem:[#allocation5 + $0x2d8] sm:$0xff]
        %v1722 = vld [vmem:[#allocation5 + $0x2e0] sm:$0xff]
        %v1723 = vld [vmem:[#allocation5 + $0x2e8] sm:$0xff]
        %v1724 = vld [vmem:[#allocation5 + $0x2f0] sm:$0xff]
        %v1725 = vld [vmem:[#allocation5 + $0x2f8] sm:$0xff]
        %v1726 = vld [vmem:[#allocation5 + $0x300] sm:$0xff]
        %v1727 = vld [vmem:[#allocation5 + $0x308] sm:$0xff]
        %v1728 = vld [vmem:[#allocation5 + $0x310] sm:$0xff]
        %v1729 = vld [vmem:[#allocation5 + $0x318] sm:$0xff]
        %v1730 = vld [vmem:[#allocation5 + $0x320] sm:$0xff]
        %v1731 = vld [vmem:[#allocation5 + $0x328] sm:$0xff]
        %v1732 = vld [vmem:[#allocation5 + $0x330] sm:$0xff]
        %v1733 = vld [vmem:[#allocation5 + $0x338] sm:$0xff]
        %v1734 = vld [vmem:[#allocation5 + $0x340] sm:$0xff]
        %v1735 = vld [vmem:[#allocation5 + $0x348] sm:$0xff]
        %v1736 = vld [vmem:[#allocation5 + $0x350] sm:$0xff]
        %v1737 = vld [vmem:[#allocation5 + $0x358] sm:$0xff]
        %v1738 = vld [vmem:[#allocation5 + $0x360] sm:$0xff]
        %v1739 = vld [vmem:[#allocation5 + $0x368] sm:$0xff]
        %v1740 = vld [vmem:[#allocation5 + $0x370] sm:$0xff]
        %v1741 = vld [vmem:[#allocation5 + $0x378] sm:$0xff]
        %v1742 = vld [vmem:[#allocation5 + $0x380] sm:$0xff]
        %v1743 = vld [vmem:[#allocation5 + $0x388] sm:$0xff]
        %v1744 = vld [vmem:[#allocation5 + $0x390] sm:$0xff]
        %v1745 = vld [vmem:[#allocation5 + $0x398] sm:$0xff]
        %v1746 = vld [vmem:[#allocation5 + $0x3a0] sm:$0xff]
        %v1747 = vld [vmem:[#allocation5 + $0x3a8] sm:$0xff]
        %v1748 = vld [vmem:[#allocation5 + $0x3b0] sm:$0xff]
        %v1749 = vld [vmem:[#allocation5 + $0x3b8] sm:$0xff]
        %v1750 = vld [vmem:[#allocation5 + $0x3c0] sm:$0xff]
        %v1751 = vld [vmem:[#allocation5 + $0x3c8] sm:$0xff]
        %v1752 = vld [vmem:[#allocation5 + $0x3d0] sm:$0xff]
        %v1753 = vld [vmem:[#allocation5 + $0x3d8] sm:$0xff]
        %v1754 = vld [vmem:[#allocation5 + $0x3e0] sm:$0xff]
        %v1755 = vld [vmem:[#allocation5 + $0x3e8] sm:$0xff]
        %v1756 = vld [vmem:[#allocation5 + $0x3f0] sm:$0xff]
        %v1757 = vld [vmem:[#allocation5 + $0x3f8] sm:$0xff]
        %v1758 = vld [vmem:[#allocation5 + $0x400] sm:$0xff]
        %v1759 = vld [vmem:[#allocation5 + $0x408] sm:$0xff]
        %v1760 = vld [vmem:[#allocation5 + $0x410] sm:$0xff]
        %v1761 = vld [vmem:[#allocation5 + $0x418] sm:$0xff]
        %v1762 = vld [vmem:[#allocation5 + $0x420] sm:$0xff]
        %v1763 = vld [vmem:[#allocation5 + $0x428] sm:$0xff]
        %v1764 = vld [vmem:[#allocation5 + $0x430] sm:$0xff]
        %v1765 = vld [vmem:[#allocation5 + $0x438] sm:$0xff]
        %v1766 = vld [vmem:[#allocation5 + $0x440] sm:$0xff]
        %v1767 = vld [vmem:[#allocation5 + $0x448] sm:$0xff]
        %v1768 = vld [vmem:[#allocation5 + $0x450] sm:$0xff]
        %v1769 = vld [vmem:[#allocation5 + $0x458] sm:$0xff]
        %v1770 = vld [vmem:[#allocation5 + $0x460] sm:$0xff]
        %v1771 = vld [vmem:[#allocation5 + $0x468] sm:$0xff]
        %v1772 = vld [vmem:[#allocation5 + $0x470] sm:$0xff]
        %v1773 = vld [vmem:[#allocation5 + $0x478] sm:$0xff]
        %v1774 = vld [vmem:[#allocation5 + $0x480] sm:$0xff]
        %v1775 = vld [vmem:[#allocation5 + $0x488] sm:$0xff]
        %v1776 = vld [vmem:[#allocation5 + $0x490] sm:$0xff]
        %v1777 = vld [vmem:[#allocation5 + $0x498] sm:$0xff]
        %v1778 = vld [vmem:[#allocation5 + $0x4a0] sm:$0xff]
        %v1779 = vld [vmem:[#allocation5 + $0x4a8] sm:$0xff]
        %v1780 = vld [vmem:[#allocation5 + $0x4b0] sm:$0xff]
        %v1781 = vld [vmem:[#allocation5 + $0x4b8] sm:$0xff]
        %v1782 = vld [vmem:[#allocation5 + $0x4c0] sm:$0xff]
        %v1783 = vld [vmem:[#allocation5 + $0x4c8] sm:$0xff]
        %v1784 = vld [vmem:[#allocation5 + $0x4d0] sm:$0xff]
        %v1785 = vld [vmem:[#allocation5 + $0x4d8] sm:$0xff]
        %v1786 = vld [vmem:[#allocation5 + $0x4e0] sm:$0xff]
        %v1787 = vld [vmem:[#allocation5 + $0x4e8] sm:$0xff]
        %v1788 = vld [vmem:[#allocation5 + $0x4f0] sm:$0xff]
        %v1789 = vld [vmem:[#allocation5 + $0x4f8] sm:$0xff]
        %v1790 = vld [vmem:[#allocation5 + $0x500] sm:$0xff]
        %v1791 = vld [vmem:[#allocation5 + $0x508] sm:$0xff]
        %v1792 = vld [vmem:[#allocation5 + $0x510] sm:$0xff]
        %v1793 = vld [vmem:[#allocation5 + $0x518] sm:$0xff]
        %v1794 = vld [vmem:[#allocation5 + $0x520] sm:$0xff]
        %v1795 = vld [vmem:[#allocation5 + $0x528] sm:$0xff]
        %v1796 = vld [vmem:[#allocation5 + $0x530] sm:$0xff]
        %v1797 = vld [vmem:[#allocation5 + $0x538] sm:$0xff]
        %v1798 = vld [vmem:[#allocation5 + $0x540] sm:$0xff]
        %v1799 = vld [vmem:[#allocation5 + $0x548] sm:$0xff]
        %v1800 = vld [vmem:[#allocation5 + $0x550] sm:$0xff]
        %v1801 = vld [vmem:[#allocation5 + $0x558] sm:$0xff]
        %v1802 = vld [vmem:[#allocation5 + $0x560] sm:$0xff]
        %v1803 = vld [vmem:[#allocation5 + $0x568] sm:$0xff]
        %v1804 = vld [vmem:[#allocation5 + $0x570] sm:$0xff]
        %v1805 = vld [vmem:[#allocation5 + $0x578] sm:$0xff]
        %v1806 = vld [vmem:[#allocation5 + $0x580] sm:$0xff]
        %v1807 = vld [vmem:[#allocation5 + $0x588] sm:$0xff]
        %v1808 = vld [vmem:[#allocation5 + $0x590] sm:$0xff]
        %v1809 = vld [vmem:[#allocation5 + $0x598] sm:$0xff]
        %v1810 = vld [vmem:[#allocation5 + $0x5a0] sm:$0xff]
        %v1811 = vld [vmem:[#allocation5 + $0x5a8] sm:$0xff]
        %v1812 = vld [vmem:[#allocation5 + $0x5b0] sm:$0xff]
        %v1813 = vld [vmem:[#allocation5 + $0x5b8] sm:$0xff]
        %v1814 = vld [vmem:[#allocation5 + $0x5c0] sm:$0xff]
        %v1815 = vld [vmem:[#allocation5 + $0x5c8] sm:$0xff]
        %v1816 = vld [vmem:[#allocation5 + $0x5d0] sm:$0xff]
        %v1817 = vld [vmem:[#allocation5 + $0x5d8] sm:$0xff]
        %v1818 = vld [vmem:[#allocation5 + $0x5e0] sm:$0xff]
        %v1819 = vld [vmem:[#allocation5 + $0x5e8] sm:$0xff]
        %v1820 = vld [vmem:[#allocation5 + $0x5f0] sm:$0xff]
        %v1821 = vld [vmem:[#allocation5 + $0x5f8] sm:$0xff]
        %v1822 = vld [vmem:[#allocation5 + $0x600] sm:$0xff]
        %v1823 = vld [vmem:[#allocation5 + $0x608] sm:$0xff]
        %v1824 = vld [vmem:[#allocation5 + $0x610] sm:$0xff]
        %v1825 = vld [vmem:[#allocation5 + $0x618] sm:$0xff]
        %v1826 = vld [vmem:[#allocation5 + $0x620] sm:$0xff]
        %v1827 = vld [vmem:[#allocation5 + $0x628] sm:$0xff]
        %v1828 = vld [vmem:[#allocation5 + $0x630] sm:$0xff]
        %v1829 = vld [vmem:[#allocation5 + $0x638] sm:$0xff]
        %v1830 = vld [vmem:[#allocation5 + $0x640] sm:$0xff]
        %v1831 = vld [vmem:[#allocation5 + $0x648] sm:$0xff]
        %v1832 = vld [vmem:[#allocation5 + $0x650] sm:$0xff]
        %v1833 = vld [vmem:[#allocation5 + $0x658] sm:$0xff]
        %v1834 = vld [vmem:[#allocation5 + $0x660] sm:$0xff]
        %v1835 = vld [vmem:[#allocation5 + $0x668] sm:$0xff]
        %v1836 = vld [vmem:[#allocation5 + $0x670] sm:$0xff]
        %v1837 = vld [vmem:[#allocation5 + $0x678] sm:$0xff]
        %v1838 = vld [vmem:[#allocation5 + $0x680] sm:$0xff]
        %v1839 = vld [vmem:[#allocation5 + $0x688] sm:$0xff]
        %v1840 = vld [vmem:[#allocation5 + $0x690] sm:$0xff]
        %v1841 = vld [vmem:[#allocation5 + $0x698] sm:$0xff]
        %v1842 = vld [vmem:[#allocation5 + $0x6a0] sm:$0xff]
        %v1843 = vld [vmem:[#allocation5 + $0x6a8] sm:$0xff]
        %v1844 = vld [vmem:[#allocation5 + $0x6b0] sm:$0xff]
        %v1845 = vld [vmem:[#allocation5 + $0x6b8] sm:$0xff]
        %v1846 = vld [vmem:[#allocation5 + $0x6c0] sm:$0xff]
        %v1847 = vld [vmem:[#allocation5 + $0x6c8] sm:$0xff]
        %v1848 = vld [vmem:[#allocation5 + $0x6d0] sm:$0xff]
        %v1849 = vld [vmem:[#allocation5 + $0x6d8] sm:$0xff]
        %v1850 = vld [vmem:[#allocation5 + $0x6e0] sm:$0xff]
        %v1851 = vld [vmem:[#allocation5 + $0x6e8] sm:$0xff]
        %v1852 = vld [vmem:[#allocation5 + $0x6f0] sm:$0xff]
        %v1853 = vld [vmem:[#allocation5 + $0x6f8] sm:$0xff]
        %v1854 = vld [vmem:[#allocation5 + $0x700] sm:$0xff]
        %v1855 = vld [vmem:[#allocation5 + $0x708] sm:$0xff]
        %v1856 = vld [vmem:[#allocation5 + $0x710] sm:$0xff]
        %v1857 = vld [vmem:[#allocation5 + $0x718] sm:$0xff]
        %v1858 = vld [vmem:[#allocation5 + $0x720] sm:$0xff]
        %v1859 = vld [vmem:[#allocation5 + $0x728] sm:$0xff]
        %v1860 = vld [vmem:[#allocation5 + $0x730] sm:$0xff]
        %v1861 = vld [vmem:[#allocation5 + $0x738] sm:$0xff]
        %v1862 = vld [vmem:[#allocation5 + $0x740] sm:$0xff]
        %v1863 = vld [vmem:[#allocation5 + $0x748] sm:$0xff]
        %v1864 = vld [vmem:[#allocation5 + $0x750] sm:$0xff]
        %v1865 = vld [vmem:[#allocation5 + $0x758] sm:$0xff]
        %v1866 = vld [vmem:[#allocation5 + $0x760] sm:$0xff]
        %v1867 = vld [vmem:[#allocation5 + $0x768] sm:$0xff]
        %v1868 = vld [vmem:[#allocation5 + $0x770] sm:$0xff]
        %v1869 = vld [vmem:[#allocation5 + $0x778] sm:$0xff]
        %v1870 = vld [vmem:[#allocation5 + $0x780] sm:$0xff]
        %v1871 = vld [vmem:[#allocation5 + $0x788] sm:$0xff]
        %v1872 = vld [vmem:[#allocation5 + $0x790] sm:$0xff]
        %v1873 = vld [vmem:[#allocation5 + $0x798] sm:$0xff]
        %v1874 = vld [vmem:[#allocation5 + $0x7a0] sm:$0xff]
        %v1875 = vld [vmem:[#allocation5 + $0x7a8] sm:$0xff]
        %v1876 = vld [vmem:[#allocation5 + $0x7b0] sm:$0xff]
        %v1877 = vld [vmem:[#allocation5 + $0x7b8] sm:$0xff]
        %v1878 = vld [vmem:[#allocation5 + $0x7c0] sm:$0xff]
        %v1879 = vld [vmem:[#allocation5 + $0x7c8] sm:$0xff]
        %v1880 = vld [vmem:[#allocation5 + $0x7d0] sm:$0xff]
        %v1881 = vld [vmem:[#allocation5 + $0x7d8] sm:$0xff]
        %v1882 = vld [vmem:[#allocation5 + $0x7e0] sm:$0xff]
        %v1883 = vld [vmem:[#allocation5 + $0x7e8] sm:$0xff]
        %v1884 = vld [vmem:[#allocation5 + $0x7f0] sm:$0xff]
        %v1885 = vld [vmem:[#allocation5 + $0x7f8] sm:$0xff]
        %v1886 = vld [vmem:[#allocation7] sm:$0xf]
        %v1888 = vlaneseq
        %v1889 = vshrl.u32 %v1888, 7
        %v1890 = vsub.s32 0, %v1889
        %v1891 = vrot.slane %v1886, %v1890
        %v1892 = vlaneseq
        %v1893 = vshrl.u32 %v1892, 7
        %v1894 = vsub.s32 1, %v1893
        %v1895 = vrot.slane %v1886, %v1894
        %v1896 = vlaneseq
        %v1897 = vshrl.u32 %v1896, 7
        %v1898 = vsub.s32 2, %v1897
        %v1899 = vrot.slane %v1886, %v1898
        %v1900 = vlaneseq
        %v1901 = vshrl.u32 %v1900, 7
        %v1902 = vsub.s32 3, %v1901
        %v1903 = vrot.slane %v1886, %v1902
        %v2164 = vunpack.c.l.b16 %v1630
        %v2165 = vunpack.c.h.b16 %v1630
        %v2166 = vunpack.c.l.b16 %v1631
        %v2167 = vunpack.c.h.b16 %v1631
        %v2168 = vunpack.c.l.b16 %v1632
        %v2169 = vunpack.c.h.b16 %v1632
        %v2170 = vunpack.c.l.b16 %v1633
        %v2171 = vunpack.c.h.b16 %v1633
        %v2172 = vunpack.c.l.b16 %v1634
        %v2173 = vunpack.c.h.b16 %v1634
        %v2174 = vunpack.c.l.b16 %v1635
        %v2175 = vunpack.c.h.b16 %v1635
        %v2176 = vunpack.c.l.b16 %v1636
        %v2177 = vunpack.c.h.b16 %v1636
        %v2178 = vunpack.c.l.b16 %v1637
        %v2179 = vunpack.c.h.b16 %v1637
        %v2180 = vunpack.c.l.b16 %v1638
        %v2181 = vunpack.c.h.b16 %v1638
        %v2182 = vunpack.c.l.b16 %v1639
        %v2183 = vunpack.c.h.b16 %v1639
        %v2184 = vunpack.c.l.b16 %v1640
        %v2185 = vunpack.c.h.b16 %v1640
        %v2186 = vunpack.c.l.b16 %v1641
        %v2187 = vunpack.c.h.b16 %v1641
        %v2188 = vunpack.c.l.b16 %v1642
        %v2189 = vunpack.c.h.b16 %v1642
        %v2190 = vunpack.c.l.b16 %v1643
        %v2191 = vunpack.c.h.b16 %v1643
        %v2192 = vunpack.c.l.b16 %v1644
        %v2193 = vunpack.c.h.b16 %v1644
        %v2194 = vunpack.c.l.b16 %v1645
        %v2195 = vunpack.c.h.b16 %v1645
        %v2196 = vunpack.c.l.b16 %v1646
        %v2197 = vunpack.c.h.b16 %v1646
        %v2198 = vunpack.c.l.b16 %v1647
        %v2199 = vunpack.c.h.b16 %v1647
        %v2200 = vunpack.c.l.b16 %v1648
        %v2201 = vunpack.c.h.b16 %v1648
        %v2202 = vunpack.c.l.b16 %v1649
        %v2203 = vunpack.c.h.b16 %v1649
        %v2204 = vunpack.c.l.b16 %v1650
        %v2205 = vunpack.c.h.b16 %v1650
        %v2206 = vunpack.c.l.b16 %v1651
        %v2207 = vunpack.c.h.b16 %v1651
        %v2208 = vunpack.c.l.b16 %v1652
        %v2209 = vunpack.c.h.b16 %v1652
        %v2210 = vunpack.c.l.b16 %v1653
        %v2211 = vunpack.c.h.b16 %v1653
        %v2212 = vunpack.c.l.b16 %v1654
        %v2213 = vunpack.c.h.b16 %v1654
        %v2214 = vunpack.c.l.b16 %v1655
        %v2215 = vunpack.c.h.b16 %v1655
        %v2216 = vunpack.c.l.b16 %v1656
        %v2217 = vunpack.c.h.b16 %v1656
        %v2218 = vunpack.c.l.b16 %v1657
        %v2219 = vunpack.c.h.b16 %v1657
        %v2220 = vunpack.c.l.b16 %v1658
        %v2221 = vunpack.c.h.b16 %v1658
        %v2222 = vunpack.c.l.b16 %v1659
        %v2223 = vunpack.c.h.b16 %v1659
        %v2224 = vunpack.c.l.b16 %v1660
        %v2225 = vunpack.c.h.b16 %v1660
        %v2226 = vunpack.c.l.b16 %v1661
        %v2227 = vunpack.c.h.b16 %v1661
        %v2228 = vunpack.c.l.b16 %v1662
        %v2229 = vunpack.c.h.b16 %v1662
        %v2230 = vunpack.c.l.b16 %v1663
        %v2231 = vunpack.c.h.b16 %v1663
        %v2232 = vunpack.c.l.b16 %v1664
        %v2233 = vunpack.c.h.b16 %v1664
        %v2234 = vunpack.c.l.b16 %v1665
        %v2235 = vunpack.c.h.b16 %v1665
        %v2236 = vunpack.c.l.b16 %v1666
        %v2237 = vunpack.c.h.b16 %v1666
        %v2238 = vunpack.c.l.b16 %v1667
        %v2239 = vunpack.c.h.b16 %v1667
        %v2240 = vunpack.c.l.b16 %v1668
        %v2241 = vunpack.c.h.b16 %v1668
        %v2242 = vunpack.c.l.b16 %v1669
        %v2243 = vunpack.c.h.b16 %v1669
        %v2244 = vunpack.c.l.b16 %v1670
        %v2245 = vunpack.c.h.b16 %v1670
        %v2246 = vunpack.c.l.b16 %v1671
        %v2247 = vunpack.c.h.b16 %v1671
        %v2248 = vunpack.c.l.b16 %v1672
        %v2249 = vunpack.c.h.b16 %v1672
        %v2250 = vunpack.c.l.b16 %v1673
        %v2251 = vunpack.c.h.b16 %v1673
        %v2252 = vunpack.c.l.b16 %v1674
        %v2253 = vunpack.c.h.b16 %v1674
        %v2254 = vunpack.c.l.b16 %v1675
        %v2255 = vunpack.c.h.b16 %v1675
        %v2256 = vunpack.c.l.b16 %v1676
        %v2257 = vunpack.c.h.b16 %v1676
        %v2258 = vunpack.c.l.b16 %v1677
        %v2259 = vunpack.c.h.b16 %v1677
        %v2260 = vunpack.c.l.b16 %v1678
        %v2261 = vunpack.c.h.b16 %v1678
        %v2262 = vunpack.c.l.b16 %v1679
        %v2263 = vunpack.c.h.b16 %v1679
        %v2264 = vunpack.c.l.b16 %v1680
        %v2265 = vunpack.c.h.b16 %v1680
        %v2266 = vunpack.c.l.b16 %v1681
        %v2267 = vunpack.c.h.b16 %v1681
        %v2268 = vunpack.c.l.b16 %v1682
        %v2269 = vunpack.c.h.b16 %v1682
        %v2270 = vunpack.c.l.b16 %v1683
        %v2271 = vunpack.c.h.b16 %v1683
        %v2272 = vunpack.c.l.b16 %v1684
        %v2273 = vunpack.c.h.b16 %v1684
        %v2274 = vunpack.c.l.b16 %v1685
        %v2275 = vunpack.c.h.b16 %v1685
        %v2276 = vunpack.c.l.b16 %v1686
        %v2277 = vunpack.c.h.b16 %v1686
        %v2278 = vunpack.c.l.b16 %v1687
        %v2279 = vunpack.c.h.b16 %v1687
        %v2280 = vunpack.c.l.b16 %v1688
        %v2281 = vunpack.c.h.b16 %v1688
        %v2282 = vunpack.c.l.b16 %v1689
        %v2283 = vunpack.c.h.b16 %v1689
        %v2284 = vunpack.c.l.b16 %v1690
        %v2285 = vunpack.c.h.b16 %v1690
        %v2286 = vunpack.c.l.b16 %v1691
        %v2287 = vunpack.c.h.b16 %v1691
        %v2288 = vunpack.c.l.b16 %v1692
        %v2289 = vunpack.c.h.b16 %v1692
        %v2290 = vunpack.c.l.b16 %v1693
        %v2291 = vunpack.c.h.b16 %v1693
        %v2292 = vunpack.c.l.b16 %v1694
        %v2293 = vunpack.c.h.b16 %v1694
        %v2294 = vunpack.c.l.b16 %v1695
        %v2295 = vunpack.c.h.b16 %v1695
        %v2296 = vunpack.c.l.b16 %v1696
        %v2297 = vunpack.c.h.b16 %v1696
        %v2298 = vunpack.c.l.b16 %v1697
        %v2299 = vunpack.c.h.b16 %v1697
        %v2300 = vunpack.c.l.b16 %v1698
        %v2301 = vunpack.c.h.b16 %v1698
        %v2302 = vunpack.c.l.b16 %v1699
        %v2303 = vunpack.c.h.b16 %v1699
        %v2304 = vunpack.c.l.b16 %v1700
        %v2305 = vunpack.c.h.b16 %v1700
        %v2306 = vunpack.c.l.b16 %v1701
        %v2307 = vunpack.c.h.b16 %v1701
        %v2308 = vunpack.c.l.b16 %v1702
        %v2309 = vunpack.c.h.b16 %v1702
        %v2310 = vunpack.c.l.b16 %v1703
        %v2311 = vunpack.c.h.b16 %v1703
        %v2312 = vunpack.c.l.b16 %v1704
        %v2313 = vunpack.c.h.b16 %v1704
        %v2314 = vunpack.c.l.b16 %v1705
        %v2315 = vunpack.c.h.b16 %v1705
        %v2316 = vunpack.c.l.b16 %v1706
        %v2317 = vunpack.c.h.b16 %v1706
        %v2318 = vunpack.c.l.b16 %v1707
        %v2319 = vunpack.c.h.b16 %v1707
        %v2320 = vunpack.c.l.b16 %v1708
        %v2321 = vunpack.c.h.b16 %v1708
        %v2322 = vunpack.c.l.b16 %v1709
        %v2323 = vunpack.c.h.b16 %v1709
        %v2324 = vunpack.c.l.b16 %v1710
        %v2325 = vunpack.c.h.b16 %v1710
        %v2326 = vunpack.c.l.b16 %v1711
        %v2327 = vunpack.c.h.b16 %v1711
        %v2328 = vunpack.c.l.b16 %v1712
        %v2329 = vunpack.c.h.b16 %v1712
        %v2330 = vunpack.c.l.b16 %v1713
        %v2331 = vunpack.c.h.b16 %v1713
        %v2332 = vunpack.c.l.b16 %v1714
        %v2333 = vunpack.c.h.b16 %v1714
        %v2334 = vunpack.c.l.b16 %v1715
        %v2335 = vunpack.c.h.b16 %v1715
        %v2336 = vunpack.c.l.b16 %v1716
        %v2337 = vunpack.c.h.b16 %v1716
        %v2338 = vunpack.c.l.b16 %v1717
        %v2339 = vunpack.c.h.b16 %v1717
        %v2340 = vunpack.c.l.b16 %v1718
        %v2341 = vunpack.c.h.b16 %v1718
        %v2342 = vunpack.c.l.b16 %v1719
        %v2343 = vunpack.c.h.b16 %v1719
        %v2344 = vunpack.c.l.b16 %v1720
        %v2345 = vunpack.c.h.b16 %v1720
        %v2346 = vunpack.c.l.b16 %v1721
        %v2347 = vunpack.c.h.b16 %v1721
        %v2348 = vunpack.c.l.b16 %v1722
        %v2349 = vunpack.c.h.b16 %v1722
        %v2350 = vunpack.c.l.b16 %v1723
        %v2351 = vunpack.c.h.b16 %v1723
        %v2352 = vunpack.c.l.b16 %v1724
        %v2353 = vunpack.c.h.b16 %v1724
        %v2354 = vunpack.c.l.b16 %v1725
        %v2355 = vunpack.c.h.b16 %v1725
        %v2356 = vunpack.c.l.b16 %v1726
        %v2357 = vunpack.c.h.b16 %v1726
        %v2358 = vunpack.c.l.b16 %v1727
        %v2359 = vunpack.c.h.b16 %v1727
        %v2360 = vunpack.c.l.b16 %v1728
        %v2361 = vunpack.c.h.b16 %v1728
        %v2362 = vunpack.c.l.b16 %v1729
        %v2363 = vunpack.c.h.b16 %v1729
        %v2364 = vunpack.c.l.b16 %v1730
        %v2365 = vunpack.c.h.b16 %v1730
        %v2366 = vunpack.c.l.b16 %v1731
        %v2367 = vunpack.c.h.b16 %v1731
        %v2368 = vunpack.c.l.b16 %v1732
        %v2369 = vunpack.c.h.b16 %v1732
        %v2370 = vunpack.c.l.b16 %v1733
        %v2371 = vunpack.c.h.b16 %v1733
        %v2372 = vunpack.c.l.b16 %v1734
        %v2373 = vunpack.c.h.b16 %v1734
        %v2374 = vunpack.c.l.b16 %v1735
        %v2375 = vunpack.c.h.b16 %v1735
        %v2376 = vunpack.c.l.b16 %v1736
        %v2377 = vunpack.c.h.b16 %v1736
        %v2378 = vunpack.c.l.b16 %v1737
        %v2379 = vunpack.c.h.b16 %v1737
        %v2380 = vunpack.c.l.b16 %v1738
        %v2381 = vunpack.c.h.b16 %v1738
        %v2382 = vunpack.c.l.b16 %v1739
        %v2383 = vunpack.c.h.b16 %v1739
        %v2384 = vunpack.c.l.b16 %v1740
        %v2385 = vunpack.c.h.b16 %v1740
        %v2386 = vunpack.c.l.b16 %v1741
        %v2387 = vunpack.c.h.b16 %v1741
        %v2388 = vunpack.c.l.b16 %v1742
        %v2389 = vunpack.c.h.b16 %v1742
        %v2390 = vunpack.c.l.b16 %v1743
        %v2391 = vunpack.c.h.b16 %v1743
        %v2392 = vunpack.c.l.b16 %v1744
        %v2393 = vunpack.c.h.b16 %v1744
        %v2394 = vunpack.c.l.b16 %v1745
        %v2395 = vunpack.c.h.b16 %v1745
        %v2396 = vunpack.c.l.b16 %v1746
        %v2397 = vunpack.c.h.b16 %v1746
        %v2398 = vunpack.c.l.b16 %v1747
        %v2399 = vunpack.c.h.b16 %v1747
        %v2400 = vunpack.c.l.b16 %v1748
        %v2401 = vunpack.c.h.b16 %v1748
        %v2402 = vunpack.c.l.b16 %v1749
        %v2403 = vunpack.c.h.b16 %v1749
        %v2404 = vunpack.c.l.b16 %v1750
        %v2405 = vunpack.c.h.b16 %v1750
        %v2406 = vunpack.c.l.b16 %v1751
        %v2407 = vunpack.c.h.b16 %v1751
        %v2408 = vunpack.c.l.b16 %v1752
        %v2409 = vunpack.c.h.b16 %v1752
        %v2410 = vunpack.c.l.b16 %v1753
        %v2411 = vunpack.c.h.b16 %v1753
        %v2412 = vunpack.c.l.b16 %v1754
        %v2413 = vunpack.c.h.b16 %v1754
        %v2414 = vunpack.c.l.b16 %v1755
        %v2415 = vunpack.c.h.b16 %v1755
        %v2416 = vunpack.c.l.b16 %v1756
        %v2417 = vunpack.c.h.b16 %v1756
        %v2418 = vunpack.c.l.b16 %v1757
        %v2419 = vunpack.c.h.b16 %v1757
        %v2420 = vunpack.c.l.b16 %v1758
        %v2421 = vunpack.c.h.b16 %v1758
        %v2422 = vunpack.c.l.b16 %v1759
        %v2423 = vunpack.c.h.b16 %v1759
        %v2424 = vunpack.c.l.b16 %v1760
        %v2425 = vunpack.c.h.b16 %v1760
        %v2426 = vunpack.c.l.b16 %v1761
        %v2427 = vunpack.c.h.b16 %v1761
        %v2428 = vunpack.c.l.b16 %v1762
        %v2429 = vunpack.c.h.b16 %v1762
        %v2430 = vunpack.c.l.b16 %v1763
        %v2431 = vunpack.c.h.b16 %v1763
        %v2432 = vunpack.c.l.b16 %v1764
        %v2433 = vunpack.c.h.b16 %v1764
        %v2434 = vunpack.c.l.b16 %v1765
        %v2435 = vunpack.c.h.b16 %v1765
        %v2436 = vunpack.c.l.b16 %v1766
        %v2437 = vunpack.c.h.b16 %v1766
        %v2438 = vunpack.c.l.b16 %v1767
        %v2439 = vunpack.c.h.b16 %v1767
        %v2440 = vunpack.c.l.b16 %v1768
        %v2441 = vunpack.c.h.b16 %v1768
        %v2442 = vunpack.c.l.b16 %v1769
        %v2443 = vunpack.c.h.b16 %v1769
        %v2444 = vunpack.c.l.b16 %v1770
        %v2445 = vunpack.c.h.b16 %v1770
        %v2446 = vunpack.c.l.b16 %v1771
        %v2447 = vunpack.c.h.b16 %v1771
        %v2448 = vunpack.c.l.b16 %v1772
        %v2449 = vunpack.c.h.b16 %v1772
        %v2450 = vunpack.c.l.b16 %v1773
        %v2451 = vunpack.c.h.b16 %v1773
        %v2452 = vunpack.c.l.b16 %v1774
        %v2453 = vunpack.c.h.b16 %v1774
        %v2454 = vunpack.c.l.b16 %v1775
        %v2455 = vunpack.c.h.b16 %v1775
        %v2456 = vunpack.c.l.b16 %v1776
        %v2457 = vunpack.c.h.b16 %v1776
        %v2458 = vunpack.c.l.b16 %v1777
        %v2459 = vunpack.c.h.b16 %v1777
        %v2460 = vunpack.c.l.b16 %v1778
        %v2461 = vunpack.c.h.b16 %v1778
        %v2462 = vunpack.c.l.b16 %v1779
        %v2463 = vunpack.c.h.b16 %v1779
        %v2464 = vunpack.c.l.b16 %v1780
        %v2465 = vunpack.c.h.b16 %v1780
        %v2466 = vunpack.c.l.b16 %v1781
        %v2467 = vunpack.c.h.b16 %v1781
        %v2468 = vunpack.c.l.b16 %v1782
        %v2469 = vunpack.c.h.b16 %v1782
        %v2470 = vunpack.c.l.b16 %v1783
        %v2471 = vunpack.c.h.b16 %v1783
        %v2472 = vunpack.c.l.b16 %v1784
        %v2473 = vunpack.c.h.b16 %v1784
        %v2474 = vunpack.c.l.b16 %v1785
        %v2475 = vunpack.c.h.b16 %v1785
        %v2476 = vunpack.c.l.b16 %v1786
        %v2477 = vunpack.c.h.b16 %v1786
        %v2478 = vunpack.c.l.b16 %v1787
        %v2479 = vunpack.c.h.b16 %v1787
        %v2480 = vunpack.c.l.b16 %v1788
        %v2481 = vunpack.c.h.b16 %v1788
        %v2482 = vunpack.c.l.b16 %v1789
        %v2483 = vunpack.c.h.b16 %v1789
        %v2484 = vunpack.c.l.b16 %v1790
        %v2485 = vunpack.c.h.b16 %v1790
        %v2486 = vunpack.c.l.b16 %v1791
        %v2487 = vunpack.c.h.b16 %v1791
        %v2488 = vunpack.c.l.b16 %v1792
        %v2489 = vunpack.c.h.b16 %v1792
        %v2490 = vunpack.c.l.b16 %v1793
        %v2491 = vunpack.c.h.b16 %v1793
        %v2492 = vunpack.c.l.b16 %v1794
        %v2493 = vunpack.c.h.b16 %v1794
        %v2494 = vunpack.c.l.b16 %v1795
        %v2495 = vunpack.c.h.b16 %v1795
        %v2496 = vunpack.c.l.b16 %v1796
        %v2497 = vunpack.c.h.b16 %v1796
        %v2498 = vunpack.c.l.b16 %v1797
        %v2499 = vunpack.c.h.b16 %v1797
        %v2500 = vunpack.c.l.b16 %v1798
        %v2501 = vunpack.c.h.b16 %v1798
        %v2502 = vunpack.c.l.b16 %v1799
        %v2503 = vunpack.c.h.b16 %v1799
        %v2504 = vunpack.c.l.b16 %v1800
        %v2505 = vunpack.c.h.b16 %v1800
        %v2506 = vunpack.c.l.b16 %v1801
        %v2507 = vunpack.c.h.b16 %v1801
        %v2508 = vunpack.c.l.b16 %v1802
        %v2509 = vunpack.c.h.b16 %v1802
        %v2510 = vunpack.c.l.b16 %v1803
        %v2511 = vunpack.c.h.b16 %v1803
        %v2512 = vunpack.c.l.b16 %v1804
        %v2513 = vunpack.c.h.b16 %v1804
        %v2514 = vunpack.c.l.b16 %v1805
        %v2515 = vunpack.c.h.b16 %v1805
        %v2516 = vunpack.c.l.b16 %v1806
        %v2517 = vunpack.c.h.b16 %v1806
        %v2518 = vunpack.c.l.b16 %v1807
        %v2519 = vunpack.c.h.b16 %v1807
        %v2520 = vunpack.c.l.b16 %v1808
        %v2521 = vunpack.c.h.b16 %v1808
        %v2522 = vunpack.c.l.b16 %v1809
        %v2523 = vunpack.c.h.b16 %v1809
        %v2524 = vunpack.c.l.b16 %v1810
        %v2525 = vunpack.c.h.b16 %v1810
        %v2526 = vunpack.c.l.b16 %v1811
        %v2527 = vunpack.c.h.b16 %v1811
        %v2528 = vunpack.c.l.b16 %v1812
        %v2529 = vunpack.c.h.b16 %v1812
        %v2530 = vunpack.c.l.b16 %v1813
        %v2531 = vunpack.c.h.b16 %v1813
        %v2532 = vunpack.c.l.b16 %v1814
        %v2533 = vunpack.c.h.b16 %v1814
        %v2534 = vunpack.c.l.b16 %v1815
        %v2535 = vunpack.c.h.b16 %v1815
        %v2536 = vunpack.c.l.b16 %v1816
        %v2537 = vunpack.c.h.b16 %v1816
        %v2538 = vunpack.c.l.b16 %v1817
        %v2539 = vunpack.c.h.b16 %v1817
        %v2540 = vunpack.c.l.b16 %v1818
        %v2541 = vunpack.c.h.b16 %v1818
        %v2542 = vunpack.c.l.b16 %v1819
        %v2543 = vunpack.c.h.b16 %v1819
        %v2544 = vunpack.c.l.b16 %v1820
        %v2545 = vunpack.c.h.b16 %v1820
        %v2546 = vunpack.c.l.b16 %v1821
        %v2547 = vunpack.c.h.b16 %v1821
        %v2548 = vunpack.c.l.b16 %v1822
        %v2549 = vunpack.c.h.b16 %v1822
        %v2550 = vunpack.c.l.b16 %v1823
        %v2551 = vunpack.c.h.b16 %v1823
        %v2552 = vunpack.c.l.b16 %v1824
        %v2553 = vunpack.c.h.b16 %v1824
        %v2554 = vunpack.c.l.b16 %v1825
        %v2555 = vunpack.c.h.b16 %v1825
        %v2556 = vunpack.c.l.b16 %v1826
        %v2557 = vunpack.c.h.b16 %v1826
        %v2558 = vunpack.c.l.b16 %v1827
        %v2559 = vunpack.c.h.b16 %v1827
        %v2560 = vunpack.c.l.b16 %v1828
        %v2561 = vunpack.c.h.b16 %v1828
        %v2562 = vunpack.c.l.b16 %v1829
        %v2563 = vunpack.c.h.b16 %v1829
        %v2564 = vunpack.c.l.b16 %v1830
        %v2565 = vunpack.c.h.b16 %v1830
        %v2566 = vunpack.c.l.b16 %v1831
        %v2567 = vunpack.c.h.b16 %v1831
        %v2568 = vunpack.c.l.b16 %v1832
        %v2569 = vunpack.c.h.b16 %v1832
        %v2570 = vunpack.c.l.b16 %v1833
        %v2571 = vunpack.c.h.b16 %v1833
        %v2572 = vunpack.c.l.b16 %v1834
        %v2573 = vunpack.c.h.b16 %v1834
        %v2574 = vunpack.c.l.b16 %v1835
        %v2575 = vunpack.c.h.b16 %v1835
        %v2576 = vunpack.c.l.b16 %v1836
        %v2577 = vunpack.c.h.b16 %v1836
        %v2578 = vunpack.c.l.b16 %v1837
        %v2579 = vunpack.c.h.b16 %v1837
        %v2580 = vunpack.c.l.b16 %v1838
        %v2581 = vunpack.c.h.b16 %v1838
        %v2582 = vunpack.c.l.b16 %v1839
        %v2583 = vunpack.c.h.b16 %v1839
        %v2584 = vunpack.c.l.b16 %v1840
        %v2585 = vunpack.c.h.b16 %v1840
        %v2586 = vunpack.c.l.b16 %v1841
        %v2587 = vunpack.c.h.b16 %v1841
        %v2588 = vunpack.c.l.b16 %v1842
        %v2589 = vunpack.c.h.b16 %v1842
        %v2590 = vunpack.c.l.b16 %v1843
        %v2591 = vunpack.c.h.b16 %v1843
        %v2592 = vunpack.c.l.b16 %v1844
        %v2593 = vunpack.c.h.b16 %v1844
        %v2594 = vunpack.c.l.b16 %v1845
        %v2595 = vunpack.c.h.b16 %v1845
        %v2596 = vunpack.c.l.b16 %v1846
        %v2597 = vunpack.c.h.b16 %v1846
        %v2598 = vunpack.c.l.b16 %v1847
        %v2599 = vunpack.c.h.b16 %v1847
        %v2600 = vunpack.c.l.b16 %v1848
        %v2601 = vunpack.c.h.b16 %v1848
        %v2602 = vunpack.c.l.b16 %v1849
        %v2603 = vunpack.c.h.b16 %v1849
        %v2604 = vunpack.c.l.b16 %v1850
        %v2605 = vunpack.c.h.b16 %v1850
        %v2606 = vunpack.c.l.b16 %v1851
        %v2607 = vunpack.c.h.b16 %v1851
        %v2608 = vunpack.c.l.b16 %v1852
        %v2609 = vunpack.c.h.b16 %v1852
        %v2610 = vunpack.c.l.b16 %v1853
        %v2611 = vunpack.c.h.b16 %v1853
        %v2612 = vunpack.c.l.b16 %v1854
        %v2613 = vunpack.c.h.b16 %v1854
        %v2614 = vunpack.c.l.b16 %v1855
        %v2615 = vunpack.c.h.b16 %v1855
        %v2616 = vunpack.c.l.b16 %v1856
        %v2617 = vunpack.c.h.b16 %v1856
        %v2618 = vunpack.c.l.b16 %v1857
        %v2619 = vunpack.c.h.b16 %v1857
        %v2620 = vunpack.c.l.b16 %v1858
        %v2621 = vunpack.c.h.b16 %v1858
        %v2622 = vunpack.c.l.b16 %v1859
        %v2623 = vunpack.c.h.b16 %v1859
        %v2624 = vunpack.c.l.b16 %v1860
        %v2625 = vunpack.c.h.b16 %v1860
        %v2626 = vunpack.c.l.b16 %v1861
        %v2627 = vunpack.c.h.b16 %v1861
        %v2628 = vunpack.c.l.b16 %v1862
        %v2629 = vunpack.c.h.b16 %v1862
        %v2630 = vunpack.c.l.b16 %v1863
        %v2631 = vunpack.c.h.b16 %v1863
        %v2632 = vunpack.c.l.b16 %v1864
        %v2633 = vunpack.c.h.b16 %v1864
        %v2634 = vunpack.c.l.b16 %v1865
        %v2635 = vunpack.c.h.b16 %v1865
        %v2636 = vunpack.c.l.b16 %v1866
        %v2637 = vunpack.c.h.b16 %v1866
        %v2638 = vunpack.c.l.b16 %v1867
        %v2639 = vunpack.c.h.b16 %v1867
        %v2640 = vunpack.c.l.b16 %v1868
        %v2641 = vunpack.c.h.b16 %v1868
        %v2642 = vunpack.c.l.b16 %v1869
        %v2643 = vunpack.c.h.b16 %v1869
        %v2644 = vunpack.c.l.b16 %v1870
        %v2645 = vunpack.c.h.b16 %v1870
        %v2646 = vunpack.c.l.b16 %v1871
        %v2647 = vunpack.c.h.b16 %v1871
        %v2648 = vunpack.c.l.b16 %v1872
        %v2649 = vunpack.c.h.b16 %v1872
        %v2650 = vunpack.c.l.b16 %v1873
        %v2651 = vunpack.c.h.b16 %v1873
        %v2652 = vunpack.c.l.b16 %v1874
        %v2653 = vunpack.c.h.b16 %v1874
        %v2654 = vunpack.c.l.b16 %v1875
        %v2655 = vunpack.c.h.b16 %v1875
        %v2656 = vunpack.c.l.b16 %v1876
        %v2657 = vunpack.c.h.b16 %v1876
        %v2658 = vunpack.c.l.b16 %v1877
        %v2659 = vunpack.c.h.b16 %v1877
        %v2660 = vunpack.c.l.b16 %v1878
        %v2661 = vunpack.c.h.b16 %v1878
        %v2662 = vunpack.c.l.b16 %v1879
        %v2663 = vunpack.c.h.b16 %v1879
        %v2664 = vunpack.c.l.b16 %v1880
        %v2665 = vunpack.c.h.b16 %v1880
        %v2666 = vunpack.c.l.b16 %v1881
        %v2667 = vunpack.c.h.b16 %v1881
        %v2668 = vunpack.c.l.b16 %v1882
        %v2669 = vunpack.c.h.b16 %v1882
        %v2670 = vunpack.c.l.b16 %v1883
        %v2671 = vunpack.c.h.b16 %v1883
        %v2672 = vunpack.c.l.b16 %v1884
        %v2673 = vunpack.c.h.b16 %v1884
        %v2674 = vunpack.c.l.b16 %v1885
        %v2675 = vunpack.c.h.b16 %v1885
        %v2676 = vpack.c.b16 %v2168, %v2164
        %v2677 = vpack.c.b16 %v2169, %v2165
        %v2678 = vpack.c.b16 %v2170, %v2166
        %v2679 = vpack.c.b16 %v2171, %v2167
        %v2680 = vpack.c.b16 %v2176, %v2172
        %v2681 = vpack.c.b16 %v2177, %v2173
        %v2682 = vpack.c.b16 %v2178, %v2174
        %v2683 = vpack.c.b16 %v2179, %v2175
        %v2684 = vpack.c.b16 %v2184, %v2180
        %v2685 = vpack.c.b16 %v2185, %v2181
        %v2686 = vpack.c.b16 %v2186, %v2182
        %v2687 = vpack.c.b16 %v2187, %v2183
        %v2688 = vpack.c.b16 %v2192, %v2188
        %v2689 = vpack.c.b16 %v2193, %v2189
        %v2690 = vpack.c.b16 %v2194, %v2190
        %v2691 = vpack.c.b16 %v2195, %v2191
        %v2692 = vpack.c.b16 %v2200, %v2196
        %v2693 = vpack.c.b16 %v2201, %v2197
        %v2694 = vpack.c.b16 %v2202, %v2198
        %v2695 = vpack.c.b16 %v2203, %v2199
        %v2696 = vpack.c.b16 %v2208, %v2204
        %v2697 = vpack.c.b16 %v2209, %v2205
        %v2698 = vpack.c.b16 %v2210, %v2206
        %v2699 = vpack.c.b16 %v2211, %v2207
        %v2700 = vpack.c.b16 %v2216, %v2212
        %v2701 = vpack.c.b16 %v2217, %v2213
        %v2702 = vpack.c.b16 %v2218, %v2214
        %v2703 = vpack.c.b16 %v2219, %v2215
        %v2704 = vpack.c.b16 %v2224, %v2220
        %v2705 = vpack.c.b16 %v2225, %v2221
        %v2706 = vpack.c.b16 %v2226, %v2222
        %v2707 = vpack.c.b16 %v2227, %v2223
        %v2708 = vpack.c.b16 %v2232, %v2228
        %v2709 = vpack.c.b16 %v2233, %v2229
        %v2710 = vpack.c.b16 %v2234, %v2230
        %v2711 = vpack.c.b16 %v2235, %v2231
        %v2712 = vpack.c.b16 %v2240, %v2236
        %v2713 = vpack.c.b16 %v2241, %v2237
        %v2714 = vpack.c.b16 %v2242, %v2238
        %v2715 = vpack.c.b16 %v2243, %v2239
        %v2716 = vpack.c.b16 %v2248, %v2244
        %v2717 = vpack.c.b16 %v2249, %v2245
        %v2718 = vpack.c.b16 %v2250, %v2246
        %v2719 = vpack.c.b16 %v2251, %v2247
        %v2720 = vpack.c.b16 %v2256, %v2252
        %v2721 = vpack.c.b16 %v2257, %v2253
        %v2722 = vpack.c.b16 %v2258, %v2254
        %v2723 = vpack.c.b16 %v2259, %v2255
        %v2724 = vpack.c.b16 %v2264, %v2260
        %v2725 = vpack.c.b16 %v2265, %v2261
        %v2726 = vpack.c.b16 %v2266, %v2262
        %v2727 = vpack.c.b16 %v2267, %v2263
        %v2728 = vpack.c.b16 %v2272, %v2268
        %v2729 = vpack.c.b16 %v2273, %v2269
        %v2730 = vpack.c.b16 %v2274, %v2270
        %v2731 = vpack.c.b16 %v2275, %v2271
        %v2732 = vpack.c.b16 %v2280, %v2276
        %v2733 = vpack.c.b16 %v2281, %v2277
        %v2734 = vpack.c.b16 %v2282, %v2278
        %v2735 = vpack.c.b16 %v2283, %v2279
        %v2736 = vpack.c.b16 %v2288, %v2284
        %v2737 = vpack.c.b16 %v2289, %v2285
        %v2738 = vpack.c.b16 %v2290, %v2286
        %v2739 = vpack.c.b16 %v2291, %v2287
        %v2740 = vpack.c.b16 %v2296, %v2292
        %v2741 = vpack.c.b16 %v2297, %v2293
        %v2742 = vpack.c.b16 %v2298, %v2294
        %v2743 = vpack.c.b16 %v2299, %v2295
        %v2744 = vpack.c.b16 %v2304, %v2300
        %v2745 = vpack.c.b16 %v2305, %v2301
        %v2746 = vpack.c.b16 %v2306, %v2302
        %v2747 = vpack.c.b16 %v2307, %v2303
        %v2748 = vpack.c.b16 %v2312, %v2308
        %v2749 = vpack.c.b16 %v2313, %v2309
        %v2750 = vpack.c.b16 %v2314, %v2310
        %v2751 = vpack.c.b16 %v2315, %v2311
        %v2752 = vpack.c.b16 %v2320, %v2316
        %v2753 = vpack.c.b16 %v2321, %v2317
        %v2754 = vpack.c.b16 %v2322, %v2318
        %v2755 = vpack.c.b16 %v2323, %v2319
        %v2756 = vpack.c.b16 %v2328, %v2324
        %v2757 = vpack.c.b16 %v2329, %v2325
        %v2758 = vpack.c.b16 %v2330, %v2326
        %v2759 = vpack.c.b16 %v2331, %v2327
        %v2760 = vpack.c.b16 %v2336, %v2332
        %v2761 = vpack.c.b16 %v2337, %v2333
        %v2762 = vpack.c.b16 %v2338, %v2334
        %v2763 = vpack.c.b16 %v2339, %v2335
        %v2764 = vpack.c.b16 %v2344, %v2340
        %v2765 = vpack.c.b16 %v2345, %v2341
        %v2766 = vpack.c.b16 %v2346, %v2342
        %v2767 = vpack.c.b16 %v2347, %v2343
        %v2768 = vpack.c.b16 %v2352, %v2348
        %v2769 = vpack.c.b16 %v2353, %v2349
        %v2770 = vpack.c.b16 %v2354, %v2350
        %v2771 = vpack.c.b16 %v2355, %v2351
        %v2772 = vpack.c.b16 %v2360, %v2356
        %v2773 = vpack.c.b16 %v2361, %v2357
        %v2774 = vpack.c.b16 %v2362, %v2358
        %v2775 = vpack.c.b16 %v2363, %v2359
        %v2776 = vpack.c.b16 %v2368, %v2364
        %v2777 = vpack.c.b16 %v2369, %v2365
        %v2778 = vpack.c.b16 %v2370, %v2366
        %v2779 = vpack.c.b16 %v2371, %v2367
        %v2780 = vpack.c.b16 %v2376, %v2372
        %v2781 = vpack.c.b16 %v2377, %v2373
        %v2782 = vpack.c.b16 %v2378, %v2374
        %v2783 = vpack.c.b16 %v2379, %v2375
        %v2784 = vpack.c.b16 %v2384, %v2380
        %v2785 = vpack.c.b16 %v2385, %v2381
        %v2786 = vpack.c.b16 %v2386, %v2382
        %v2787 = vpack.c.b16 %v2387, %v2383
        %v2788 = vpack.c.b16 %v2392, %v2388
        %v2789 = vpack.c.b16 %v2393, %v2389
        %v2790 = vpack.c.b16 %v2394, %v2390
        %v2791 = vpack.c.b16 %v2395, %v2391
        %v2792 = vpack.c.b16 %v2400, %v2396
        %v2793 = vpack.c.b16 %v2401, %v2397
        %v2794 = vpack.c.b16 %v2402, %v2398
        %v2795 = vpack.c.b16 %v2403, %v2399
        %v2796 = vpack.c.b16 %v2408, %v2404
        %v2797 = vpack.c.b16 %v2409, %v2405
        %v2798 = vpack.c.b16 %v2410, %v2406
        %v2799 = vpack.c.b16 %v2411, %v2407
        %v2800 = vpack.c.b16 %v2416, %v2412
        %v2801 = vpack.c.b16 %v2417, %v2413
        %v2802 = vpack.c.b16 %v2418, %v2414
        %v2803 = vpack.c.b16 %v2419, %v2415
        %v2804 = vpack.c.b16 %v2424, %v2420
        %v2805 = vpack.c.b16 %v2425, %v2421
        %v2806 = vpack.c.b16 %v2426, %v2422
        %v2807 = vpack.c.b16 %v2427, %v2423
        %v2808 = vpack.c.b16 %v2432, %v2428
        %v2809 = vpack.c.b16 %v2433, %v2429
        %v2810 = vpack.c.b16 %v2434, %v2430
        %v2811 = vpack.c.b16 %v2435, %v2431
        %v2812 = vpack.c.b16 %v2440, %v2436
        %v2813 = vpack.c.b16 %v2441, %v2437
        %v2814 = vpack.c.b16 %v2442, %v2438
        %v2815 = vpack.c.b16 %v2443, %v2439
        %v2816 = vpack.c.b16 %v2448, %v2444
        %v2817 = vpack.c.b16 %v2449, %v2445
        %v2818 = vpack.c.b16 %v2450, %v2446
        %v2819 = vpack.c.b16 %v2451, %v2447
        %v2820 = vpack.c.b16 %v2456, %v2452
        %v2821 = vpack.c.b16 %v2457, %v2453
        %v2822 = vpack.c.b16 %v2458, %v2454
        %v2823 = vpack.c.b16 %v2459, %v2455
        %v2824 = vpack.c.b16 %v2464, %v2460
        %v2825 = vpack.c.b16 %v2465, %v2461
        %v2826 = vpack.c.b16 %v2466, %v2462
        %v2827 = vpack.c.b16 %v2467, %v2463
        %v2828 = vpack.c.b16 %v2472, %v2468
        %v2829 = vpack.c.b16 %v2473, %v2469
        %v2830 = vpack.c.b16 %v2474, %v2470
        %v2831 = vpack.c.b16 %v2475, %v2471
        %v2832 = vpack.c.b16 %v2480, %v2476
        %v2833 = vpack.c.b16 %v2481, %v2477
        %v2834 = vpack.c.b16 %v2482, %v2478
        %v2835 = vpack.c.b16 %v2483, %v2479
        %v2836 = vpack.c.b16 %v2488, %v2484
        %v2837 = vpack.c.b16 %v2489, %v2485
        %v2838 = vpack.c.b16 %v2490, %v2486
        %v2839 = vpack.c.b16 %v2491, %v2487
        %v2840 = vpack.c.b16 %v2496, %v2492
        %v2841 = vpack.c.b16 %v2497, %v2493
        %v2842 = vpack.c.b16 %v2498, %v2494
        %v2843 = vpack.c.b16 %v2499, %v2495
        %v2844 = vpack.c.b16 %v2504, %v2500
        %v2845 = vpack.c.b16 %v2505, %v2501
        %v2846 = vpack.c.b16 %v2506, %v2502
        %v2847 = vpack.c.b16 %v2507, %v2503
        %v2848 = vpack.c.b16 %v2512, %v2508
        %v2849 = vpack.c.b16 %v2513, %v2509
        %v2850 = vpack.c.b16 %v2514, %v2510
        %v2851 = vpack.c.b16 %v2515, %v2511
        %v2852 = vpack.c.b16 %v2520, %v2516
        %v2853 = vpack.c.b16 %v2521, %v2517
        %v2854 = vpack.c.b16 %v2522, %v2518
        %v2855 = vpack.c.b16 %v2523, %v2519
        %v2856 = vpack.c.b16 %v2528, %v2524
        %v2857 = vpack.c.b16 %v2529, %v2525
        %v2858 = vpack.c.b16 %v2530, %v2526
        %v2859 = vpack.c.b16 %v2531, %v2527
        %v2860 = vpack.c.b16 %v2536, %v2532
        %v2861 = vpack.c.b16 %v2537, %v2533
        %v2862 = vpack.c.b16 %v2538, %v2534
        %v2863 = vpack.c.b16 %v2539, %v2535
        %v2864 = vpack.c.b16 %v2544, %v2540
        %v2865 = vpack.c.b16 %v2545, %v2541
        %v2866 = vpack.c.b16 %v2546, %v2542
        %v2867 = vpack.c.b16 %v2547, %v2543
        %v2868 = vpack.c.b16 %v2552, %v2548
        %v2869 = vpack.c.b16 %v2553, %v2549
        %v2870 = vpack.c.b16 %v2554, %v2550
        %v2871 = vpack.c.b16 %v2555, %v2551
        %v2872 = vpack.c.b16 %v2560, %v2556
        %v2873 = vpack.c.b16 %v2561, %v2557
        %v2874 = vpack.c.b16 %v2562, %v2558
        %v2875 = vpack.c.b16 %v2563, %v2559
        %v2876 = vpack.c.b16 %v2568, %v2564
        %v2877 = vpack.c.b16 %v2569, %v2565
        %v2878 = vpack.c.b16 %v2570, %v2566
        %v2879 = vpack.c.b16 %v2571, %v2567
        %v2880 = vpack.c.b16 %v2576, %v2572
        %v2881 = vpack.c.b16 %v2577, %v2573
        %v2882 = vpack.c.b16 %v2578, %v2574
        %v2883 = vpack.c.b16 %v2579, %v2575
        %v2884 = vpack.c.b16 %v2584, %v2580
        %v2885 = vpack.c.b16 %v2585, %v2581
        %v2886 = vpack.c.b16 %v2586, %v2582
        %v2887 = vpack.c.b16 %v2587, %v2583
        %v2888 = vpack.c.b16 %v2592, %v2588
        %v2889 = vpack.c.b16 %v2593, %v2589
        %v2890 = vpack.c.b16 %v2594, %v2590
        %v2891 = vpack.c.b16 %v2595, %v2591
        %v2892 = vpack.c.b16 %v2600, %v2596
        %v2893 = vpack.c.b16 %v2601, %v2597
        %v2894 = vpack.c.b16 %v2602, %v2598
        %v2895 = vpack.c.b16 %v2603, %v2599
        %v2896 = vpack.c.b16 %v2608, %v2604
        %v2897 = vpack.c.b16 %v2609, %v2605
        %v2898 = vpack.c.b16 %v2610, %v2606
        %v2899 = vpack.c.b16 %v2611, %v2607
        %v2900 = vpack.c.b16 %v2616, %v2612
        %v2901 = vpack.c.b16 %v2617, %v2613
        %v2902 = vpack.c.b16 %v2618, %v2614
        %v2903 = vpack.c.b16 %v2619, %v2615
        %v2904 = vpack.c.b16 %v2624, %v2620
        %v2905 = vpack.c.b16 %v2625, %v2621
        %v2906 = vpack.c.b16 %v2626, %v2622
        %v2907 = vpack.c.b16 %v2627, %v2623
        %v2908 = vpack.c.b16 %v2632, %v2628
        %v2909 = vpack.c.b16 %v2633, %v2629
        %v2910 = vpack.c.b16 %v2634, %v2630
        %v2911 = vpack.c.b16 %v2635, %v2631
        %v2912 = vpack.c.b16 %v2640, %v2636
        %v2913 = vpack.c.b16 %v2641, %v2637
        %v2914 = vpack.c.b16 %v2642, %v2638
        %v2915 = vpack.c.b16 %v2643, %v2639
        %v2916 = vpack.c.b16 %v2648, %v2644
        %v2917 = vpack.c.b16 %v2649, %v2645
        %v2918 = vpack.c.b16 %v2650, %v2646
        %v2919 = vpack.c.b16 %v2651, %v2647
        %v2920 = vpack.c.b16 %v2656, %v2652
        %v2921 = vpack.c.b16 %v2657, %v2653
        %v2922 = vpack.c.b16 %v2658, %v2654
        %v2923 = vpack.c.b16 %v2659, %v2655
        %v2924 = vpack.c.b16 %v2664, %v2660
        %v2925 = vpack.c.b16 %v2665, %v2661
        %v2926 = vpack.c.b16 %v2666, %v2662
        %v2927 = vpack.c.b16 %v2667, %v2663
        %v2928 = vpack.c.b16 %v2672, %v2668
        %v2929 = vpack.c.b16 %v2673, %v2669
        %v2930 = vpack.c.b16 %v2674, %v2670
        %v2931 = vpack.c.b16 %v2675, %v2671
        %3188 = vmatprep.subr.bf16.mxu0 %v2677
        %3189 = vmatpush1.bf16.msra.mxu0 %v2676
        %3190 = vmatprep.subr.bf16.mxu0 %v2681
        %3191 = vmatpush1.bf16.msra.mxu0 %v2680
        %3192 = vmatprep.subr.bf16.mxu0 %v2685
        %3193 = vmatpush1.bf16.msra.mxu0 %v2684
        %3194 = vmatprep.subr.bf16.mxu0 %v2689
        %3195 = vmatpush1.bf16.msra.mxu0 %v2688
        %3196 = vmatprep.subr.bf16.mxu0 %v2693
        %3197 = vmatpush1.bf16.msra.mxu0 %v2692
        %3198 = vmatprep.subr.bf16.mxu0 %v2697
        %3199 = vmatpush1.bf16.msra.mxu0 %v2696
        %3200 = vmatprep.subr.bf16.mxu0 %v2701
        %3201 = vmatpush1.bf16.msra.mxu0 %v2700
        %3202 = vmatprep.subr.bf16.mxu0 %v2705
        %3203 = vmatpush1.bf16.msra.mxu0 %v2704
        %3204 = vmatprep.subr.bf16.mxu0 %v2709
        %3205 = vmatpush1.bf16.msra.mxu0 %v2708
        %3206 = vmatprep.subr.bf16.mxu0 %v2713
        %3207 = vmatpush1.bf16.msra.mxu0 %v2712
        %3208 = vmatprep.subr.bf16.mxu0 %v2717
        %3209 = vmatpush1.bf16.msra.mxu0 %v2716
        %3210 = vmatprep.subr.bf16.mxu0 %v2721
        %3211 = vmatpush1.bf16.msra.mxu0 %v2720
        %3212 = vmatprep.subr.bf16.mxu0 %v2725
        %3213 = vmatpush1.bf16.msra.mxu0 %v2724
        %3214 = vmatprep.subr.bf16.mxu0 %v2729
        %3215 = vmatpush1.bf16.msra.mxu0 %v2728
        %3216 = vmatprep.subr.bf16.mxu0 %v2733
        %3217 = vmatpush1.bf16.msra.mxu0 %v2732
        %3218 = vmatprep.subr.bf16.mxu0 %v2737
        %3219 = vmatpush1.bf16.msra.mxu0 %v2736
        %3220 = vmatprep.mubr.bf16.mxu0 %v1503
        %3221 = vmatmul.mubr.bf16.gmra.mrb[0].mxu0 %v1502
        %v3222 = vpop.f32.mrb[0].mxu0
        %v3223 = vadd.f32 %v1891, %v3222
        %v3224 = vpop.f32.mrb[0].mxu0
        %v3225 = vadd.f32 %v1895, %v3224
        %v3226 = vpop.f32.mrb[0].mxu0
        %v3227 = vadd.f32 %v1891, %v3226
        %v3228 = vpop.f32.mrb[0].mxu0
        %v3229 = vadd.f32 %v1895, %v3228
        %3230 = vmatprep.mubr.bf16.mxu0 %v1511
        %3231 = vmatmul.mubr.bf16.gmra.mrb[0].mxu0 %v1510
        %v3232 = vpop.f32.mrb[0].mxu0
        %v3233 = vadd.f32 %v1891, %v3232
        %v3234 = vpop.f32.mrb[0].mxu0
        %v3235 = vadd.f32 %v1895, %v3234
        %v3236 = vpop.f32.mrb[0].mxu0
        %v3237 = vadd.f32 %v1891, %v3236
        %v3238 = vpop.f32.mrb[0].mxu0
        %v3239 = vadd.f32 %v1895, %v3238
        %3240 = vmatprep.mubr.bf16.mxu0 %v1519
        %3241 = vmatmul.mubr.bf16.gmra.mrb[0].mxu0 %v1518
        %v3242 = vpop.f32.mrb[0].mxu0
        %v3243 = vadd.f32 %v1891, %v3242
        %v3244 = vpop.f32.mrb[0].mxu0
        %v3245 = vadd.f32 %v1895, %v3244
        %v3246 = vpop.f32.mrb[0].mxu0
        %v3247 = vadd.f32 %v1891, %v3246
        %v3248 = vpop.f32.mrb[0].mxu0
        %v3249 = vadd.f32 %v1895, %v3248
        %3250 = vmatprep.mubr.bf16.mxu0 %v1527
        %3251 = vmatmul.mubr.bf16.gmra.mrb[0].mxu0 %v1526
        %v3252 = vpop.f32.mrb[0].mxu0
        %v3253 = vadd.f32 %v1891, %v3252
        %v3254 = vpop.f32.mrb[0].mxu0
        %v3255 = vadd.f32 %v1895, %v3254
        %v3256 = vpop.f32.mrb[0].mxu0
        %v3257 = vadd.f32 %v1891, %v3256
        %v3258 = vpop.f32.mrb[0].mxu0
        %v3259 = vadd.f32 %v1895, %v3258
        %3260 = vmatprep.mubr.bf16.mxu0 %v1535
        %3261 = vmatmul.mubr.bf16.gmra.mrb[0].mxu0 %v1534
        %v3262 = vpop.f32.mrb[0].mxu0
        %v3263 = vadd.f32 %v1891, %v3262
        %v3264 = vpop.f32.mrb[0].mxu0
        %v3265 = vadd.f32 %v1895, %v3264
        %v3266 = vpop.f32.mrb[0].mxu0
        %v3267 = vadd.f32 %v1891, %v3266
        %v3268 = vpop.f32.mrb[0].mxu0
        %v3269 = vadd.f32 %v1895, %v3268
        %3270 = vmatprep.mubr.bf16.mxu0 %v1543
        %3271 = vmatmul.mubr.bf16.gmra.mrb[0].mxu0 %v1542
        %v3272 = vpop.f32.mrb[0].mxu0
        %v3273 = vadd.f32 %v1891, %v3272
        %v3274 = vpop.f32.mrb[0].mxu0
        %v3275 = vadd.f32 %v1895, %v3274
        %v3276 = vpop.f32.mrb[0].mxu0
        %v3277 = vadd.f32 %v1891, %v3276
        %v3278 = vpop.f32.mrb[0].mxu0
        %v3279 = vadd.f32 %v1895, %v3278
        %3280 = vmatprep.mubr.bf16.mxu0 %v1551
        %3281 = vmatmul.mubr.bf16.gmra.mrb[0].mxu0 %v1550
        %v3282 = vpop.f32.mrb[0].mxu0
        %v3283 = vadd.f32 %v1891, %v3282
        %v3284 = vpop.f32.mrb[0].mxu0
        %v3285 = vadd.f32 %v1895, %v3284
        %v3286 = vpop.f32.mrb[0].mxu0
        %v3287 = vadd.f32 %v1891, %v3286
        %v3288 = vpop.f32.mrb[0].mxu0
        %v3289 = vadd.f32 %v1895, %v3288
        %3290 = vmatprep.mubr.bf16.mxu0 %v1559
        %3291 = vmatmul.mubr.bf16.gmra.mrb[0].mxu0 %v1558
        %v3292 = vpop.f32.mrb[0].mxu0
        %v3293 = vadd.f32 %v1891, %v3292
        %v3294 = vpop.f32.mrb[0].mxu0
        %v3295 = vadd.f32 %v1895, %v3294
        %v3296 = vpop.f32.mrb[0].mxu0
        %v3297 = vadd.f32 %v1891, %v3296
        %v3298 = vpop.f32.mrb[0].mxu0
        %v3299 = vadd.f32 %v1895, %v3298
        %3300 = vmatprep.mubr.bf16.mxu0 %v1567
        %3301 = vmatmul.mubr.bf16.gmra.mrb[0].mxu0 %v1566
        %v3302 = vpop.f32.mrb[0].mxu0
        %v3303 = vadd.f32 %v1891, %v3302
        %v3304 = vpop.f32.mrb[0].mxu0
        %v3305 = vadd.f32 %v1895, %v3304
        %v3306 = vpop.f32.mrb[0].mxu0
        %v3307 = vadd.f32 %v1891, %v3306
        %v3308 = vpop.f32.mrb[0].mxu0
        %v3309 = vadd.f32 %v1895, %v3308
        %3310 = vmatprep.mubr.bf16.mxu0 %v1575
        %3311 = vmatmul.mubr.bf16.gmra.mrb[0].mxu0 %v1574
        %v3312 = vpop.f32.mrb[0].mxu0
        %v3313 = vadd.f32 %v1891, %v3312
        %v3314 = vpop.f32.mrb[0].mxu0
        %v3315 = vadd.f32 %v1895, %v3314
        %v3316 = vpop.f32.mrb[0].mxu0
        %v3317 = vadd.f32 %v1891, %v3316
        %v3318 = vpop.f32.mrb[0].mxu0
        %v3319 = vadd.f32 %v1895, %v3318
        %3320 = vmatprep.mubr.bf16.mxu0 %v1583
        %3321 = vmatmul.mubr.bf16.gmra.mrb[0].mxu0 %v1582
        %v3322 = vpop.f32.mrb[0].mxu0
        %v3323 = vadd.f32 %v1891, %v3322
        %v3324 = vpop.f32.mrb[0].mxu0
        %v3325 = vadd.f32 %v1895, %v3324
        %v3326 = vpop.f32.mrb[0].mxu0
        %v3327 = vadd.f32 %v1891, %v3326
        %v3328 = vpop.f32.mrb[0].mxu0
        %v3329 = vadd.f32 %v1895, %v3328
        %3330 = vmatprep.mubr.bf16.mxu0 %v1591
        %3331 = vmatmul.mubr.bf16.gmra.mrb[0].mxu0 %v1590
        %v3332 = vpop.f32.mrb[0].mxu0
        %v3333 = vadd.f32 %v1891, %v3332
        %v3334 = vpop.f32.mrb[0].mxu0
        %v3335 = vadd.f32 %v1895, %v3334
        %v3336 = vpop.f32.mrb[0].mxu0
        %v3337 = vadd.f32 %v1891, %v3336
        %v3338 = vpop.f32.mrb[0].mxu0
        %v3339 = vadd.f32 %v1895, %v3338
        %3340 = vmatprep.mubr.bf16.mxu0 %v1599
        %3341 = vmatmul.mubr.bf16.gmra.mrb[0].mxu0 %v1598
        %v3342 = vpop.f32.mrb[0].mxu0
        %v3343 = vadd.f32 %v1891, %v3342
        %v3344 = vpop.f32.mrb[0].mxu0
        %v3345 = vadd.f32 %v1895, %v3344
        %v3346 = vpop.f32.mrb[0].mxu0
        %v3347 = vadd.f32 %v1891, %v3346
        %v3348 = vpop.f32.mrb[0].mxu0
        %v3349 = vadd.f32 %v1895, %v3348
        %3350 = vmatprep.mubr.bf16.mxu0 %v1607
        %3351 = vmatmul.mubr.bf16.gmra.mrb[0].mxu0 %v1606
        %v3352 = vpop.f32.mrb[0].mxu0
        %v3353 = vadd.f32 %v1891, %v3352
        %v3354 = vpop.f32.mrb[0].mxu0
        %v3355 = vadd.f32 %v1895, %v3354
        %v3356 = vpop.f32.mrb[0].mxu0
        %v3357 = vadd.f32 %v1891, %v3356
        %v3358 = vpop.f32.mrb[0].mxu0
        %v3359 = vadd.f32 %v1895, %v3358
        %3360 = vmatprep.mubr.bf16.mxu0 %v1615
        %3361 = vmatmul.mubr.bf16.gmra.mrb[0].mxu0 %v1614
        %v3362 = vpop.f32.mrb[0].mxu0
        %v3363 = vadd.f32 %v1891, %v3362
        %v3364 = vpop.f32.mrb[0].mxu0
        %v3365 = vadd.f32 %v1895, %v3364
        %v3366 = vpop.f32.mrb[0].mxu0
        %v3367 = vadd.f32 %v1891, %v3366
        %v3368 = vpop.f32.mrb[0].mxu0
        %v3369 = vadd.f32 %v1895, %v3368
        %3370 = vmatprep.mubr.bf16.mxu0 %v1623
        %3371 = vmatmul.mubr.bf16.gmra.mrb[0].mxu0 %v1622
        %v3372 = vpop.f32.mrb[0].mxu0
        %v3373 = vadd.f32 %v1891, %v3372
        %v3374 = vpop.f32.mrb[0].mxu0
        %v3375 = vadd.f32 %v1895, %v3374
        %v3376 = vpop.f32.mrb[0].mxu0
        %v3377 = vadd.f32 %v1891, %v3376
        %v3378 = vpop.f32.mrb[0].mxu0
        %v3379 = vadd.f32 %v1895, %v3378
        %3380 = vdwg.mxu0
        %3381 = vmatprep.subr.bf16.mxu0 %v2741
        %3382 = vmatpush1.bf16.msra.mxu0 %v2740
        %3383 = vmatprep.subr.bf16.mxu0 %v2745
        %3384 = vmatpush1.bf16.msra.mxu0 %v2744
        %3385 = vmatprep.subr.bf16.mxu0 %v2749
        %3386 = vmatpush1.bf16.msra.mxu0 %v2748
        %3387 = vmatprep.subr.bf16.mxu0 %v2753
        %3388 = vmatpush1.bf16.msra.mxu0 %v2752
        %3389 = vmatprep.subr.bf16.mxu0 %v2757
        %3390 = vmatpush1.bf16.msra.mxu0 %v2756
        %3391 = vmatprep.subr.bf16.mxu0 %v2761
        %3392 = vmatpush1.bf16.msra.mxu0 %v2760
        %3393 = vmatprep.subr.bf16.mxu0 %v2765
        %3394 = vmatpush1.bf16.msra.mxu0 %v2764
        %3395 = vmatprep.subr.bf16.mxu0 %v2769
        %3396 = vmatpush1.bf16.msra.mxu0 %v2768
        %3397 = vmatprep.subr.bf16.mxu0 %v2773
        %3398 = vmatpush1.bf16.msra.mxu0 %v2772
        %3399 = vmatprep.subr.bf16.mxu0 %v2777
        %3400 = vmatpush1.bf16.msra.mxu0 %v2776
        %3401 = vmatprep.subr.bf16.mxu0 %v2781
        %3402 = vmatpush1.bf16.msra.mxu0 %v2780
        %3403 = vmatprep.subr.bf16.mxu0 %v2785
        %3404 = vmatpush1.bf16.msra.mxu0 %v2784
        %3405 = vmatprep.subr.bf16.mxu0 %v2789
        %3406 = vmatpush1.bf16.msra.mxu0 %v2788
        %3407 = vmatprep.subr.bf16.mxu0 %v2793
        %3408 = vmatpush1.bf16.msra.mxu0 %v2792
        %3409 = vmatprep.subr.bf16.mxu0 %v2797
        %3410 = vmatpush1.bf16.msra.mxu0 %v2796
        %3411 = vmatprep.subr.bf16.mxu0 %v2801
        %3412 = vmatpush1.bf16.msra.mxu0 %v2800
        %3413 = vmatprep.mubr.bf16.mxu0 %v1505
        %3414 = vmatmul.mubr.bf16.gmra.mrb[0].mxu0 %v1504
        %v3415 = vpop.f32.mrb[0].mxu0
        %v3416 = vadd.f32 %v3223, %v3415
        %v3417 = vpop.f32.mrb[0].mxu0
        %v3418 = vadd.f32 %v3225, %v3417
        %v3419 = vpop.f32.mrb[0].mxu0
        %v3420 = vadd.f32 %v3227, %v3419
        %v3421 = vpop.f32.mrb[0].mxu0
        %v3422 = vadd.f32 %v3229, %v3421
        %3423 = vmatprep.mubr.bf16.mxu0 %v1513
        %3424 = vmatmul.mubr.bf16.gmra.mrb[0].mxu0 %v1512
        %v3425 = vpop.f32.mrb[0].mxu0
        %v3426 = vadd.f32 %v3233, %v3425
        %v3427 = vpop.f32.mrb[0].mxu0
        %v3428 = vadd.f32 %v3235, %v3427
        %v3429 = vpop.f32.mrb[0].mxu0
        %v3430 = vadd.f32 %v3237, %v3429
        %v3431 = vpop.f32.mrb[0].mxu0
        %v3432 = vadd.f32 %v3239, %v3431
        %3433 = vmatprep.mubr.bf16.mxu0 %v1521
        %3434 = vmatmul.mubr.bf16.gmra.mrb[0].mxu0 %v1520
        %v3435 = vpop.f32.mrb[0].mxu0
        %v3436 = vadd.f32 %v3243, %v3435
        %v3437 = vpop.f32.mrb[0].mxu0
        %v3438 = vadd.f32 %v3245, %v3437
        %v3439 = vpop.f32.mrb[0].mxu0
        %v3440 = vadd.f32 %v3247, %v3439
        %v3441 = vpop.f32.mrb[0].mxu0
        %v3442 = vadd.f32 %v3249, %v3441
        %3443 = vmatprep.mubr.bf16.mxu0 %v1529
        %3444 = vmatmul.mubr.bf16.gmra.mrb[0].mxu0 %v1528
        %v3445 = vpop.f32.mrb[0].mxu0
        %v3446 = vadd.f32 %v3253, %v3445
        %v3447 = vpop.f32.mrb[0].mxu0
        %v3448 = vadd.f32 %v3255, %v3447
        %v3449 = vpop.f32.mrb[0].mxu0
        %v3450 = vadd.f32 %v3257, %v3449
        %v3451 = vpop.f32.mrb[0].mxu0
        %v3452 = vadd.f32 %v3259, %v3451
        %3453 = vmatprep.mubr.bf16.mxu0 %v1537
        %3454 = vmatmul.mubr.bf16.gmra.mrb[0].mxu0 %v1536
        %v3455 = vpop.f32.mrb[0].mxu0
        %v3456 = vadd.f32 %v3263, %v3455
        %v3457 = vpop.f32.mrb[0].mxu0
        %v3458 = vadd.f32 %v3265, %v3457
        %v3459 = vpop.f32.mrb[0].mxu0
        %v3460 = vadd.f32 %v3267, %v3459
        %v3461 = vpop.f32.mrb[0].mxu0
        %v3462 = vadd.f32 %v3269, %v3461
        %3463 = vmatprep.mubr.bf16.mxu0 %v1545
        %3464 = vmatmul.mubr.bf16.gmra.mrb[0].mxu0 %v1544
        %v3465 = vpop.f32.mrb[0].mxu0
        %v3466 = vadd.f32 %v3273, %v3465
        %v3467 = vpop.f32.mrb[0].mxu0
        %v3468 = vadd.f32 %v3275, %v3467
        %v3469 = vpop.f32.mrb[0].mxu0
        %v3470 = vadd.f32 %v3277, %v3469
        %v3471 = vpop.f32.mrb[0].mxu0
        %v3472 = vadd.f32 %v3279, %v3471
        %3473 = vmatprep.mubr.bf16.mxu0 %v1553
        %3474 = vmatmul.mubr.bf16.gmra.mrb[0].mxu0 %v1552
        %v3475 = vpop.f32.mrb[0].mxu0
        %v3476 = vadd.f32 %v3283, %v3475
        %v3477 = vpop.f32.mrb[0].mxu0
        %v3478 = vadd.f32 %v3285, %v3477
        %v3479 = vpop.f32.mrb[0].mxu0
        %v3480 = vadd.f32 %v3287, %v3479
        %v3481 = vpop.f32.mrb[0].mxu0
        %v3482 = vadd.f32 %v3289, %v3481
        %3483 = vmatprep.mubr.bf16.mxu0 %v1561
        %3484 = vmatmul.mubr.bf16.gmra.mrb[0].mxu0 %v1560
        %v3485 = vpop.f32.mrb[0].mxu0
        %v3486 = vadd.f32 %v3293, %v3485
        %v3487 = vpop.f32.mrb[0].mxu0
        %v3488 = vadd.f32 %v3295, %v3487
        %v3489 = vpop.f32.mrb[0].mxu0
        %v3490 = vadd.f32 %v3297, %v3489
        %v3491 = vpop.f32.mrb[0].mxu0
        %v3492 = vadd.f32 %v3299, %v3491
        %3493 = vmatprep.mubr.bf16.mxu0 %v1569
        %3494 = vmatmul.mubr.bf16.gmra.mrb[0].mxu0 %v1568
        %v3495 = vpop.f32.mrb[0].mxu0
        %v3496 = vadd.f32 %v3303, %v3495
        %v3497 = vpop.f32.mrb[0].mxu0
        %v3498 = vadd.f32 %v3305, %v3497
        %v3499 = vpop.f32.mrb[0].mxu0
        %v3500 = vadd.f32 %v3307, %v3499
        %v3501 = vpop.f32.mrb[0].mxu0
        %v3502 = vadd.f32 %v3309, %v3501
        %3503 = vmatprep.mubr.bf16.mxu0 %v1577
        %3504 = vmatmul.mubr.bf16.gmra.mrb[0].mxu0 %v1576
        %v3505 = vpop.f32.mrb[0].mxu0
        %v3506 = vadd.f32 %v3313, %v3505
        %v3507 = vpop.f32.mrb[0].mxu0
        %v3508 = vadd.f32 %v3315, %v3507
        %v3509 = vpop.f32.mrb[0].mxu0
        %v3510 = vadd.f32 %v3317, %v3509
        %v3511 = vpop.f32.mrb[0].mxu0
        %v3512 = vadd.f32 %v3319, %v3511
        %3513 = vmatprep.mubr.bf16.mxu0 %v1585
        %3514 = vmatmul.mubr.bf16.gmra.mrb[0].mxu0 %v1584
        %v3515 = vpop.f32.mrb[0].mxu0
        %v3516 = vadd.f32 %v3323, %v3515
        %v3517 = vpop.f32.mrb[0].mxu0
        %v3518 = vadd.f32 %v3325, %v3517
        %v3519 = vpop.f32.mrb[0].mxu0
        %v3520 = vadd.f32 %v3327, %v3519
        %v3521 = vpop.f32.mrb[0].mxu0
        %v3522 = vadd.f32 %v3329, %v3521
        %3523 = vmatprep.mubr.bf16.mxu0 %v1593
        %3524 = vmatmul.mubr.bf16.gmra.mrb[0].mxu0 %v1592
        %v3525 = vpop.f32.mrb[0].mxu0
        %v3526 = vadd.f32 %v3333, %v3525
        %v3527 = vpop.f32.mrb[0].mxu0
        %v3528 = vadd.f32 %v3335, %v3527
        %v3529 = vpop.f32.mrb[0].mxu0
        %v3530 = vadd.f32 %v3337, %v3529
        %v3531 = vpop.f32.mrb[0].mxu0
        %v3532 = vadd.f32 %v3339, %v3531
        %3533 = vmatprep.mubr.bf16.mxu0 %v1601
        %3534 = vmatmul.mubr.bf16.gmra.mrb[0].mxu0 %v1600
        %v3535 = vpop.f32.mrb[0].mxu0
        %v3536 = vadd.f32 %v3343, %v3535
        %v3537 = vpop.f32.mrb[0].mxu0
        %v3538 = vadd.f32 %v3345, %v3537
        %v3539 = vpop.f32.mrb[0].mxu0
        %v3540 = vadd.f32 %v3347, %v3539
        %v3541 = vpop.f32.mrb[0].mxu0
        %v3542 = vadd.f32 %v3349, %v3541
        %3543 = vmatprep.mubr.bf16.mxu0 %v1609
        %3544 = vmatmul.mubr.bf16.gmra.mrb[0].mxu0 %v1608
        %v3545 = vpop.f32.mrb[0].mxu0
        %v3546 = vadd.f32 %v3353, %v3545
        %v3547 = vpop.f32.mrb[0].mxu0
        %v3548 = vadd.f32 %v3355, %v3547
        %v3549 = vpop.f32.mrb[0].mxu0
        %v3550 = vadd.f32 %v3357, %v3549
        %v3551 = vpop.f32.mrb[0].mxu0
        %v3552 = vadd.f32 %v3359, %v3551
        %3553 = vmatprep.mubr.bf16.mxu0 %v1617
        %3554 = vmatmul.mubr.bf16.gmra.mrb[0].mxu0 %v1616
        %v3555 = vpop.f32.mrb[0].mxu0
        %v3556 = vadd.f32 %v3363, %v3555
        %v3557 = vpop.f32.mrb[0].mxu0
        %v3558 = vadd.f32 %v3365, %v3557
        %v3559 = vpop.f32.mrb[0].mxu0
        %v3560 = vadd.f32 %v3367, %v3559
        %v3561 = vpop.f32.mrb[0].mxu0
        %v3562 = vadd.f32 %v3369, %v3561
        %3563 = vmatprep.mubr.bf16.mxu0 %v1625
        %3564 = vmatmul.mubr.bf16.gmra.mrb[0].mxu0 %v1624
        %v3565 = vpop.f32.mrb[0].mxu0
        %v3566 = vadd.f32 %v3373, %v3565
        %v3567 = vpop.f32.mrb[0].mxu0
        %v3568 = vadd.f32 %v3375, %v3567
        %v3569 = vpop.f32.mrb[0].mxu0
        %v3570 = vadd.f32 %v3377, %v3569
        %v3571 = vpop.f32.mrb[0].mxu0
        %v3572 = vadd.f32 %v3379, %v3571
        %3573 = vdwg.mxu0
        %3574 = vmatprep.subr.bf16.mxu0 %v2805
        %3575 = vmatpush1.bf16.msra.mxu0 %v2804
        %3576 = vmatprep.subr.bf16.mxu0 %v2809
        %3577 = vmatpush1.bf16.msra.mxu0 %v2808
        %3578 = vmatprep.subr.bf16.mxu0 %v2813
        %3579 = vmatpush1.bf16.msra.mxu0 %v2812
        %3580 = vmatprep.subr.bf16.mxu0 %v2817
        %3581 = vmatpush1.bf16.msra.mxu0 %v2816
        %3582 = vmatprep.subr.bf16.mxu0 %v2821
        %3583 = vmatpush1.bf16.msra.mxu0 %v2820
        %3584 = vmatprep.subr.bf16.mxu0 %v2825
        %3585 = vmatpush1.bf16.msra.mxu0 %v2824
        %3586 = vmatprep.subr.bf16.mxu0 %v2829
        %3587 = vmatpush1.bf16.msra.mxu0 %v2828
        %3588 = vmatprep.subr.bf16.mxu0 %v2833
        %3589 = vmatpush1.bf16.msra.mxu0 %v2832
        %3590 = vmatprep.subr.bf16.mxu0 %v2837
        %3591 = vmatpush1.bf16.msra.mxu0 %v2836
        %3592 = vmatprep.subr.bf16.mxu0 %v2841
        %3593 = vmatpush1.bf16.msra.mxu0 %v2840
        %3594 = vmatprep.subr.bf16.mxu0 %v2845
        %3595 = vmatpush1.bf16.msra.mxu0 %v2844
        %3596 = vmatprep.subr.bf16.mxu0 %v2849
        %3597 = vmatpush1.bf16.msra.mxu0 %v2848
        %3598 = vmatprep.subr.bf16.mxu0 %v2853
        %3599 = vmatpush1.bf16.msra.mxu0 %v2852
        %3600 = vmatprep.subr.bf16.mxu0 %v2857
        %3601 = vmatpush1.bf16.msra.mxu0 %v2856
        %3602 = vmatprep.subr.bf16.mxu0 %v2861
        %3603 = vmatpush1.bf16.msra.mxu0 %v2860
        %3604 = vmatprep.subr.bf16.mxu0 %v2865
        %3605 = vmatpush1.bf16.msra.mxu0 %v2864
        %3606 = vmatprep.mubr.bf16.mxu0 %v1507
        %3607 = vmatmul.mubr.bf16.gmra.mrb[0].mxu0 %v1506
        %v3608 = vpop.f32.mrb[0].mxu0
        %v3609 = vadd.f32 %v3416, %v3608
        %v3610 = vpop.f32.mrb[0].mxu0
        %v3611 = vadd.f32 %v3418, %v3610
        %v3612 = vpop.f32.mrb[0].mxu0
        %v3613 = vadd.f32 %v3420, %v3612
        %v3614 = vpop.f32.mrb[0].mxu0
        %v3615 = vadd.f32 %v3422, %v3614
        %3616 = vmatprep.mubr.bf16.mxu0 %v1515
        %3617 = vmatmul.mubr.bf16.gmra.mrb[0].mxu0 %v1514
        %v3618 = vpop.f32.mrb[0].mxu0
        %v3619 = vadd.f32 %v3426, %v3618
        %v3620 = vpop.f32.mrb[0].mxu0
        %v3621 = vadd.f32 %v3428, %v3620
        %v3622 = vpop.f32.mrb[0].mxu0
        %v3623 = vadd.f32 %v3430, %v3622
        %v3624 = vpop.f32.mrb[0].mxu0
        %v3625 = vadd.f32 %v3432, %v3624
        %3626 = vmatprep.mubr.bf16.mxu0 %v1523
        %3627 = vmatmul.mubr.bf16.gmra.mrb[0].mxu0 %v1522
        %v3628 = vpop.f32.mrb[0].mxu0
        %v3629 = vadd.f32 %v3436, %v3628
        %v3630 = vpop.f32.mrb[0].mxu0
        %v3631 = vadd.f32 %v3438, %v3630
        %v3632 = vpop.f32.mrb[0].mxu0
        %v3633 = vadd.f32 %v3440, %v3632
        %v3634 = vpop.f32.mrb[0].mxu0
        %v3635 = vadd.f32 %v3442, %v3634
        %3636 = vmatprep.mubr.bf16.mxu0 %v1531
        %3637 = vmatmul.mubr.bf16.gmra.mrb[0].mxu0 %v1530
        %v3638 = vpop.f32.mrb[0].mxu0
        %v3639 = vadd.f32 %v3446, %v3638
        %v3640 = vpop.f32.mrb[0].mxu0
        %v3641 = vadd.f32 %v3448, %v3640
        %v3642 = vpop.f32.mrb[0].mxu0
        %v3643 = vadd.f32 %v3450, %v3642
        %v3644 = vpop.f32.mrb[0].mxu0
        %v3645 = vadd.f32 %v3452, %v3644
        %3646 = vmatprep.mubr.bf16.mxu0 %v1539
        %3647 = vmatmul.mubr.bf16.gmra.mrb[0].mxu0 %v1538
        %v3648 = vpop.f32.mrb[0].mxu0
        %v3649 = vadd.f32 %v3456, %v3648
        %v3650 = vpop.f32.mrb[0].mxu0
        %v3651 = vadd.f32 %v3458, %v3650
        %v3652 = vpop.f32.mrb[0].mxu0
        %v3653 = vadd.f32 %v3460, %v3652
        %v3654 = vpop.f32.mrb[0].mxu0
        %v3655 = vadd.f32 %v3462, %v3654
        %3656 = vmatprep.mubr.bf16.mxu0 %v1547
        %3657 = vmatmul.mubr.bf16.gmra.mrb[0].mxu0 %v1546
        %v3658 = vpop.f32.mrb[0].mxu0
        %v3659 = vadd.f32 %v3466, %v3658
        %v3660 = vpop.f32.mrb[0].mxu0
        %v3661 = vadd.f32 %v3468, %v3660
        %v3662 = vpop.f32.mrb[0].mxu0
        %v3663 = vadd.f32 %v3470, %v3662
        %v3664 = vpop.f32.mrb[0].mxu0
        %v3665 = vadd.f32 %v3472, %v3664
        %3666 = vmatprep.mubr.bf16.mxu0 %v1555
        %3667 = vmatmul.mubr.bf16.gmra.mrb[0].mxu0 %v1554
        %v3668 = vpop.f32.mrb[0].mxu0
        %v3669 = vadd.f32 %v3476, %v3668
        %v3670 = vpop.f32.mrb[0].mxu0
        %v3671 = vadd.f32 %v3478, %v3670
        %v3672 = vpop.f32.mrb[0].mxu0
        %v3673 = vadd.f32 %v3480, %v3672
        %v3674 = vpop.f32.mrb[0].mxu0
        %v3675 = vadd.f32 %v3482, %v3674
        %3676 = vmatprep.mubr.bf16.mxu0 %v1563
        %3677 = vmatmul.mubr.bf16.gmra.mrb[0].mxu0 %v1562
        %v3678 = vpop.f32.mrb[0].mxu0
        %v3679 = vadd.f32 %v3486, %v3678
        %v3680 = vpop.f32.mrb[0].mxu0
        %v3681 = vadd.f32 %v3488, %v3680
        %v3682 = vpop.f32.mrb[0].mxu0
        %v3683 = vadd.f32 %v3490, %v3682
        %v3684 = vpop.f32.mrb[0].mxu0
        %v3685 = vadd.f32 %v3492, %v3684
        %3686 = vmatprep.mubr.bf16.mxu0 %v1571
        %3687 = vmatmul.mubr.bf16.gmra.mrb[0].mxu0 %v1570
        %v3688 = vpop.f32.mrb[0].mxu0
        %v3689 = vadd.f32 %v3496, %v3688
        %v3690 = vpop.f32.mrb[0].mxu0
        %v3691 = vadd.f32 %v3498, %v3690
        %v3692 = vpop.f32.mrb[0].mxu0
        %v3693 = vadd.f32 %v3500, %v3692
        %v3694 = vpop.f32.mrb[0].mxu0
        %v3695 = vadd.f32 %v3502, %v3694
        %3696 = vmatprep.mubr.bf16.mxu0 %v1579
        %3697 = vmatmul.mubr.bf16.gmra.mrb[0].mxu0 %v1578
        %v3698 = vpop.f32.mrb[0].mxu0
        %v3699 = vadd.f32 %v3506, %v3698
        %v3700 = vpop.f32.mrb[0].mxu0
        %v3701 = vadd.f32 %v3508, %v3700
        %v3702 = vpop.f32.mrb[0].mxu0
        %v3703 = vadd.f32 %v3510, %v3702
        %v3704 = vpop.f32.mrb[0].mxu0
        %v3705 = vadd.f32 %v3512, %v3704
        %3706 = vmatprep.mubr.bf16.mxu0 %v1587
        %3707 = vmatmul.mubr.bf16.gmra.mrb[0].mxu0 %v1586
        %v3708 = vpop.f32.mrb[0].mxu0
        %v3709 = vadd.f32 %v3516, %v3708
        %v3710 = vpop.f32.mrb[0].mxu0
        %v3711 = vadd.f32 %v3518, %v3710
        %v3712 = vpop.f32.mrb[0].mxu0
        %v3713 = vadd.f32 %v3520, %v3712
        %v3714 = vpop.f32.mrb[0].mxu0
        %v3715 = vadd.f32 %v3522, %v3714
        %3716 = vmatprep.mubr.bf16.mxu0 %v1595
        %3717 = vmatmul.mubr.bf16.gmra.mrb[0].mxu0 %v1594
        %v3718 = vpop.f32.mrb[0].mxu0
        %v3719 = vadd.f32 %v3526, %v3718
        %v3720 = vpop.f32.mrb[0].mxu0
        %v3721 = vadd.f32 %v3528, %v3720
        %v3722 = vpop.f32.mrb[0].mxu0
        %v3723 = vadd.f32 %v3530, %v3722
        %v3724 = vpop.f32.mrb[0].mxu0
        %v3725 = vadd.f32 %v3532, %v3724
        %3726 = vmatprep.mubr.bf16.mxu0 %v1603
        %3727 = vmatmul.mubr.bf16.gmra.mrb[0].mxu0 %v1602
        %v3728 = vpop.f32.mrb[0].mxu0
        %v3729 = vadd.f32 %v3536, %v3728
        %v3730 = vpop.f32.mrb[0].mxu0
        %v3731 = vadd.f32 %v3538, %v3730
        %v3732 = vpop.f32.mrb[0].mxu0
        %v3733 = vadd.f32 %v3540, %v3732
        %v3734 = vpop.f32.mrb[0].mxu0
        %v3735 = vadd.f32 %v3542, %v3734
        %3736 = vmatprep.mubr.bf16.mxu0 %v1611
        %3737 = vmatmul.mubr.bf16.gmra.mrb[0].mxu0 %v1610
        %v3738 = vpop.f32.mrb[0].mxu0
        %v3739 = vadd.f32 %v3546, %v3738
        %v3740 = vpop.f32.mrb[0].mxu0
        %v3741 = vadd.f32 %v3548, %v3740
        %v3742 = vpop.f32.mrb[0].mxu0
        %v3743 = vadd.f32 %v3550, %v3742
        %v3744 = vpop.f32.mrb[0].mxu0
        %v3745 = vadd.f32 %v3552, %v3744
        %3746 = vmatprep.mubr.bf16.mxu0 %v1619
        %3747 = vmatmul.mubr.bf16.gmra.mrb[0].mxu0 %v1618
        %v3748 = vpop.f32.mrb[0].mxu0
        %v3749 = vadd.f32 %v3556, %v3748
        %v3750 = vpop.f32.mrb[0].mxu0
        %v3751 = vadd.f32 %v3558, %v3750
        %v3752 = vpop.f32.mrb[0].mxu0
        %v3753 = vadd.f32 %v3560, %v3752
        %v3754 = vpop.f32.mrb[0].mxu0
        %v3755 = vadd.f32 %v3562, %v3754
        %3756 = vmatprep.mubr.bf16.mxu0 %v1627
        %3757 = vmatmul.mubr.bf16.gmra.mrb[0].mxu0 %v1626
        %v3758 = vpop.f32.mrb[0].mxu0
        %v3759 = vadd.f32 %v3566, %v3758
        %v3760 = vpop.f32.mrb[0].mxu0
        %v3761 = vadd.f32 %v3568, %v3760
        %v3762 = vpop.f32.mrb[0].mxu0
        %v3763 = vadd.f32 %v3570, %v3762
        %v3764 = vpop.f32.mrb[0].mxu0
        %v3765 = vadd.f32 %v3572, %v3764
        %3766 = vdwg.mxu0
        %3767 = vmatprep.subr.bf16.mxu0 %v2869
        %3768 = vmatpush1.bf16.msra.mxu0 %v2868
        %3769 = vmatprep.subr.bf16.mxu0 %v2873
        %3770 = vmatpush1.bf16.msra.mxu0 %v2872
        %3771 = vmatprep.subr.bf16.mxu0 %v2877
        %3772 = vmatpush1.bf16.msra.mxu0 %v2876
        %3773 = vmatprep.subr.bf16.mxu0 %v2881
        %3774 = vmatpush1.bf16.msra.mxu0 %v2880
        %3775 = vmatprep.subr.bf16.mxu0 %v2885
        %3776 = vmatpush1.bf16.msra.mxu0 %v2884
        %3777 = vmatprep.subr.bf16.mxu0 %v2889
        %3778 = vmatpush1.bf16.msra.mxu0 %v2888
        %3779 = vmatprep.subr.bf16.mxu0 %v2893
        %3780 = vmatpush1.bf16.msra.mxu0 %v2892
        %3781 = vmatprep.subr.bf16.mxu0 %v2897
        %3782 = vmatpush1.bf16.msra.mxu0 %v2896
        %3783 = vmatprep.subr.bf16.mxu0 %v2901
        %3784 = vmatpush1.bf16.msra.mxu0 %v2900
        %3785 = vmatprep.subr.bf16.mxu0 %v2905
        %3786 = vmatpush1.bf16.msra.mxu0 %v2904
        %3787 = vmatprep.subr.bf16.mxu0 %v2909
        %3788 = vmatpush1.bf16.msra.mxu0 %v2908
        %3789 = vmatprep.subr.bf16.mxu0 %v2913
        %3790 = vmatpush1.bf16.msra.mxu0 %v2912
        %3791 = vmatprep.subr.bf16.mxu0 %v2917
        %3792 = vmatpush1.bf16.msra.mxu0 %v2916
        %3793 = vmatprep.subr.bf16.mxu0 %v2921
        %3794 = vmatpush1.bf16.msra.mxu0 %v2920
        %3795 = vmatprep.subr.bf16.mxu0 %v2925
        %3796 = vmatpush1.bf16.msra.mxu0 %v2924
        %3797 = vmatprep.subr.bf16.mxu0 %v2929
        %3798 = vmatpush1.bf16.msra.mxu0 %v2928
        %3799 = vmatprep.mubr.bf16.mxu0 %v1509
        %3800 = vmatmul.mubr.bf16.gmra.mrb[0].mxu0 %v1508
        %v3801 = vpop.f32.mrb[0].mxu0
        %v3802 = vadd.f32 %v3609, %v3801
        %v3803 = vpop.f32.mrb[0].mxu0
        %v3804 = vadd.f32 %v3611, %v3803
        %v3805 = vpop.f32.mrb[0].mxu0
        %v3806 = vadd.f32 %v3613, %v3805
        %v3807 = vpop.f32.mrb[0].mxu0
        %v3808 = vadd.f32 %v3615, %v3807
        %3809 = vmatprep.mubr.bf16.mxu0 %v1517
        %3810 = vmatmul.mubr.bf16.gmra.mrb[0].mxu0 %v1516
        %v3811 = vpop.f32.mrb[0].mxu0
        %v3812 = vadd.f32 %v3619, %v3811
        %v3813 = vpop.f32.mrb[0].mxu0
        %v3814 = vadd.f32 %v3621, %v3813
        %v3815 = vpop.f32.mrb[0].mxu0
        %v3816 = vadd.f32 %v3623, %v3815
        %v3817 = vpop.f32.mrb[0].mxu0
        %v3818 = vadd.f32 %v3625, %v3817
        %3819 = vmatprep.mubr.bf16.mxu0 %v1525
        %3820 = vmatmul.mubr.bf16.gmra.mrb[0].mxu0 %v1524
        %v3821 = vpop.f32.mrb[0].mxu0
        %v3822 = vadd.f32 %v3629, %v3821
        %v3823 = vpop.f32.mrb[0].mxu0
        %v3824 = vadd.f32 %v3631, %v3823
        %v3825 = vpop.f32.mrb[0].mxu0
        %v3826 = vadd.f32 %v3633, %v3825
        %v3827 = vpop.f32.mrb[0].mxu0
        %v3828 = vadd.f32 %v3635, %v3827
        %3829 = vmatprep.mubr.bf16.mxu0 %v1533
        %3830 = vmatmul.mubr.bf16.gmra.mrb[0].mxu0 %v1532
        %v3831 = vpop.f32.mrb[0].mxu0
        %v3832 = vadd.f32 %v3639, %v3831
        %v3833 = vpop.f32.mrb[0].mxu0
        %v3834 = vadd.f32 %v3641, %v3833
        %v3835 = vpop.f32.mrb[0].mxu0
        %v3836 = vadd.f32 %v3643, %v3835
        %v3837 = vpop.f32.mrb[0].mxu0
        %v3838 = vadd.f32 %v3645, %v3837
        %3839 = vmatprep.mubr.bf16.mxu0 %v1541
        %3840 = vmatmul.mubr.bf16.gmra.mrb[0].mxu0 %v1540
        %v3841 = vpop.f32.mrb[0].mxu0
        %v3842 = vadd.f32 %v3649, %v3841
        %v3843 = vpop.f32.mrb[0].mxu0
        %v3844 = vadd.f32 %v3651, %v3843
        %v3845 = vpop.f32.mrb[0].mxu0
        %v3846 = vadd.f32 %v3653, %v3845
        %v3847 = vpop.f32.mrb[0].mxu0
        %v3848 = vadd.f32 %v3655, %v3847
        %3849 = vmatprep.mubr.bf16.mxu0 %v1549
        %3850 = vmatmul.mubr.bf16.gmra.mrb[0].mxu0 %v1548
        %v3851 = vpop.f32.mrb[0].mxu0
        %v3852 = vadd.f32 %v3659, %v3851
        %v3853 = vpop.f32.mrb[0].mxu0
        %v3854 = vadd.f32 %v3661, %v3853
        %v3855 = vpop.f32.mrb[0].mxu0
        %v3856 = vadd.f32 %v3663, %v3855
        %v3857 = vpop.f32.mrb[0].mxu0
        %v3858 = vadd.f32 %v3665, %v3857
        %3859 = vmatprep.mubr.bf16.mxu0 %v1557
        %3860 = vmatmul.mubr.bf16.gmra.mrb[0].mxu0 %v1556
        %v3861 = vpop.f32.mrb[0].mxu0
        %v3862 = vadd.f32 %v3669, %v3861
        %v3863 = vpop.f32.mrb[0].mxu0
        %v3864 = vadd.f32 %v3671, %v3863
        %v3865 = vpop.f32.mrb[0].mxu0
        %v3866 = vadd.f32 %v3673, %v3865
        %v3867 = vpop.f32.mrb[0].mxu0
        %v3868 = vadd.f32 %v3675, %v3867
        %3869 = vmatprep.mubr.bf16.mxu0 %v1565
        %3870 = vmatmul.mubr.bf16.gmra.mrb[0].mxu0 %v1564
        %v3871 = vpop.f32.mrb[0].mxu0
        %v3872 = vadd.f32 %v3679, %v3871
        %v3873 = vpop.f32.mrb[0].mxu0
        %v3874 = vadd.f32 %v3681, %v3873
        %v3875 = vpop.f32.mrb[0].mxu0
        %v3876 = vadd.f32 %v3683, %v3875
        %v3877 = vpop.f32.mrb[0].mxu0
        %v3878 = vadd.f32 %v3685, %v3877
        %3879 = vmatprep.mubr.bf16.mxu0 %v1573
        %3880 = vmatmul.mubr.bf16.gmra.mrb[0].mxu0 %v1572
        %v3881 = vpop.f32.mrb[0].mxu0
        %v3882 = vadd.f32 %v3689, %v3881
        %v3883 = vpop.f32.mrb[0].mxu0
        %v3884 = vadd.f32 %v3691, %v3883
        %v3885 = vpop.f32.mrb[0].mxu0
        %v3886 = vadd.f32 %v3693, %v3885
        %v3887 = vpop.f32.mrb[0].mxu0
        %v3888 = vadd.f32 %v3695, %v3887
        %3889 = vmatprep.mubr.bf16.mxu0 %v1581
        %3890 = vmatmul.mubr.bf16.gmra.mrb[0].mxu0 %v1580
        %v3891 = vpop.f32.mrb[0].mxu0
        %v3892 = vadd.f32 %v3699, %v3891
        %v3893 = vpop.f32.mrb[0].mxu0
        %v3894 = vadd.f32 %v3701, %v3893
        %v3895 = vpop.f32.mrb[0].mxu0
        %v3896 = vadd.f32 %v3703, %v3895
        %v3897 = vpop.f32.mrb[0].mxu0
        %v3898 = vadd.f32 %v3705, %v3897
        %3899 = vmatprep.mubr.bf16.mxu0 %v1589
        %3900 = vmatmul.mubr.bf16.gmra.mrb[0].mxu0 %v1588
        %v3901 = vpop.f32.mrb[0].mxu0
        %v3902 = vadd.f32 %v3709, %v3901
        %v3903 = vpop.f32.mrb[0].mxu0
        %v3904 = vadd.f32 %v3711, %v3903
        %v3905 = vpop.f32.mrb[0].mxu0
        %v3906 = vadd.f32 %v3713, %v3905
        %v3907 = vpop.f32.mrb[0].mxu0
        %v3908 = vadd.f32 %v3715, %v3907
        %3909 = vmatprep.mubr.bf16.mxu0 %v1597
        %3910 = vmatmul.mubr.bf16.gmra.mrb[0].mxu0 %v1596
        %v3911 = vpop.f32.mrb[0].mxu0
        %v3912 = vadd.f32 %v3719, %v3911
        %v3913 = vpop.f32.mrb[0].mxu0
        %v3914 = vadd.f32 %v3721, %v3913
        %v3915 = vpop.f32.mrb[0].mxu0
        %v3916 = vadd.f32 %v3723, %v3915
        %v3917 = vpop.f32.mrb[0].mxu0
        %v3918 = vadd.f32 %v3725, %v3917
        %3919 = vmatprep.mubr.bf16.mxu0 %v1605
        %3920 = vmatmul.mubr.bf16.gmra.mrb[0].mxu0 %v1604
        %v3921 = vpop.f32.mrb[0].mxu0
        %v3922 = vadd.f32 %v3729, %v3921
        %v3923 = vpop.f32.mrb[0].mxu0
        %v3924 = vadd.f32 %v3731, %v3923
        %v3925 = vpop.f32.mrb[0].mxu0
        %v3926 = vadd.f32 %v3733, %v3925
        %v3927 = vpop.f32.mrb[0].mxu0
        %v3928 = vadd.f32 %v3735, %v3927
        %3929 = vmatprep.mubr.bf16.mxu0 %v1613
        %3930 = vmatmul.mubr.bf16.gmra.mrb[0].mxu0 %v1612
        %v3931 = vpop.f32.mrb[0].mxu0
        %v3932 = vadd.f32 %v3739, %v3931
        %v3933 = vpop.f32.mrb[0].mxu0
        %v3934 = vadd.f32 %v3741, %v3933
        %v3935 = vpop.f32.mrb[0].mxu0
        %v3936 = vadd.f32 %v3743, %v3935
        %v3937 = vpop.f32.mrb[0].mxu0
        %v3938 = vadd.f32 %v3745, %v3937
        %3939 = vmatprep.mubr.bf16.mxu0 %v1621
        %3940 = vmatmul.mubr.bf16.gmra.mrb[0].mxu0 %v1620
        %v3941 = vpop.f32.mrb[0].mxu0
        %v3942 = vadd.f32 %v3749, %v3941
        %v3943 = vpop.f32.mrb[0].mxu0
        %v3944 = vadd.f32 %v3751, %v3943
        %v3945 = vpop.f32.mrb[0].mxu0
        %v3946 = vadd.f32 %v3753, %v3945
        %v3947 = vpop.f32.mrb[0].mxu0
        %v3948 = vadd.f32 %v3755, %v3947
        %3949 = vmatprep.mubr.bf16.mxu0 %v1629
        %3950 = vmatmul.mubr.bf16.gmra.mrb[0].mxu0 %v1628
        %v3951 = vpop.f32.mrb[0].mxu0
        %v3952 = vadd.f32 %v3759, %v3951
        %v3953 = vpop.f32.mrb[0].mxu0
        %v3954 = vadd.f32 %v3761, %v3953
        %v3955 = vpop.f32.mrb[0].mxu0
        %v3956 = vadd.f32 %v3763, %v3955
        %v3957 = vpop.f32.mrb[0].mxu0
        %v3958 = vadd.f32 %v3765, %v3957
        %3959 = vdwg.mxu0
        %3960 = vmatprep.subr.bf16.mxu0 %v2679
        %3961 = vmatpush1.bf16.msra.mxu0 %v2678
        %3962 = vmatprep.subr.bf16.mxu0 %v2683
        %3963 = vmatpush1.bf16.msra.mxu0 %v2682
        %3964 = vmatprep.subr.bf16.mxu0 %v2687
        %3965 = vmatpush1.bf16.msra.mxu0 %v2686
        %3966 = vmatprep.subr.bf16.mxu0 %v2691
        %3967 = vmatpush1.bf16.msra.mxu0 %v2690
        %3968 = vmatprep.subr.bf16.mxu0 %v2695
        %3969 = vmatpush1.bf16.msra.mxu0 %v2694
        %3970 = vmatprep.subr.bf16.mxu0 %v2699
        %3971 = vmatpush1.bf16.msra.mxu0 %v2698
        %3972 = vmatprep.subr.bf16.mxu0 %v2703
        %3973 = vmatpush1.bf16.msra.mxu0 %v2702
        %3974 = vmatprep.subr.bf16.mxu0 %v2707
        %3975 = vmatpush1.bf16.msra.mxu0 %v2706
        %3976 = vmatprep.subr.bf16.mxu0 %v2711
        %3977 = vmatpush1.bf16.msra.mxu0 %v2710
        %3978 = vmatprep.subr.bf16.mxu0 %v2715
        %3979 = vmatpush1.bf16.msra.mxu0 %v2714
        %3980 = vmatprep.subr.bf16.mxu0 %v2719
        %3981 = vmatpush1.bf16.msra.mxu0 %v2718
        %3982 = vmatprep.subr.bf16.mxu0 %v2723
        %3983 = vmatpush1.bf16.msra.mxu0 %v2722
        %3984 = vmatprep.subr.bf16.mxu0 %v2727
        %3985 = vmatpush1.bf16.msra.mxu0 %v2726
        %3986 = vmatprep.subr.bf16.mxu0 %v2731
        %3987 = vmatpush1.bf16.msra.mxu0 %v2730
        %3988 = vmatprep.subr.bf16.mxu0 %v2735
        %3989 = vmatpush1.bf16.msra.mxu0 %v2734
        %3990 = vmatprep.subr.bf16.mxu0 %v2739
        %3991 = vmatpush1.bf16.msra.mxu0 %v2738
        %3992 = vmatprep.mubr.bf16.mxu0 %v1503
        %3993 = vmatmul.mubr.bf16.gmra.mrb[0].mxu0 %v1502
        %v3994 = vpop.f32.mrb[0].mxu0
        %v3995 = vadd.f32 %v1899, %v3994
        %v3996 = vpop.f32.mrb[0].mxu0
        %v3997 = vadd.f32 %v1903, %v3996
        %v3998 = vpop.f32.mrb[0].mxu0
        %v3999 = vadd.f32 %v1899, %v3998
        %v4000 = vpop.f32.mrb[0].mxu0
        %v4001 = vadd.f32 %v1903, %v4000
        %4002 = vmatprep.mubr.bf16.mxu0 %v1511
        %4003 = vmatmul.mubr.bf16.gmra.mrb[0].mxu0 %v1510
        %v4004 = vpop.f32.mrb[0].mxu0
        %v4005 = vadd.f32 %v1899, %v4004
        %v4006 = vpop.f32.mrb[0].mxu0
        %v4007 = vadd.f32 %v1903, %v4006
        %v4008 = vpop.f32.mrb[0].mxu0
        %v4009 = vadd.f32 %v1899, %v4008
        %v4010 = vpop.f32.mrb[0].mxu0
        %v4011 = vadd.f32 %v1903, %v4010
        %4012 = vmatprep.mubr.bf16.mxu0 %v1519
        %4013 = vmatmul.mubr.bf16.gmra.mrb[0].mxu0 %v1518
        %v4014 = vpop.f32.mrb[0].mxu0
        %v4015 = vadd.f32 %v1899, %v4014
        %v4016 = vpop.f32.mrb[0].mxu0
        %v4017 = vadd.f32 %v1903, %v4016
        %v4018 = vpop.f32.mrb[0].mxu0
        %v4019 = vadd.f32 %v1899, %v4018
        %v4020 = vpop.f32.mrb[0].mxu0
        %v4021 = vadd.f32 %v1903, %v4020
        %4022 = vmatprep.mubr.bf16.mxu0 %v1527
        %4023 = vmatmul.mubr.bf16.gmra.mrb[0].mxu0 %v1526
        %v4024 = vpop.f32.mrb[0].mxu0
        %v4025 = vadd.f32 %v1899, %v4024
        %v4026 = vpop.f32.mrb[0].mxu0
        %v4027 = vadd.f32 %v1903, %v4026
        %v4028 = vpop.f32.mrb[0].mxu0
        %v4029 = vadd.f32 %v1899, %v4028
        %v4030 = vpop.f32.mrb[0].mxu0
        %v4031 = vadd.f32 %v1903, %v4030
        %4032 = vmatprep.mubr.bf16.mxu0 %v1535
        %4033 = vmatmul.mubr.bf16.gmra.mrb[0].mxu0 %v1534
        %v4034 = vpop.f32.mrb[0].mxu0
        %v4035 = vadd.f32 %v1899, %v4034
        %v4036 = vpop.f32.mrb[0].mxu0
        %v4037 = vadd.f32 %v1903, %v4036
        %v4038 = vpop.f32.mrb[0].mxu0
        %v4039 = vadd.f32 %v1899, %v4038
        %v4040 = vpop.f32.mrb[0].mxu0
        %v4041 = vadd.f32 %v1903, %v4040
        %4042 = vmatprep.mubr.bf16.mxu0 %v1543
        %4043 = vmatmul.mubr.bf16.gmra.mrb[0].mxu0 %v1542
        %v4044 = vpop.f32.mrb[0].mxu0
        %v4045 = vadd.f32 %v1899, %v4044
        %v4046 = vpop.f32.mrb[0].mxu0
        %v4047 = vadd.f32 %v1903, %v4046
        %v4048 = vpop.f32.mrb[0].mxu0
        %v4049 = vadd.f32 %v1899, %v4048
        %v4050 = vpop.f32.mrb[0].mxu0
        %v4051 = vadd.f32 %v1903, %v4050
        %4052 = vmatprep.mubr.bf16.mxu0 %v1551
        %4053 = vmatmul.mubr.bf16.gmra.mrb[0].mxu0 %v1550
        %v4054 = vpop.f32.mrb[0].mxu0
        %v4055 = vadd.f32 %v1899, %v4054
        %v4056 = vpop.f32.mrb[0].mxu0
        %v4057 = vadd.f32 %v1903, %v4056
        %v4058 = vpop.f32.mrb[0].mxu0
        %v4059 = vadd.f32 %v1899, %v4058
        %v4060 = vpop.f32.mrb[0].mxu0
        %v4061 = vadd.f32 %v1903, %v4060
        %4062 = vmatprep.mubr.bf16.mxu0 %v1559
        %4063 = vmatmul.mubr.bf16.gmra.mrb[0].mxu0 %v1558
        %v4064 = vpop.f32.mrb[0].mxu0
        %v4065 = vadd.f32 %v1899, %v4064
        %v4066 = vpop.f32.mrb[0].mxu0
        %v4067 = vadd.f32 %v1903, %v4066
        %v4068 = vpop.f32.mrb[0].mxu0
        %v4069 = vadd.f32 %v1899, %v4068
        %v4070 = vpop.f32.mrb[0].mxu0
        %v4071 = vadd.f32 %v1903, %v4070
        %4072 = vmatprep.mubr.bf16.mxu0 %v1567
        %4073 = vmatmul.mubr.bf16.gmra.mrb[0].mxu0 %v1566
        %v4074 = vpop.f32.mrb[0].mxu0
        %v4075 = vadd.f32 %v1899, %v4074
        %v4076 = vpop.f32.mrb[0].mxu0
        %v4077 = vadd.f32 %v1903, %v4076
        %v4078 = vpop.f32.mrb[0].mxu0
        %v4079 = vadd.f32 %v1899, %v4078
        %v4080 = vpop.f32.mrb[0].mxu0
        %v4081 = vadd.f32 %v1903, %v4080
        %4082 = vmatprep.mubr.bf16.mxu0 %v1575
        %4083 = vmatmul.mubr.bf16.gmra.mrb[0].mxu0 %v1574
        %v4084 = vpop.f32.mrb[0].mxu0
        %v4085 = vadd.f32 %v1899, %v4084
        %v4086 = vpop.f32.mrb[0].mxu0
        %v4087 = vadd.f32 %v1903, %v4086
        %v4088 = vpop.f32.mrb[0].mxu0
        %v4089 = vadd.f32 %v1899, %v4088
        %v4090 = vpop.f32.mrb[0].mxu0
        %v4091 = vadd.f32 %v1903, %v4090
        %4092 = vmatprep.mubr.bf16.mxu0 %v1583
        %4093 = vmatmul.mubr.bf16.gmra.mrb[0].mxu0 %v1582
        %v4094 = vpop.f32.mrb[0].mxu0
        %v4095 = vadd.f32 %v1899, %v4094
        %v4096 = vpop.f32.mrb[0].mxu0
        %v4097 = vadd.f32 %v1903, %v4096
        %v4098 = vpop.f32.mrb[0].mxu0
        %v4099 = vadd.f32 %v1899, %v4098
        %v4100 = vpop.f32.mrb[0].mxu0
        %v4101 = vadd.f32 %v1903, %v4100
        %4102 = vmatprep.mubr.bf16.mxu0 %v1591
        %4103 = vmatmul.mubr.bf16.gmra.mrb[0].mxu0 %v1590
        %v4104 = vpop.f32.mrb[0].mxu0
        %v4105 = vadd.f32 %v1899, %v4104
        %v4106 = vpop.f32.mrb[0].mxu0
        %v4107 = vadd.f32 %v1903, %v4106
        %v4108 = vpop.f32.mrb[0].mxu0
        %v4109 = vadd.f32 %v1899, %v4108
        %v4110 = vpop.f32.mrb[0].mxu0
        %v4111 = vadd.f32 %v1903, %v4110
        %4112 = vmatprep.mubr.bf16.mxu0 %v1599
        %4113 = vmatmul.mubr.bf16.gmra.mrb[0].mxu0 %v1598
        %v4114 = vpop.f32.mrb[0].mxu0
        %v4115 = vadd.f32 %v1899, %v4114
        %v4116 = vpop.f32.mrb[0].mxu0
        %v4117 = vadd.f32 %v1903, %v4116
        %v4118 = vpop.f32.mrb[0].mxu0
        %v4119 = vadd.f32 %v1899, %v4118
        %v4120 = vpop.f32.mrb[0].mxu0
        %v4121 = vadd.f32 %v1903, %v4120
        %4122 = vmatprep.mubr.bf16.mxu0 %v1607
        %4123 = vmatmul.mubr.bf16.gmra.mrb[0].mxu0 %v1606
        %v4124 = vpop.f32.mrb[0].mxu0
        %v4125 = vadd.f32 %v1899, %v4124
        %v4126 = vpop.f32.mrb[0].mxu0
        %v4127 = vadd.f32 %v1903, %v4126
        %v4128 = vpop.f32.mrb[0].mxu0
        %v4129 = vadd.f32 %v1899, %v4128
        %v4130 = vpop.f32.mrb[0].mxu0
        %v4131 = vadd.f32 %v1903, %v4130
        %4132 = vmatprep.mubr.bf16.mxu0 %v1615
        %4133 = vmatmul.mubr.bf16.gmra.mrb[0].mxu0 %v1614
        %v4134 = vpop.f32.mrb[0].mxu0
        %v4135 = vadd.f32 %v1899, %v4134
        %v4136 = vpop.f32.mrb[0].mxu0
        %v4137 = vadd.f32 %v1903, %v4136
        %v4138 = vpop.f32.mrb[0].mxu0
        %v4139 = vadd.f32 %v1899, %v4138
        %v4140 = vpop.f32.mrb[0].mxu0
        %v4141 = vadd.f32 %v1903, %v4140
        %4142 = vmatprep.mubr.bf16.mxu0 %v1623
        %4143 = vmatmul.mubr.bf16.gmra.mrb[0].mxu0 %v1622
        %v4144 = vpop.f32.mrb[0].mxu0
        %v4145 = vadd.f32 %v1899, %v4144
        %v4146 = vpop.f32.mrb[0].mxu0
        %v4147 = vadd.f32 %v1903, %v4146
        %v4148 = vpop.f32.mrb[0].mxu0
        %v4149 = vadd.f32 %v1899, %v4148
        %v4150 = vpop.f32.mrb[0].mxu0
        %v4151 = vadd.f32 %v1903, %v4150
        %4152 = vdwg.mxu0
        %4153 = vmatprep.subr.bf16.mxu0 %v2743
        %4154 = vmatpush1.bf16.msra.mxu0 %v2742
        %4155 = vmatprep.subr.bf16.mxu0 %v2747
        %4156 = vmatpush1.bf16.msra.mxu0 %v2746
        %4157 = vmatprep.subr.bf16.mxu0 %v2751
        %4158 = vmatpush1.bf16.msra.mxu0 %v2750
        %4159 = vmatprep.subr.bf16.mxu0 %v2755
        %4160 = vmatpush1.bf16.msra.mxu0 %v2754
        %4161 = vmatprep.subr.bf16.mxu0 %v2759
        %4162 = vmatpush1.bf16.msra.mxu0 %v2758
        %4163 = vmatprep.subr.bf16.mxu0 %v2763
        %4164 = vmatpush1.bf16.msra.mxu0 %v2762
        %4165 = vmatprep.subr.bf16.mxu0 %v2767
        %4166 = vmatpush1.bf16.msra.mxu0 %v2766
        %4167 = vmatprep.subr.bf16.mxu0 %v2771
        %4168 = vmatpush1.bf16.msra.mxu0 %v2770
        %4169 = vmatprep.subr.bf16.mxu0 %v2775
        %4170 = vmatpush1.bf16.msra.mxu0 %v2774
        %4171 = vmatprep.subr.bf16.mxu0 %v2779
        %4172 = vmatpush1.bf16.msra.mxu0 %v2778
        %4173 = vmatprep.subr.bf16.mxu0 %v2783
        %4174 = vmatpush1.bf16.msra.mxu0 %v2782
        %4175 = vmatprep.subr.bf16.mxu0 %v2787
        %4176 = vmatpush1.bf16.msra.mxu0 %v2786
        %4177 = vmatprep.subr.bf16.mxu0 %v2791
        %4178 = vmatpush1.bf16.msra.mxu0 %v2790
        %4179 = vmatprep.subr.bf16.mxu0 %v2795
        %4180 = vmatpush1.bf16.msra.mxu0 %v2794
        %4181 = vmatprep.subr.bf16.mxu0 %v2799
        %4182 = vmatpush1.bf16.msra.mxu0 %v2798
        %4183 = vmatprep.subr.bf16.mxu0 %v2803
        %4184 = vmatpush1.bf16.msra.mxu0 %v2802
        %4185 = vmatprep.mubr.bf16.mxu0 %v1505
        %4186 = vmatmul.mubr.bf16.gmra.mrb[0].mxu0 %v1504
        %v4187 = vpop.f32.mrb[0].mxu0
        %v4188 = vadd.f32 %v3995, %v4187
        %v4189 = vpop.f32.mrb[0].mxu0
        %v4190 = vadd.f32 %v3997, %v4189
        %v4191 = vpop.f32.mrb[0].mxu0
        %v4192 = vadd.f32 %v3999, %v4191
        %v4193 = vpop.f32.mrb[0].mxu0
        %v4194 = vadd.f32 %v4001, %v4193
        %4195 = vmatprep.mubr.bf16.mxu0 %v1513
        %4196 = vmatmul.mubr.bf16.gmra.mrb[0].mxu0 %v1512
        %v4197 = vpop.f32.mrb[0].mxu0
        %v4198 = vadd.f32 %v4005, %v4197
        %v4199 = vpop.f32.mrb[0].mxu0
        %v4200 = vadd.f32 %v4007, %v4199
        %v4201 = vpop.f32.mrb[0].mxu0
        %v4202 = vadd.f32 %v4009, %v4201
        %v4203 = vpop.f32.mrb[0].mxu0
        %v4204 = vadd.f32 %v4011, %v4203
        %4205 = vmatprep.mubr.bf16.mxu0 %v1521
        %4206 = vmatmul.mubr.bf16.gmra.mrb[0].mxu0 %v1520
        %v4207 = vpop.f32.mrb[0].mxu0
        %v4208 = vadd.f32 %v4015, %v4207
        %v4209 = vpop.f32.mrb[0].mxu0
        %v4210 = vadd.f32 %v4017, %v4209
        %v4211 = vpop.f32.mrb[0].mxu0
        %v4212 = vadd.f32 %v4019, %v4211
        %v4213 = vpop.f32.mrb[0].mxu0
        %v4214 = vadd.f32 %v4021, %v4213
        %4215 = vmatprep.mubr.bf16.mxu0 %v1529
        %4216 = vmatmul.mubr.bf16.gmra.mrb[0].mxu0 %v1528
        %v4217 = vpop.f32.mrb[0].mxu0
        %v4218 = vadd.f32 %v4025, %v4217
        %v4219 = vpop.f32.mrb[0].mxu0
        %v4220 = vadd.f32 %v4027, %v4219
        %v4221 = vpop.f32.mrb[0].mxu0
        %v4222 = vadd.f32 %v4029, %v4221
        %v4223 = vpop.f32.mrb[0].mxu0
        %v4224 = vadd.f32 %v4031, %v4223
        %4225 = vmatprep.mubr.bf16.mxu0 %v1537
        %4226 = vmatmul.mubr.bf16.gmra.mrb[0].mxu0 %v1536
        %v4227 = vpop.f32.mrb[0].mxu0
        %v4228 = vadd.f32 %v4035, %v4227
        %v4229 = vpop.f32.mrb[0].mxu0
        %v4230 = vadd.f32 %v4037, %v4229
        %v4231 = vpop.f32.mrb[0].mxu0
        %v4232 = vadd.f32 %v4039, %v4231
        %v4233 = vpop.f32.mrb[0].mxu0
        %v4234 = vadd.f32 %v4041, %v4233
        %4235 = vmatprep.mubr.bf16.mxu0 %v1545
        %4236 = vmatmul.mubr.bf16.gmra.mrb[0].mxu0 %v1544
        %v4237 = vpop.f32.mrb[0].mxu0
        %v4238 = vadd.f32 %v4045, %v4237
        %v4239 = vpop.f32.mrb[0].mxu0
        %v4240 = vadd.f32 %v4047, %v4239
        %v4241 = vpop.f32.mrb[0].mxu0
        %v4242 = vadd.f32 %v4049, %v4241
        %v4243 = vpop.f32.mrb[0].mxu0
        %v4244 = vadd.f32 %v4051, %v4243
        %4245 = vmatprep.mubr.bf16.mxu0 %v1553
        %4246 = vmatmul.mubr.bf16.gmra.mrb[0].mxu0 %v1552
        %v4247 = vpop.f32.mrb[0].mxu0
        %v4248 = vadd.f32 %v4055, %v4247
        %v4249 = vpop.f32.mrb[0].mxu0
        %v4250 = vadd.f32 %v4057, %v4249
        %v4251 = vpop.f32.mrb[0].mxu0
        %v4252 = vadd.f32 %v4059, %v4251
        %v4253 = vpop.f32.mrb[0].mxu0
        %v4254 = vadd.f32 %v4061, %v4253
        %4255 = vmatprep.mubr.bf16.mxu0 %v1561
        %4256 = vmatmul.mubr.bf16.gmra.mrb[0].mxu0 %v1560
        %v4257 = vpop.f32.mrb[0].mxu0
        %v4258 = vadd.f32 %v4065, %v4257
        %v4259 = vpop.f32.mrb[0].mxu0
        %v4260 = vadd.f32 %v4067, %v4259
        %v4261 = vpop.f32.mrb[0].mxu0
        %v4262 = vadd.f32 %v4069, %v4261
        %v4263 = vpop.f32.mrb[0].mxu0
        %v4264 = vadd.f32 %v4071, %v4263
        %4265 = vmatprep.mubr.bf16.mxu0 %v1569
        %4266 = vmatmul.mubr.bf16.gmra.mrb[0].mxu0 %v1568
        %v4267 = vpop.f32.mrb[0].mxu0
        %v4268 = vadd.f32 %v4075, %v4267
        %v4269 = vpop.f32.mrb[0].mxu0
        %v4270 = vadd.f32 %v4077, %v4269
        %v4271 = vpop.f32.mrb[0].mxu0
        %v4272 = vadd.f32 %v4079, %v4271
        %v4273 = vpop.f32.mrb[0].mxu0
        %v4274 = vadd.f32 %v4081, %v4273
        %4275 = vmatprep.mubr.bf16.mxu0 %v1577
        %4276 = vmatmul.mubr.bf16.gmra.mrb[0].mxu0 %v1576
        %v4277 = vpop.f32.mrb[0].mxu0
        %v4278 = vadd.f32 %v4085, %v4277
        %v4279 = vpop.f32.mrb[0].mxu0
        %v4280 = vadd.f32 %v4087, %v4279
        %v4281 = vpop.f32.mrb[0].mxu0
        %v4282 = vadd.f32 %v4089, %v4281
        %v4283 = vpop.f32.mrb[0].mxu0
        %v4284 = vadd.f32 %v4091, %v4283
        %4285 = vmatprep.mubr.bf16.mxu0 %v1585
        %4286 = vmatmul.mubr.bf16.gmra.mrb[0].mxu0 %v1584
        %v4287 = vpop.f32.mrb[0].mxu0
        %v4288 = vadd.f32 %v4095, %v4287
        %v4289 = vpop.f32.mrb[0].mxu0
        %v4290 = vadd.f32 %v4097, %v4289
        %v4291 = vpop.f32.mrb[0].mxu0
        %v4292 = vadd.f32 %v4099, %v4291
        %v4293 = vpop.f32.mrb[0].mxu0
        %v4294 = vadd.f32 %v4101, %v4293
        %4295 = vmatprep.mubr.bf16.mxu0 %v1593
        %4296 = vmatmul.mubr.bf16.gmra.mrb[0].mxu0 %v1592
        %v4297 = vpop.f32.mrb[0].mxu0
        %v4298 = vadd.f32 %v4105, %v4297
        %v4299 = vpop.f32.mrb[0].mxu0
        %v4300 = vadd.f32 %v4107, %v4299
        %v4301 = vpop.f32.mrb[0].mxu0
        %v4302 = vadd.f32 %v4109, %v4301
        %v4303 = vpop.f32.mrb[0].mxu0
        %v4304 = vadd.f32 %v4111, %v4303
        %4305 = vmatprep.mubr.bf16.mxu0 %v1601
        %4306 = vmatmul.mubr.bf16.gmra.mrb[0].mxu0 %v1600
        %v4307 = vpop.f32.mrb[0].mxu0
        %v4308 = vadd.f32 %v4115, %v4307
        %v4309 = vpop.f32.mrb[0].mxu0
        %v4310 = vadd.f32 %v4117, %v4309
        %v4311 = vpop.f32.mrb[0].mxu0
        %v4312 = vadd.f32 %v4119, %v4311
        %v4313 = vpop.f32.mrb[0].mxu0
        %v4314 = vadd.f32 %v4121, %v4313
        %4315 = vmatprep.mubr.bf16.mxu0 %v1609
        %4316 = vmatmul.mubr.bf16.gmra.mrb[0].mxu0 %v1608
        %v4317 = vpop.f32.mrb[0].mxu0
        %v4318 = vadd.f32 %v4125, %v4317
        %v4319 = vpop.f32.mrb[0].mxu0
        %v4320 = vadd.f32 %v4127, %v4319
        %v4321 = vpop.f32.mrb[0].mxu0
        %v4322 = vadd.f32 %v4129, %v4321
        %v4323 = vpop.f32.mrb[0].mxu0
        %v4324 = vadd.f32 %v4131, %v4323
        %4325 = vmatprep.mubr.bf16.mxu0 %v1617
        %4326 = vmatmul.mubr.bf16.gmra.mrb[0].mxu0 %v1616
        %v4327 = vpop.f32.mrb[0].mxu0
        %v4328 = vadd.f32 %v4135, %v4327
        %v4329 = vpop.f32.mrb[0].mxu0
        %v4330 = vadd.f32 %v4137, %v4329
        %v4331 = vpop.f32.mrb[0].mxu0
        %v4332 = vadd.f32 %v4139, %v4331
        %v4333 = vpop.f32.mrb[0].mxu0
        %v4334 = vadd.f32 %v4141, %v4333
        %4335 = vmatprep.mubr.bf16.mxu0 %v1625
        %4336 = vmatmul.mubr.bf16.gmra.mrb[0].mxu0 %v1624
        %v4337 = vpop.f32.mrb[0].mxu0
        %v4338 = vadd.f32 %v4145, %v4337
        %v4339 = vpop.f32.mrb[0].mxu0
        %v4340 = vadd.f32 %v4147, %v4339
        %v4341 = vpop.f32.mrb[0].mxu0
        %v4342 = vadd.f32 %v4149, %v4341
        %v4343 = vpop.f32.mrb[0].mxu0
        %v4344 = vadd.f32 %v4151, %v4343
        %4345 = vdwg.mxu0
        %4346 = vmatprep.subr.bf16.mxu0 %v2807
        %4347 = vmatpush1.bf16.msra.mxu0 %v2806
        %4348 = vmatprep.subr.bf16.mxu0 %v2811
        %4349 = vmatpush1.bf16.msra.mxu0 %v2810
        %4350 = vmatprep.subr.bf16.mxu0 %v2815
        %4351 = vmatpush1.bf16.msra.mxu0 %v2814
        %4352 = vmatprep.subr.bf16.mxu0 %v2819
        %4353 = vmatpush1.bf16.msra.mxu0 %v2818
        %4354 = vmatprep.subr.bf16.mxu0 %v2823
        %4355 = vmatpush1.bf16.msra.mxu0 %v2822
        %4356 = vmatprep.subr.bf16.mxu0 %v2827
        %4357 = vmatpush1.bf16.msra.mxu0 %v2826
        %4358 = vmatprep.subr.bf16.mxu0 %v2831
        %4359 = vmatpush1.bf16.msra.mxu0 %v2830
        %4360 = vmatprep.subr.bf16.mxu0 %v2835
        %4361 = vmatpush1.bf16.msra.mxu0 %v2834
        %4362 = vmatprep.subr.bf16.mxu0 %v2839
        %4363 = vmatpush1.bf16.msra.mxu0 %v2838
        %4364 = vmatprep.subr.bf16.mxu0 %v2843
        %4365 = vmatpush1.bf16.msra.mxu0 %v2842
        %4366 = vmatprep.subr.bf16.mxu0 %v2847
        %4367 = vmatpush1.bf16.msra.mxu0 %v2846
        %4368 = vmatprep.subr.bf16.mxu0 %v2851
        %4369 = vmatpush1.bf16.msra.mxu0 %v2850
        %4370 = vmatprep.subr.bf16.mxu0 %v2855
        %4371 = vmatpush1.bf16.msra.mxu0 %v2854
        %4372 = vmatprep.subr.bf16.mxu0 %v2859
        %4373 = vmatpush1.bf16.msra.mxu0 %v2858
        %4374 = vmatprep.subr.bf16.mxu0 %v2863
        %4375 = vmatpush1.bf16.msra.mxu0 %v2862
        %4376 = vmatprep.subr.bf16.mxu0 %v2867
        %4377 = vmatpush1.bf16.msra.mxu0 %v2866
        %4378 = vmatprep.mubr.bf16.mxu0 %v1507
        %4379 = vmatmul.mubr.bf16.gmra.mrb[0].mxu0 %v1506
        %v4380 = vpop.f32.mrb[0].mxu0
        %v4381 = vadd.f32 %v4188, %v4380
        %v4382 = vpop.f32.mrb[0].mxu0
        %v4383 = vadd.f32 %v4190, %v4382
        %v4384 = vpop.f32.mrb[0].mxu0
        %v4385 = vadd.f32 %v4192, %v4384
        %v4386 = vpop.f32.mrb[0].mxu0
        %v4387 = vadd.f32 %v4194, %v4386
        %4388 = vmatprep.mubr.bf16.mxu0 %v1515
        %4389 = vmatmul.mubr.bf16.gmra.mrb[0].mxu0 %v1514
        %v4390 = vpop.f32.mrb[0].mxu0
        %v4391 = vadd.f32 %v4198, %v4390
        %v4392 = vpop.f32.mrb[0].mxu0
        %v4393 = vadd.f32 %v4200, %v4392
        %v4394 = vpop.f32.mrb[0].mxu0
        %v4395 = vadd.f32 %v4202, %v4394
        %v4396 = vpop.f32.mrb[0].mxu0
        %v4397 = vadd.f32 %v4204, %v4396
        %4398 = vmatprep.mubr.bf16.mxu0 %v1523
        %4399 = vmatmul.mubr.bf16.gmra.mrb[0].mxu0 %v1522
        %v4400 = vpop.f32.mrb[0].mxu0
        %v4401 = vadd.f32 %v4208, %v4400
        %v4402 = vpop.f32.mrb[0].mxu0
        %v4403 = vadd.f32 %v4210, %v4402
        %v4404 = vpop.f32.mrb[0].mxu0
        %v4405 = vadd.f32 %v4212, %v4404
        %v4406 = vpop.f32.mrb[0].mxu0
        %v4407 = vadd.f32 %v4214, %v4406
        %4408 = vmatprep.mubr.bf16.mxu0 %v1531
        %4409 = vmatmul.mubr.bf16.gmra.mrb[0].mxu0 %v1530
        %v4410 = vpop.f32.mrb[0].mxu0
        %v4411 = vadd.f32 %v4218, %v4410
        %v4412 = vpop.f32.mrb[0].mxu0
        %v4413 = vadd.f32 %v4220, %v4412
        %v4414 = vpop.f32.mrb[0].mxu0
        %v4415 = vadd.f32 %v4222, %v4414
        %v4416 = vpop.f32.mrb[0].mxu0
        %v4417 = vadd.f32 %v4224, %v4416
        %4418 = vmatprep.mubr.bf16.mxu0 %v1539
        %4419 = vmatmul.mubr.bf16.gmra.mrb[0].mxu0 %v1538
        %v4420 = vpop.f32.mrb[0].mxu0
        %v4421 = vadd.f32 %v4228, %v4420
        %v4422 = vpop.f32.mrb[0].mxu0
        %v4423 = vadd.f32 %v4230, %v4422
        %v4424 = vpop.f32.mrb[0].mxu0
        %v4425 = vadd.f32 %v4232, %v4424
        %v4426 = vpop.f32.mrb[0].mxu0
        %v4427 = vadd.f32 %v4234, %v4426
        %4428 = vmatprep.mubr.bf16.mxu0 %v1547
        %4429 = vmatmul.mubr.bf16.gmra.mrb[0].mxu0 %v1546
        %v4430 = vpop.f32.mrb[0].mxu0
        %v4431 = vadd.f32 %v4238, %v4430
        %v4432 = vpop.f32.mrb[0].mxu0
        %v4433 = vadd.f32 %v4240, %v4432
        %v4434 = vpop.f32.mrb[0].mxu0
        %v4435 = vadd.f32 %v4242, %v4434
        %v4436 = vpop.f32.mrb[0].mxu0
        %v4437 = vadd.f32 %v4244, %v4436
        %4438 = vmatprep.mubr.bf16.mxu0 %v1555
        %4439 = vmatmul.mubr.bf16.gmra.mrb[0].mxu0 %v1554
        %v4440 = vpop.f32.mrb[0].mxu0
        %v4441 = vadd.f32 %v4248, %v4440
        %v4442 = vpop.f32.mrb[0].mxu0
        %v4443 = vadd.f32 %v4250, %v4442
        %v4444 = vpop.f32.mrb[0].mxu0
        %v4445 = vadd.f32 %v4252, %v4444
        %v4446 = vpop.f32.mrb[0].mxu0
        %v4447 = vadd.f32 %v4254, %v4446
        %4448 = vmatprep.mubr.bf16.mxu0 %v1563
        %4449 = vmatmul.mubr.bf16.gmra.mrb[0].mxu0 %v1562
        %v4450 = vpop.f32.mrb[0].mxu0
        %v4451 = vadd.f32 %v4258, %v4450
        %v4452 = vpop.f32.mrb[0].mxu0
        %v4453 = vadd.f32 %v4260, %v4452
        %v4454 = vpop.f32.mrb[0].mxu0
        %v4455 = vadd.f32 %v4262, %v4454
        %v4456 = vpop.f32.mrb[0].mxu0
        %v4457 = vadd.f32 %v4264, %v4456
        %4458 = vmatprep.mubr.bf16.mxu0 %v1571
        %4459 = vmatmul.mubr.bf16.gmra.mrb[0].mxu0 %v1570
        %v4460 = vpop.f32.mrb[0].mxu0
        %v4461 = vadd.f32 %v4268, %v4460
        %v4462 = vpop.f32.mrb[0].mxu0
        %v4463 = vadd.f32 %v4270, %v4462
        %v4464 = vpop.f32.mrb[0].mxu0
        %v4465 = vadd.f32 %v4272, %v4464
        %v4466 = vpop.f32.mrb[0].mxu0
        %v4467 = vadd.f32 %v4274, %v4466
        %4468 = vmatprep.mubr.bf16.mxu0 %v1579
        %4469 = vmatmul.mubr.bf16.gmra.mrb[0].mxu0 %v1578
        %v4470 = vpop.f32.mrb[0].mxu0
        %v4471 = vadd.f32 %v4278, %v4470
        %v4472 = vpop.f32.mrb[0].mxu0
        %v4473 = vadd.f32 %v4280, %v4472
        %v4474 = vpop.f32.mrb[0].mxu0
        %v4475 = vadd.f32 %v4282, %v4474
        %v4476 = vpop.f32.mrb[0].mxu0
        %v4477 = vadd.f32 %v4284, %v4476
        %4478 = vmatprep.mubr.bf16.mxu0 %v1587
        %4479 = vmatmul.mubr.bf16.gmra.mrb[0].mxu0 %v1586
        %v4480 = vpop.f32.mrb[0].mxu0
        %v4481 = vadd.f32 %v4288, %v4480
        %v4482 = vpop.f32.mrb[0].mxu0
        %v4483 = vadd.f32 %v4290, %v4482
        %v4484 = vpop.f32.mrb[0].mxu0
        %v4485 = vadd.f32 %v4292, %v4484
        %v4486 = vpop.f32.mrb[0].mxu0
        %v4487 = vadd.f32 %v4294, %v4486
        %4488 = vmatprep.mubr.bf16.mxu0 %v1595
        %4489 = vmatmul.mubr.bf16.gmra.mrb[0].mxu0 %v1594
        %v4490 = vpop.f32.mrb[0].mxu0
        %v4491 = vadd.f32 %v4298, %v4490
        %v4492 = vpop.f32.mrb[0].mxu0
        %v4493 = vadd.f32 %v4300, %v4492
        %v4494 = vpop.f32.mrb[0].mxu0
        %v4495 = vadd.f32 %v4302, %v4494
        %v4496 = vpop.f32.mrb[0].mxu0
        %v4497 = vadd.f32 %v4304, %v4496
        %4498 = vmatprep.mubr.bf16.mxu0 %v1603
        %4499 = vmatmul.mubr.bf16.gmra.mrb[0].mxu0 %v1602
        %v4500 = vpop.f32.mrb[0].mxu0
        %v4501 = vadd.f32 %v4308, %v4500
        %v4502 = vpop.f32.mrb[0].mxu0
        %v4503 = vadd.f32 %v4310, %v4502
        %v4504 = vpop.f32.mrb[0].mxu0
        %v4505 = vadd.f32 %v4312, %v4504
        %v4506 = vpop.f32.mrb[0].mxu0
        %v4507 = vadd.f32 %v4314, %v4506
        %4508 = vmatprep.mubr.bf16.mxu0 %v1611
        %4509 = vmatmul.mubr.bf16.gmra.mrb[0].mxu0 %v1610
        %v4510 = vpop.f32.mrb[0].mxu0
        %v4511 = vadd.f32 %v4318, %v4510
        %v4512 = vpop.f32.mrb[0].mxu0
        %v4513 = vadd.f32 %v4320, %v4512
        %v4514 = vpop.f32.mrb[0].mxu0
        %v4515 = vadd.f32 %v4322, %v4514
        %v4516 = vpop.f32.mrb[0].mxu0
        %v4517 = vadd.f32 %v4324, %v4516
        %4518 = vmatprep.mubr.bf16.mxu0 %v1619
        %4519 = vmatmul.mubr.bf16.gmra.mrb[0].mxu0 %v1618
        %v4520 = vpop.f32.mrb[0].mxu0
        %v4521 = vadd.f32 %v4328, %v4520
        %v4522 = vpop.f32.mrb[0].mxu0
        %v4523 = vadd.f32 %v4330, %v4522
        %v4524 = vpop.f32.mrb[0].mxu0
        %v4525 = vadd.f32 %v4332, %v4524
        %v4526 = vpop.f32.mrb[0].mxu0
        %v4527 = vadd.f32 %v4334, %v4526
        %4528 = vmatprep.mubr.bf16.mxu0 %v1627
        %4529 = vmatmul.mubr.bf16.gmra.mrb[0].mxu0 %v1626
        %v4530 = vpop.f32.mrb[0].mxu0
        %v4531 = vadd.f32 %v4338, %v4530
        %v4532 = vpop.f32.mrb[0].mxu0
        %v4533 = vadd.f32 %v4340, %v4532
        %v4534 = vpop.f32.mrb[0].mxu0
        %v4535 = vadd.f32 %v4342, %v4534
        %v4536 = vpop.f32.mrb[0].mxu0
        %v4537 = vadd.f32 %v4344, %v4536
        %4538 = vdwg.mxu0
        %4539 = vmatprep.subr.bf16.mxu0 %v2871
        %4540 = vmatpush1.bf16.msra.mxu0 %v2870
        %4541 = vmatprep.subr.bf16.mxu0 %v2875
        %4542 = vmatpush1.bf16.msra.mxu0 %v2874
        %4543 = vmatprep.subr.bf16.mxu0 %v2879
        %4544 = vmatpush1.bf16.msra.mxu0 %v2878
        %4545 = vmatprep.subr.bf16.mxu0 %v2883
        %4546 = vmatpush1.bf16.msra.mxu0 %v2882
        %4547 = vmatprep.subr.bf16.mxu0 %v2887
        %4548 = vmatpush1.bf16.msra.mxu0 %v2886
        %4549 = vmatprep.subr.bf16.mxu0 %v2891
        %4550 = vmatpush1.bf16.msra.mxu0 %v2890
        %4551 = vmatprep.subr.bf16.mxu0 %v2895
        %4552 = vmatpush1.bf16.msra.mxu0 %v2894
        %4553 = vmatprep.subr.bf16.mxu0 %v2899
        %4554 = vmatpush1.bf16.msra.mxu0 %v2898
        %4555 = vmatprep.subr.bf16.mxu0 %v2903
        %4556 = vmatpush1.bf16.msra.mxu0 %v2902
        %4557 = vmatprep.subr.bf16.mxu0 %v2907
        %4558 = vmatpush1.bf16.msra.mxu0 %v2906
        %4559 = vmatprep.subr.bf16.mxu0 %v2911
        %4560 = vmatpush1.bf16.msra.mxu0 %v2910
        %4561 = vmatprep.subr.bf16.mxu0 %v2915
        %4562 = vmatpush1.bf16.msra.mxu0 %v2914
        %4563 = vmatprep.subr.bf16.mxu0 %v2919
        %4564 = vmatpush1.bf16.msra.mxu0 %v2918
        %4565 = vmatprep.subr.bf16.mxu0 %v2923
        %4566 = vmatpush1.bf16.msra.mxu0 %v2922
        %4567 = vmatprep.subr.bf16.mxu0 %v2927
        %4568 = vmatpush1.bf16.msra.mxu0 %v2926
        %4569 = vmatprep.subr.bf16.mxu0 %v2931
        %4570 = vmatpush1.bf16.msra.mxu0 %v2930
        %4571 = vmatprep.mubr.bf16.mxu0 %v1509
        %4572 = vmatmul.mubr.bf16.gmra.mrb[0].mxu0 %v1508
        %v4573 = vpop.f32.mrb[0].mxu0
        %v4574 = vadd.f32 %v4381, %v4573
        %v4575 = vpop.f32.mrb[0].mxu0
        %v4576 = vadd.f32 %v4383, %v4575
        %v4577 = vpop.f32.mrb[0].mxu0
        %v4578 = vadd.f32 %v4385, %v4577
        %v4579 = vpop.f32.mrb[0].mxu0
        %v4580 = vadd.f32 %v4387, %v4579
        %4581 = vmatprep.mubr.bf16.mxu0 %v1517
        %4582 = vmatmul.mubr.bf16.gmra.mrb[0].mxu0 %v1516
        %v4583 = vpop.f32.mrb[0].mxu0
        %v4584 = vadd.f32 %v4391, %v4583
        %v4585 = vpop.f32.mrb[0].mxu0
        %v4586 = vadd.f32 %v4393, %v4585
        %v4587 = vpop.f32.mrb[0].mxu0
        %v4588 = vadd.f32 %v4395, %v4587
        %v4589 = vpop.f32.mrb[0].mxu0
        %v4590 = vadd.f32 %v4397, %v4589
        %4591 = vmatprep.mubr.bf16.mxu0 %v1525
        %4592 = vmatmul.mubr.bf16.gmra.mrb[0].mxu0 %v1524
        %v4593 = vpop.f32.mrb[0].mxu0
        %v4594 = vadd.f32 %v4401, %v4593
        %v4595 = vpop.f32.mrb[0].mxu0
        %v4596 = vadd.f32 %v4403, %v4595
        %v4597 = vpop.f32.mrb[0].mxu0
        %v4598 = vadd.f32 %v4405, %v4597
        %v4599 = vpop.f32.mrb[0].mxu0
        %v4600 = vadd.f32 %v4407, %v4599
        %4601 = vmatprep.mubr.bf16.mxu0 %v1533
        %4602 = vmatmul.mubr.bf16.gmra.mrb[0].mxu0 %v1532
        %v4603 = vpop.f32.mrb[0].mxu0
        %v4604 = vadd.f32 %v4411, %v4603
        %v4605 = vpop.f32.mrb[0].mxu0
        %v4606 = vadd.f32 %v4413, %v4605
        %v4607 = vpop.f32.mrb[0].mxu0
        %v4608 = vadd.f32 %v4415, %v4607
        %v4609 = vpop.f32.mrb[0].mxu0
        %v4610 = vadd.f32 %v4417, %v4609
        %4611 = vmatprep.mubr.bf16.mxu0 %v1541
        %4612 = vmatmul.mubr.bf16.gmra.mrb[0].mxu0 %v1540
        %v4613 = vpop.f32.mrb[0].mxu0
        %v4614 = vadd.f32 %v4421, %v4613
        %v4615 = vpop.f32.mrb[0].mxu0
        %v4616 = vadd.f32 %v4423, %v4615
        %v4617 = vpop.f32.mrb[0].mxu0
        %v4618 = vadd.f32 %v4425, %v4617
        %v4619 = vpop.f32.mrb[0].mxu0
        %v4620 = vadd.f32 %v4427, %v4619
        %4621 = vmatprep.mubr.bf16.mxu0 %v1549
        %4622 = vmatmul.mubr.bf16.gmra.mrb[0].mxu0 %v1548
        %v4623 = vpop.f32.mrb[0].mxu0
        %v4624 = vadd.f32 %v4431, %v4623
        %v4625 = vpop.f32.mrb[0].mxu0
        %v4626 = vadd.f32 %v4433, %v4625
        %v4627 = vpop.f32.mrb[0].mxu0
        %v4628 = vadd.f32 %v4435, %v4627
        %v4629 = vpop.f32.mrb[0].mxu0
        %v4630 = vadd.f32 %v4437, %v4629
        %4631 = vmatprep.mubr.bf16.mxu0 %v1557
        %4632 = vmatmul.mubr.bf16.gmra.mrb[0].mxu0 %v1556
        %v4633 = vpop.f32.mrb[0].mxu0
        %v4634 = vadd.f32 %v4441, %v4633
        %v4635 = vpop.f32.mrb[0].mxu0
        %v4636 = vadd.f32 %v4443, %v4635
        %v4637 = vpop.f32.mrb[0].mxu0
        %v4638 = vadd.f32 %v4445, %v4637
        %v4639 = vpop.f32.mrb[0].mxu0
        %v4640 = vadd.f32 %v4447, %v4639
        %4641 = vmatprep.mubr.bf16.mxu0 %v1565
        %4642 = vmatmul.mubr.bf16.gmra.mrb[0].mxu0 %v1564
        %v4643 = vpop.f32.mrb[0].mxu0
        %v4644 = vadd.f32 %v4451, %v4643
        %v4645 = vpop.f32.mrb[0].mxu0
        %v4646 = vadd.f32 %v4453, %v4645
        %v4647 = vpop.f32.mrb[0].mxu0
        %v4648 = vadd.f32 %v4455, %v4647
        %v4649 = vpop.f32.mrb[0].mxu0
        %v4650 = vadd.f32 %v4457, %v4649
        %4651 = vmatprep.mubr.bf16.mxu0 %v1573
        %4652 = vmatmul.mubr.bf16.gmra.mrb[0].mxu0 %v1572
        %v4653 = vpop.f32.mrb[0].mxu0
        %v4654 = vadd.f32 %v4461, %v4653
        %v4655 = vpop.f32.mrb[0].mxu0
        %v4656 = vadd.f32 %v4463, %v4655
        %v4657 = vpop.f32.mrb[0].mxu0
        %v4658 = vadd.f32 %v4465, %v4657
        %v4659 = vpop.f32.mrb[0].mxu0
        %v4660 = vadd.f32 %v4467, %v4659
        %4661 = vmatprep.mubr.bf16.mxu0 %v1581
        %4662 = vmatmul.mubr.bf16.gmra.mrb[0].mxu0 %v1580
        %v4663 = vpop.f32.mrb[0].mxu0
        %v4664 = vadd.f32 %v4471, %v4663
        %v4665 = vpop.f32.mrb[0].mxu0
        %v4666 = vadd.f32 %v4473, %v4665
        %v4667 = vpop.f32.mrb[0].mxu0
        %v4668 = vadd.f32 %v4475, %v4667
        %v4669 = vpop.f32.mrb[0].mxu0
        %v4670 = vadd.f32 %v4477, %v4669
        %4671 = vmatprep.mubr.bf16.mxu0 %v1589
        %4672 = vmatmul.mubr.bf16.gmra.mrb[0].mxu0 %v1588
        %v4673 = vpop.f32.mrb[0].mxu0
        %v4674 = vadd.f32 %v4481, %v4673
        %v4675 = vpop.f32.mrb[0].mxu0
        %v4676 = vadd.f32 %v4483, %v4675
        %v4677 = vpop.f32.mrb[0].mxu0
        %v4678 = vadd.f32 %v4485, %v4677
        %v4679 = vpop.f32.mrb[0].mxu0
        %v4680 = vadd.f32 %v4487, %v4679
        %4681 = vmatprep.mubr.bf16.mxu0 %v1597
        %4682 = vmatmul.mubr.bf16.gmra.mrb[0].mxu0 %v1596
        %v4683 = vpop.f32.mrb[0].mxu0
        %v4684 = vadd.f32 %v4491, %v4683
        %v4685 = vpop.f32.mrb[0].mxu0
        %v4686 = vadd.f32 %v4493, %v4685
        %v4687 = vpop.f32.mrb[0].mxu0
        %v4688 = vadd.f32 %v4495, %v4687
        %v4689 = vpop.f32.mrb[0].mxu0
        %v4690 = vadd.f32 %v4497, %v4689
        %4691 = vmatprep.mubr.bf16.mxu0 %v1605
        %4692 = vmatmul.mubr.bf16.gmra.mrb[0].mxu0 %v1604
        %v4693 = vpop.f32.mrb[0].mxu0
        %v4694 = vadd.f32 %v4501, %v4693
        %v4695 = vpop.f32.mrb[0].mxu0
        %v4696 = vadd.f32 %v4503, %v4695
        %v4697 = vpop.f32.mrb[0].mxu0
        %v4698 = vadd.f32 %v4505, %v4697
        %v4699 = vpop.f32.mrb[0].mxu0
        %v4700 = vadd.f32 %v4507, %v4699
        %4701 = vmatprep.mubr.bf16.mxu0 %v1613
        %4702 = vmatmul.mubr.bf16.gmra.mrb[0].mxu0 %v1612
        %v4703 = vpop.f32.mrb[0].mxu0
        %v4704 = vadd.f32 %v4511, %v4703
        %v4705 = vpop.f32.mrb[0].mxu0
        %v4706 = vadd.f32 %v4513, %v4705
        %v4707 = vpop.f32.mrb[0].mxu0
        %v4708 = vadd.f32 %v4515, %v4707
        %v4709 = vpop.f32.mrb[0].mxu0
        %v4710 = vadd.f32 %v4517, %v4709
        %4711 = vmatprep.mubr.bf16.mxu0 %v1621
        %4712 = vmatmul.mubr.bf16.gmra.mrb[0].mxu0 %v1620
        %v4713 = vpop.f32.mrb[0].mxu0
        %v4714 = vadd.f32 %v4521, %v4713
        %v4715 = vpop.f32.mrb[0].mxu0
        %v4716 = vadd.f32 %v4523, %v4715
        %v4717 = vpop.f32.mrb[0].mxu0
        %v4718 = vadd.f32 %v4525, %v4717
        %v4719 = vpop.f32.mrb[0].mxu0
        %v4720 = vadd.f32 %v4527, %v4719
        %4721 = vmatprep.mubr.bf16.mxu0 %v1629
        %4722 = vmatmul.mubr.bf16.gmra.mrb[0].mxu0 %v1628
        %v4723 = vpop.f32.mrb[0].mxu0
        %v4724 = vadd.f32 %v4531, %v4723
        %v4725 = vpop.f32.mrb[0].mxu0
        %v4726 = vadd.f32 %v4533, %v4725
        %v4727 = vpop.f32.mrb[0].mxu0
        %v4728 = vadd.f32 %v4535, %v4727
        %v4729 = vpop.f32.mrb[0].mxu0
        %v4730 = vadd.f32 %v4537, %v4729
        %4731 = vdwg.mxu0
        %v4732 = vmax.f32 %v3802, 0.0
        %v4733 = vmax.f32 %v3804, 0.0
        %v4734 = vmax.f32 %v4574, 0.0
        %v4735 = vmax.f32 %v4576, 0.0
        %v4736 = vmax.f32 %v3806, 0.0
        %v4737 = vmax.f32 %v3808, 0.0
        %v4738 = vmax.f32 %v4578, 0.0
        %v4739 = vmax.f32 %v4580, 0.0
        %v4740 = vmax.f32 %v3812, 0.0
        %v4741 = vmax.f32 %v3814, 0.0
        %v4742 = vmax.f32 %v4584, 0.0
        %v4743 = vmax.f32 %v4586, 0.0
        %v4744 = vmax.f32 %v3816, 0.0
        %v4745 = vmax.f32 %v3818, 0.0
        %v4746 = vmax.f32 %v4588, 0.0
        %v4747 = vmax.f32 %v4590, 0.0
        %v4748 = vmax.f32 %v3822, 0.0
        %v4749 = vmax.f32 %v3824, 0.0
        %v4750 = vmax.f32 %v4594, 0.0
        %v4751 = vmax.f32 %v4596, 0.0
        %v4752 = vmax.f32 %v3826, 0.0
        %v4753 = vmax.f32 %v3828, 0.0
        %v4754 = vmax.f32 %v4598, 0.0
        %v4755 = vmax.f32 %v4600, 0.0
        %v4756 = vmax.f32 %v3832, 0.0
        %v4757 = vmax.f32 %v3834, 0.0
        %v4758 = vmax.f32 %v4604, 0.0
        %v4759 = vmax.f32 %v4606, 0.0
        %v4760 = vmax.f32 %v3836, 0.0
        %v4761 = vmax.f32 %v3838, 0.0
        %v4762 = vmax.f32 %v4608, 0.0
        %v4763 = vmax.f32 %v4610, 0.0
        %v4764 = vmax.f32 %v3842, 0.0
        %v4765 = vmax.f32 %v3844, 0.0
        %v4766 = vmax.f32 %v4614, 0.0
        %v4767 = vmax.f32 %v4616, 0.0
        %v4768 = vmax.f32 %v3846, 0.0
        %v4769 = vmax.f32 %v3848, 0.0
        %v4770 = vmax.f32 %v4618, 0.0
        %v4771 = vmax.f32 %v4620, 0.0
        %v4772 = vmax.f32 %v3852, 0.0
        %v4773 = vmax.f32 %v3854, 0.0
        %v4774 = vmax.f32 %v4624, 0.0
        %v4775 = vmax.f32 %v4626, 0.0
        %v4776 = vmax.f32 %v3856, 0.0
        %v4777 = vmax.f32 %v3858, 0.0
        %v4778 = vmax.f32 %v4628, 0.0
        %v4779 = vmax.f32 %v4630, 0.0
        %v4780 = vmax.f32 %v3862, 0.0
        %v4781 = vmax.f32 %v3864, 0.0
        %v4782 = vmax.f32 %v4634, 0.0
        %v4783 = vmax.f32 %v4636, 0.0
        %v4784 = vmax.f32 %v3866, 0.0
        %v4785 = vmax.f32 %v3868, 0.0
        %v4786 = vmax.f32 %v4638, 0.0
        %v4787 = vmax.f32 %v4640, 0.0
        %v4788 = vmax.f32 %v3872, 0.0
        %v4789 = vmax.f32 %v3874, 0.0
        %v4790 = vmax.f32 %v4644, 0.0
        %v4791 = vmax.f32 %v4646, 0.0
        %v4792 = vmax.f32 %v3876, 0.0
        %v4793 = vmax.f32 %v3878, 0.0
        %v4794 = vmax.f32 %v4648, 0.0
        %v4795 = vmax.f32 %v4650, 0.0
        %v4796 = vmax.f32 %v3882, 0.0
        %v4797 = vmax.f32 %v3884, 0.0
        %v4798 = vmax.f32 %v4654, 0.0
        %v4799 = vmax.f32 %v4656, 0.0
        %v4800 = vmax.f32 %v3886, 0.0
        %v4801 = vmax.f32 %v3888, 0.0
        %v4802 = vmax.f32 %v4658, 0.0
        %v4803 = vmax.f32 %v4660, 0.0
        %v4804 = vmax.f32 %v3892, 0.0
        %v4805 = vmax.f32 %v3894, 0.0
        %v4806 = vmax.f32 %v4664, 0.0
        %v4807 = vmax.f32 %v4666, 0.0
        %v4808 = vmax.f32 %v3896, 0.0
        %v4809 = vmax.f32 %v3898, 0.0
        %v4810 = vmax.f32 %v4668, 0.0
        %v4811 = vmax.f32 %v4670, 0.0
        %v4812 = vmax.f32 %v3902, 0.0
        %v4813 = vmax.f32 %v3904, 0.0
        %v4814 = vmax.f32 %v4674, 0.0
        %v4815 = vmax.f32 %v4676, 0.0
        %v4816 = vmax.f32 %v3906, 0.0
        %v4817 = vmax.f32 %v3908, 0.0
        %v4818 = vmax.f32 %v4678, 0.0
        %v4819 = vmax.f32 %v4680, 0.0
        %v4820 = vmax.f32 %v3912, 0.0
        %v4821 = vmax.f32 %v3914, 0.0
        %v4822 = vmax.f32 %v4684, 0.0
        %v4823 = vmax.f32 %v4686, 0.0
        %v4824 = vmax.f32 %v3916, 0.0
        %v4825 = vmax.f32 %v3918, 0.0
        %v4826 = vmax.f32 %v4688, 0.0
        %v4827 = vmax.f32 %v4690, 0.0
        %v4828 = vmax.f32 %v3922, 0.0
        %v4829 = vmax.f32 %v3924, 0.0
        %v4830 = vmax.f32 %v4694, 0.0
        %v4831 = vmax.f32 %v4696, 0.0
        %v4832 = vmax.f32 %v3926, 0.0
        %v4833 = vmax.f32 %v3928, 0.0
        %v4834 = vmax.f32 %v4698, 0.0
        %v4835 = vmax.f32 %v4700, 0.0
        %v4836 = vmax.f32 %v3932, 0.0
        %v4837 = vmax.f32 %v3934, 0.0
        %v4838 = vmax.f32 %v4704, 0.0
        %v4839 = vmax.f32 %v4706, 0.0
        %v4840 = vmax.f32 %v3936, 0.0
        %v4841 = vmax.f32 %v3938, 0.0
        %v4842 = vmax.f32 %v4708, 0.0
        %v4843 = vmax.f32 %v4710, 0.0
        %v4844 = vmax.f32 %v3942, 0.0
        %v4845 = vmax.f32 %v3944, 0.0
        %v4846 = vmax.f32 %v4714, 0.0
        %v4847 = vmax.f32 %v4716, 0.0
        %v4848 = vmax.f32 %v3946, 0.0
        %v4849 = vmax.f32 %v3948, 0.0
        %v4850 = vmax.f32 %v4718, 0.0
        %v4851 = vmax.f32 %v4720, 0.0
        %v4852 = vmax.f32 %v3952, 0.0
        %v4853 = vmax.f32 %v3954, 0.0
        %v4854 = vmax.f32 %v4724, 0.0
        %v4855 = vmax.f32 %v4726, 0.0
        %v4856 = vmax.f32 %v3956, 0.0
        %v4857 = vmax.f32 %v3958, 0.0
        %v4858 = vmax.f32 %v4728, 0.0
        %v4859 = vmax.f32 %v4730, 0.0
        %v4860 = vmul.f32 %v4732, %v4732
        %v4861 = vmul.f32 %v4733, %v4733
        %v4862 = vmul.f32 %v4734, %v4734
        %v4863 = vmul.f32 %v4735, %v4735
        %v4864 = vmul.f32 %v4736, %v4736
        %v4865 = vmul.f32 %v4737, %v4737
        %v4866 = vmul.f32 %v4738, %v4738
        %v4867 = vmul.f32 %v4739, %v4739
        %v4868 = vmul.f32 %v4740, %v4740
        %v4869 = vmul.f32 %v4741, %v4741
        %v4870 = vmul.f32 %v4742, %v4742
        %v4871 = vmul.f32 %v4743, %v4743
        %v4872 = vmul.f32 %v4744, %v4744
        %v4873 = vmul.f32 %v4745, %v4745
        %v4874 = vmul.f32 %v4746, %v4746
        %v4875 = vmul.f32 %v4747, %v4747
        %v4876 = vmul.f32 %v4748, %v4748
        %v4877 = vmul.f32 %v4749, %v4749
        %v4878 = vmul.f32 %v4750, %v4750
        %v4879 = vmul.f32 %v4751, %v4751
        %v4880 = vmul.f32 %v4752, %v4752
        %v4881 = vmul.f32 %v4753, %v4753
        %v4882 = vmul.f32 %v4754, %v4754
        %v4883 = vmul.f32 %v4755, %v4755
        %v4884 = vmul.f32 %v4756, %v4756
        %v4885 = vmul.f32 %v4757, %v4757
        %v4886 = vmul.f32 %v4758, %v4758
        %v4887 = vmul.f32 %v4759, %v4759
        %v4888 = vmul.f32 %v4760, %v4760
        %v4889 = vmul.f32 %v4761, %v4761
        %v4890 = vmul.f32 %v4762, %v4762
        %v4891 = vmul.f32 %v4763, %v4763
        %v4892 = vmul.f32 %v4764, %v4764
        %v4893 = vmul.f32 %v4765, %v4765
        %v4894 = vmul.f32 %v4766, %v4766
        %v4895 = vmul.f32 %v4767, %v4767
        %v4896 = vmul.f32 %v4768, %v4768
        %v4897 = vmul.f32 %v4769, %v4769
        %v4898 = vmul.f32 %v4770, %v4770
        %v4899 = vmul.f32 %v4771, %v4771
        %v4900 = vmul.f32 %v4772, %v4772
        %v4901 = vmul.f32 %v4773, %v4773
        %v4902 = vmul.f32 %v4774, %v4774
        %v4903 = vmul.f32 %v4775, %v4775
        %v4904 = vmul.f32 %v4776, %v4776
        %v4905 = vmul.f32 %v4777, %v4777
        %v4906 = vmul.f32 %v4778, %v4778
        %v4907 = vmul.f32 %v4779, %v4779
        %v4908 = vmul.f32 %v4780, %v4780
        %v4909 = vmul.f32 %v4781, %v4781
        %v4910 = vmul.f32 %v4782, %v4782
        %v4911 = vmul.f32 %v4783, %v4783
        %v4912 = vmul.f32 %v4784, %v4784
        %v4913 = vmul.f32 %v4785, %v4785
        %v4914 = vmul.f32 %v4786, %v4786
        %v4915 = vmul.f32 %v4787, %v4787
        %v4916 = vmul.f32 %v4788, %v4788
        %v4917 = vmul.f32 %v4789, %v4789
        %v4918 = vmul.f32 %v4790, %v4790
        %v4919 = vmul.f32 %v4791, %v4791
        %v4920 = vmul.f32 %v4792, %v4792
        %v4921 = vmul.f32 %v4793, %v4793
        %v4922 = vmul.f32 %v4794, %v4794
        %v4923 = vmul.f32 %v4795, %v4795
        %v4924 = vmul.f32 %v4796, %v4796
        %v4925 = vmul.f32 %v4797, %v4797
        %v4926 = vmul.f32 %v4798, %v4798
        %v4927 = vmul.f32 %v4799, %v4799
        %v4928 = vmul.f32 %v4800, %v4800
        %v4929 = vmul.f32 %v4801, %v4801
        %v4930 = vmul.f32 %v4802, %v4802
        %v4931 = vmul.f32 %v4803, %v4803
        %v4932 = vmul.f32 %v4804, %v4804
        %v4933 = vmul.f32 %v4805, %v4805
        %v4934 = vmul.f32 %v4806, %v4806
        %v4935 = vmul.f32 %v4807, %v4807
        %v4936 = vmul.f32 %v4808, %v4808
        %v4937 = vmul.f32 %v4809, %v4809
        %v4938 = vmul.f32 %v4810, %v4810
        %v4939 = vmul.f32 %v4811, %v4811
        %v4940 = vmul.f32 %v4812, %v4812
        %v4941 = vmul.f32 %v4813, %v4813
        %v4942 = vmul.f32 %v4814, %v4814
        %v4943 = vmul.f32 %v4815, %v4815
        %v4944 = vmul.f32 %v4816, %v4816
        %v4945 = vmul.f32 %v4817, %v4817
        %v4946 = vmul.f32 %v4818, %v4818
        %v4947 = vmul.f32 %v4819, %v4819
        %v4948 = vmul.f32 %v4820, %v4820
        %v4949 = vmul.f32 %v4821, %v4821
        %v4950 = vmul.f32 %v4822, %v4822
        %v4951 = vmul.f32 %v4823, %v4823
        %v4952 = vmul.f32 %v4824, %v4824
        %v4953 = vmul.f32 %v4825, %v4825
        %v4954 = vmul.f32 %v4826, %v4826
        %v4955 = vmul.f32 %v4827, %v4827
        %v4956 = vmul.f32 %v4828, %v4828
        %v4957 = vmul.f32 %v4829, %v4829
        %v4958 = vmul.f32 %v4830, %v4830
        %v4959 = vmul.f32 %v4831, %v4831
        %v4960 = vmul.f32 %v4832, %v4832
        %v4961 = vmul.f32 %v4833, %v4833
        %v4962 = vmul.f32 %v4834, %v4834
        %v4963 = vmul.f32 %v4835, %v4835
        %v4964 = vmul.f32 %v4836, %v4836
        %v4965 = vmul.f32 %v4837, %v4837
        %v4966 = vmul.f32 %v4838, %v4838
        %v4967 = vmul.f32 %v4839, %v4839
        %v4968 = vmul.f32 %v4840, %v4840
        %v4969 = vmul.f32 %v4841, %v4841
        %v4970 = vmul.f32 %v4842, %v4842
        %v4971 = vmul.f32 %v4843, %v4843
        %v4972 = vmul.f32 %v4844, %v4844
        %v4973 = vmul.f32 %v4845, %v4845
        %v4974 = vmul.f32 %v4846, %v4846
        %v4975 = vmul.f32 %v4847, %v4847
        %v4976 = vmul.f32 %v4848, %v4848
        %v4977 = vmul.f32 %v4849, %v4849
        %v4978 = vmul.f32 %v4850, %v4850
        %v4979 = vmul.f32 %v4851, %v4851
        %v4980 = vmul.f32 %v4852, %v4852
        %v4981 = vmul.f32 %v4853, %v4853
        %v4982 = vmul.f32 %v4854, %v4854
        %v4983 = vmul.f32 %v4855, %v4855
        %v4984 = vmul.f32 %v4856, %v4856
        %v4985 = vmul.f32 %v4857, %v4857
        %v4986 = vmul.f32 %v4858, %v4858
        %v4987 = vmul.f32 %v4859, %v4859
        %v4988 = vadd.f32 %v4860, %v4861
        %v4989 = vadd.f32 %v4988, %v4862
        %v4990 = vadd.f32 %v4989, %v4863
        %4991 = vadd.xlane.f32.xlu0 %v4990
        %v4992 = vpop.xlane.xlu0 %4991
        %v4993 = vadd.f32 %v4864, %v4865
        %v4994 = vadd.f32 %v4993, %v4866
        %v4995 = vadd.f32 %v4994, %v4867
        %4996 = vadd.xlane.f32.xlu0 %v4995
        %v4997 = vpop.xlane.xlu0 %4996
        %v4998 = vadd.f32 %v4868, %v4869
        %v4999 = vadd.f32 %v4998, %v4870
        %v5000 = vadd.f32 %v4999, %v4871
        %5001 = vadd.xlane.f32.xlu0 %v5000
        %v5002 = vpop.xlane.xlu0 %5001
        %v5003 = vadd.f32 %v4872, %v4873
        %v5004 = vadd.f32 %v5003, %v4874
        %v5005 = vadd.f32 %v5004, %v4875
        %5006 = vadd.xlane.f32.xlu0 %v5005
        %v5007 = vpop.xlane.xlu0 %5006
        %v5008 = vadd.f32 %v4876, %v4877
        %v5009 = vadd.f32 %v5008, %v4878
        %v5010 = vadd.f32 %v5009, %v4879
        %5011 = vadd.xlane.f32.xlu0 %v5010
        %v5012 = vpop.xlane.xlu0 %5011
        %v5013 = vadd.f32 %v4880, %v4881
        %v5014 = vadd.f32 %v5013, %v4882
        %v5015 = vadd.f32 %v5014, %v4883
        %5016 = vadd.xlane.f32.xlu0 %v5015
        %v5017 = vpop.xlane.xlu0 %5016
        %v5018 = vadd.f32 %v4884, %v4885
        %v5019 = vadd.f32 %v5018, %v4886
        %v5020 = vadd.f32 %v5019, %v4887
        %5021 = vadd.xlane.f32.xlu0 %v5020
        %v5022 = vpop.xlane.xlu0 %5021
        %v5023 = vadd.f32 %v4888, %v4889
        %v5024 = vadd.f32 %v5023, %v4890
        %v5025 = vadd.f32 %v5024, %v4891
        %5026 = vadd.xlane.f32.xlu0 %v5025
        %v5027 = vpop.xlane.xlu0 %5026
        %v5028 = vadd.f32 %v4892, %v4893
        %v5029 = vadd.f32 %v5028, %v4894
        %v5030 = vadd.f32 %v5029, %v4895
        %5031 = vadd.xlane.f32.xlu0 %v5030
        %v5032 = vpop.xlane.xlu0 %5031
        %v5033 = vadd.f32 %v4896, %v4897
        %v5034 = vadd.f32 %v5033, %v4898
        %v5035 = vadd.f32 %v5034, %v4899
        %5036 = vadd.xlane.f32.xlu0 %v5035
        %v5037 = vpop.xlane.xlu0 %5036
        %v5038 = vadd.f32 %v4900, %v4901
        %v5039 = vadd.f32 %v5038, %v4902
        %v5040 = vadd.f32 %v5039, %v4903
        %5041 = vadd.xlane.f32.xlu0 %v5040
        %v5042 = vpop.xlane.xlu0 %5041
        %v5043 = vadd.f32 %v4904, %v4905
        %v5044 = vadd.f32 %v5043, %v4906
        %v5045 = vadd.f32 %v5044, %v4907
        %5046 = vadd.xlane.f32.xlu0 %v5045
        %v5047 = vpop.xlane.xlu0 %5046
        %v5048 = vadd.f32 %v4908, %v4909
        %v5049 = vadd.f32 %v5048, %v4910
        %v5050 = vadd.f32 %v5049, %v4911
        %5051 = vadd.xlane.f32.xlu0 %v5050
        %v5052 = vpop.xlane.xlu0 %5051
        %v5053 = vadd.f32 %v4912, %v4913
        %v5054 = vadd.f32 %v5053, %v4914
        %v5055 = vadd.f32 %v5054, %v4915
        %5056 = vadd.xlane.f32.xlu0 %v5055
        %v5057 = vpop.xlane.xlu0 %5056
        %v5058 = vadd.f32 %v4916, %v4917
        %v5059 = vadd.f32 %v5058, %v4918
        %v5060 = vadd.f32 %v5059, %v4919
        %5061 = vadd.xlane.f32.xlu0 %v5060
        %v5062 = vpop.xlane.xlu0 %5061
        %v5063 = vadd.f32 %v4920, %v4921
        %v5064 = vadd.f32 %v5063, %v4922
        %v5065 = vadd.f32 %v5064, %v4923
        %5066 = vadd.xlane.f32.xlu0 %v5065
        %v5067 = vpop.xlane.xlu0 %5066
        %v5068 = vadd.f32 %v4924, %v4925
        %v5069 = vadd.f32 %v5068, %v4926
        %v5070 = vadd.f32 %v5069, %v4927
        %5071 = vadd.xlane.f32.xlu0 %v5070
        %v5072 = vpop.xlane.xlu0 %5071
        %v5073 = vadd.f32 %v4928, %v4929
        %v5074 = vadd.f32 %v5073, %v4930
        %v5075 = vadd.f32 %v5074, %v4931
        %5076 = vadd.xlane.f32.xlu0 %v5075
        %v5077 = vpop.xlane.xlu0 %5076
        %v5078 = vadd.f32 %v4932, %v4933
        %v5079 = vadd.f32 %v5078, %v4934
        %v5080 = vadd.f32 %v5079, %v4935
        %5081 = vadd.xlane.f32.xlu0 %v5080
        %v5082 = vpop.xlane.xlu0 %5081
        %v5083 = vadd.f32 %v4936, %v4937
        %v5084 = vadd.f32 %v5083, %v4938
        %v5085 = vadd.f32 %v5084, %v4939
        %5086 = vadd.xlane.f32.xlu0 %v5085
        %v5087 = vpop.xlane.xlu0 %5086
        %v5088 = vadd.f32 %v4940, %v4941
        %v5089 = vadd.f32 %v5088, %v4942
        %v5090 = vadd.f32 %v5089, %v4943
        %5091 = vadd.xlane.f32.xlu0 %v5090
        %v5092 = vpop.xlane.xlu0 %5091
        %v5093 = vadd.f32 %v4944, %v4945
        %v5094 = vadd.f32 %v5093, %v4946
        %v5095 = vadd.f32 %v5094, %v4947
        %5096 = vadd.xlane.f32.xlu0 %v5095
        %v5097 = vpop.xlane.xlu0 %5096
        %v5098 = vadd.f32 %v4948, %v4949
        %v5099 = vadd.f32 %v5098, %v4950
        %v5100 = vadd.f32 %v5099, %v4951
        %5101 = vadd.xlane.f32.xlu0 %v5100
        %v5102 = vpop.xlane.xlu0 %5101
        %v5103 = vadd.f32 %v4952, %v4953
        %v5104 = vadd.f32 %v5103, %v4954
        %v5105 = vadd.f32 %v5104, %v4955
        %5106 = vadd.xlane.f32.xlu0 %v5105
        %v5107 = vpop.xlane.xlu0 %5106
        %v5108 = vadd.f32 %v4956, %v4957
        %v5109 = vadd.f32 %v5108, %v4958
        %v5110 = vadd.f32 %v5109, %v4959
        %5111 = vadd.xlane.f32.xlu0 %v5110
        %v5112 = vpop.xlane.xlu0 %5111
        %v5113 = vadd.f32 %v4960, %v4961
        %v5114 = vadd.f32 %v5113, %v4962
        %v5115 = vadd.f32 %v5114, %v4963
        %5116 = vadd.xlane.f32.xlu0 %v5115
        %v5117 = vpop.xlane.xlu0 %5116
        %v5118 = vadd.f32 %v4964, %v4965
        %v5119 = vadd.f32 %v5118, %v4966
        %v5120 = vadd.f32 %v5119, %v4967
        %5121 = vadd.xlane.f32.xlu0 %v5120
        %v5122 = vpop.xlane.xlu0 %5121
        %v5123 = vadd.f32 %v4968, %v4969
        %v5124 = vadd.f32 %v5123, %v4970
        %v5125 = vadd.f32 %v5124, %v4971
        %5126 = vadd.xlane.f32.xlu0 %v5125
        %v5127 = vpop.xlane.xlu0 %5126
        %v5128 = vadd.f32 %v4972, %v4973
        %v5129 = vadd.f32 %v5128, %v4974
        %v5130 = vadd.f32 %v5129, %v4975
        %5131 = vadd.xlane.f32.xlu0 %v5130
        %v5132 = vpop.xlane.xlu0 %5131
        %v5133 = vadd.f32 %v4976, %v4977
        %v5134 = vadd.f32 %v5133, %v4978
        %v5135 = vadd.f32 %v5134, %v4979
        %5136 = vadd.xlane.f32.xlu0 %v5135
        %v5137 = vpop.xlane.xlu0 %5136
        %v5138 = vadd.f32 %v4980, %v4981
        %v5139 = vadd.f32 %v5138, %v4982
        %v5140 = vadd.f32 %v5139, %v4983
        %5141 = vadd.xlane.f32.xlu0 %v5140
        %v5142 = vpop.xlane.xlu0 %5141
        %v5143 = vadd.f32 %v4984, %v4985
        %v5144 = vadd.f32 %v5143, %v4986
        %v5145 = vadd.f32 %v5144, %v4987
        %5146 = vadd.xlane.f32.xlu0 %v5145
        %v5147 = vpop.xlane.xlu0 %5146
        %v5148 = vmax.f32 %v4992, 1e-24
        %v5149 = vmax.f32 %v4997, 1e-24
        %v5150 = vmax.f32 %v5002, 1e-24
        %v5151 = vmax.f32 %v5007, 1e-24
        %v5152 = vmax.f32 %v5012, 1e-24
        %v5153 = vmax.f32 %v5017, 1e-24
        %v5154 = vmax.f32 %v5022, 1e-24
        %v5155 = vmax.f32 %v5027, 1e-24
        %v5156 = vmax.f32 %v5032, 1e-24
        %v5157 = vmax.f32 %v5037, 1e-24
        %v5158 = vmax.f32 %v5042, 1e-24
        %v5159 = vmax.f32 %v5047, 1e-24
        %v5160 = vmax.f32 %v5052, 1e-24
        %v5161 = vmax.f32 %v5057, 1e-24
        %v5162 = vmax.f32 %v5062, 1e-24
        %v5163 = vmax.f32 %v5067, 1e-24
        %v5164 = vmax.f32 %v5072, 1e-24
        %v5165 = vmax.f32 %v5077, 1e-24
        %v5166 = vmax.f32 %v5082, 1e-24
        %v5167 = vmax.f32 %v5087, 1e-24
        %v5168 = vmax.f32 %v5092, 1e-24
        %v5169 = vmax.f32 %v5097, 1e-24
        %v5170 = vmax.f32 %v5102, 1e-24
        %v5171 = vmax.f32 %v5107, 1e-24
        %v5172 = vmax.f32 %v5112, 1e-24
        %v5173 = vmax.f32 %v5117, 1e-24
        %v5174 = vmax.f32 %v5122, 1e-24
        %v5175 = vmax.f32 %v5127, 1e-24
        %v5176 = vmax.f32 %v5132, 1e-24
        %v5177 = vmax.f32 %v5137, 1e-24
        %v5178 = vmax.f32 %v5142, 1e-24
        %v5179 = vmax.f32 %v5147, 1e-24
        %v5180 = vrsqrt.pop %v5148
        %v5181 = vrsqrt.pop %v5149
        %v5182 = vrsqrt.pop %v5150
        %v5183 = vrsqrt.pop %v5151
        %v5184 = vrsqrt.pop %v5152
        %v5185 = vrsqrt.pop %v5153
        %v5186 = vrsqrt.pop %v5154
        %v5187 = vrsqrt.pop %v5155
        %v5188 = vrsqrt.pop %v5156
        %v5189 = vrsqrt.pop %v5157
        %v5190 = vrsqrt.pop %v5158
        %v5191 = vrsqrt.pop %v5159
        %v5192 = vrsqrt.pop %v5160
        %v5193 = vrsqrt.pop %v5161
        %v5194 = vrsqrt.pop %v5162
        %v5195 = vrsqrt.pop %v5163
        %v5196 = vrsqrt.pop %v5164
        %v5197 = vrsqrt.pop %v5165
        %v5198 = vrsqrt.pop %v5166
        %v5199 = vrsqrt.pop %v5167
        %v5200 = vrsqrt.pop %v5168
        %v5201 = vrsqrt.pop %v5169
        %v5202 = vrsqrt.pop %v5170
        %v5203 = vrsqrt.pop %v5171
        %v5204 = vrsqrt.pop %v5172
        %v5205 = vrsqrt.pop %v5173
        %v5206 = vrsqrt.pop %v5174
        %v5207 = vrsqrt.pop %v5175
        %v5208 = vrsqrt.pop %v5176
        %v5209 = vrsqrt.pop %v5177
        %v5210 = vrsqrt.pop %v5178
        %v5211 = vrsqrt.pop %v5179
        %v5212 = vmul.f32 %v4732, %v5180
        %v5213 = vmul.f32 %v4733, %v5180
        %v5214 = vmul.f32 %v4734, %v5180
        %v5215 = vmul.f32 %v4735, %v5180
        %v5216 = vmul.f32 %v4736, %v5181
        %v5217 = vmul.f32 %v4737, %v5181
        %v5218 = vmul.f32 %v4738, %v5181
        %v5219 = vmul.f32 %v4739, %v5181
        %v5220 = vmul.f32 %v4740, %v5182
        %v5221 = vmul.f32 %v4741, %v5182
        %v5222 = vmul.f32 %v4742, %v5182
        %v5223 = vmul.f32 %v4743, %v5182
        %v5224 = vmul.f32 %v4744, %v5183
        %v5225 = vmul.f32 %v4745, %v5183
        %v5226 = vmul.f32 %v4746, %v5183
        %v5227 = vmul.f32 %v4747, %v5183
        %v5228 = vmul.f32 %v4748, %v5184
        %v5229 = vmul.f32 %v4749, %v5184
        %v5230 = vmul.f32 %v4750, %v5184
        %v5231 = vmul.f32 %v4751, %v5184
        %v5232 = vmul.f32 %v4752, %v5185
        %v5233 = vmul.f32 %v4753, %v5185
        %v5234 = vmul.f32 %v4754, %v5185
        %v5235 = vmul.f32 %v4755, %v5185
        %v5236 = vmul.f32 %v4756, %v5186
        %v5237 = vmul.f32 %v4757, %v5186
        %v5238 = vmul.f32 %v4758, %v5186
        %v5239 = vmul.f32 %v4759, %v5186
        %v5240 = vmul.f32 %v4760, %v5187
        %v5241 = vmul.f32 %v4761, %v5187
        %v5242 = vmul.f32 %v4762, %v5187
        %v5243 = vmul.f32 %v4763, %v5187
        %v5244 = vmul.f32 %v4764, %v5188
        %v5245 = vmul.f32 %v4765, %v5188
        %v5246 = vmul.f32 %v4766, %v5188
        %v5247 = vmul.f32 %v4767, %v5188
        %v5248 = vmul.f32 %v4768, %v5189
        %v5249 = vmul.f32 %v4769, %v5189
        %v5250 = vmul.f32 %v4770, %v5189
        %v5251 = vmul.f32 %v4771, %v5189
        %v5252 = vmul.f32 %v4772, %v5190
        %v5253 = vmul.f32 %v4773, %v5190
        %v5254 = vmul.f32 %v4774, %v5190
        %v5255 = vmul.f32 %v4775, %v5190
        %v5256 = vmul.f32 %v4776, %v5191
        %v5257 = vmul.f32 %v4777, %v5191
        %v5258 = vmul.f32 %v4778, %v5191
        %v5259 = vmul.f32 %v4779, %v5191
        %v5260 = vmul.f32 %v4780, %v5192
        %v5261 = vmul.f32 %v4781, %v5192
        %v5262 = vmul.f32 %v4782, %v5192
        %v5263 = vmul.f32 %v4783, %v5192
        %v5264 = vmul.f32 %v4784, %v5193
        %v5265 = vmul.f32 %v4785, %v5193
        %v5266 = vmul.f32 %v4786, %v5193
        %v5267 = vmul.f32 %v4787, %v5193
        %v5268 = vmul.f32 %v4788, %v5194
        %v5269 = vmul.f32 %v4789, %v5194
        %v5270 = vmul.f32 %v4790, %v5194
        %v5271 = vmul.f32 %v4791, %v5194
        %v5272 = vmul.f32 %v4792, %v5195
        %v5273 = vmul.f32 %v4793, %v5195
        %v5274 = vmul.f32 %v4794, %v5195
        %v5275 = vmul.f32 %v4795, %v5195
        %v5276 = vmul.f32 %v4796, %v5196
        %v5277 = vmul.f32 %v4797, %v5196
        %v5278 = vmul.f32 %v4798, %v5196
        %v5279 = vmul.f32 %v4799, %v5196
        %v5280 = vmul.f32 %v4800, %v5197
        %v5281 = vmul.f32 %v4801, %v5197
        %v5282 = vmul.f32 %v4802, %v5197
        %v5283 = vmul.f32 %v4803, %v5197
        %v5284 = vmul.f32 %v4804, %v5198
        %v5285 = vmul.f32 %v4805, %v5198
        %v5286 = vmul.f32 %v4806, %v5198
        %v5287 = vmul.f32 %v4807, %v5198
        %v5288 = vmul.f32 %v4808, %v5199
        %v5289 = vmul.f32 %v4809, %v5199
        %v5290 = vmul.f32 %v4810, %v5199
        %v5291 = vmul.f32 %v4811, %v5199
        %v5292 = vmul.f32 %v4812, %v5200
        %v5293 = vmul.f32 %v4813, %v5200
        %v5294 = vmul.f32 %v4814, %v5200
        %v5295 = vmul.f32 %v4815, %v5200
        %v5296 = vmul.f32 %v4816, %v5201
        %v5297 = vmul.f32 %v4817, %v5201
        %v5298 = vmul.f32 %v4818, %v5201
        %v5299 = vmul.f32 %v4819, %v5201
        %v5300 = vmul.f32 %v4820, %v5202
        %v5301 = vmul.f32 %v4821, %v5202
        %v5302 = vmul.f32 %v4822, %v5202
        %v5303 = vmul.f32 %v4823, %v5202
        %v5304 = vmul.f32 %v4824, %v5203
        %v5305 = vmul.f32 %v4825, %v5203
        %v5306 = vmul.f32 %v4826, %v5203
        %v5307 = vmul.f32 %v4827, %v5203
        %v5308 = vmul.f32 %v4828, %v5204
        %v5309 = vmul.f32 %v4829, %v5204
        %v5310 = vmul.f32 %v4830, %v5204
        %v5311 = vmul.f32 %v4831, %v5204
        %v5312 = vmul.f32 %v4832, %v5205
        %v5313 = vmul.f32 %v4833, %v5205
        %v5314 = vmul.f32 %v4834, %v5205
        %v5315 = vmul.f32 %v4835, %v5205
        %v5316 = vmul.f32 %v4836, %v5206
        %v5317 = vmul.f32 %v4837, %v5206
        %v5318 = vmul.f32 %v4838, %v5206
        %v5319 = vmul.f32 %v4839, %v5206
        %v5320 = vmul.f32 %v4840, %v5207
        %v5321 = vmul.f32 %v4841, %v5207
        %v5322 = vmul.f32 %v4842, %v5207
        %v5323 = vmul.f32 %v4843, %v5207
        %v5324 = vmul.f32 %v4844, %v5208
        %v5325 = vmul.f32 %v4845, %v5208
        %v5326 = vmul.f32 %v4846, %v5208
        %v5327 = vmul.f32 %v4847, %v5208
        %v5328 = vmul.f32 %v4848, %v5209
        %v5329 = vmul.f32 %v4849, %v5209
        %v5330 = vmul.f32 %v4850, %v5209
        %v5331 = vmul.f32 %v4851, %v5209
        %v5332 = vmul.f32 %v4852, %v5210
        %v5333 = vmul.f32 %v4853, %v5210
        %v5334 = vmul.f32 %v4854, %v5210
        %v5335 = vmul.f32 %v4855, %v5210
        %v5336 = vmul.f32 %v4856, %v5211
        %v5337 = vmul.f32 %v4857, %v5211
        %v5338 = vmul.f32 %v4858, %v5211
        %v5339 = vmul.f32 %v4859, %v5211
        %v5340 = vpack.c.bf16 %v5216, %v5212
        %v5341 = vpack.c.bf16 %v5217, %v5213
        %v5342 = vpack.c.bf16 %v5218, %v5214
        %v5343 = vpack.c.bf16 %v5219, %v5215
        %v5344 = vpack.c.bf16 %v5224, %v5220
        %v5345 = vpack.c.bf16 %v5225, %v5221
        %v5346 = vpack.c.bf16 %v5226, %v5222
        %v5347 = vpack.c.bf16 %v5227, %v5223
        %v5348 = vpack.c.bf16 %v5232, %v5228
        %v5349 = vpack.c.bf16 %v5233, %v5229
        %v5350 = vpack.c.bf16 %v5234, %v5230
        %v5351 = vpack.c.bf16 %v5235, %v5231
        %v5352 = vpack.c.bf16 %v5240, %v5236
        %v5353 = vpack.c.bf16 %v5241, %v5237
        %v5354 = vpack.c.bf16 %v5242, %v5238
        %v5355 = vpack.c.bf16 %v5243, %v5239
        %v5356 = vpack.c.bf16 %v5248, %v5244
        %v5357 = vpack.c.bf16 %v5249, %v5245
        %v5358 = vpack.c.bf16 %v5250, %v5246
        %v5359 = vpack.c.bf16 %v5251, %v5247
        %v5360 = vpack.c.bf16 %v5256, %v5252
        %v5361 = vpack.c.bf16 %v5257, %v5253
        %v5362 = vpack.c.bf16 %v5258, %v5254
        %v5363 = vpack.c.bf16 %v5259, %v5255
        %v5364 = vpack.c.bf16 %v5264, %v5260
        %v5365 = vpack.c.bf16 %v5265, %v5261
        %v5366 = vpack.c.bf16 %v5266, %v5262
        %v5367 = vpack.c.bf16 %v5267, %v5263
        %v5368 = vpack.c.bf16 %v5272, %v5268
        %v5369 = vpack.c.bf16 %v5273, %v5269
        %v5370 = vpack.c.bf16 %v5274, %v5270
        %v5371 = vpack.c.bf16 %v5275, %v5271
        %v5372 = vpack.c.bf16 %v5280, %v5276
        %v5373 = vpack.c.bf16 %v5281, %v5277
        %v5374 = vpack.c.bf16 %v5282, %v5278
        %v5375 = vpack.c.bf16 %v5283, %v5279
        %v5376 = vpack.c.bf16 %v5288, %v5284
        %v5377 = vpack.c.bf16 %v5289, %v5285
        %v5378 = vpack.c.bf16 %v5290, %v5286
        %v5379 = vpack.c.bf16 %v5291, %v5287
        %v5380 = vpack.c.bf16 %v5296, %v5292
        %v5381 = vpack.c.bf16 %v5297, %v5293
        %v5382 = vpack.c.bf16 %v5298, %v5294
        %v5383 = vpack.c.bf16 %v5299, %v5295
        %v5384 = vpack.c.bf16 %v5304, %v5300
        %v5385 = vpack.c.bf16 %v5305, %v5301
        %v5386 = vpack.c.bf16 %v5306, %v5302
        %v5387 = vpack.c.bf16 %v5307, %v5303
        %v5388 = vpack.c.bf16 %v5312, %v5308
        %v5389 = vpack.c.bf16 %v5313, %v5309
        %v5390 = vpack.c.bf16 %v5314, %v5310
        %v5391 = vpack.c.bf16 %v5315, %v5311
        %v5392 = vpack.c.bf16 %v5320, %v5316
        %v5393 = vpack.c.bf16 %v5321, %v5317
        %v5394 = vpack.c.bf16 %v5322, %v5318
        %v5395 = vpack.c.bf16 %v5323, %v5319
        %v5396 = vpack.c.bf16 %v5328, %v5324
        %v5397 = vpack.c.bf16 %v5329, %v5325
        %v5398 = vpack.c.bf16 %v5330, %v5326
        %v5399 = vpack.c.bf16 %v5331, %v5327
        %v5400 = vpack.c.bf16 %v5336, %v5332
        %v5401 = vpack.c.bf16 %v5337, %v5333
        %v5402 = vpack.c.bf16 %v5338, %v5334
        %v5403 = vpack.c.bf16 %v5339, %v5335
        %v5404 = vld [vmem:[#allocation8] sm:$0xff]
        %v5405 = vld [vmem:[#allocation8 + $0x8] sm:$0xff]
        %v5406 = vld [vmem:[#allocation8 + $0x10] sm:$0xff]
        %v5407 = vld [vmem:[#allocation8 + $0x18] sm:$0xff]
        %v5408 = vld [vmem:[#allocation8 + $0x20] sm:$0xff]
        %v5409 = vld [vmem:[#allocation8 + $0x28] sm:$0xff]
        %v5410 = vld [vmem:[#allocation8 + $0x30] sm:$0xff]
        %v5411 = vld [vmem:[#allocation8 + $0x38] sm:$0xff]
        %v5412 = vld [vmem:[#allocation8 + $0x40] sm:$0xff]
        %v5413 = vld [vmem:[#allocation8 + $0x48] sm:$0xff]
        %v5414 = vld [vmem:[#allocation8 + $0x50] sm:$0xff]
        %v5415 = vld [vmem:[#allocation8 + $0x58] sm:$0xff]
        %v5416 = vld [vmem:[#allocation8 + $0x60] sm:$0xff]
        %v5417 = vld [vmem:[#allocation8 + $0x68] sm:$0xff]
        %v5418 = vld [vmem:[#allocation8 + $0x70] sm:$0xff]
        %v5419 = vld [vmem:[#allocation8 + $0x78] sm:$0xff]
        %v5420 = vld [vmem:[#allocation8 + $0x80] sm:$0xff]
        %v5421 = vld [vmem:[#allocation8 + $0x88] sm:$0xff]
        %v5422 = vld [vmem:[#allocation8 + $0x90] sm:$0xff]
        %v5423 = vld [vmem:[#allocation8 + $0x98] sm:$0xff]
        %v5424 = vld [vmem:[#allocation8 + $0xa0] sm:$0xff]
        %v5425 = vld [vmem:[#allocation8 + $0xa8] sm:$0xff]
        %v5426 = vld [vmem:[#allocation8 + $0xb0] sm:$0xff]
        %v5427 = vld [vmem:[#allocation8 + $0xb8] sm:$0xff]
        %v5428 = vld [vmem:[#allocation8 + $0xc0] sm:$0xff]
        %v5429 = vld [vmem:[#allocation8 + $0xc8] sm:$0xff]
        %v5430 = vld [vmem:[#allocation8 + $0xd0] sm:$0xff]
        %v5431 = vld [vmem:[#allocation8 + $0xd8] sm:$0xff]
        %v5432 = vld [vmem:[#allocation8 + $0xe0] sm:$0xff]
        %v5433 = vld [vmem:[#allocation8 + $0xe8] sm:$0xff]
        %v5434 = vld [vmem:[#allocation8 + $0xf0] sm:$0xff]
        %v5435 = vld [vmem:[#allocation8 + $0xf8] sm:$0xff]
        %v5436 = vld [vmem:[#allocation8 + $0x100] sm:$0xff]
        %v5437 = vld [vmem:[#allocation8 + $0x108] sm:$0xff]
        %v5438 = vld [vmem:[#allocation8 + $0x110] sm:$0xff]
        %v5439 = vld [vmem:[#allocation8 + $0x118] sm:$0xff]
        %v5440 = vld [vmem:[#allocation8 + $0x120] sm:$0xff]
        %v5441 = vld [vmem:[#allocation8 + $0x128] sm:$0xff]
        %v5442 = vld [vmem:[#allocation8 + $0x130] sm:$0xff]
        %v5443 = vld [vmem:[#allocation8 + $0x138] sm:$0xff]
        %v5444 = vld [vmem:[#allocation8 + $0x140] sm:$0xff]
        %v5445 = vld [vmem:[#allocation8 + $0x148] sm:$0xff]
        %v5446 = vld [vmem:[#allocation8 + $0x150] sm:$0xff]
        %v5447 = vld [vmem:[#allocation8 + $0x158] sm:$0xff]
        %v5448 = vld [vmem:[#allocation8 + $0x160] sm:$0xff]
        %v5449 = vld [vmem:[#allocation8 + $0x168] sm:$0xff]
        %v5450 = vld [vmem:[#allocation8 + $0x170] sm:$0xff]
        %v5451 = vld [vmem:[#allocation8 + $0x178] sm:$0xff]
        %v5452 = vld [vmem:[#allocation8 + $0x180] sm:$0xff]
        %v5453 = vld [vmem:[#allocation8 + $0x188] sm:$0xff]
        %v5454 = vld [vmem:[#allocation8 + $0x190] sm:$0xff]
        %v5455 = vld [vmem:[#allocation8 + $0x198] sm:$0xff]
        %v5456 = vld [vmem:[#allocation8 + $0x1a0] sm:$0xff]
        %v5457 = vld [vmem:[#allocation8 + $0x1a8] sm:$0xff]
        %v5458 = vld [vmem:[#allocation8 + $0x1b0] sm:$0xff]
        %v5459 = vld [vmem:[#allocation8 + $0x1b8] sm:$0xff]
        %v5460 = vld [vmem:[#allocation8 + $0x1c0] sm:$0xff]
        %v5461 = vld [vmem:[#allocation8 + $0x1c8] sm:$0xff]
        %v5462 = vld [vmem:[#allocation8 + $0x1d0] sm:$0xff]
        %v5463 = vld [vmem:[#allocation8 + $0x1d8] sm:$0xff]
        %v5464 = vld [vmem:[#allocation8 + $0x1e0] sm:$0xff]
        %v5465 = vld [vmem:[#allocation8 + $0x1e8] sm:$0xff]
        %v5466 = vld [vmem:[#allocation8 + $0x1f0] sm:$0xff]
        %v5467 = vld [vmem:[#allocation8 + $0x1f8] sm:$0xff]
        %v5468 = vld [vmem:[#allocation10] sm:$0x3]
        %v5470 = vlaneseq
        %v5471 = vshrl.u32 %v5470, 7
        %v5472 = vsub.s32 0, %v5471
        %v5473 = vrot.slane %v5468, %v5472
        %v5474 = vlaneseq
        %v5475 = vshrl.u32 %v5474, 7
        %v5476 = vsub.s32 1, %v5475
        %v5477 = vrot.slane %v5468, %v5476
        %v5544 = vunpack.c.l.b16 %v5404
        %v5545 = vunpack.c.h.b16 %v5404
        %v5546 = vunpack.c.l.b16 %v5405
        %v5547 = vunpack.c.h.b16 %v5405
        %v5548 = vunpack.c.l.b16 %v5406
        %v5549 = vunpack.c.h.b16 %v5406
        %v5550 = vunpack.c.l.b16 %v5407
        %v5551 = vunpack.c.h.b16 %v5407
        %v5552 = vunpack.c.l.b16 %v5408
        %v5553 = vunpack.c.h.b16 %v5408
        %v5554 = vunpack.c.l.b16 %v5409
        %v5555 = vunpack.c.h.b16 %v5409
        %v5556 = vunpack.c.l.b16 %v5410
        %v5557 = vunpack.c.h.b16 %v5410
        %v5558 = vunpack.c.l.b16 %v5411
        %v5559 = vunpack.c.h.b16 %v5411
        %v5560 = vunpack.c.l.b16 %v5412
        %v5561 = vunpack.c.h.b16 %v5412
        %v5562 = vunpack.c.l.b16 %v5413
        %v5563 = vunpack.c.h.b16 %v5413
        %v5564 = vunpack.c.l.b16 %v5414
        %v5565 = vunpack.c.h.b16 %v5414
        %v5566 = vunpack.c.l.b16 %v5415
        %v5567 = vunpack.c.h.b16 %v5415
        %v5568 = vunpack.c.l.b16 %v5416
        %v5569 = vunpack.c.h.b16 %v5416
        %v5570 = vunpack.c.l.b16 %v5417
        %v5571 = vunpack.c.h.b16 %v5417
        %v5572 = vunpack.c.l.b16 %v5418
        %v5573 = vunpack.c.h.b16 %v5418
        %v5574 = vunpack.c.l.b16 %v5419
        %v5575 = vunpack.c.h.b16 %v5419
        %v5576 = vunpack.c.l.b16 %v5420
        %v5577 = vunpack.c.h.b16 %v5420
        %v5578 = vunpack.c.l.b16 %v5421
        %v5579 = vunpack.c.h.b16 %v5421
        %v5580 = vunpack.c.l.b16 %v5422
        %v5581 = vunpack.c.h.b16 %v5422
        %v5582 = vunpack.c.l.b16 %v5423
        %v5583 = vunpack.c.h.b16 %v5423
        %v5584 = vunpack.c.l.b16 %v5424
        %v5585 = vunpack.c.h.b16 %v5424
        %v5586 = vunpack.c.l.b16 %v5425
        %v5587 = vunpack.c.h.b16 %v5425
        %v5588 = vunpack.c.l.b16 %v5426
        %v5589 = vunpack.c.h.b16 %v5426
        %v5590 = vunpack.c.l.b16 %v5427
        %v5591 = vunpack.c.h.b16 %v5427
        %v5592 = vunpack.c.l.b16 %v5428
        %v5593 = vunpack.c.h.b16 %v5428
        %v5594 = vunpack.c.l.b16 %v5429
        %v5595 = vunpack.c.h.b16 %v5429
        %v5596 = vunpack.c.l.b16 %v5430
        %v5597 = vunpack.c.h.b16 %v5430
        %v5598 = vunpack.c.l.b16 %v5431
        %v5599 = vunpack.c.h.b16 %v5431
        %v5600 = vunpack.c.l.b16 %v5432
        %v5601 = vunpack.c.h.b16 %v5432
        %v5602 = vunpack.c.l.b16 %v5433
        %v5603 = vunpack.c.h.b16 %v5433
        %v5604 = vunpack.c.l.b16 %v5434
        %v5605 = vunpack.c.h.b16 %v5434
        %v5606 = vunpack.c.l.b16 %v5435
        %v5607 = vunpack.c.h.b16 %v5435
        %v5608 = vunpack.c.l.b16 %v5436
        %v5609 = vunpack.c.h.b16 %v5436
        %v5610 = vunpack.c.l.b16 %v5437
        %v5611 = vunpack.c.h.b16 %v5437
        %v5612 = vunpack.c.l.b16 %v5438
        %v5613 = vunpack.c.h.b16 %v5438
        %v5614 = vunpack.c.l.b16 %v5439
        %v5615 = vunpack.c.h.b16 %v5439
        %v5616 = vunpack.c.l.b16 %v5440
        %v5617 = vunpack.c.h.b16 %v5440
        %v5618 = vunpack.c.l.b16 %v5441
        %v5619 = vunpack.c.h.b16 %v5441
        %v5620 = vunpack.c.l.b16 %v5442
        %v5621 = vunpack.c.h.b16 %v5442
        %v5622 = vunpack.c.l.b16 %v5443
        %v5623 = vunpack.c.h.b16 %v5443
        %v5624 = vunpack.c.l.b16 %v5444
        %v5625 = vunpack.c.h.b16 %v5444
        %v5626 = vunpack.c.l.b16 %v5445
        %v5627 = vunpack.c.h.b16 %v5445
        %v5628 = vunpack.c.l.b16 %v5446
        %v5629 = vunpack.c.h.b16 %v5446
        %v5630 = vunpack.c.l.b16 %v5447
        %v5631 = vunpack.c.h.b16 %v5447
        %v5632 = vunpack.c.l.b16 %v5448
        %v5633 = vunpack.c.h.b16 %v5448
        %v5634 = vunpack.c.l.b16 %v5449
        %v5635 = vunpack.c.h.b16 %v5449
        %v5636 = vunpack.c.l.b16 %v5450
        %v5637 = vunpack.c.h.b16 %v5450
        %v5638 = vunpack.c.l.b16 %v5451
        %v5639 = vunpack.c.h.b16 %v5451
        %v5640 = vunpack.c.l.b16 %v5452
        %v5641 = vunpack.c.h.b16 %v5452
        %v5642 = vunpack.c.l.b16 %v5453
        %v5643 = vunpack.c.h.b16 %v5453
        %v5644 = vunpack.c.l.b16 %v5454
        %v5645 = vunpack.c.h.b16 %v5454
        %v5646 = vunpack.c.l.b16 %v5455
        %v5647 = vunpack.c.h.b16 %v5455
        %v5648 = vunpack.c.l.b16 %v5456
        %v5649 = vunpack.c.h.b16 %v5456
        %v5650 = vunpack.c.l.b16 %v5457
        %v5651 = vunpack.c.h.b16 %v5457
        %v5652 = vunpack.c.l.b16 %v5458
        %v5653 = vunpack.c.h.b16 %v5458
        %v5654 = vunpack.c.l.b16 %v5459
        %v5655 = vunpack.c.h.b16 %v5459
        %v5656 = vunpack.c.l.b16 %v5460
        %v5657 = vunpack.c.h.b16 %v5460
        %v5658 = vunpack.c.l.b16 %v5461
        %v5659 = vunpack.c.h.b16 %v5461
        %v5660 = vunpack.c.l.b16 %v5462
        %v5661 = vunpack.c.h.b16 %v5462
        %v5662 = vunpack.c.l.b16 %v5463
        %v5663 = vunpack.c.h.b16 %v5463
        %v5664 = vunpack.c.l.b16 %v5464
        %v5665 = vunpack.c.h.b16 %v5464
        %v5666 = vunpack.c.l.b16 %v5465
        %v5667 = vunpack.c.h.b16 %v5465
        %v5668 = vunpack.c.l.b16 %v5466
        %v5669 = vunpack.c.h.b16 %v5466
        %v5670 = vunpack.c.l.b16 %v5467
        %v5671 = vunpack.c.h.b16 %v5467
        %v5672 = vpack.c.b16 %v5546, %v5544
        %v5673 = vpack.c.b16 %v5547, %v5545
        %v5674 = vpack.c.b16 %v5550, %v5548
        %v5675 = vpack.c.b16 %v5551, %v5549
        %v5676 = vpack.c.b16 %v5554, %v5552
        %v5677 = vpack.c.b16 %v5555, %v5553
        %v5678 = vpack.c.b16 %v5558, %v5556
        %v5679 = vpack.c.b16 %v5559, %v5557
        %v5680 = vpack.c.b16 %v5562, %v5560
        %v5681 = vpack.c.b16 %v5563, %v5561
        %v5682 = vpack.c.b16 %v5566, %v5564
        %v5683 = vpack.c.b16 %v5567, %v5565
        %v5684 = vpack.c.b16 %v5570, %v5568
        %v5685 = vpack.c.b16 %v5571, %v5569
        %v5686 = vpack.c.b16 %v5574, %v5572
        %v5687 = vpack.c.b16 %v5575, %v5573
        %v5688 = vpack.c.b16 %v5578, %v5576
        %v5689 = vpack.c.b16 %v5579, %v5577
        %v5690 = vpack.c.b16 %v5582, %v5580
        %v5691 = vpack.c.b16 %v5583, %v5581
        %v5692 = vpack.c.b16 %v5586, %v5584
        %v5693 = vpack.c.b16 %v5587, %v5585
        %v5694 = vpack.c.b16 %v5590, %v5588
        %v5695 = vpack.c.b16 %v5591, %v5589
        %v5696 = vpack.c.b16 %v5594, %v5592
        %v5697 = vpack.c.b16 %v5595, %v5593
        %v5698 = vpack.c.b16 %v5598, %v5596
        %v5699 = vpack.c.b16 %v5599, %v5597
        %v5700 = vpack.c.b16 %v5602, %v5600
        %v5701 = vpack.c.b16 %v5603, %v5601
        %v5702 = vpack.c.b16 %v5606, %v5604
        %v5703 = vpack.c.b16 %v5607, %v5605
        %v5704 = vpack.c.b16 %v5610, %v5608
        %v5705 = vpack.c.b16 %v5611, %v5609
        %v5706 = vpack.c.b16 %v5614, %v5612
        %v5707 = vpack.c.b16 %v5615, %v5613
        %v5708 = vpack.c.b16 %v5618, %v5616
        %v5709 = vpack.c.b16 %v5619, %v5617
        %v5710 = vpack.c.b16 %v5622, %v5620
        %v5711 = vpack.c.b16 %v5623, %v5621
        %v5712 = vpack.c.b16 %v5626, %v5624
        %v5713 = vpack.c.b16 %v5627, %v5625
        %v5714 = vpack.c.b16 %v5630, %v5628
        %v5715 = vpack.c.b16 %v5631, %v5629
        %v5716 = vpack.c.b16 %v5634, %v5632
        %v5717 = vpack.c.b16 %v5635, %v5633
        %v5718 = vpack.c.b16 %v5638, %v5636
        %v5719 = vpack.c.b16 %v5639, %v5637
        %v5720 = vpack.c.b16 %v5642, %v5640
        %v5721 = vpack.c.b16 %v5643, %v5641
        %v5722 = vpack.c.b16 %v5646, %v5644
        %v5723 = vpack.c.b16 %v5647, %v5645
        %v5724 = vpack.c.b16 %v5650, %v5648
        %v5725 = vpack.c.b16 %v5651, %v5649
        %v5726 = vpack.c.b16 %v5654, %v5652
        %v5727 = vpack.c.b16 %v5655, %v5653
        %v5728 = vpack.c.b16 %v5658, %v5656
        %v5729 = vpack.c.b16 %v5659, %v5657
        %v5730 = vpack.c.b16 %v5662, %v5660
        %v5731 = vpack.c.b16 %v5663, %v5661
        %v5732 = vpack.c.b16 %v5666, %v5664
        %v5733 = vpack.c.b16 %v5667, %v5665
        %v5734 = vpack.c.b16 %v5670, %v5668
        %v5735 = vpack.c.b16 %v5671, %v5669
        %5800 = vmatprep.subr.bf16.mxu0 %v5673
        %5801 = vmatpush1.bf16.msra.mxu0 %v5672
        %5802 = vmatprep.subr.bf16.mxu0 %v5675
        %5803 = vmatpush1.bf16.msra.mxu0 %v5674
        %5804 = vmatprep.subr.bf16.mxu0 %v5677
        %5805 = vmatpush1.bf16.msra.mxu0 %v5676
        %5806 = vmatprep.subr.bf16.mxu0 %v5679
        %5807 = vmatpush1.bf16.msra.mxu0 %v5678
        %5808 = vmatprep.subr.bf16.mxu0 %v5681
        %5809 = vmatpush1.bf16.msra.mxu0 %v5680
        %5810 = vmatprep.subr.bf16.mxu0 %v5683
        %5811 = vmatpush1.bf16.msra.mxu0 %v5682
        %5812 = vmatprep.subr.bf16.mxu0 %v5685
        %5813 = vmatpush1.bf16.msra.mxu0 %v5684
        %5814 = vmatprep.subr.bf16.mxu0 %v5687
        %5815 = vmatpush1.bf16.msra.mxu0 %v5686
        %5816 = vmatprep.subr.bf16.mxu0 %v5689
        %5817 = vmatpush1.bf16.msra.mxu0 %v5688
        %5818 = vmatprep.subr.bf16.mxu0 %v5691
        %5819 = vmatpush1.bf16.msra.mxu0 %v5690
        %5820 = vmatprep.subr.bf16.mxu0 %v5693
        %5821 = vmatpush1.bf16.msra.mxu0 %v5692
        %5822 = vmatprep.subr.bf16.mxu0 %v5695
        %5823 = vmatpush1.bf16.msra.mxu0 %v5694
        %5824 = vmatprep.subr.bf16.mxu0 %v5697
        %5825 = vmatpush1.bf16.msra.mxu0 %v5696
        %5826 = vmatprep.subr.bf16.mxu0 %v5699
        %5827 = vmatpush1.bf16.msra.mxu0 %v5698
        %5828 = vmatprep.subr.bf16.mxu0 %v5701
        %5829 = vmatpush1.bf16.msra.mxu0 %v5700
        %5830 = vmatprep.subr.bf16.mxu0 %v5703
        %5831 = vmatpush1.bf16.msra.mxu0 %v5702
        %5832 = vmatprep.mubr.bf16.mxu0 %v5341
        %5833 = vmatmul.mubr.bf16.gmra.mrb[0].mxu0 %v5340
        %v5834 = vpop.f32.mrb[0].mxu0
        %v5835 = vadd.f32 %v5473, %v5834
        %v5836 = vpop.f32.mrb[0].mxu0
        %v5837 = vadd.f32 %v5477, %v5836
        %v5838 = vpop.f32.mrb[0].mxu0
        %v5839 = vadd.f32 %v5473, %v5838
        %v5840 = vpop.f32.mrb[0].mxu0
        %v5841 = vadd.f32 %v5477, %v5840
        %5842 = vmatprep.mubr.bf16.mxu0 %v5345
        %5843 = vmatmul.mubr.bf16.gmra.mrb[0].mxu0 %v5344
        %v5844 = vpop.f32.mrb[0].mxu0
        %v5845 = vadd.f32 %v5473, %v5844
        %v5846 = vpop.f32.mrb[0].mxu0
        %v5847 = vadd.f32 %v5477, %v5846
        %v5848 = vpop.f32.mrb[0].mxu0
        %v5849 = vadd.f32 %v5473, %v5848
        %v5850 = vpop.f32.mrb[0].mxu0
        %v5851 = vadd.f32 %v5477, %v5850
        %5852 = vmatprep.mubr.bf16.mxu0 %v5349
        %5853 = vmatmul.mubr.bf16.gmra.mrb[0].mxu0 %v5348
        %v5854 = vpop.f32.mrb[0].mxu0
        %v5855 = vadd.f32 %v5473, %v5854
        %v5856 = vpop.f32.mrb[0].mxu0
        %v5857 = vadd.f32 %v5477, %v5856
        %v5858 = vpop.f32.mrb[0].mxu0
        %v5859 = vadd.f32 %v5473, %v5858
        %v5860 = vpop.f32.mrb[0].mxu0
        %v5861 = vadd.f32 %v5477, %v5860
        %5862 = vmatprep.mubr.bf16.mxu0 %v5353
        %5863 = vmatmul.mubr.bf16.gmra.mrb[0].mxu0 %v5352
        %v5864 = vpop.f32.mrb[0].mxu0
        %v5865 = vadd.f32 %v5473, %v5864
        %v5866 = vpop.f32.mrb[0].mxu0
        %v5867 = vadd.f32 %v5477, %v5866
        %v5868 = vpop.f32.mrb[0].mxu0
        %v5869 = vadd.f32 %v5473, %v5868
        %v5870 = vpop.f32.mrb[0].mxu0
        %v5871 = vadd.f32 %v5477, %v5870
        %5872 = vmatprep.mubr.bf16.mxu0 %v5357
        %5873 = vmatmul.mubr.bf16.gmra.mrb[0].mxu0 %v5356
        %v5874 = vpop.f32.mrb[0].mxu0
        %v5875 = vadd.f32 %v5473, %v5874
        %v5876 = vpop.f32.mrb[0].mxu0
        %v5877 = vadd.f32 %v5477, %v5876
        %v5878 = vpop.f32.mrb[0].mxu0
        %v5879 = vadd.f32 %v5473, %v5878
        %v5880 = vpop.f32.mrb[0].mxu0
        %v5881 = vadd.f32 %v5477, %v5880
        %5882 = vmatprep.mubr.bf16.mxu0 %v5361
        %5883 = vmatmul.mubr.bf16.gmra.mrb[0].mxu0 %v5360
        %v5884 = vpop.f32.mrb[0].mxu0
        %v5885 = vadd.f32 %v5473, %v5884
        %v5886 = vpop.f32.mrb[0].mxu0
        %v5887 = vadd.f32 %v5477, %v5886
        %v5888 = vpop.f32.mrb[0].mxu0
        %v5889 = vadd.f32 %v5473, %v5888
        %v5890 = vpop.f32.mrb[0].mxu0
        %v5891 = vadd.f32 %v5477, %v5890
        %5892 = vmatprep.mubr.bf16.mxu0 %v5365
        %5893 = vmatmul.mubr.bf16.gmra.mrb[0].mxu0 %v5364
        %v5894 = vpop.f32.mrb[0].mxu0
        %v5895 = vadd.f32 %v5473, %v5894
        %v5896 = vpop.f32.mrb[0].mxu0
        %v5897 = vadd.f32 %v5477, %v5896
        %v5898 = vpop.f32.mrb[0].mxu0
        %v5899 = vadd.f32 %v5473, %v5898
        %v5900 = vpop.f32.mrb[0].mxu0
        %v5901 = vadd.f32 %v5477, %v5900
        %5902 = vmatprep.mubr.bf16.mxu0 %v5369
        %5903 = vmatmul.mubr.bf16.gmra.mrb[0].mxu0 %v5368
        %v5904 = vpop.f32.mrb[0].mxu0
        %v5905 = vadd.f32 %v5473, %v5904
        %v5906 = vpop.f32.mrb[0].mxu0
        %v5907 = vadd.f32 %v5477, %v5906
        %v5908 = vpop.f32.mrb[0].mxu0
        %v5909 = vadd.f32 %v5473, %v5908
        %v5910 = vpop.f32.mrb[0].mxu0
        %v5911 = vadd.f32 %v5477, %v5910
        %5912 = vmatprep.mubr.bf16.mxu0 %v5373
        %5913 = vmatmul.mubr.bf16.gmra.mrb[0].mxu0 %v5372
        %v5914 = vpop.f32.mrb[0].mxu0
        %v5915 = vadd.f32 %v5473, %v5914
        %v5916 = vpop.f32.mrb[0].mxu0
        %v5917 = vadd.f32 %v5477, %v5916
        %v5918 = vpop.f32.mrb[0].mxu0
        %v5919 = vadd.f32 %v5473, %v5918
        %v5920 = vpop.f32.mrb[0].mxu0
        %v5921 = vadd.f32 %v5477, %v5920
        %5922 = vmatprep.mubr.bf16.mxu0 %v5377
        %5923 = vmatmul.mubr.bf16.gmra.mrb[0].mxu0 %v5376
        %v5924 = vpop.f32.mrb[0].mxu0
        %v5925 = vadd.f32 %v5473, %v5924
        %v5926 = vpop.f32.mrb[0].mxu0
        %v5927 = vadd.f32 %v5477, %v5926
        %v5928 = vpop.f32.mrb[0].mxu0
        %v5929 = vadd.f32 %v5473, %v5928
        %v5930 = vpop.f32.mrb[0].mxu0
        %v5931 = vadd.f32 %v5477, %v5930
        %5932 = vmatprep.mubr.bf16.mxu0 %v5381
        %5933 = vmatmul.mubr.bf16.gmra.mrb[0].mxu0 %v5380
        %v5934 = vpop.f32.mrb[0].mxu0
        %v5935 = vadd.f32 %v5473, %v5934
        %v5936 = vpop.f32.mrb[0].mxu0
        %v5937 = vadd.f32 %v5477, %v5936
        %v5938 = vpop.f32.mrb[0].mxu0
        %v5939 = vadd.f32 %v5473, %v5938
        %v5940 = vpop.f32.mrb[0].mxu0
        %v5941 = vadd.f32 %v5477, %v5940
        %5942 = vmatprep.mubr.bf16.mxu0 %v5385
        %5943 = vmatmul.mubr.bf16.gmra.mrb[0].mxu0 %v5384
        %v5944 = vpop.f32.mrb[0].mxu0
        %v5945 = vadd.f32 %v5473, %v5944
        %v5946 = vpop.f32.mrb[0].mxu0
        %v5947 = vadd.f32 %v5477, %v5946
        %v5948 = vpop.f32.mrb[0].mxu0
        %v5949 = vadd.f32 %v5473, %v5948
        %v5950 = vpop.f32.mrb[0].mxu0
        %v5951 = vadd.f32 %v5477, %v5950
        %5952 = vmatprep.mubr.bf16.mxu0 %v5389
        %5953 = vmatmul.mubr.bf16.gmra.mrb[0].mxu0 %v5388
        %v5954 = vpop.f32.mrb[0].mxu0
        %v5955 = vadd.f32 %v5473, %v5954
        %v5956 = vpop.f32.mrb[0].mxu0
        %v5957 = vadd.f32 %v5477, %v5956
        %v5958 = vpop.f32.mrb[0].mxu0
        %v5959 = vadd.f32 %v5473, %v5958
        %v5960 = vpop.f32.mrb[0].mxu0
        %v5961 = vadd.f32 %v5477, %v5960
        %5962 = vmatprep.mubr.bf16.mxu0 %v5393
        %5963 = vmatmul.mubr.bf16.gmra.mrb[0].mxu0 %v5392
        %v5964 = vpop.f32.mrb[0].mxu0
        %v5965 = vadd.f32 %v5473, %v5964
        %v5966 = vpop.f32.mrb[0].mxu0
        %v5967 = vadd.f32 %v5477, %v5966
        %v5968 = vpop.f32.mrb[0].mxu0
        %v5969 = vadd.f32 %v5473, %v5968
        %v5970 = vpop.f32.mrb[0].mxu0
        %v5971 = vadd.f32 %v5477, %v5970
        %5972 = vmatprep.mubr.bf16.mxu0 %v5397
        %5973 = vmatmul.mubr.bf16.gmra.mrb[0].mxu0 %v5396
        %v5974 = vpop.f32.mrb[0].mxu0
        %v5975 = vadd.f32 %v5473, %v5974
        %v5976 = vpop.f32.mrb[0].mxu0
        %v5977 = vadd.f32 %v5477, %v5976
        %v5978 = vpop.f32.mrb[0].mxu0
        %v5979 = vadd.f32 %v5473, %v5978
        %v5980 = vpop.f32.mrb[0].mxu0
        %v5981 = vadd.f32 %v5477, %v5980
        %5982 = vmatprep.mubr.bf16.mxu0 %v5401
        %5983 = vmatmul.mubr.bf16.gmra.mrb[0].mxu0 %v5400
        %v5984 = vpop.f32.mrb[0].mxu0
        %v5985 = vadd.f32 %v5473, %v5984
        %v5986 = vpop.f32.mrb[0].mxu0
        %v5987 = vadd.f32 %v5477, %v5986
        %v5988 = vpop.f32.mrb[0].mxu0
        %v5989 = vadd.f32 %v5473, %v5988
        %v5990 = vpop.f32.mrb[0].mxu0
        %v5991 = vadd.f32 %v5477, %v5990
        %5992 = vdwg.mxu0
        %5993 = vmatprep.subr.bf16.mxu0 %v5705
        %5994 = vmatpush1.bf16.msra.mxu0 %v5704
        %5995 = vmatprep.subr.bf16.mxu0 %v5707
        %5996 = vmatpush1.bf16.msra.mxu0 %v5706
        %5997 = vmatprep.subr.bf16.mxu0 %v5709
        %5998 = vmatpush1.bf16.msra.mxu0 %v5708
        %5999 = vmatprep.subr.bf16.mxu0 %v5711
        %6000 = vmatpush1.bf16.msra.mxu0 %v5710
        %6001 = vmatprep.subr.bf16.mxu0 %v5713
        %6002 = vmatpush1.bf16.msra.mxu0 %v5712
        %6003 = vmatprep.subr.bf16.mxu0 %v5715
        %6004 = vmatpush1.bf16.msra.mxu0 %v5714
        %6005 = vmatprep.subr.bf16.mxu0 %v5717
        %6006 = vmatpush1.bf16.msra.mxu0 %v5716
        %6007 = vmatprep.subr.bf16.mxu0 %v5719
        %6008 = vmatpush1.bf16.msra.mxu0 %v5718
        %6009 = vmatprep.subr.bf16.mxu0 %v5721
        %6010 = vmatpush1.bf16.msra.mxu0 %v5720
        %6011 = vmatprep.subr.bf16.mxu0 %v5723
        %6012 = vmatpush1.bf16.msra.mxu0 %v5722
        %6013 = vmatprep.subr.bf16.mxu0 %v5725
        %6014 = vmatpush1.bf16.msra.mxu0 %v5724
        %6015 = vmatprep.subr.bf16.mxu0 %v5727
        %6016 = vmatpush1.bf16.msra.mxu0 %v5726
        %6017 = vmatprep.subr.bf16.mxu0 %v5729
        %6018 = vmatpush1.bf16.msra.mxu0 %v5728
        %6019 = vmatprep.subr.bf16.mxu0 %v5731
        %6020 = vmatpush1.bf16.msra.mxu0 %v5730
        %6021 = vmatprep.subr.bf16.mxu0 %v5733
        %6022 = vmatpush1.bf16.msra.mxu0 %v5732
        %6023 = vmatprep.subr.bf16.mxu0 %v5735
        %6024 = vmatpush1.bf16.msra.mxu0 %v5734
        %6025 = vmatprep.mubr.bf16.mxu0 %v5343
        %6026 = vmatmul.mubr.bf16.gmra.mrb[0].mxu0 %v5342
        %v6027 = vpop.f32.mrb[0].mxu0
        %v6028 = vadd.f32 %v5835, %v6027
        %v6029 = vpop.f32.mrb[0].mxu0
        %v6030 = vadd.f32 %v5837, %v6029
        %v6031 = vpop.f32.mrb[0].mxu0
        %v6032 = vadd.f32 %v5839, %v6031
        %v6033 = vpop.f32.mrb[0].mxu0
        %v6034 = vadd.f32 %v5841, %v6033
        %6035 = vmatprep.mubr.bf16.mxu0 %v5347
        %6036 = vmatmul.mubr.bf16.gmra.mrb[0].mxu0 %v5346
        %v6037 = vpop.f32.mrb[0].mxu0
        %v6038 = vadd.f32 %v5845, %v6037
        %v6039 = vpop.f32.mrb[0].mxu0
        %v6040 = vadd.f32 %v5847, %v6039
        %v6041 = vpop.f32.mrb[0].mxu0
        %v6042 = vadd.f32 %v5849, %v6041
        %v6043 = vpop.f32.mrb[0].mxu0
        %v6044 = vadd.f32 %v5851, %v6043
        %6045 = vmatprep.mubr.bf16.mxu0 %v5351
        %6046 = vmatmul.mubr.bf16.gmra.mrb[0].mxu0 %v5350
        %v6047 = vpop.f32.mrb[0].mxu0
        %v6048 = vadd.f32 %v5855, %v6047
        %v6049 = vpop.f32.mrb[0].mxu0
        %v6050 = vadd.f32 %v5857, %v6049
        %v6051 = vpop.f32.mrb[0].mxu0
        %v6052 = vadd.f32 %v5859, %v6051
        %v6053 = vpop.f32.mrb[0].mxu0
        %v6054 = vadd.f32 %v5861, %v6053
        %6055 = vmatprep.mubr.bf16.mxu0 %v5355
        %6056 = vmatmul.mubr.bf16.gmra.mrb[0].mxu0 %v5354
        %v6057 = vpop.f32.mrb[0].mxu0
        %v6058 = vadd.f32 %v5865, %v6057
        %v6059 = vpop.f32.mrb[0].mxu0
        %v6060 = vadd.f32 %v5867, %v6059
        %v6061 = vpop.f32.mrb[0].mxu0
        %v6062 = vadd.f32 %v5869, %v6061
        %v6063 = vpop.f32.mrb[0].mxu0
        %v6064 = vadd.f32 %v5871, %v6063
        %6065 = vmatprep.mubr.bf16.mxu0 %v5359
        %6066 = vmatmul.mubr.bf16.gmra.mrb[0].mxu0 %v5358
        %v6067 = vpop.f32.mrb[0].mxu0
        %v6068 = vadd.f32 %v5875, %v6067
        %v6069 = vpop.f32.mrb[0].mxu0
        %v6070 = vadd.f32 %v5877, %v6069
        %v6071 = vpop.f32.mrb[0].mxu0
        %v6072 = vadd.f32 %v5879, %v6071
        %v6073 = vpop.f32.mrb[0].mxu0
        %v6074 = vadd.f32 %v5881, %v6073
        %6075 = vmatprep.mubr.bf16.mxu0 %v5363
        %6076 = vmatmul.mubr.bf16.gmra.mrb[0].mxu0 %v5362
        %v6077 = vpop.f32.mrb[0].mxu0
        %v6078 = vadd.f32 %v5885, %v6077
        %v6079 = vpop.f32.mrb[0].mxu0
        %v6080 = vadd.f32 %v5887, %v6079
        %v6081 = vpop.f32.mrb[0].mxu0
        %v6082 = vadd.f32 %v5889, %v6081
        %v6083 = vpop.f32.mrb[0].mxu0
        %v6084 = vadd.f32 %v5891, %v6083
        %6085 = vmatprep.mubr.bf16.mxu0 %v5367
        %6086 = vmatmul.mubr.bf16.gmra.mrb[0].mxu0 %v5366
        %v6087 = vpop.f32.mrb[0].mxu0
        %v6088 = vadd.f32 %v5895, %v6087
        %v6089 = vpop.f32.mrb[0].mxu0
        %v6090 = vadd.f32 %v5897, %v6089
        %v6091 = vpop.f32.mrb[0].mxu0
        %v6092 = vadd.f32 %v5899, %v6091
        %v6093 = vpop.f32.mrb[0].mxu0
        %v6094 = vadd.f32 %v5901, %v6093
        %6095 = vmatprep.mubr.bf16.mxu0 %v5371
        %6096 = vmatmul.mubr.bf16.gmra.mrb[0].mxu0 %v5370
        %v6097 = vpop.f32.mrb[0].mxu0
        %v6098 = vadd.f32 %v5905, %v6097
        %v6099 = vpop.f32.mrb[0].mxu0
        %v6100 = vadd.f32 %v5907, %v6099
        %v6101 = vpop.f32.mrb[0].mxu0
        %v6102 = vadd.f32 %v5909, %v6101
        %v6103 = vpop.f32.mrb[0].mxu0
        %v6104 = vadd.f32 %v5911, %v6103
        %6105 = vmatprep.mubr.bf16.mxu0 %v5375
        %6106 = vmatmul.mubr.bf16.gmra.mrb[0].mxu0 %v5374
        %v6107 = vpop.f32.mrb[0].mxu0
        %v6108 = vadd.f32 %v5915, %v6107
        %v6109 = vpop.f32.mrb[0].mxu0
        %v6110 = vadd.f32 %v5917, %v6109
        %v6111 = vpop.f32.mrb[0].mxu0
        %v6112 = vadd.f32 %v5919, %v6111
        %v6113 = vpop.f32.mrb[0].mxu0
        %v6114 = vadd.f32 %v5921, %v6113
        %6115 = vmatprep.mubr.bf16.mxu0 %v5379
        %6116 = vmatmul.mubr.bf16.gmra.mrb[0].mxu0 %v5378
        %v6117 = vpop.f32.mrb[0].mxu0
        %v6118 = vadd.f32 %v5925, %v6117
        %v6119 = vpop.f32.mrb[0].mxu0
        %v6120 = vadd.f32 %v5927, %v6119
        %v6121 = vpop.f32.mrb[0].mxu0
        %v6122 = vadd.f32 %v5929, %v6121
        %v6123 = vpop.f32.mrb[0].mxu0
        %v6124 = vadd.f32 %v5931, %v6123
        %6125 = vmatprep.mubr.bf16.mxu0 %v5383
        %6126 = vmatmul.mubr.bf16.gmra.mrb[0].mxu0 %v5382
        %v6127 = vpop.f32.mrb[0].mxu0
        %v6128 = vadd.f32 %v5935, %v6127
        %v6129 = vpop.f32.mrb[0].mxu0
        %v6130 = vadd.f32 %v5937, %v6129
        %v6131 = vpop.f32.mrb[0].mxu0
        %v6132 = vadd.f32 %v5939, %v6131
        %v6133 = vpop.f32.mrb[0].mxu0
        %v6134 = vadd.f32 %v5941, %v6133
        %6135 = vmatprep.mubr.bf16.mxu0 %v5387
        %6136 = vmatmul.mubr.bf16.gmra.mrb[0].mxu0 %v5386
        %v6137 = vpop.f32.mrb[0].mxu0
        %v6138 = vadd.f32 %v5945, %v6137
        %v6139 = vpop.f32.mrb[0].mxu0
        %v6140 = vadd.f32 %v5947, %v6139
        %v6141 = vpop.f32.mrb[0].mxu0
        %v6142 = vadd.f32 %v5949, %v6141
        %v6143 = vpop.f32.mrb[0].mxu0
        %v6144 = vadd.f32 %v5951, %v6143
        %6145 = vmatprep.mubr.bf16.mxu0 %v5391
        %6146 = vmatmul.mubr.bf16.gmra.mrb[0].mxu0 %v5390
        %v6147 = vpop.f32.mrb[0].mxu0
        %v6148 = vadd.f32 %v5955, %v6147
        %v6149 = vpop.f32.mrb[0].mxu0
        %v6150 = vadd.f32 %v5957, %v6149
        %v6151 = vpop.f32.mrb[0].mxu0
        %v6152 = vadd.f32 %v5959, %v6151
        %v6153 = vpop.f32.mrb[0].mxu0
        %v6154 = vadd.f32 %v5961, %v6153
        %6155 = vmatprep.mubr.bf16.mxu0 %v5395
        %6156 = vmatmul.mubr.bf16.gmra.mrb[0].mxu0 %v5394
        %v6157 = vpop.f32.mrb[0].mxu0
        %v6158 = vadd.f32 %v5965, %v6157
        %v6159 = vpop.f32.mrb[0].mxu0
        %v6160 = vadd.f32 %v5967, %v6159
        %v6161 = vpop.f32.mrb[0].mxu0
        %v6162 = vadd.f32 %v5969, %v6161
        %v6163 = vpop.f32.mrb[0].mxu0
        %v6164 = vadd.f32 %v5971, %v6163
        %6165 = vmatprep.mubr.bf16.mxu0 %v5399
        %6166 = vmatmul.mubr.bf16.gmra.mrb[0].mxu0 %v5398
        %v6167 = vpop.f32.mrb[0].mxu0
        %v6168 = vadd.f32 %v5975, %v6167
        %v6169 = vpop.f32.mrb[0].mxu0
        %v6170 = vadd.f32 %v5977, %v6169
        %v6171 = vpop.f32.mrb[0].mxu0
        %v6172 = vadd.f32 %v5979, %v6171
        %v6173 = vpop.f32.mrb[0].mxu0
        %v6174 = vadd.f32 %v5981, %v6173
        %6175 = vmatprep.mubr.bf16.mxu0 %v5403
        %6176 = vmatmul.mubr.bf16.gmra.mrb[0].mxu0 %v5402
        %v6177 = vpop.f32.mrb[0].mxu0
        %v6178 = vadd.f32 %v5985, %v6177
        %v6179 = vpop.f32.mrb[0].mxu0
        %v6180 = vadd.f32 %v5987, %v6179
        %v6181 = vpop.f32.mrb[0].mxu0
        %v6182 = vadd.f32 %v5989, %v6181
        %v6183 = vpop.f32.mrb[0].mxu0
        %v6184 = vadd.f32 %v5991, %v6183
        %6185 = vdwg.mxu0
        %v6186 = vmax.f32 %v6028, 0.0
        %v6187 = vmax.f32 %v6030, 0.0
        %v6188 = vmax.f32 %v6032, 0.0
        %v6189 = vmax.f32 %v6034, 0.0
        %v6190 = vmax.f32 %v6038, 0.0
        %v6191 = vmax.f32 %v6040, 0.0
        %v6192 = vmax.f32 %v6042, 0.0
        %v6193 = vmax.f32 %v6044, 0.0
        %v6194 = vmax.f32 %v6048, 0.0
        %v6195 = vmax.f32 %v6050, 0.0
        %v6196 = vmax.f32 %v6052, 0.0
        %v6197 = vmax.f32 %v6054, 0.0
        %v6198 = vmax.f32 %v6058, 0.0
        %v6199 = vmax.f32 %v6060, 0.0
        %v6200 = vmax.f32 %v6062, 0.0
        %v6201 = vmax.f32 %v6064, 0.0
        %v6202 = vmax.f32 %v6068, 0.0
        %v6203 = vmax.f32 %v6070, 0.0
        %v6204 = vmax.f32 %v6072, 0.0
        %v6205 = vmax.f32 %v6074, 0.0
        %v6206 = vmax.f32 %v6078, 0.0
        %v6207 = vmax.f32 %v6080, 0.0
        %v6208 = vmax.f32 %v6082, 0.0
        %v6209 = vmax.f32 %v6084, 0.0
        %v6210 = vmax.f32 %v6088, 0.0
        %v6211 = vmax.f32 %v6090, 0.0
        %v6212 = vmax.f32 %v6092, 0.0
        %v6213 = vmax.f32 %v6094, 0.0
        %v6214 = vmax.f32 %v6098, 0.0
        %v6215 = vmax.f32 %v6100, 0.0
        %v6216 = vmax.f32 %v6102, 0.0
        %v6217 = vmax.f32 %v6104, 0.0
        %v6218 = vmax.f32 %v6108, 0.0
        %v6219 = vmax.f32 %v6110, 0.0
        %v6220 = vmax.f32 %v6112, 0.0
        %v6221 = vmax.f32 %v6114, 0.0
        %v6222 = vmax.f32 %v6118, 0.0
        %v6223 = vmax.f32 %v6120, 0.0
        %v6224 = vmax.f32 %v6122, 0.0
        %v6225 = vmax.f32 %v6124, 0.0
        %v6226 = vmax.f32 %v6128, 0.0
        %v6227 = vmax.f32 %v6130, 0.0
        %v6228 = vmax.f32 %v6132, 0.0
        %v6229 = vmax.f32 %v6134, 0.0
        %v6230 = vmax.f32 %v6138, 0.0
        %v6231 = vmax.f32 %v6140, 0.0
        %v6232 = vmax.f32 %v6142, 0.0
        %v6233 = vmax.f32 %v6144, 0.0
        %v6234 = vmax.f32 %v6148, 0.0
        %v6235 = vmax.f32 %v6150, 0.0
        %v6236 = vmax.f32 %v6152, 0.0
        %v6237 = vmax.f32 %v6154, 0.0
        %v6238 = vmax.f32 %v6158, 0.0
        %v6239 = vmax.f32 %v6160, 0.0
        %v6240 = vmax.f32 %v6162, 0.0
        %v6241 = vmax.f32 %v6164, 0.0
        %v6242 = vmax.f32 %v6168, 0.0
        %v6243 = vmax.f32 %v6170, 0.0
        %v6244 = vmax.f32 %v6172, 0.0
        %v6245 = vmax.f32 %v6174, 0.0
        %v6246 = vmax.f32 %v6178, 0.0
        %v6247 = vmax.f32 %v6180, 0.0
        %v6248 = vmax.f32 %v6182, 0.0
        %v6249 = vmax.f32 %v6184, 0.0
        %v6250 = vmul.f32 %v6186, %v6186
        %v6251 = vmul.f32 %v6187, %v6187
        %v6252 = vmul.f32 %v6188, %v6188
        %v6253 = vmul.f32 %v6189, %v6189
        %v6254 = vmul.f32 %v6190, %v6190
        %v6255 = vmul.f32 %v6191, %v6191
        %v6256 = vmul.f32 %v6192, %v6192
        %v6257 = vmul.f32 %v6193, %v6193
        %v6258 = vmul.f32 %v6194, %v6194
        %v6259 = vmul.f32 %v6195, %v6195
        %v6260 = vmul.f32 %v6196, %v6196
        %v6261 = vmul.f32 %v6197, %v6197
        %v6262 = vmul.f32 %v6198, %v6198
        %v6263 = vmul.f32 %v6199, %v6199
        %v6264 = vmul.f32 %v6200, %v6200
        %v6265 = vmul.f32 %v6201, %v6201
        %v6266 = vmul.f32 %v6202, %v6202
        %v6267 = vmul.f32 %v6203, %v6203
        %v6268 = vmul.f32 %v6204, %v6204
        %v6269 = vmul.f32 %v6205, %v6205
        %v6270 = vmul.f32 %v6206, %v6206
        %v6271 = vmul.f32 %v6207, %v6207
        %v6272 = vmul.f32 %v6208, %v6208
        %v6273 = vmul.f32 %v6209, %v6209
        %v6274 = vmul.f32 %v6210, %v6210
        %v6275 = vmul.f32 %v6211, %v6211
        %v6276 = vmul.f32 %v6212, %v6212
        %v6277 = vmul.f32 %v6213, %v6213
        %v6278 = vmul.f32 %v6214, %v6214
        %v6279 = vmul.f32 %v6215, %v6215
        %v6280 = vmul.f32 %v6216, %v6216
        %v6281 = vmul.f32 %v6217, %v6217
        %v6282 = vmul.f32 %v6218, %v6218
        %v6283 = vmul.f32 %v6219, %v6219
        %v6284 = vmul.f32 %v6220, %v6220
        %v6285 = vmul.f32 %v6221, %v6221
        %v6286 = vmul.f32 %v6222, %v6222
        %v6287 = vmul.f32 %v6223, %v6223
        %v6288 = vmul.f32 %v6224, %v6224
        %v6289 = vmul.f32 %v6225, %v6225
        %v6290 = vmul.f32 %v6226, %v6226
        %v6291 = vmul.f32 %v6227, %v6227
        %v6292 = vmul.f32 %v6228, %v6228
        %v6293 = vmul.f32 %v6229, %v6229
        %v6294 = vmul.f32 %v6230, %v6230
        %v6295 = vmul.f32 %v6231, %v6231
        %v6296 = vmul.f32 %v6232, %v6232
        %v6297 = vmul.f32 %v6233, %v6233
        %v6298 = vmul.f32 %v6234, %v6234
        %v6299 = vmul.f32 %v6235, %v6235
        %v6300 = vmul.f32 %v6236, %v6236
        %v6301 = vmul.f32 %v6237, %v6237
        %v6302 = vmul.f32 %v6238, %v6238
        %v6303 = vmul.f32 %v6239, %v6239
        %v6304 = vmul.f32 %v6240, %v6240
        %v6305 = vmul.f32 %v6241, %v6241
        %v6306 = vmul.f32 %v6242, %v6242
        %v6307 = vmul.f32 %v6243, %v6243
        %v6308 = vmul.f32 %v6244, %v6244
        %v6309 = vmul.f32 %v6245, %v6245
        %v6310 = vmul.f32 %v6246, %v6246
        %v6311 = vmul.f32 %v6247, %v6247
        %v6312 = vmul.f32 %v6248, %v6248
        %v6313 = vmul.f32 %v6249, %v6249
        %v6314 = vadd.f32 %v6250, %v6251
        %6315 = vadd.xlane.f32.xlu0 %v6314
        %v6316 = vpop.xlane.xlu0 %6315
        %v6317 = vadd.f32 %v6252, %v6253
        %6318 = vadd.xlane.f32.xlu0 %v6317
        %v6319 = vpop.xlane.xlu0 %6318
        %v6320 = vadd.f32 %v6254, %v6255
        %6321 = vadd.xlane.f32.xlu0 %v6320
        %v6322 = vpop.xlane.xlu0 %6321
        %v6323 = vadd.f32 %v6256, %v6257
        %6324 = vadd.xlane.f32.xlu0 %v6323
        %v6325 = vpop.xlane.xlu0 %6324
        %v6326 = vadd.f32 %v6258, %v6259
        %6327 = vadd.xlane.f32.xlu0 %v6326
        %v6328 = vpop.xlane.xlu0 %6327
        %v6329 = vadd.f32 %v6260, %v6261
        %6330 = vadd.xlane.f32.xlu0 %v6329
        %v6331 = vpop.xlane.xlu0 %6330
        %v6332 = vadd.f32 %v6262, %v6263
        %6333 = vadd.xlane.f32.xlu0 %v6332
        %v6334 = vpop.xlane.xlu0 %6333
        %v6335 = vadd.f32 %v6264, %v6265
        %6336 = vadd.xlane.f32.xlu0 %v6335
        %v6337 = vpop.xlane.xlu0 %6336
        %v6338 = vadd.f32 %v6266, %v6267
        %6339 = vadd.xlane.f32.xlu0 %v6338
        %v6340 = vpop.xlane.xlu0 %6339
        %v6341 = vadd.f32 %v6268, %v6269
        %6342 = vadd.xlane.f32.xlu0 %v6341
        %v6343 = vpop.xlane.xlu0 %6342
        %v6344 = vadd.f32 %v6270, %v6271
        %6345 = vadd.xlane.f32.xlu0 %v6344
        %v6346 = vpop.xlane.xlu0 %6345
        %v6347 = vadd.f32 %v6272, %v6273
        %6348 = vadd.xlane.f32.xlu0 %v6347
        %v6349 = vpop.xlane.xlu0 %6348
        %v6350 = vadd.f32 %v6274, %v6275
        %6351 = vadd.xlane.f32.xlu0 %v6350
        %v6352 = vpop.xlane.xlu0 %6351
        %v6353 = vadd.f32 %v6276, %v6277
        %6354 = vadd.xlane.f32.xlu0 %v6353
        %v6355 = vpop.xlane.xlu0 %6354
        %v6356 = vadd.f32 %v6278, %v6279
        %6357 = vadd.xlane.f32.xlu0 %v6356
        %v6358 = vpop.xlane.xlu0 %6357
        %v6359 = vadd.f32 %v6280, %v6281
        %6360 = vadd.xlane.f32.xlu0 %v6359
        %v6361 = vpop.xlane.xlu0 %6360
        %v6362 = vadd.f32 %v6282, %v6283
        %6363 = vadd.xlane.f32.xlu0 %v6362
        %v6364 = vpop.xlane.xlu0 %6363
        %v6365 = vadd.f32 %v6284, %v6285
        %6366 = vadd.xlane.f32.xlu0 %v6365
        %v6367 = vpop.xlane.xlu0 %6366
        %v6368 = vadd.f32 %v6286, %v6287
        %6369 = vadd.xlane.f32.xlu0 %v6368
        %v6370 = vpop.xlane.xlu0 %6369
        %v6371 = vadd.f32 %v6288, %v6289
        %6372 = vadd.xlane.f32.xlu0 %v6371
        %v6373 = vpop.xlane.xlu0 %6372
        %v6374 = vadd.f32 %v6290, %v6291
        %6375 = vadd.xlane.f32.xlu0 %v6374
        %v6376 = vpop.xlane.xlu0 %6375
        %v6377 = vadd.f32 %v6292, %v6293
        %6378 = vadd.xlane.f32.xlu0 %v6377
        %v6379 = vpop.xlane.xlu0 %6378
        %v6380 = vadd.f32 %v6294, %v6295
        %6381 = vadd.xlane.f32.xlu0 %v6380
        %v6382 = vpop.xlane.xlu0 %6381
        %v6383 = vadd.f32 %v6296, %v6297
        %6384 = vadd.xlane.f32.xlu0 %v6383
        %v6385 = vpop.xlane.xlu0 %6384
        %v6386 = vadd.f32 %v6298, %v6299
        %6387 = vadd.xlane.f32.xlu0 %v6386
        %v6388 = vpop.xlane.xlu0 %6387
        %v6389 = vadd.f32 %v6300, %v6301
        %6390 = vadd.xlane.f32.xlu0 %v6389
        %v6391 = vpop.xlane.xlu0 %6390
        %v6392 = vadd.f32 %v6302, %v6303
        %6393 = vadd.xlane.f32.xlu0 %v6392
        %v6394 = vpop.xlane.xlu0 %6393
        %v6395 = vadd.f32 %v6304, %v6305
        %6396 = vadd.xlane.f32.xlu0 %v6395
        %v6397 = vpop.xlane.xlu0 %6396
        %v6398 = vadd.f32 %v6306, %v6307
        %6399 = vadd.xlane.f32.xlu0 %v6398
        %v6400 = vpop.xlane.xlu0 %6399
        %v6401 = vadd.f32 %v6308, %v6309
        %6402 = vadd.xlane.f32.xlu0 %v6401
        %v6403 = vpop.xlane.xlu0 %6402
        %v6404 = vadd.f32 %v6310, %v6311
        %6405 = vadd.xlane.f32.xlu0 %v6404
        %v6406 = vpop.xlane.xlu0 %6405
        %v6407 = vadd.f32 %v6312, %v6313
        %6408 = vadd.xlane.f32.xlu0 %v6407
        %v6409 = vpop.xlane.xlu0 %6408
        %v6410 = vmax.f32 %v6316, 1e-24
        %v6411 = vmax.f32 %v6319, 1e-24
        %v6412 = vmax.f32 %v6322, 1e-24
        %v6413 = vmax.f32 %v6325, 1e-24
        %v6414 = vmax.f32 %v6328, 1e-24
        %v6415 = vmax.f32 %v6331, 1e-24
        %v6416 = vmax.f32 %v6334, 1e-24
        %v6417 = vmax.f32 %v6337, 1e-24
        %v6418 = vmax.f32 %v6340, 1e-24
        %v6419 = vmax.f32 %v6343, 1e-24
        %v6420 = vmax.f32 %v6346, 1e-24
        %v6421 = vmax.f32 %v6349, 1e-24
        %v6422 = vmax.f32 %v6352, 1e-24
        %v6423 = vmax.f32 %v6355, 1e-24
        %v6424 = vmax.f32 %v6358, 1e-24
        %v6425 = vmax.f32 %v6361, 1e-24
        %v6426 = vmax.f32 %v6364, 1e-24
        %v6427 = vmax.f32 %v6367, 1e-24
        %v6428 = vmax.f32 %v6370, 1e-24
        %v6429 = vmax.f32 %v6373, 1e-24
        %v6430 = vmax.f32 %v6376, 1e-24
        %v6431 = vmax.f32 %v6379, 1e-24
        %v6432 = vmax.f32 %v6382, 1e-24
        %v6433 = vmax.f32 %v6385, 1e-24
        %v6434 = vmax.f32 %v6388, 1e-24
        %v6435 = vmax.f32 %v6391, 1e-24
        %v6436 = vmax.f32 %v6394, 1e-24
        %v6437 = vmax.f32 %v6397, 1e-24
        %v6438 = vmax.f32 %v6400, 1e-24
        %v6439 = vmax.f32 %v6403, 1e-24
        %v6440 = vmax.f32 %v6406, 1e-24
        %v6441 = vmax.f32 %v6409, 1e-24
        %v6442 = vrsqrt.pop %v6410
        %v6443 = vrsqrt.pop %v6411
        %v6444 = vrsqrt.pop %v6412
        %v6445 = vrsqrt.pop %v6413
        %v6446 = vrsqrt.pop %v6414
        %v6447 = vrsqrt.pop %v6415
        %v6448 = vrsqrt.pop %v6416
        %v6449 = vrsqrt.pop %v6417
        %v6450 = vrsqrt.pop %v6418
        %v6451 = vrsqrt.pop %v6419
        %v6452 = vrsqrt.pop %v6420
        %v6453 = vrsqrt.pop %v6421
        %v6454 = vrsqrt.pop %v6422
        %v6455 = vrsqrt.pop %v6423
        %v6456 = vrsqrt.pop %v6424
        %v6457 = vrsqrt.pop %v6425
        %v6458 = vrsqrt.pop %v6426
        %v6459 = vrsqrt.pop %v6427
        %v6460 = vrsqrt.pop %v6428
        %v6461 = vrsqrt.pop %v6429
        %v6462 = vrsqrt.pop %v6430
        %v6463 = vrsqrt.pop %v6431
        %v6464 = vrsqrt.pop %v6432
        %v6465 = vrsqrt.pop %v6433
        %v6466 = vrsqrt.pop %v6434
        %v6467 = vrsqrt.pop %v6435
        %v6468 = vrsqrt.pop %v6436
        %v6469 = vrsqrt.pop %v6437
        %v6470 = vrsqrt.pop %v6438
        %v6471 = vrsqrt.pop %v6439
        %v6472 = vrsqrt.pop %v6440
        %v6473 = vrsqrt.pop %v6441
        %v6474 = vmul.f32 %v6186, %v6442
        %v6475 = vmul.f32 %v6187, %v6442
        %v6476 = vmul.f32 %v6188, %v6443
        %v6477 = vmul.f32 %v6189, %v6443
        %v6478 = vmul.f32 %v6190, %v6444
        %v6479 = vmul.f32 %v6191, %v6444
        %v6480 = vmul.f32 %v6192, %v6445
        %v6481 = vmul.f32 %v6193, %v6445
        %v6482 = vmul.f32 %v6194, %v6446
        %v6483 = vmul.f32 %v6195, %v6446
        %v6484 = vmul.f32 %v6196, %v6447
        %v6485 = vmul.f32 %v6197, %v6447
        %v6486 = vmul.f32 %v6198, %v6448
        %v6487 = vmul.f32 %v6199, %v6448
        %v6488 = vmul.f32 %v6200, %v6449
        %v6489 = vmul.f32 %v6201, %v6449
        %v6490 = vmul.f32 %v6202, %v6450
        %v6491 = vmul.f32 %v6203, %v6450
        %v6492 = vmul.f32 %v6204, %v6451
        %v6493 = vmul.f32 %v6205, %v6451
        %v6494 = vmul.f32 %v6206, %v6452
        %v6495 = vmul.f32 %v6207, %v6452
        %v6496 = vmul.f32 %v6208, %v6453
        %v6497 = vmul.f32 %v6209, %v6453
        %v6498 = vmul.f32 %v6210, %v6454
        %v6499 = vmul.f32 %v6211, %v6454
        %v6500 = vmul.f32 %v6212, %v6455
        %v6501 = vmul.f32 %v6213, %v6455
        %v6502 = vmul.f32 %v6214, %v6456
        %v6503 = vmul.f32 %v6215, %v6456
        %v6504 = vmul.f32 %v6216, %v6457
        %v6505 = vmul.f32 %v6217, %v6457
        %v6506 = vmul.f32 %v6218, %v6458
        %v6507 = vmul.f32 %v6219, %v6458
        %v6508 = vmul.f32 %v6220, %v6459
        %v6509 = vmul.f32 %v6221, %v6459
        %v6510 = vmul.f32 %v6222, %v6460
        %v6511 = vmul.f32 %v6223, %v6460
        %v6512 = vmul.f32 %v6224, %v6461
        %v6513 = vmul.f32 %v6225, %v6461
        %v6514 = vmul.f32 %v6226, %v6462
        %v6515 = vmul.f32 %v6227, %v6462
        %v6516 = vmul.f32 %v6228, %v6463
        %v6517 = vmul.f32 %v6229, %v6463
        %v6518 = vmul.f32 %v6230, %v6464
        %v6519 = vmul.f32 %v6231, %v6464
        %v6520 = vmul.f32 %v6232, %v6465
        %v6521 = vmul.f32 %v6233, %v6465
        %v6522 = vmul.f32 %v6234, %v6466
        %v6523 = vmul.f32 %v6235, %v6466
        %v6524 = vmul.f32 %v6236, %v6467
        %v6525 = vmul.f32 %v6237, %v6467
        %v6526 = vmul.f32 %v6238, %v6468
        %v6527 = vmul.f32 %v6239, %v6468
        %v6528 = vmul.f32 %v6240, %v6469
        %v6529 = vmul.f32 %v6241, %v6469
        %v6530 = vmul.f32 %v6242, %v6470
        %v6531 = vmul.f32 %v6243, %v6470
        %v6532 = vmul.f32 %v6244, %v6471
        %v6533 = vmul.f32 %v6245, %v6471
        %v6534 = vmul.f32 %v6246, %v6472
        %v6535 = vmul.f32 %v6247, %v6472
        %v6536 = vmul.f32 %v6248, %v6473
        %v6537 = vmul.f32 %v6249, %v6473
        %v6538 = vpack.c.bf16 %v6476, %v6474
        %v6539 = vpack.c.bf16 %v6477, %v6475
        %v6540 = vpack.c.bf16 %v6480, %v6478
        %v6541 = vpack.c.bf16 %v6481, %v6479
        %v6542 = vpack.c.bf16 %v6484, %v6482
        %v6543 = vpack.c.bf16 %v6485, %v6483
        %v6544 = vpack.c.bf16 %v6488, %v6486
        %v6545 = vpack.c.bf16 %v6489, %v6487
        %v6546 = vpack.c.bf16 %v6492, %v6490
        %v6547 = vpack.c.bf16 %v6493, %v6491
        %v6548 = vpack.c.bf16 %v6496, %v6494
        %v6549 = vpack.c.bf16 %v6497, %v6495
        %v6550 = vpack.c.bf16 %v6500, %v6498
        %v6551 = vpack.c.bf16 %v6501, %v6499
        %v6552 = vpack.c.bf16 %v6504, %v6502
        %v6553 = vpack.c.bf16 %v6505, %v6503
        %v6554 = vpack.c.bf16 %v6508, %v6506
        %v6555 = vpack.c.bf16 %v6509, %v6507
        %v6556 = vpack.c.bf16 %v6512, %v6510
        %v6557 = vpack.c.bf16 %v6513, %v6511
        %v6558 = vpack.c.bf16 %v6516, %v6514
        %v6559 = vpack.c.bf16 %v6517, %v6515
        %v6560 = vpack.c.bf16 %v6520, %v6518
        %v6561 = vpack.c.bf16 %v6521, %v6519
        %v6562 = vpack.c.bf16 %v6524, %v6522
        %v6563 = vpack.c.bf16 %v6525, %v6523
        %v6564 = vpack.c.bf16 %v6528, %v6526
        %v6565 = vpack.c.bf16 %v6529, %v6527
        %v6566 = vpack.c.bf16 %v6532, %v6530
        %v6567 = vpack.c.bf16 %v6533, %v6531
        %v6568 = vpack.c.bf16 %v6536, %v6534
        %v6569 = vpack.c.bf16 %v6537, %v6535
        %v6570 = vld [vmem:[#allocation11] sm:$0xf]
        %v6571 = vld [vmem:[#allocation11 + $0x4] sm:$0xf]
        %v6572 = vld [vmem:[#allocation11 + $0x8] sm:$0xf]
        %v6573 = vld [vmem:[#allocation11 + $0xc] sm:$0xf]
        %v6574 = vld [vmem:[#allocation11 + $0x10] sm:$0xf]
        %v6575 = vld [vmem:[#allocation11 + $0x14] sm:$0xf]
        %v6576 = vld [vmem:[#allocation11 + $0x18] sm:$0xf]
        %v6577 = vld [vmem:[#allocation11 + $0x1c] sm:$0xf]
        %v6578 = vld [vmem:[#allocation11 + $0x20] sm:$0xf]
        %v6579 = vld [vmem:[#allocation11 + $0x24] sm:$0xf]
        %v6580 = vld [vmem:[#allocation11 + $0x28] sm:$0xf]
        %v6581 = vld [vmem:[#allocation11 + $0x2c] sm:$0xf]
        %v6582 = vld [vmem:[#allocation11 + $0x30] sm:$0xf]
        %v6583 = vld [vmem:[#allocation11 + $0x34] sm:$0xf]
        %v6584 = vld [vmem:[#allocation11 + $0x38] sm:$0xf]
        %v6585 = vld [vmem:[#allocation11 + $0x3c] sm:$0xf]
        %v6586 = vld [vmem:[#allocation11 + $0x40] sm:$0xf]
        %v6587 = vld [vmem:[#allocation11 + $0x44] sm:$0xf]
        %v6588 = vld [vmem:[#allocation11 + $0x48] sm:$0xf]
        %v6589 = vld [vmem:[#allocation11 + $0x4c] sm:$0xf]
        %v6590 = vld [vmem:[#allocation11 + $0x50] sm:$0xf]
        %v6591 = vld [vmem:[#allocation11 + $0x54] sm:$0xf]
        %v6592 = vld [vmem:[#allocation11 + $0x58] sm:$0xf]
        %v6593 = vld [vmem:[#allocation11 + $0x5c] sm:$0xf]
        %v6594 = vld [vmem:[#allocation11 + $0x60] sm:$0xf]
        %v6595 = vld [vmem:[#allocation11 + $0x64] sm:$0xf]
        %v6596 = vld [vmem:[#allocation11 + $0x68] sm:$0xf]
        %v6597 = vld [vmem:[#allocation11 + $0x6c] sm:$0xf]
        %v6598 = vld [vmem:[#allocation11 + $0x70] sm:$0xf]
        %v6599 = vld [vmem:[#allocation11 + $0x74] sm:$0xf]
        %v6600 = vld [vmem:[#allocation11 + $0x78] sm:$0xf]
        %v6601 = vld [vmem:[#allocation11 + $0x7c] sm:$0xf]
        %v6602 = vld [vmem:[#allocation13] sm:$0x1]
        %v6604 = vlaneseq
        %v6605 = vshrl.u32 %v6604, 7
        %v6606 = vsub.s32 0, %v6605
        %v6607 = vrot.slane %v6602, %v6606
        %v6641 = vunpack.c.l.b16 %v6570
        %v6642 = vunpack.c.l.b16 %v6571
        %v6643 = vunpack.c.l.b16 %v6572
        %v6644 = vunpack.c.l.b16 %v6573
        %v6645 = vunpack.c.l.b16 %v6574
        %v6646 = vunpack.c.l.b16 %v6575
        %v6647 = vunpack.c.l.b16 %v6576
        %v6648 = vunpack.c.l.b16 %v6577
        %v6649 = vunpack.c.l.b16 %v6578
        %v6650 = vunpack.c.l.b16 %v6579
        %v6651 = vunpack.c.l.b16 %v6580
        %v6652 = vunpack.c.l.b16 %v6581
        %v6653 = vunpack.c.l.b16 %v6582
        %v6654 = vunpack.c.l.b16 %v6583
        %v6655 = vunpack.c.l.b16 %v6584
        %v6656 = vunpack.c.l.b16 %v6585
        %v6657 = vunpack.c.l.b16 %v6586
        %v6658 = vunpack.c.l.b16 %v6587
        %v6659 = vunpack.c.l.b16 %v6588
        %v6660 = vunpack.c.l.b16 %v6589
        %v6661 = vunpack.c.l.b16 %v6590
        %v6662 = vunpack.c.l.b16 %v6591
        %v6663 = vunpack.c.l.b16 %v6592
        %v6664 = vunpack.c.l.b16 %v6593
        %v6665 = vunpack.c.l.b16 %v6594
        %v6666 = vunpack.c.l.b16 %v6595
        %v6667 = vunpack.c.l.b16 %v6596
        %v6668 = vunpack.c.l.b16 %v6597
        %v6669 = vunpack.c.l.b16 %v6598
        %v6670 = vunpack.c.l.b16 %v6599
        %v6671 = vunpack.c.l.b16 %v6600
        %v6672 = vunpack.c.l.b16 %v6601
        %v6673 = vpack.c.b16 %v6642, %v6641
        %v6674 = vpack.c.b16 %v6644, %v6643
        %v6675 = vpack.c.b16 %v6646, %v6645
        %v6676 = vpack.c.b16 %v6648, %v6647
        %v6677 = vpack.c.b16 %v6650, %v6649
        %v6678 = vpack.c.b16 %v6652, %v6651
        %v6679 = vpack.c.b16 %v6654, %v6653
        %v6680 = vpack.c.b16 %v6656, %v6655
        %v6681 = vpack.c.b16 %v6658, %v6657
        %v6682 = vpack.c.b16 %v6660, %v6659
        %v6683 = vpack.c.b16 %v6662, %v6661
        %v6684 = vpack.c.b16 %v6664, %v6663
        %v6685 = vpack.c.b16 %v6666, %v6665
        %v6686 = vpack.c.b16 %v6668, %v6667
        %v6687 = vpack.c.b16 %v6670, %v6669
        %v6688 = vpack.c.b16 %v6672, %v6671
        %6705 = vmatprep.subr.bf16.mxu0 0
        %6706 = vmatpush1.bf16.msra.mxu0 %v6673
        %6707 = vmatprep.subr.bf16.mxu0 0
        %6708 = vmatpush1.bf16.msra.mxu0 %v6674
        %6709 = vmatprep.subr.bf16.mxu0 0
        %6710 = vmatpush1.bf16.msra.mxu0 %v6675
        %6711 = vmatprep.subr.bf16.mxu0 0
        %6712 = vmatpush1.bf16.msra.mxu0 %v6676
        %6713 = vmatprep.subr.bf16.mxu0 0
        %6714 = vmatpush1.bf16.msra.mxu0 %v6677
        %6715 = vmatprep.subr.bf16.mxu0 0
        %6716 = vmatpush1.bf16.msra.mxu0 %v6678
        %6717 = vmatprep.subr.bf16.mxu0 0
        %6718 = vmatpush1.bf16.msra.mxu0 %v6679
        %6719 = vmatprep.subr.bf16.mxu0 0
        %6720 = vmatpush1.bf16.msra.mxu0 %v6680
        %6721 = vmatprep.subr.bf16.mxu0 0
        %6722 = vmatpush1.bf16.msra.mxu0 %v6681
        %6723 = vmatprep.subr.bf16.mxu0 0
        %6724 = vmatpush1.bf16.msra.mxu0 %v6682
        %6725 = vmatprep.subr.bf16.mxu0 0
        %6726 = vmatpush1.bf16.msra.mxu0 %v6683
        %6727 = vmatprep.subr.bf16.mxu0 0
        %6728 = vmatpush1.bf16.msra.mxu0 %v6684
        %6729 = vmatprep.subr.bf16.mxu0 0
        %6730 = vmatpush1.bf16.msra.mxu0 %v6685
        %6731 = vmatprep.subr.bf16.mxu0 0
        %6732 = vmatpush1.bf16.msra.mxu0 %v6686
        %6733 = vmatprep.subr.bf16.mxu0 0
        %6734 = vmatpush1.bf16.msra.mxu0 %v6687
        %6735 = vmatprep.subr.bf16.mxu0 0
        %6736 = vmatpush1.bf16.msra.mxu0 %v6688
        %6737 = vmatprep.mubr.bf16.mxu0 %v6539
        %6738 = vmatmul.mubr.bf16.gmra.mrb[0].mxu0 %v6538
        %v6739 = vpop.f32.mrb[0].mxu0
        %v6740 = vadd.f32 %v6607, %v6739
        %v6741 = vpop.f32.mrb[0].mxu0
        %v6742 = vpop.f32.mrb[0].mxu0
        %v6743 = vadd.f32 %v6607, %v6742
        %v6744 = vpop.f32.mrb[0].mxu0
        %6745 = vmatprep.mubr.bf16.mxu0 %v6541
        %6746 = vmatmul.mubr.bf16.gmra.mrb[0].mxu0 %v6540
        %v6747 = vpop.f32.mrb[0].mxu0
        %v6748 = vadd.f32 %v6607, %v6747
        %v6749 = vpop.f32.mrb[0].mxu0
        %v6750 = vpop.f32.mrb[0].mxu0
        %v6751 = vadd.f32 %v6607, %v6750
        %v6752 = vpop.f32.mrb[0].mxu0
        %6753 = vmatprep.mubr.bf16.mxu0 %v6543
        %6754 = vmatmul.mubr.bf16.gmra.mrb[0].mxu0 %v6542
        %v6755 = vpop.f32.mrb[0].mxu0
        %v6756 = vadd.f32 %v6607, %v6755
        %v6757 = vpop.f32.mrb[0].mxu0
        %v6758 = vpop.f32.mrb[0].mxu0
        %v6759 = vadd.f32 %v6607, %v6758
        %v6760 = vpop.f32.mrb[0].mxu0
        %6761 = vmatprep.mubr.bf16.mxu0 %v6545
        %6762 = vmatmul.mubr.bf16.gmra.mrb[0].mxu0 %v6544
        %v6763 = vpop.f32.mrb[0].mxu0
        %v6764 = vadd.f32 %v6607, %v6763
        %v6765 = vpop.f32.mrb[0].mxu0
        %v6766 = vpop.f32.mrb[0].mxu0
        %v6767 = vadd.f32 %v6607, %v6766
        %v6768 = vpop.f32.mrb[0].mxu0
        %6769 = vmatprep.mubr.bf16.mxu0 %v6547
        %6770 = vmatmul.mubr.bf16.gmra.mrb[0].mxu0 %v6546
        %v6771 = vpop.f32.mrb[0].mxu0
        %v6772 = vadd.f32 %v6607, %v6771
        %v6773 = vpop.f32.mrb[0].mxu0
        %v6774 = vpop.f32.mrb[0].mxu0
        %v6775 = vadd.f32 %v6607, %v6774
        %v6776 = vpop.f32.mrb[0].mxu0
        %6777 = vmatprep.mubr.bf16.mxu0 %v6549
        %6778 = vmatmul.mubr.bf16.gmra.mrb[0].mxu0 %v6548
        %v6779 = vpop.f32.mrb[0].mxu0
        %v6780 = vadd.f32 %v6607, %v6779
        %v6781 = vpop.f32.mrb[0].mxu0
        %v6782 = vpop.f32.mrb[0].mxu0
        %v6783 = vadd.f32 %v6607, %v6782
        %v6784 = vpop.f32.mrb[0].mxu0
        %6785 = vmatprep.mubr.bf16.mxu0 %v6551
        %6786 = vmatmul.mubr.bf16.gmra.mrb[0].mxu0 %v6550
        %v6787 = vpop.f32.mrb[0].mxu0
        %v6788 = vadd.f32 %v6607, %v6787
        %v6789 = vpop.f32.mrb[0].mxu0
        %v6790 = vpop.f32.mrb[0].mxu0
        %v6791 = vadd.f32 %v6607, %v6790
        %v6792 = vpop.f32.mrb[0].mxu0
        %6793 = vmatprep.mubr.bf16.mxu0 %v6553
        %6794 = vmatmul.mubr.bf16.gmra.mrb[0].mxu0 %v6552
        %v6795 = vpop.f32.mrb[0].mxu0
        %v6796 = vadd.f32 %v6607, %v6795
        %v6797 = vpop.f32.mrb[0].mxu0
        %v6798 = vpop.f32.mrb[0].mxu0
        %v6799 = vadd.f32 %v6607, %v6798
        %v6800 = vpop.f32.mrb[0].mxu0
        %6801 = vmatprep.mubr.bf16.mxu0 %v6555
        %6802 = vmatmul.mubr.bf16.gmra.mrb[0].mxu0 %v6554
        %v6803 = vpop.f32.mrb[0].mxu0
        %v6804 = vadd.f32 %v6607, %v6803
        %v6805 = vpop.f32.mrb[0].mxu0
        %v6806 = vpop.f32.mrb[0].mxu0
        %v6807 = vadd.f32 %v6607, %v6806
        %v6808 = vpop.f32.mrb[0].mxu0
        %6809 = vmatprep.mubr.bf16.mxu0 %v6557
        %6810 = vmatmul.mubr.bf16.gmra.mrb[0].mxu0 %v6556
        %v6811 = vpop.f32.mrb[0].mxu0
        %v6812 = vadd.f32 %v6607, %v6811
        %v6813 = vpop.f32.mrb[0].mxu0
        %v6814 = vpop.f32.mrb[0].mxu0
        %v6815 = vadd.f32 %v6607, %v6814
        %v6816 = vpop.f32.mrb[0].mxu0
        %6817 = vmatprep.mubr.bf16.mxu0 %v6559
        %6818 = vmatmul.mubr.bf16.gmra.mrb[0].mxu0 %v6558
        %v6819 = vpop.f32.mrb[0].mxu0
        %v6820 = vadd.f32 %v6607, %v6819
        %v6821 = vpop.f32.mrb[0].mxu0
        %v6822 = vpop.f32.mrb[0].mxu0
        %v6823 = vadd.f32 %v6607, %v6822
        %v6824 = vpop.f32.mrb[0].mxu0
        %6825 = vmatprep.mubr.bf16.mxu0 %v6561
        %6826 = vmatmul.mubr.bf16.gmra.mrb[0].mxu0 %v6560
        %v6827 = vpop.f32.mrb[0].mxu0
        %v6828 = vadd.f32 %v6607, %v6827
        %v6829 = vpop.f32.mrb[0].mxu0
        %v6830 = vpop.f32.mrb[0].mxu0
        %v6831 = vadd.f32 %v6607, %v6830
        %v6832 = vpop.f32.mrb[0].mxu0
        %6833 = vmatprep.mubr.bf16.mxu0 %v6563
        %6834 = vmatmul.mubr.bf16.gmra.mrb[0].mxu0 %v6562
        %v6835 = vpop.f32.mrb[0].mxu0
        %v6836 = vadd.f32 %v6607, %v6835
        %v6837 = vpop.f32.mrb[0].mxu0
        %v6838 = vpop.f32.mrb[0].mxu0
        %v6839 = vadd.f32 %v6607, %v6838
        %v6840 = vpop.f32.mrb[0].mxu0
        %6841 = vmatprep.mubr.bf16.mxu0 %v6565
        %6842 = vmatmul.mubr.bf16.gmra.mrb[0].mxu0 %v6564
        %v6843 = vpop.f32.mrb[0].mxu0
        %v6844 = vadd.f32 %v6607, %v6843
        %v6845 = vpop.f32.mrb[0].mxu0
        %v6846 = vpop.f32.mrb[0].mxu0
        %v6847 = vadd.f32 %v6607, %v6846
        %v6848 = vpop.f32.mrb[0].mxu0
        %6849 = vmatprep.mubr.bf16.mxu0 %v6567
        %6850 = vmatmul.mubr.bf16.gmra.mrb[0].mxu0 %v6566
        %v6851 = vpop.f32.mrb[0].mxu0
        %v6852 = vadd.f32 %v6607, %v6851
        %v6853 = vpop.f32.mrb[0].mxu0
        %v6854 = vpop.f32.mrb[0].mxu0
        %v6855 = vadd.f32 %v6607, %v6854
        %v6856 = vpop.f32.mrb[0].mxu0
        %6857 = vmatprep.mubr.bf16.mxu0 %v6569
        %6858 = vmatmul.mubr.bf16.gmra.mrb[0].mxu0 %v6568
        %v6859 = vpop.f32.mrb[0].mxu0
        %v6860 = vadd.f32 %v6607, %v6859
        %v6861 = vpop.f32.mrb[0].mxu0
        %v6862 = vpop.f32.mrb[0].mxu0
        %v6863 = vadd.f32 %v6607, %v6862
        %v6864 = vpop.f32.mrb[0].mxu0
        %6865 = vdwg.mxu0
        %6866 = vst [vmem:[%s378] sm:$0xff] %v6740
        %6867 = vst [vmem:[%s378 + $0x8] sm:$0xff] %v6743
        %6868 = vst [vmem:[%s378 + $0x10] sm:$0xff] %v6748
        %6869 = vst [vmem:[%s378 + $0x18] sm:$0xff] %v6751
        %6870 = vst [vmem:[%s378 + $0x20] sm:$0xff] %v6756
        %6871 = vst [vmem:[%s378 + $0x28] sm:$0xff] %v6759
        %6872 = vst [vmem:[%s378 + $0x30] sm:$0xff] %v6764
        %6873 = vst [vmem:[%s378 + $0x38] sm:$0xff] %v6767
        %6874 = vst [vmem:[%s378 + $0x40] sm:$0xff] %v6772
        %6875 = vst [vmem:[%s378 + $0x48] sm:$0xff] %v6775
        %6876 = vst [vmem:[%s378 + $0x50] sm:$0xff] %v6780
        %6877 = vst [vmem:[%s378 + $0x58] sm:$0xff] %v6783
        %6878 = vst [vmem:[%s378 + $0x60] sm:$0xff] %v6788
        %6879 = vst [vmem:[%s378 + $0x68] sm:$0xff] %v6791
        %6880 = vst [vmem:[%s378 + $0x70] sm:$0xff] %v6796
        %6881 = vst [vmem:[%s378 + $0x78] sm:$0xff] %v6799
        %6882 = vst [vmem:[%s378 + $0x80] sm:$0xff] %v6804
        %6883 = vst [vmem:[%s378 + $0x88] sm:$0xff] %v6807
        %6884 = vst [vmem:[%s378 + $0x90] sm:$0xff] %v6812
        %6885 = vst [vmem:[%s378 + $0x98] sm:$0xff] %v6815
        %6886 = vst [vmem:[%s378 + $0xa0] sm:$0xff] %v6820
        %6887 = vst [vmem:[%s378 + $0xa8] sm:$0xff] %v6823
        %6888 = vst [vmem:[%s378 + $0xb0] sm:$0xff] %v6828
        %6889 = vst [vmem:[%s378 + $0xb8] sm:$0xff] %v6831
        %6890 = vst [vmem:[%s378 + $0xc0] sm:$0xff] %v6836
        %6891 = vst [vmem:[%s378 + $0xc8] sm:$0xff] %v6839
        %6892 = vst [vmem:[%s378 + $0xd0] sm:$0xff] %v6844
        %6893 = vst [vmem:[%s378 + $0xd8] sm:$0xff] %v6847
        %6894 = vst [vmem:[%s378 + $0xe0] sm:$0xff] %v6852
        %6895 = vst [vmem:[%s378 + $0xe8] sm:$0xff] %v6855
        %6896 = vst [vmem:[%s378 + $0xf0] sm:$0xff] %v6860
        %6897 = vst [vmem:[%s378 + $0xf8] sm:$0xff] %v6863
        %s6898 = sand.u32 %s187, 1
        %s6899 = scalar_lea.sflag [#allocation4], %s6898
        %s6900 = sand.u32 %s187, 1
        %s6901 = smul.addr %s6900, 256
        %s6902 = scalar_lea.vmem [#allocation14], %s6901
        // Predicated region
        $region77: #{tpu_custom_call.1} parent=47 // pred_check
          %p6903 = pneg %p197
        $region78: #{tpu_custom_call.1} parent=47 // pred_check_branch
          %6905 = sbr.rel (%p6903) target = $region80
        $region79: #{tpu_custom_call.1} parent=47 // pred_region
          %s6906 = smul.u32 32, %s27
          %s6908 = ssub.s32 4096, 4096
          %6909 = vsyncadd %s6899, %s6908
          %s6910 = smul.addr %s6906, 128
          %s6911 = scalar_lea.hbm %s7, %s6910
          %s6912 = sshll.u32 %s6902, 4
          %s6913 = int_to_ptr.vmem [resolvable:$true] %s6912
          %6918 = dma.vmem_to_hbm [thread:$0]  %s6913, 4096, %s6911, %s6899, 128, 128, 8
        $region80: #{tpu_custom_call.1} parent=47 // pred_fallthru
          _
      $region48: #{tpu_custom_call.1} parent=5 // pred_fallthru
        _
      %p6919 = scmp.le.s32.totalorder 2, %s22
      // Predicated region
      $region81: #{tpu_custom_call.1} parent=5 // pred_check
        %p6920 = pneg %p6919
      $region82: #{tpu_custom_call.1} parent=5 // pred_check_branch
        %6922 = sbr.rel (%p6920) target = $region84
      $region83: #{tpu_custom_call.1} parent=5 // pred_region
        %s6923 = ssub.s32 %s22, 2
        // Predicated region
        $region85: #{tpu_custom_call.1} parent=83 // pred_check
          %p6924 = pneg %p203
        $region86: #{tpu_custom_call.1} parent=83 // pred_check_branch
          %6926 = sbr.rel (%p6924) target = $region88
        $region87: #{tpu_custom_call.1} parent=83 // pred_region
          %s6927 = sand.u32 %s188, 1
          %s6928 = scalar_lea.sflag [#allocation4], %s6927
          %s6929 = sand.u32 %s188, 1
          %s6930 = smul.addr %s6929, 256
          %s6931 = scalar_lea.vmem [#allocation14], %s6930
          %6932 = dma.done %s6928, 4096
        $region88: #{tpu_custom_call.1} parent=83 // pred_fallthru
          _
      $region84: #{tpu_custom_call.1} parent=5 // pred_fallthru
        _
    $region6: #{tpu_custom_call.1} parent=1 // loop_footer
      %s26 = sadd.s32 1, %s22
    $region7: #{tpu_custom_call.1} parent=1 // loop_footer_branch
      %21 = sbr.rel target = $region3
    $region8: #{tpu_custom_call.1} parent=1 // loop_exit
      _
    %6933 = vsyncpa [#allocation3], 1
    %s6934 = scalar_lea.sflag [#allocation3], 1
    %6935 = vsyncpa %s6934, 1
    %6936 = vsyncpa [#allocation6], 1
    %6937 = vsyncpa [#allocation9], 1
    %6938 = vsyncpa [#allocation12], 1
    %6939 = vsyncpa [#allocation4], 1
    %s6940 = scalar_lea.sflag [#allocation4], 1
    %6941 = vsyncpa %s6940, 1

</llo_original>
